<compile_context>
chip_gen: v6e
topology: v6e:2x2x1
jax: 0.10.0
libtpu: 0.0.40
codegen_flags: <defaults>
</compile_context>

<pallas_src>
import functools
import math

import jax
import jax.numpy as jnp
from jax.experimental import pallas as pl
from jax.experimental.pallas import tpu as pltpu

EPS = 1e-6  # Norm eps from the reference module


# ----------------------------- fused Pallas kernel ---------------------------

def _decoder_kernel(x_ref, e_ref, tmask_ref, smask_ref,
                    ln_a_ref, ln_b_ref,
                    wqkv1_ref, bqkv1_ref, wo1_ref, bo1_ref,
                    wq2_ref, bq2_ref, wkv2_ref, bkv2_ref, wo2_ref, bo2_ref,
                    w1_ref, b1_ref, w2_ref, b2_ref,
                    fn_a_ref, fn_b_ref,
                    o_ref, *, n_layers, heads, eps):
    x = x_ref[0]            # [St, D]   decoder activations for this batch element
    e = e_ref[0]            # [Ss, D]   encoder outputs
    tmask = tmask_ref[0]    # [St, St]  additive causal mask (0 / -1e9)
    smask = smask_ref[0]    # [St, Ss]  additive src mask (0 / -1e9)

    d = x.shape[-1]
    dk = d // heads
    scale = 1.0 / math.sqrt(dk)

    def layer_norm(z, a, b):
        # Matches the tutorial Norm: alpha * (x - mu) / (std_unbiased + eps) + bias
        mu = jnp.mean(z, axis=-1, keepdims=True)
        zc = z - mu
        var = jnp.sum(zc * zc, axis=-1, keepdims=True) / (d - 1)   # torch.std is unbiased
        inv = pl.reciprocal(jnp.sqrt(var) + eps, approx=True)      # EUP, not VPU divide
        return a * zc * inv + b

    def mha(q, k, v, wo, bo, amask):
        # q: [Sq, D], k/v: [Sk, D], wo: [D, D], amask: [Sq, Sk] additive.
        sq = q.shape[0]
        out = jnp.zeros((sq, d), jnp.float32)
        for h in range(heads):                       # static unroll over heads
            lo, hi = h * dk, (h + 1) * dk
            qh, kh, vh = q[:, lo:hi], k[:, lo:hi], v[:, lo:hi]
            s = jax.lax.dot_general(qh, kh, (((1,), (1,)), ((), ())),
                                    preferred_element_type=jnp.float32)
            s = s * scale + amask
            s = s - jnp.max(s, axis=-1, keepdims=True)
            p = jnp.exp(s)
            p = p * pl.reciprocal(jnp.sum(p, axis=-1, keepdims=True), approx=True)
            ah = jnp.dot(p, vh, preferred_element_type=jnp.float32)            # [Sq, dk]
            # accumulate the output projection per head (avoids concat)
            out = out + jnp.dot(ah, wo[lo:hi, :], preferred_element_type=jnp.float32)
        return out + bo

    for l in range(n_layers):                        # static unroll over layers
        # --- sub-layer 1: masked self-attention ---
        x2 = layer_norm(x, ln_a_ref[l, 0], ln_b_ref[l, 0])
        qkv = jnp.dot(x2, wqkv1_ref[l], preferred_element_type=jnp.float32) + bqkv1_ref[l]
        x = x + mha(qkv[:, :d], qkv[:, d:2 * d], qkv[:, 2 * d:],
                    wo1_ref[l], bo1_ref[l], tmask)
        # --- sub-layer 2: cross-attention over encoder outputs ---
        x2 = layer_norm(x, ln_a_ref[l, 1], ln_b_ref[l, 1])
        q = jnp.dot(x2, wq2_ref[l], preferred_element_type=jnp.float32) + bq2_ref[l]
        kv = jnp.dot(e, wkv2_ref[l], preferred_element_type=jnp.float32) + bkv2_ref[l]
        x = x + mha(q, kv[:, :d], kv[:, d:], wo2_ref[l], bo2_ref[l], smask)
        # --- sub-layer 3: feed-forward ---
        x2 = layer_norm(x, ln_a_ref[l, 2], ln_b_ref[l, 2])
        h1 = jnp.maximum(
            jnp.dot(x2, w1_ref[l], preferred_element_type=jnp.float32) + b1_ref[l], 0.0)
        x = x + jnp.dot(h1, w2_ref[l], preferred_element_type=jnp.float32) + b2_ref[l]

    # final Norm
    o_ref[0] = layer_norm(x, fn_a_ref[...], fn_b_ref[...]).astype(o_ref.dtype)


# ------------------------------ model wrapper --------------------------------

def positional_encoding(max_len, d_model):
    pos = jnp.arange(max_len, dtype=jnp.float32)[:, None]
    j = jnp.arange(d_model, dtype=jnp.float32)[None, :]
    angle = pos / jnp.power(10000.0, (2.0 * j) / d_model)   # tutorial's exact formula
    return jnp.where(jnp.arange(d_model)[None, :] % 2 == 0, jnp.sin(angle), jnp.cos(angle))


def decoder_forward(params, trg, e_outputs, src_mask, trg_mask, *, heads, d_model):
    b, st = trg.shape
    ss = e_outputs.shape[1]
    layers = params['layers']
    n_layers = len(layers)

    # Embedding gather + positional encoding stay in JAX glue (a gather of a few
    # hundred rows has no kernel win).  Dropout is identity (eval mode).
    # TODO(synk): embedding gather kept outside the Pallas kernel.
    x = params['embed'][trg] * math.sqrt(d_model) + params['pe'][:st][None]
    x = x.astype(jnp.float32)

    # Additive masks, precomputed once (kernel just adds them to the scores).
    tmask = jnp.where(trg_mask == 0, -1e9, 0.0).astype(jnp.float32)          # [B,St,St]
    smask = jnp.broadcast_to(
        jnp.where(src_mask == 0, -1e9, 0.0).astype(jnp.float32), (b, st, ss))  # [B,St,Ss]

    # Pack per-layer parameters into stacked tensors (leading layer axis).
    stack = lambda f: jnp.stack([f(lp) for lp in layers])
    ln_a = stack(lambda lp: jnp.stack([lp['norm1']['alpha'], lp['norm2']['alpha'],
                                       lp['norm3']['alpha']]))[:, :, None, :]   # [N,3,1,D]
    ln_b = stack(lambda lp: jnp.stack([lp['norm1']['bias'], lp['norm2']['bias'],
                                       lp['norm3']['bias']]))[:, :, None, :]
    wqkv1 = stack(lambda lp: jnp.concatenate(
        [lp['attn1']['wq'], lp['attn1']['wk'], lp['attn1']['wv']], axis=1))      # [N,D,3D]
    bqkv1 = stack(lambda lp: jnp.concatenate(
        [lp['attn1']['bq'], lp['attn1']['bk'], lp['attn1']['bv']]))[:, None, :]  # [N,1,3D]
    wo1 = stack(lambda lp: lp['attn1']['wo'])
    bo1 = stack(lambda lp: lp['attn1']['bo'])[:, None, :]
    wq2 = stack(lambda lp: lp['attn2']['wq'])
    bq2 = stack(lambda lp: lp['attn2']['bq'])[:, None, :]
    wkv2 = stack(lambda lp: jnp.concatenate(
        [lp['attn2']['wk'], lp['attn2']['wv']], axis=1))                          # [N,D,2D]
    bkv2 = stack(lambda lp: jnp.concatenate(
        [lp['attn2']['bk'], lp['attn2']['bv']]))[:, None, :]                      # [N,1,2D]
    wo2 = stack(lambda lp: lp['attn2']['wo'])
    bo2 = stack(lambda lp: lp['attn2']['bo'])[:, None, :]
    w1 = stack(lambda lp: lp['ff']['w1'])
    b1 = stack(lambda lp: lp['ff']['b1'])[:, None, :]
    w2 = stack(lambda lp: lp['ff']['w2'])
    b2 = stack(lambda lp: lp['ff']['b2'])[:, None, :]
    fn_a = params['norm']['alpha'][None, :]
    fn_b = params['norm']['bias'][None, :]

    # BlockSpecs: activations/masks tiled per batch element; weights whole-array
    # resident (fine at these dims on v5e/v6e/v7x VMEM budgets).
    per_b = lambda s1, s2: pl.BlockSpec((1, s1, s2), lambda bb: (bb, 0, 0))
    whole = lambda arr: pl.BlockSpec(tuple(arr.shape),
                                     lambda bb, _n=len(arr.shape): (0,) * _n)

    out = pl.pallas_call(
        functools.partial(_decoder_kernel, n_layers=n_layers, heads=heads, eps=EPS),
        out_shape=jax.ShapeDtypeStruct((b, st, d_model), jnp.float32),
        grid=(b,),
        in_specs=[per_b(st, d_model),        # x
                  per_b(ss, d_model),        # e_outputs
                  per_b(st, st),             # additive trg mask
                  per_b(st, ss),             # additive src mask
                  whole(ln_a), whole(ln_b),
                  whole(wqkv1), whole(bqkv1), whole(wo1), whole(bo1),
                  whole(wq2), whole(bq2), whole(wkv2), whole(bkv2),
                  whole(wo2), whole(bo2),
                  whole(w1), whole(b1), whole(w2), whole(b2),
                  whole(fn_a), whole(fn_b)],
        out_specs=per_b(st, d_model),
        compiler_params=pltpu.CompilerParams(dimension_semantics=("parallel",)),
    )(x, e_outputs, tmask, smask, ln_a, ln_b,
      wqkv1, bqkv1, wo1, bo1, wq2, bq2, wkv2, bkv2, wo2, bo2,
      w1, b1, w2, b2, fn_a, fn_b)
    return out


# ----------------------------- parameter setup --------------------------------

def init_params(key, vocab_size, d_model, n_layers, heads, d_ff, max_len):
    ks = iter(jax.random.split(key, 8 + n_layers * 32))

    def dense(din, dout):
        w = jax.random.normal(next(ks), (din, dout), jnp.float32) / math.sqrt(din)
        b = 0.01 * jax.random.normal(next(ks), (dout,), jnp.float32)
        return w, b

    def mha_p():
        wq, bq = dense(d_model, d_model); wk, bk = dense(d_model, d_model)
        wv, bv = dense(d_model, d_model); wo, bo = dense(d_model, d_model)
        return dict(wq=wq, bq=bq, wk=wk, bk=bk, wv=wv, bv=bv, wo=wo, bo=bo)

    def norm_p():
        return dict(alpha=jnp.ones((d_model,), jnp.float32),
                    bias=jnp.zeros((d_model,), jnp.float32))

    layers = []
    for _ in range(n_layers):
        w1, b1 = dense(d_model, d_ff)
        w2, b2 = dense(d_ff, d_model)
        layers.append(dict(norm1=norm_p(), norm2=norm_p(), norm3=norm_p(),
                           attn1=mha_p(), attn2=mha_p(),
                           ff=dict(w1=w1, b1=b1, w2=w2, b2=b2)))
    return dict(embed=jax.random.normal(next(ks), (vocab_size, d_model), jnp.float32),
                pe=positional_encoding(max_len, d_model),
                layers=layers,
                norm=norm_p())


# ---------------------------- pure-JAX reference ------------------------------

def _ref_layernorm(x, alpha, bias):
    mu = x.mean(-1, keepdims=True)
    std = jnp.sqrt(((x - mu) ** 2).sum(-1, keepdims=True) / (x.shape[-1] - 1))
    return alpha * (x - mu) / (std + EPS) + bias


def _ref_mha(p, q_in, k_in, v_in, mask, heads):
    b, sq, d = q_in.shape
    sk = k_in.shape[1]
    dk = d // heads
    q = (q_in @ p['wq'] + p['bq']).reshape(b, sq, heads, dk).transpose(0, 2, 1, 3)
    k = (k_in @ p['wk'] + p['bk']).reshape(b, sk, heads, dk).transpose(0, 2, 1, 3)
    v = (v_in @ p['wv'] + p['bv']).reshape(b, sk, heads, dk).transpose(0, 2, 1, 3)
    s = jnp.einsum('bhqd,bhkd->bhqk', q, k) / math.sqrt(dk)
    s = jnp.where(mask[:, None] == 0, -1e9, s)
    a = jax.nn.softmax(s, axis=-1)
    o = jnp.einsum('bhqk,bhkd->bhqd', a, v).transpose(0, 2, 1, 3).reshape(b, sq, d)
    return o @ p['wo'] + p['bo']


def _ref_decoder(params, trg, e_outputs, src_mask, trg_mask, heads, d_model):
    x = params['embed'][trg] * math.sqrt(d_model) + params['pe'][:trg.shape[1]][None]
    for lp in params['layers']:
        x2 = _ref_layernorm(x, lp['norm1']['alpha'], lp['norm1']['bias'])
        x = x + _ref_mha(lp['attn1'], x2, x2, x2, trg_mask, heads)
        x2 = _ref_layernorm(x, lp['norm2']['alpha'], lp['norm2']['bias'])
        x = x + _ref_mha(lp['attn2'], x2, e_outputs, e_outputs, src_mask, heads)
        x2 = _ref_layernorm(x, lp['norm3']['alpha'], lp['norm3']['bias'])
        h = jnp.maximum(x2 @ lp['ff']['w1'] + lp['ff']['b1'], 0.0)
        x = x + h @ lp['ff']['w2'] + lp['ff']['b2']
    return _ref_layernorm(x, params['norm']['alpha'], params['norm']['bias'])


# ----------------------------------- main -------------------------------------

if __name__ == "__main__":
    vocab_size, d_model, n_layers, heads, d_ff = 50, 32, 2, 4, 64
    B, St, Ss, max_len = 2, 8, 16, 64

    key = jax.random.PRNGKey(0)
    kp, kt, ke = jax.random.split(key, 3)
    params = init_params(kp, vocab_size, d_model, n_layers, heads, d_ff, max_len)

    trg = jax.random.randint(kt, (B, St), 0, vocab_size)                 # token ids
    e_outputs = jax.random.normal(ke, (B, Ss, d_model), jnp.float32)     # encoder output
    src_mask = jnp.ones((B, 1, Ss), jnp.int32)
    trg_mask = jnp.broadcast_to(jnp.tril(jnp.ones((St, St), jnp.int32))[None], (B, St, St))

    fwd = jax.jit(functools.partial(decoder_forward, heads=heads, d_model=d_model))
    out = jax.block_until_ready(fwd(params, trg, e_outputs, src_mask, trg_mask))

    ref = _ref_decoder(params, trg, e_outputs, src_mask, trg_mask, heads, d_model)
    assert out.shape == (B, St, d_model)
    # Slightly relaxed tolerance: the kernel uses the EUP approximate reciprocal
    # for softmax/LayerNorm normalization (vs exact divides in the reference).
    assert jnp.allclose(out, ref, atol=5e-3, rtol=5e-3), float(jnp.max(jnp.abs(out - ref)))

    print("KERNEL_OK")
</pallas_src>

<mosaic_0001>
module attributes {stable_mosaic.version = 11 : i64} {
  func.func @_decoder_kernel(%arg0: i32, %arg1: memref<1x8x32xf32, #tpu.memory_space<vmem>>, %arg2: memref<1x16x32xf32, #tpu.memory_space<vmem>>, %arg3: memref<1x8x8xf32, #tpu.memory_space<vmem>>, %arg4: memref<1x8x16xf32, #tpu.memory_space<vmem>>, %arg5: memref<2x3x1x32xf32, #tpu.memory_space<vmem>>, %arg6: memref<2x3x1x32xf32, #tpu.memory_space<vmem>>, %arg7: memref<2x32x96xf32, #tpu.memory_space<vmem>>, %arg8: memref<2x1x96xf32, #tpu.memory_space<vmem>>, %arg9: memref<2x32x32xf32, #tpu.memory_space<vmem>>, %arg10: memref<2x1x32xf32, #tpu.memory_space<vmem>>, %arg11: memref<2x32x32xf32, #tpu.memory_space<vmem>>, %arg12: memref<2x1x32xf32, #tpu.memory_space<vmem>>, %arg13: memref<2x32x64xf32, #tpu.memory_space<vmem>>, %arg14: memref<2x1x64xf32, #tpu.memory_space<vmem>>, %arg15: memref<2x32x32xf32, #tpu.memory_space<vmem>>, %arg16: memref<2x1x32xf32, #tpu.memory_space<vmem>>, %arg17: memref<2x32x64xf32, #tpu.memory_space<vmem>>, %arg18: memref<2x1x64xf32, #tpu.memory_space<vmem>>, %arg19: memref<2x64x32xf32, #tpu.memory_space<vmem>>, %arg20: memref<2x1x32xf32, #tpu.memory_space<vmem>>, %arg21: memref<1x32xf32, #tpu.memory_space<vmem>>, %arg22: memref<1x32xf32, #tpu.memory_space<vmem>>, %arg23: memref<1x8x32xf32, #tpu.memory_space<vmem>>) attributes {dimension_semantics = [#tpu.dimension_semantics<parallel>], iteration_bounds = array<i64: 2>, scalar_prefetch = 0 : i64, scratch_operands = 0 : i64, tpu.core_type = #tpu.core_type<tc>, window_params = [{transform_indices = @transform_0, window_bounds = array<i64: 1, 8, 32>}, {transform_indices = @transform_1, window_bounds = array<i64: 1, 16, 32>}, {transform_indices = @transform_2, window_bounds = array<i64: 1, 8, 8>}, {transform_indices = @transform_3, window_bounds = array<i64: 1, 8, 16>}, {pipeline_mode = #tpu.pipeline_mode<synchronous>, transform_indices = @transform_4, window_bounds = array<i64: 2, 3, 1, 32>}, {pipeline_mode = #tpu.pipeline_mode<synchronous>, transform_indices = @transform_5, window_bounds = array<i64: 2, 3, 1, 32>}, {pipeline_mode = #tpu.pipeline_mode<synchronous>, transform_indices = @transform_6, window_bounds = array<i64: 2, 32, 96>}, {pipeline_mode = #tpu.pipeline_mode<synchronous>, transform_indices = @transform_7, window_bounds = array<i64: 2, 1, 96>}, {pipeline_mode = #tpu.pipeline_mode<synchronous>, transform_indices = @transform_8, window_bounds = array<i64: 2, 32, 32>}, {pipeline_mode = #tpu.pipeline_mode<synchronous>, transform_indices = @transform_9, window_bounds = array<i64: 2, 1, 32>}, {pipeline_mode = #tpu.pipeline_mode<synchronous>, transform_indices = @transform_10, window_bounds = array<i64: 2, 32, 32>}, {pipeline_mode = #tpu.pipeline_mode<synchronous>, transform_indices = @transform_11, window_bounds = array<i64: 2, 1, 32>}, {pipeline_mode = #tpu.pipeline_mode<synchronous>, transform_indices = @transform_12, window_bounds = array<i64: 2, 32, 64>}, {pipeline_mode = #tpu.pipeline_mode<synchronous>, transform_indices = @transform_13, window_bounds = array<i64: 2, 1, 64>}, {pipeline_mode = #tpu.pipeline_mode<synchronous>, transform_indices = @transform_14, window_bounds = array<i64: 2, 32, 32>}, {pipeline_mode = #tpu.pipeline_mode<synchronous>, transform_indices = @transform_15, window_bounds = array<i64: 2, 1, 32>}, {pipeline_mode = #tpu.pipeline_mode<synchronous>, transform_indices = @transform_16, window_bounds = array<i64: 2, 32, 64>}, {pipeline_mode = #tpu.pipeline_mode<synchronous>, transform_indices = @transform_17, window_bounds = array<i64: 2, 1, 64>}, {pipeline_mode = #tpu.pipeline_mode<synchronous>, transform_indices = @transform_18, window_bounds = array<i64: 2, 64, 32>}, {pipeline_mode = #tpu.pipeline_mode<synchronous>, transform_indices = @transform_19, window_bounds = array<i64: 2, 1, 32>}, {pipeline_mode = #tpu.pipeline_mode<synchronous>, transform_indices = @transform_20, window_bounds = array<i64: 1, 32>}, {pipeline_mode = #tpu.pipeline_mode<synchronous>, transform_indices = @transform_21, window_bounds = array<i64: 1, 32>}, {transform_indices = @transform_22, window_bounds = array<i64: 1, 8, 32>}]} {
    %c0 = arith.constant 0 : index
    %c0_0 = arith.constant 0 : index
    %c0_1 = arith.constant 0 : index
    %0 = vector.load %arg1[%c0, %c0_0, %c0_1] : memref<1x8x32xf32, #tpu.memory_space<vmem>>, vector<1x8x32xf32>
    %1 = vector.shape_cast %0 : vector<1x8x32xf32> to vector<8x32xf32>
    %c0_2 = arith.constant 0 : index
    %c0_3 = arith.constant 0 : index
    %c0_4 = arith.constant 0 : index
    %2 = vector.load %arg2[%c0_2, %c0_3, %c0_4] : memref<1x16x32xf32, #tpu.memory_space<vmem>>, vector<1x16x32xf32>
    %3 = vector.shape_cast %2 : vector<1x16x32xf32> to vector<16x32xf32>
    %c0_5 = arith.constant 0 : index
    %c0_6 = arith.constant 0 : index
    %c0_7 = arith.constant 0 : index
    %4 = vector.load %arg3[%c0_5, %c0_6, %c0_7] : memref<1x8x8xf32, #tpu.memory_space<vmem>>, vector<1x8x8xf32>
    %5 = vector.shape_cast %4 : vector<1x8x8xf32> to vector<8x8xf32>
    %c0_8 = arith.constant 0 : index
    %c0_9 = arith.constant 0 : index
    %c0_10 = arith.constant 0 : index
    %6 = vector.load %arg4[%c0_8, %c0_9, %c0_10] : memref<1x8x16xf32, #tpu.memory_space<vmem>>, vector<1x8x16xf32>
    %7 = vector.shape_cast %6 : vector<1x8x16xf32> to vector<8x16xf32>
    %c0_11 = arith.constant 0 : index
    %c0_12 = arith.constant 0 : index
    %c0_13 = arith.constant 0 : index
    %c0_14 = arith.constant 0 : index
    %8 = vector.load %arg5[%c0_11, %c0_12, %c0_13, %c0_14] : memref<2x3x1x32xf32, #tpu.memory_space<vmem>>, vector<1x1x1x32xf32>
    %9 = vector.shape_cast %8 : vector<1x1x1x32xf32> to vector<1x32xf32>
    %c0_15 = arith.constant 0 : index
    %c0_16 = arith.constant 0 : index
    %c0_17 = arith.constant 0 : index
    %c0_18 = arith.constant 0 : index
    %10 = vector.load %arg6[%c0_15, %c0_16, %c0_17, %c0_18] : memref<2x3x1x32xf32, #tpu.memory_space<vmem>>, vector<1x1x1x32xf32>
    %11 = vector.shape_cast %10 : vector<1x1x1x32xf32> to vector<1x32xf32>
    %cst = arith.constant dense<0.000000e+00> : vector<8xf32>
    %12 = vector.multi_reduction <add>, %1, %cst [1] : vector<8x32xf32> to vector<8xf32>
    %13 = vector.shape_cast %12 : vector<8xf32> to vector<8x1xf32>
    %cst_19 = arith.constant 3.200000e+01 : f32
    %14 = vector.broadcast %cst_19 : f32 to vector<8x1xf32>
    %15 = arith.divf %13, %14 : vector<8x1xf32>
    %16 = vector.broadcast %15 : vector<8x1xf32> to vector<8x32xf32>
    %17 = arith.subf %1, %16 : vector<8x32xf32>
    %18 = arith.mulf %17, %17 : vector<8x32xf32>
    %cst_20 = arith.constant dense<0.000000e+00> : vector<8xf32>
    %19 = vector.multi_reduction <add>, %18, %cst_20 [1] : vector<8x32xf32> to vector<8xf32>
    %20 = vector.shape_cast %19 : vector<8xf32> to vector<8x1xf32>
    %cst_21 = arith.constant 3.100000e+01 : f32
    %21 = vector.broadcast %cst_21 : f32 to vector<8x1xf32>
    %22 = arith.divf %20, %21 : vector<8x1xf32>
    %23 = math.sqrt %22 : vector<8x1xf32>
    %cst_22 = arith.constant 9.99999997E-7 : f32
    %24 = vector.broadcast %cst_22 : f32 to vector<8x1xf32>
    %25 = arith.addf %23, %24 : vector<8x1xf32>
    %26 = tpu.reciprocal %25 {approx = true} : vector<8x1xf32> -> vector<8x1xf32>
    %27 = vector.broadcast %9 : vector<1x32xf32> to vector<8x32xf32>
    %28 = arith.mulf %27, %17 : vector<8x32xf32>
    %29 = vector.broadcast %26 : vector<8x1xf32> to vector<8x32xf32>
    %30 = arith.mulf %28, %29 : vector<8x32xf32>
    %31 = vector.broadcast %11 : vector<1x32xf32> to vector<8x32xf32>
    %32 = arith.addf %30, %31 : vector<8x32xf32>
    %c0_23 = arith.constant 0 : index
    %c0_24 = arith.constant 0 : index
    %c0_25 = arith.constant 0 : index
    %33 = vector.load %arg7[%c0_23, %c0_24, %c0_25] : memref<2x32x96xf32, #tpu.memory_space<vmem>>, vector<1x32x96xf32>
    %34 = vector.shape_cast %33 : vector<1x32x96xf32> to vector<32x96xf32>
    %cst_26 = arith.constant dense<0.000000e+00> : vector<8x96xf32>
    %35 = tpu.matmul %32, %34, %cst_26 {dimension_numbers = #tpu.dot_dimension_numbers<[1], [0], [0], [1], [0, 0, 1, 1], [], []>} : vector<8x32xf32>, vector<32x96xf32>, vector<8x96xf32> -> vector<8x96xf32>
    %c0_27 = arith.constant 0 : index
    %c0_28 = arith.constant 0 : index
    %c0_29 = arith.constant 0 : index
    %36 = vector.load %arg8[%c0_27, %c0_28, %c0_29] : memref<2x1x96xf32, #tpu.memory_space<vmem>>, vector<1x1x96xf32>
    %37 = vector.shape_cast %36 : vector<1x1x96xf32> to vector<1x96xf32>
    %38 = vector.broadcast %37 : vector<1x96xf32> to vector<8x96xf32>
    %39 = arith.addf %35, %38 : vector<8x96xf32>
    %40 = vector.extract_strided_slice %39 {offsets = [0, 0], sizes = [8, 32], strides = [1, 1]} : vector<8x96xf32> to vector<8x32xf32>
    %41 = vector.extract_strided_slice %39 {offsets = [0, 32], sizes = [8, 32], strides = [1, 1]} : vector<8x96xf32> to vector<8x32xf32>
    %42 = vector.extract_strided_slice %39 {offsets = [0, 64], sizes = [8, 32], strides = [1, 1]} : vector<8x96xf32> to vector<8x32xf32>
    %c0_30 = arith.constant 0 : index
    %c0_31 = arith.constant 0 : index
    %c0_32 = arith.constant 0 : index
    %43 = vector.load %arg9[%c0_30, %c0_31, %c0_32] : memref<2x32x32xf32, #tpu.memory_space<vmem>>, vector<1x32x32xf32>
    %44 = vector.shape_cast %43 : vector<1x32x32xf32> to vector<32x32xf32>
    %c0_33 = arith.constant 0 : index
    %c0_34 = arith.constant 0 : index
    %c0_35 = arith.constant 0 : index
    %45 = vector.load %arg10[%c0_33, %c0_34, %c0_35] : memref<2x1x32xf32, #tpu.memory_space<vmem>>, vector<1x1x32xf32>
    %46 = vector.shape_cast %45 : vector<1x1x32xf32> to vector<1x32xf32>
    %cst_36 = arith.constant 0.000000e+00 : f32
    %47 = vector.broadcast %cst_36 : f32 to vector<8x32xf32>
    %48 = vector.extract_strided_slice %40 {offsets = [0, 0], sizes = [8, 8], strides = [1, 1]} : vector<8x32xf32> to vector<8x8xf32>
    %49 = vector.extract_strided_slice %41 {offsets = [0, 0], sizes = [8, 8], strides = [1, 1]} : vector<8x32xf32> to vector<8x8xf32>
    %50 = vector.extract_strided_slice %42 {offsets = [0, 0], sizes = [8, 8], strides = [1, 1]} : vector<8x32xf32> to vector<8x8xf32>
    %cst_37 = arith.constant dense<0.000000e+00> : vector<8x8xf32>
    %51 = tpu.matmul %48, %49, %cst_37 {dimension_numbers = #tpu.dot_dimension_numbers<[1], [1], [0], [0], [0, 0, 1, 0], [], []>} : vector<8x8xf32>, vector<8x8xf32>, vector<8x8xf32> -> vector<8x8xf32>
    %cst_38 = arith.constant 0.353553385 : f32
    %52 = vector.broadcast %cst_38 : f32 to vector<8x8xf32>
    %53 = arith.mulf %51, %52 : vector<8x8xf32>
    %54 = arith.addf %53, %5 : vector<8x8xf32>
    %cst_39 = arith.constant dense<0xFF800000> : vector<8xf32>
    %55 = vector.multi_reduction <maximumf>, %54, %cst_39 [1] : vector<8x8xf32> to vector<8xf32>
    %56 = vector.shape_cast %55 : vector<8xf32> to vector<8x1xf32>
    %57 = vector.broadcast %56 : vector<8x1xf32> to vector<8x8xf32>
    %58 = arith.subf %54, %57 : vector<8x8xf32>
    %59 = math.exp %58 : vector<8x8xf32>
    %cst_40 = arith.constant dense<0.000000e+00> : vector<8xf32>
    %60 = vector.multi_reduction <add>, %59, %cst_40 [1] : vector<8x8xf32> to vector<8xf32>
    %61 = vector.shape_cast %60 : vector<8xf32> to vector<8x1xf32>
    %62 = tpu.reciprocal %61 {approx = true} : vector<8x1xf32> -> vector<8x1xf32>
    %63 = vector.broadcast %62 : vector<8x1xf32> to vector<8x8xf32>
    %64 = arith.mulf %59, %63 : vector<8x8xf32>
    %cst_41 = arith.constant dense<0.000000e+00> : vector<8x8xf32>
    %65 = tpu.matmul %64, %50, %cst_41 {dimension_numbers = #tpu.dot_dimension_numbers<[1], [0], [0], [1], [0, 0, 1, 1], [], []>} : vector<8x8xf32>, vector<8x8xf32>, vector<8x8xf32> -> vector<8x8xf32>
    %66 = vector.extract_strided_slice %44 {offsets = [0, 0], sizes = [8, 32], strides = [1, 1]} : vector<32x32xf32> to vector<8x32xf32>
    %cst_42 = arith.constant dense<0.000000e+00> : vector<8x32xf32>
    %67 = tpu.matmul %65, %66, %cst_42 {dimension_numbers = #tpu.dot_dimension_numbers<[1], [0], [0], [1], [0, 0, 1, 1], [], []>} : vector<8x8xf32>, vector<8x32xf32>, vector<8x32xf32> -> vector<8x32xf32>
    %68 = arith.addf %47, %67 : vector<8x32xf32>
    %69 = vector.extract_strided_slice %40 {offsets = [0, 8], sizes = [8, 8], strides = [1, 1]} : vector<8x32xf32> to vector<8x8xf32>
    %70 = vector.extract_strided_slice %41 {offsets = [0, 8], sizes = [8, 8], strides = [1, 1]} : vector<8x32xf32> to vector<8x8xf32>
    %71 = vector.extract_strided_slice %42 {offsets = [0, 8], sizes = [8, 8], strides = [1, 1]} : vector<8x32xf32> to vector<8x8xf32>
    %cst_43 = arith.constant dense<0.000000e+00> : vector<8x8xf32>
    %72 = tpu.matmul %69, %70, %cst_43 {dimension_numbers = #tpu.dot_dimension_numbers<[1], [1], [0], [0], [0, 0, 1, 0], [], []>} : vector<8x8xf32>, vector<8x8xf32>, vector<8x8xf32> -> vector<8x8xf32>
    %cst_44 = arith.constant 0.353553385 : f32
    %73 = vector.broadcast %cst_44 : f32 to vector<8x8xf32>
    %74 = arith.mulf %72, %73 : vector<8x8xf32>
    %75 = arith.addf %74, %5 : vector<8x8xf32>
    %cst_45 = arith.constant dense<0xFF800000> : vector<8xf32>
    %76 = vector.multi_reduction <maximumf>, %75, %cst_45 [1] : vector<8x8xf32> to vector<8xf32>
    %77 = vector.shape_cast %76 : vector<8xf32> to vector<8x1xf32>
    %78 = vector.broadcast %77 : vector<8x1xf32> to vector<8x8xf32>
    %79 = arith.subf %75, %78 : vector<8x8xf32>
    %80 = math.exp %79 : vector<8x8xf32>
    %cst_46 = arith.constant dense<0.000000e+00> : vector<8xf32>
    %81 = vector.multi_reduction <add>, %80, %cst_46 [1] : vector<8x8xf32> to vector<8xf32>
    %82 = vector.shape_cast %81 : vector<8xf32> to vector<8x1xf32>
    %83 = tpu.reciprocal %82 {approx = true} : vector<8x1xf32> -> vector<8x1xf32>
    %84 = vector.broadcast %83 : vector<8x1xf32> to vector<8x8xf32>
    %85 = arith.mulf %80, %84 : vector<8x8xf32>
    %cst_47 = arith.constant dense<0.000000e+00> : vector<8x8xf32>
    %86 = tpu.matmul %85, %71, %cst_47 {dimension_numbers = #tpu.dot_dimension_numbers<[1], [0], [0], [1], [0, 0, 1, 1], [], []>} : vector<8x8xf32>, vector<8x8xf32>, vector<8x8xf32> -> vector<8x8xf32>
    %87 = vector.extract_strided_slice %44 {offsets = [8, 0], sizes = [8, 32], strides = [1, 1]} : vector<32x32xf32> to vector<8x32xf32>
    %cst_48 = arith.constant dense<0.000000e+00> : vector<8x32xf32>
    %88 = tpu.matmul %86, %87, %cst_48 {dimension_numbers = #tpu.dot_dimension_numbers<[1], [0], [0], [1], [0, 0, 1, 1], [], []>} : vector<8x8xf32>, vector<8x32xf32>, vector<8x32xf32> -> vector<8x32xf32>
    %89 = arith.addf %68, %88 : vector<8x32xf32>
    %90 = vector.extract_strided_slice %40 {offsets = [0, 16], sizes = [8, 8], strides = [1, 1]} : vector<8x32xf32> to vector<8x8xf32>
    %91 = vector.extract_strided_slice %41 {offsets = [0, 16], sizes = [8, 8], strides = [1, 1]} : vector<8x32xf32> to vector<8x8xf32>
    %92 = vector.extract_strided_slice %42 {offsets = [0, 16], sizes = [8, 8], strides = [1, 1]} : vector<8x32xf32> to vector<8x8xf32>
    %cst_49 = arith.constant dense<0.000000e+00> : vector<8x8xf32>
    %93 = tpu.matmul %90, %91, %cst_49 {dimension_numbers = #tpu.dot_dimension_numbers<[1], [1], [0], [0], [0, 0, 1, 0], [], []>} : vector<8x8xf32>, vector<8x8xf32>, vector<8x8xf32> -> vector<8x8xf32>
    %cst_50 = arith.constant 0.353553385 : f32
    %94 = vector.broadcast %cst_50 : f32 to vector<8x8xf32>
    %95 = arith.mulf %93, %94 : vector<8x8xf32>
    %96 = arith.addf %95, %5 : vector<8x8xf32>
    %cst_51 = arith.constant dense<0xFF800000> : vector<8xf32>
    %97 = vector.multi_reduction <maximumf>, %96, %cst_51 [1] : vector<8x8xf32> to vector<8xf32>
    %98 = vector.shape_cast %97 : vector<8xf32> to vector<8x1xf32>
    %99 = vector.broadcast %98 : vector<8x1xf32> to vector<8x8xf32>
    %100 = arith.subf %96, %99 : vector<8x8xf32>
    %101 = math.exp %100 : vector<8x8xf32>
    %cst_52 = arith.constant dense<0.000000e+00> : vector<8xf32>
    %102 = vector.multi_reduction <add>, %101, %cst_52 [1] : vector<8x8xf32> to vector<8xf32>
    %103 = vector.shape_cast %102 : vector<8xf32> to vector<8x1xf32>
    %104 = tpu.reciprocal %103 {approx = true} : vector<8x1xf32> -> vector<8x1xf32>
    %105 = vector.broadcast %104 : vector<8x1xf32> to vector<8x8xf32>
    %106 = arith.mulf %101, %105 : vector<8x8xf32>
    %cst_53 = arith.constant dense<0.000000e+00> : vector<8x8xf32>
    %107 = tpu.matmul %106, %92, %cst_53 {dimension_numbers = #tpu.dot_dimension_numbers<[1], [0], [0], [1], [0, 0, 1, 1], [], []>} : vector<8x8xf32>, vector<8x8xf32>, vector<8x8xf32> -> vector<8x8xf32>
    %108 = vector.extract_strided_slice %44 {offsets = [16, 0], sizes = [8, 32], strides = [1, 1]} : vector<32x32xf32> to vector<8x32xf32>
    %cst_54 = arith.constant dense<0.000000e+00> : vector<8x32xf32>
    %109 = tpu.matmul %107, %108, %cst_54 {dimension_numbers = #tpu.dot_dimension_numbers<[1], [0], [0], [1], [0, 0, 1, 1], [], []>} : vector<8x8xf32>, vector<8x32xf32>, vector<8x32xf32> -> vector<8x32xf32>
    %110 = arith.addf %89, %109 : vector<8x32xf32>
    %111 = vector.extract_strided_slice %40 {offsets = [0, 24], sizes = [8, 8], strides = [1, 1]} : vector<8x32xf32> to vector<8x8xf32>
    %112 = vector.extract_strided_slice %41 {offsets = [0, 24], sizes = [8, 8], strides = [1, 1]} : vector<8x32xf32> to vector<8x8xf32>
    %113 = vector.extract_strided_slice %42 {offsets = [0, 24], sizes = [8, 8], strides = [1, 1]} : vector<8x32xf32> to vector<8x8xf32>
    %cst_55 = arith.constant dense<0.000000e+00> : vector<8x8xf32>
    %114 = tpu.matmul %111, %112, %cst_55 {dimension_numbers = #tpu.dot_dimension_numbers<[1], [1], [0], [0], [0, 0, 1, 0], [], []>} : vector<8x8xf32>, vector<8x8xf32>, vector<8x8xf32> -> vector<8x8xf32>
    %cst_56 = arith.constant 0.353553385 : f32
    %115 = vector.broadcast %cst_56 : f32 to vector<8x8xf32>
    %116 = arith.mulf %114, %115 : vector<8x8xf32>
    %117 = arith.addf %116, %5 : vector<8x8xf32>
    %cst_57 = arith.constant dense<0xFF800000> : vector<8xf32>
    %118 = vector.multi_reduction <maximumf>, %117, %cst_57 [1] : vector<8x8xf32> to vector<8xf32>
    %119 = vector.shape_cast %118 : vector<8xf32> to vector<8x1xf32>
    %120 = vector.broadcast %119 : vector<8x1xf32> to vector<8x8xf32>
    %121 = arith.subf %117, %120 : vector<8x8xf32>
    %122 = math.exp %121 : vector<8x8xf32>
    %cst_58 = arith.constant dense<0.000000e+00> : vector<8xf32>
    %123 = vector.multi_reduction <add>, %122, %cst_58 [1] : vector<8x8xf32> to vector<8xf32>
    %124 = vector.shape_cast %123 : vector<8xf32> to vector<8x1xf32>
    %125 = tpu.reciprocal %124 {approx = true} : vector<8x1xf32> -> vector<8x1xf32>
    %126 = vector.broadcast %125 : vector<8x1xf32> to vector<8x8xf32>
    %127 = arith.mulf %122, %126 : vector<8x8xf32>
    %cst_59 = arith.constant dense<0.000000e+00> : vector<8x8xf32>
    %128 = tpu.matmul %127, %113, %cst_59 {dimension_numbers = #tpu.dot_dimension_numbers<[1], [0], [0], [1], [0, 0, 1, 1], [], []>} : vector<8x8xf32>, vector<8x8xf32>, vector<8x8xf32> -> vector<8x8xf32>
    %129 = vector.extract_strided_slice %44 {offsets = [24, 0], sizes = [8, 32], strides = [1, 1]} : vector<32x32xf32> to vector<8x32xf32>
    %cst_60 = arith.constant dense<0.000000e+00> : vector<8x32xf32>
    %130 = tpu.matmul %128, %129, %cst_60 {dimension_numbers = #tpu.dot_dimension_numbers<[1], [0], [0], [1], [0, 0, 1, 1], [], []>} : vector<8x8xf32>, vector<8x32xf32>, vector<8x32xf32> -> vector<8x32xf32>
    %131 = arith.addf %110, %130 : vector<8x32xf32>
    %132 = vector.broadcast %46 : vector<1x32xf32> to vector<8x32xf32>
    %133 = arith.addf %131, %132 : vector<8x32xf32>
    %134 = arith.addf %1, %133 : vector<8x32xf32>
    %c0_61 = arith.constant 0 : index
    %c1 = arith.constant 1 : index
    %c0_62 = arith.constant 0 : index
    %c0_63 = arith.constant 0 : index
    %135 = vector.load %arg5[%c0_61, %c1, %c0_62, %c0_63] : memref<2x3x1x32xf32, #tpu.memory_space<vmem>>, vector<1x1x1x32xf32>
    %136 = vector.shape_cast %135 : vector<1x1x1x32xf32> to vector<1x32xf32>
    %c0_64 = arith.constant 0 : index
    %c1_65 = arith.constant 1 : index
    %c0_66 = arith.constant 0 : index
    %c0_67 = arith.constant 0 : index
    %137 = vector.load %arg6[%c0_64, %c1_65, %c0_66, %c0_67] : memref<2x3x1x32xf32, #tpu.memory_space<vmem>>, vector<1x1x1x32xf32>
    %138 = vector.shape_cast %137 : vector<1x1x1x32xf32> to vector<1x32xf32>
    %cst_68 = arith.constant dense<0.000000e+00> : vector<8xf32>
    %139 = vector.multi_reduction <add>, %134, %cst_68 [1] : vector<8x32xf32> to vector<8xf32>
    %140 = vector.shape_cast %139 : vector<8xf32> to vector<8x1xf32>
    %cst_69 = arith.constant 3.200000e+01 : f32
    %141 = vector.broadcast %cst_69 : f32 to vector<8x1xf32>
    %142 = arith.divf %140, %141 : vector<8x1xf32>
    %143 = vector.broadcast %142 : vector<8x1xf32> to vector<8x32xf32>
    %144 = arith.subf %134, %143 : vector<8x32xf32>
    %145 = arith.mulf %144, %144 : vector<8x32xf32>
    %cst_70 = arith.constant dense<0.000000e+00> : vector<8xf32>
    %146 = vector.multi_reduction <add>, %145, %cst_70 [1] : vector<8x32xf32> to vector<8xf32>
    %147 = vector.shape_cast %146 : vector<8xf32> to vector<8x1xf32>
    %cst_71 = arith.constant 3.100000e+01 : f32
    %148 = vector.broadcast %cst_71 : f32 to vector<8x1xf32>
    %149 = arith.divf %147, %148 : vector<8x1xf32>
    %150 = math.sqrt %149 : vector<8x1xf32>
    %cst_72 = arith.constant 9.99999997E-7 : f32
    %151 = vector.broadcast %cst_72 : f32 to vector<8x1xf32>
    %152 = arith.addf %150, %151 : vector<8x1xf32>
    %153 = tpu.reciprocal %152 {approx = true} : vector<8x1xf32> -> vector<8x1xf32>
    %154 = vector.broadcast %136 : vector<1x32xf32> to vector<8x32xf32>
    %155 = arith.mulf %154, %144 : vector<8x32xf32>
    %156 = vector.broadcast %153 : vector<8x1xf32> to vector<8x32xf32>
    %157 = arith.mulf %155, %156 : vector<8x32xf32>
    %158 = vector.broadcast %138 : vector<1x32xf32> to vector<8x32xf32>
    %159 = arith.addf %157, %158 : vector<8x32xf32>
    %c0_73 = arith.constant 0 : index
    %c0_74 = arith.constant 0 : index
    %c0_75 = arith.constant 0 : index
    %160 = vector.load %arg11[%c0_73, %c0_74, %c0_75] : memref<2x32x32xf32, #tpu.memory_space<vmem>>, vector<1x32x32xf32>
    %161 = vector.shape_cast %160 : vector<1x32x32xf32> to vector<32x32xf32>
    %cst_76 = arith.constant dense<0.000000e+00> : vector<8x32xf32>
    %162 = tpu.matmul %159, %161, %cst_76 {dimension_numbers = #tpu.dot_dimension_numbers<[1], [0], [0], [1], [0, 0, 1, 1], [], []>} : vector<8x32xf32>, vector<32x32xf32>, vector<8x32xf32> -> vector<8x32xf32>
    %c0_77 = arith.constant 0 : index
    %c0_78 = arith.constant 0 : index
    %c0_79 = arith.constant 0 : index
    %163 = vector.load %arg12[%c0_77, %c0_78, %c0_79] : memref<2x1x32xf32, #tpu.memory_space<vmem>>, vector<1x1x32xf32>
    %164 = vector.shape_cast %163 : vector<1x1x32xf32> to vector<1x32xf32>
    %165 = vector.broadcast %164 : vector<1x32xf32> to vector<8x32xf32>
    %166 = arith.addf %162, %165 : vector<8x32xf32>
    %c0_80 = arith.constant 0 : index
    %c0_81 = arith.constant 0 : index
    %c0_82 = arith.constant 0 : index
    %167 = vector.load %arg13[%c0_80, %c0_81, %c0_82] : memref<2x32x64xf32, #tpu.memory_space<vmem>>, vector<1x32x64xf32>
    %168 = vector.shape_cast %167 : vector<1x32x64xf32> to vector<32x64xf32>
    %cst_83 = arith.constant dense<0.000000e+00> : vector<16x64xf32>
    %169 = tpu.matmul %3, %168, %cst_83 {dimension_numbers = #tpu.dot_dimension_numbers<[1], [0], [0], [1], [0, 0, 1, 1], [], []>} : vector<16x32xf32>, vector<32x64xf32>, vector<16x64xf32> -> vector<16x64xf32>
    %c0_84 = arith.constant 0 : index
    %c0_85 = arith.constant 0 : index
    %c0_86 = arith.constant 0 : index
    %170 = vector.load %arg14[%c0_84, %c0_85, %c0_86] : memref<2x1x64xf32, #tpu.memory_space<vmem>>, vector<1x1x64xf32>
    %171 = vector.shape_cast %170 : vector<1x1x64xf32> to vector<1x64xf32>
    %172 = vector.broadcast %171 : vector<1x64xf32> to vector<16x64xf32>
    %173 = arith.addf %169, %172 : vector<16x64xf32>
    %174 = vector.extract_strided_slice %173 {offsets = [0, 0], sizes = [16, 32], strides = [1, 1]} : vector<16x64xf32> to vector<16x32xf32>
    %175 = vector.extract_strided_slice %173 {offsets = [0, 32], sizes = [16, 32], strides = [1, 1]} : vector<16x64xf32> to vector<16x32xf32>
    %c0_87 = arith.constant 0 : index
    %c0_88 = arith.constant 0 : index
    %c0_89 = arith.constant 0 : index
    %176 = vector.load %arg15[%c0_87, %c0_88, %c0_89] : memref<2x32x32xf32, #tpu.memory_space<vmem>>, vector<1x32x32xf32>
    %177 = vector.shape_cast %176 : vector<1x32x32xf32> to vector<32x32xf32>
    %c0_90 = arith.constant 0 : index
    %c0_91 = arith.constant 0 : index
    %c0_92 = arith.constant 0 : index
    %178 = vector.load %arg16[%c0_90, %c0_91, %c0_92] : memref<2x1x32xf32, #tpu.memory_space<vmem>>, vector<1x1x32xf32>
    %179 = vector.shape_cast %178 : vector<1x1x32xf32> to vector<1x32xf32>
    %cst_93 = arith.constant 0.000000e+00 : f32
    %180 = vector.broadcast %cst_93 : f32 to vector<8x32xf32>
    %181 = vector.extract_strided_slice %166 {offsets = [0, 0], sizes = [8, 8], strides = [1, 1]} : vector<8x32xf32> to vector<8x8xf32>
    %182 = vector.extract_strided_slice %174 {offsets = [0, 0], sizes = [16, 8], strides = [1, 1]} : vector<16x32xf32> to vector<16x8xf32>
    %183 = vector.extract_strided_slice %175 {offsets = [0, 0], sizes = [16, 8], strides = [1, 1]} : vector<16x32xf32> to vector<16x8xf32>
    %cst_94 = arith.constant dense<0.000000e+00> : vector<8x16xf32>
    %184 = tpu.matmul %181, %182, %cst_94 {dimension_numbers = #tpu.dot_dimension_numbers<[1], [1], [0], [0], [0, 0, 1, 0], [], []>} : vector<8x8xf32>, vector<16x8xf32>, vector<8x16xf32> -> vector<8x16xf32>
    %cst_95 = arith.constant 0.353553385 : f32
    %185 = vector.broadcast %cst_95 : f32 to vector<8x16xf32>
    %186 = arith.mulf %184, %185 : vector<8x16xf32>
    %187 = arith.addf %186, %7 : vector<8x16xf32>
    %cst_96 = arith.constant dense<0xFF800000> : vector<8xf32>
    %188 = vector.multi_reduction <maximumf>, %187, %cst_96 [1] : vector<8x16xf32> to vector<8xf32>
    %189 = vector.shape_cast %188 : vector<8xf32> to vector<8x1xf32>
    %190 = vector.broadcast %189 : vector<8x1xf32> to vector<8x16xf32>
    %191 = arith.subf %187, %190 : vector<8x16xf32>
    %192 = math.exp %191 : vector<8x16xf32>
    %cst_97 = arith.constant dense<0.000000e+00> : vector<8xf32>
    %193 = vector.multi_reduction <add>, %192, %cst_97 [1] : vector<8x16xf32> to vector<8xf32>
    %194 = vector.shape_cast %193 : vector<8xf32> to vector<8x1xf32>
    %195 = tpu.reciprocal %194 {approx = true} : vector<8x1xf32> -> vector<8x1xf32>
    %196 = vector.broadcast %195 : vector<8x1xf32> to vector<8x16xf32>
    %197 = arith.mulf %192, %196 : vector<8x16xf32>
    %cst_98 = arith.constant dense<0.000000e+00> : vector<8x8xf32>
    %198 = tpu.matmul %197, %183, %cst_98 {dimension_numbers = #tpu.dot_dimension_numbers<[1], [0], [0], [1], [0, 0, 1, 1], [], []>} : vector<8x16xf32>, vector<16x8xf32>, vector<8x8xf32> -> vector<8x8xf32>
    %199 = vector.extract_strided_slice %177 {offsets = [0, 0], sizes = [8, 32], strides = [1, 1]} : vector<32x32xf32> to vector<8x32xf32>
    %cst_99 = arith.constant dense<0.000000e+00> : vector<8x32xf32>
    %200 = tpu.matmul %198, %199, %cst_99 {dimension_numbers = #tpu.dot_dimension_numbers<[1], [0], [0], [1], [0, 0, 1, 1], [], []>} : vector<8x8xf32>, vector<8x32xf32>, vector<8x32xf32> -> vector<8x32xf32>
    %201 = arith.addf %180, %200 : vector<8x32xf32>
    %202 = vector.extract_strided_slice %166 {offsets = [0, 8], sizes = [8, 8], strides = [1, 1]} : vector<8x32xf32> to vector<8x8xf32>
    %203 = vector.extract_strided_slice %174 {offsets = [0, 8], sizes = [16, 8], strides = [1, 1]} : vector<16x32xf32> to vector<16x8xf32>
    %204 = vector.extract_strided_slice %175 {offsets = [0, 8], sizes = [16, 8], strides = [1, 1]} : vector<16x32xf32> to vector<16x8xf32>
    %cst_100 = arith.constant dense<0.000000e+00> : vector<8x16xf32>
    %205 = tpu.matmul %202, %203, %cst_100 {dimension_numbers = #tpu.dot_dimension_numbers<[1], [1], [0], [0], [0, 0, 1, 0], [], []>} : vector<8x8xf32>, vector<16x8xf32>, vector<8x16xf32> -> vector<8x16xf32>
    %cst_101 = arith.constant 0.353553385 : f32
    %206 = vector.broadcast %cst_101 : f32 to vector<8x16xf32>
    %207 = arith.mulf %205, %206 : vector<8x16xf32>
    %208 = arith.addf %207, %7 : vector<8x16xf32>
    %cst_102 = arith.constant dense<0xFF800000> : vector<8xf32>
    %209 = vector.multi_reduction <maximumf>, %208, %cst_102 [1] : vector<8x16xf32> to vector<8xf32>
    %210 = vector.shape_cast %209 : vector<8xf32> to vector<8x1xf32>
    %211 = vector.broadcast %210 : vector<8x1xf32> to vector<8x16xf32>
    %212 = arith.subf %208, %211 : vector<8x16xf32>
    %213 = math.exp %212 : vector<8x16xf32>
    %cst_103 = arith.constant dense<0.000000e+00> : vector<8xf32>
    %214 = vector.multi_reduction <add>, %213, %cst_103 [1] : vector<8x16xf32> to vector<8xf32>
    %215 = vector.shape_cast %214 : vector<8xf32> to vector<8x1xf32>
    %216 = tpu.reciprocal %215 {approx = true} : vector<8x1xf32> -> vector<8x1xf32>
    %217 = vector.broadcast %216 : vector<8x1xf32> to vector<8x16xf32>
    %218 = arith.mulf %213, %217 : vector<8x16xf32>
    %cst_104 = arith.constant dense<0.000000e+00> : vector<8x8xf32>
    %219 = tpu.matmul %218, %204, %cst_104 {dimension_numbers = #tpu.dot_dimension_numbers<[1], [0], [0], [1], [0, 0, 1, 1], [], []>} : vector<8x16xf32>, vector<16x8xf32>, vector<8x8xf32> -> vector<8x8xf32>
    %220 = vector.extract_strided_slice %177 {offsets = [8, 0], sizes = [8, 32], strides = [1, 1]} : vector<32x32xf32> to vector<8x32xf32>
    %cst_105 = arith.constant dense<0.000000e+00> : vector<8x32xf32>
    %221 = tpu.matmul %219, %220, %cst_105 {dimension_numbers = #tpu.dot_dimension_numbers<[1], [0], [0], [1], [0, 0, 1, 1], [], []>} : vector<8x8xf32>, vector<8x32xf32>, vector<8x32xf32> -> vector<8x32xf32>
    %222 = arith.addf %201, %221 : vector<8x32xf32>
    %223 = vector.extract_strided_slice %166 {offsets = [0, 16], sizes = [8, 8], strides = [1, 1]} : vector<8x32xf32> to vector<8x8xf32>
    %224 = vector.extract_strided_slice %174 {offsets = [0, 16], sizes = [16, 8], strides = [1, 1]} : vector<16x32xf32> to vector<16x8xf32>
    %225 = vector.extract_strided_slice %175 {offsets = [0, 16], sizes = [16, 8], strides = [1, 1]} : vector<16x32xf32> to vector<16x8xf32>
    %cst_106 = arith.constant dense<0.000000e+00> : vector<8x16xf32>
    %226 = tpu.matmul %223, %224, %cst_106 {dimension_numbers = #tpu.dot_dimension_numbers<[1], [1], [0], [0], [0, 0, 1, 0], [], []>} : vector<8x8xf32>, vector<16x8xf32>, vector<8x16xf32> -> vector<8x16xf32>
    %cst_107 = arith.constant 0.353553385 : f32
    %227 = vector.broadcast %cst_107 : f32 to vector<8x16xf32>
    %228 = arith.mulf %226, %227 : vector<8x16xf32>
    %229 = arith.addf %228, %7 : vector<8x16xf32>
    %cst_108 = arith.constant dense<0xFF800000> : vector<8xf32>
    %230 = vector.multi_reduction <maximumf>, %229, %cst_108 [1] : vector<8x16xf32> to vector<8xf32>
    %231 = vector.shape_cast %230 : vector<8xf32> to vector<8x1xf32>
    %232 = vector.broadcast %231 : vector<8x1xf32> to vector<8x16xf32>
    %233 = arith.subf %229, %232 : vector<8x16xf32>
    %234 = math.exp %233 : vector<8x16xf32>
    %cst_109 = arith.constant dense<0.000000e+00> : vector<8xf32>
    %235 = vector.multi_reduction <add>, %234, %cst_109 [1] : vector<8x16xf32> to vector<8xf32>
    %236 = vector.shape_cast %235 : vector<8xf32> to vector<8x1xf32>
    %237 = tpu.reciprocal %236 {approx = true} : vector<8x1xf32> -> vector<8x1xf32>
    %238 = vector.broadcast %237 : vector<8x1xf32> to vector<8x16xf32>
    %239 = arith.mulf %234, %238 : vector<8x16xf32>
    %cst_110 = arith.constant dense<0.000000e+00> : vector<8x8xf32>
    %240 = tpu.matmul %239, %225, %cst_110 {dimension_numbers = #tpu.dot_dimension_numbers<[1], [0], [0], [1], [0, 0, 1, 1], [], []>} : vector<8x16xf32>, vector<16x8xf32>, vector<8x8xf32> -> vector<8x8xf32>
    %241 = vector.extract_strided_slice %177 {offsets = [16, 0], sizes = [8, 32], strides = [1, 1]} : vector<32x32xf32> to vector<8x32xf32>
    %cst_111 = arith.constant dense<0.000000e+00> : vector<8x32xf32>
    %242 = tpu.matmul %240, %241, %cst_111 {dimension_numbers = #tpu.dot_dimension_numbers<[1], [0], [0], [1], [0, 0, 1, 1], [], []>} : vector<8x8xf32>, vector<8x32xf32>, vector<8x32xf32> -> vector<8x32xf32>
    %243 = arith.addf %222, %242 : vector<8x32xf32>
    %244 = vector.extract_strided_slice %166 {offsets = [0, 24], sizes = [8, 8], strides = [1, 1]} : vector<8x32xf32> to vector<8x8xf32>
    %245 = vector.extract_strided_slice %174 {offsets = [0, 24], sizes = [16, 8], strides = [1, 1]} : vector<16x32xf32> to vector<16x8xf32>
    %246 = vector.extract_strided_slice %175 {offsets = [0, 24], sizes = [16, 8], strides = [1, 1]} : vector<16x32xf32> to vector<16x8xf32>
    %cst_112 = arith.constant dense<0.000000e+00> : vector<8x16xf32>
    %247 = tpu.matmul %244, %245, %cst_112 {dimension_numbers = #tpu.dot_dimension_numbers<[1], [1], [0], [0], [0, 0, 1, 0], [], []>} : vector<8x8xf32>, vector<16x8xf32>, vector<8x16xf32> -> vector<8x16xf32>
    %cst_113 = arith.constant 0.353553385 : f32
    %248 = vector.broadcast %cst_113 : f32 to vector<8x16xf32>
    %249 = arith.mulf %247, %248 : vector<8x16xf32>
    %250 = arith.addf %249, %7 : vector<8x16xf32>
    %cst_114 = arith.constant dense<0xFF800000> : vector<8xf32>
    %251 = vector.multi_reduction <maximumf>, %250, %cst_114 [1] : vector<8x16xf32> to vector<8xf32>
    %252 = vector.shape_cast %251 : vector<8xf32> to vector<8x1xf32>
    %253 = vector.broadcast %252 : vector<8x1xf32> to vector<8x16xf32>
    %254 = arith.subf %250, %253 : vector<8x16xf32>
    %255 = math.exp %254 : vector<8x16xf32>
    %cst_115 = arith.constant dense<0.000000e+00> : vector<8xf32>
    %256 = vector.multi_reduction <add>, %255, %cst_115 [1] : vector<8x16xf32> to vector<8xf32>
    %257 = vector.shape_cast %256 : vector<8xf32> to vector<8x1xf32>
    %258 = tpu.reciprocal %257 {approx = true} : vector<8x1xf32> -> vector<8x1xf32>
    %259 = vector.broadcast %258 : vector<8x1xf32> to vector<8x16xf32>
    %260 = arith.mulf %255, %259 : vector<8x16xf32>
    %cst_116 = arith.constant dense<0.000000e+00> : vector<8x8xf32>
    %261 = tpu.matmul %260, %246, %cst_116 {dimension_numbers = #tpu.dot_dimension_numbers<[1], [0], [0], [1], [0, 0, 1, 1], [], []>} : vector<8x16xf32>, vector<16x8xf32>, vector<8x8xf32> -> vector<8x8xf32>
    %262 = vector.extract_strided_slice %177 {offsets = [24, 0], sizes = [8, 32], strides = [1, 1]} : vector<32x32xf32> to vector<8x32xf32>
    %cst_117 = arith.constant dense<0.000000e+00> : vector<8x32xf32>
    %263 = tpu.matmul %261, %262, %cst_117 {dimension_numbers = #tpu.dot_dimension_numbers<[1], [0], [0], [1], [0, 0, 1, 1], [], []>} : vector<8x8xf32>, vector<8x32xf32>, vector<8x32xf32> -> vector<8x32xf32>
    %264 = arith.addf %243, %263 : vector<8x32xf32>
    %265 = vector.broadcast %179 : vector<1x32xf32> to vector<8x32xf32>
    %266 = arith.addf %264, %265 : vector<8x32xf32>
    %267 = arith.addf %134, %266 : vector<8x32xf32>
    %c0_118 = arith.constant 0 : index
    %c2 = arith.constant 2 : index
    %c0_119 = arith.constant 0 : index
    %c0_120 = arith.constant 0 : index
    %268 = vector.load %arg5[%c0_118, %c2, %c0_119, %c0_120] : memref<2x3x1x32xf32, #tpu.memory_space<vmem>>, vector<1x1x1x32xf32>
    %269 = vector.shape_cast %268 : vector<1x1x1x32xf32> to vector<1x32xf32>
    %c0_121 = arith.constant 0 : index
    %c2_122 = arith.constant 2 : index
    %c0_123 = arith.constant 0 : index
    %c0_124 = arith.constant 0 : index
    %270 = vector.load %arg6[%c0_121, %c2_122, %c0_123, %c0_124] : memref<2x3x1x32xf32, #tpu.memory_space<vmem>>, vector<1x1x1x32xf32>
    %271 = vector.shape_cast %270 : vector<1x1x1x32xf32> to vector<1x32xf32>
    %cst_125 = arith.constant dense<0.000000e+00> : vector<8xf32>
    %272 = vector.multi_reduction <add>, %267, %cst_125 [1] : vector<8x32xf32> to vector<8xf32>
    %273 = vector.shape_cast %272 : vector<8xf32> to vector<8x1xf32>
    %cst_126 = arith.constant 3.200000e+01 : f32
    %274 = vector.broadcast %cst_126 : f32 to vector<8x1xf32>
    %275 = arith.divf %273, %274 : vector<8x1xf32>
    %276 = vector.broadcast %275 : vector<8x1xf32> to vector<8x32xf32>
    %277 = arith.subf %267, %276 : vector<8x32xf32>
    %278 = arith.mulf %277, %277 : vector<8x32xf32>
    %cst_127 = arith.constant dense<0.000000e+00> : vector<8xf32>
    %279 = vector.multi_reduction <add>, %278, %cst_127 [1] : vector<8x32xf32> to vector<8xf32>
    %280 = vector.shape_cast %279 : vector<8xf32> to vector<8x1xf32>
    %cst_128 = arith.constant 3.100000e+01 : f32
    %281 = vector.broadcast %cst_128 : f32 to vector<8x1xf32>
    %282 = arith.divf %280, %281 : vector<8x1xf32>
    %283 = math.sqrt %282 : vector<8x1xf32>
    %cst_129 = arith.constant 9.99999997E-7 : f32
    %284 = vector.broadcast %cst_129 : f32 to vector<8x1xf32>
    %285 = arith.addf %283, %284 : vector<8x1xf32>
    %286 = tpu.reciprocal %285 {approx = true} : vector<8x1xf32> -> vector<8x1xf32>
    %287 = vector.broadcast %269 : vector<1x32xf32> to vector<8x32xf32>
    %288 = arith.mulf %287, %277 : vector<8x32xf32>
    %289 = vector.broadcast %286 : vector<8x1xf32> to vector<8x32xf32>
    %290 = arith.mulf %288, %289 : vector<8x32xf32>
    %291 = vector.broadcast %271 : vector<1x32xf32> to vector<8x32xf32>
    %292 = arith.addf %290, %291 : vector<8x32xf32>
    %c0_130 = arith.constant 0 : index
    %c0_131 = arith.constant 0 : index
    %c0_132 = arith.constant 0 : index
    %293 = vector.load %arg17[%c0_130, %c0_131, %c0_132] : memref<2x32x64xf32, #tpu.memory_space<vmem>>, vector<1x32x64xf32>
    %294 = vector.shape_cast %293 : vector<1x32x64xf32> to vector<32x64xf32>
    %cst_133 = arith.constant dense<0.000000e+00> : vector<8x64xf32>
    %295 = tpu.matmul %292, %294, %cst_133 {dimension_numbers = #tpu.dot_dimension_numbers<[1], [0], [0], [1], [0, 0, 1, 1], [], []>} : vector<8x32xf32>, vector<32x64xf32>, vector<8x64xf32> -> vector<8x64xf32>
    %c0_134 = arith.constant 0 : index
    %c0_135 = arith.constant 0 : index
    %c0_136 = arith.constant 0 : index
    %296 = vector.load %arg18[%c0_134, %c0_135, %c0_136] : memref<2x1x64xf32, #tpu.memory_space<vmem>>, vector<1x1x64xf32>
    %297 = vector.shape_cast %296 : vector<1x1x64xf32> to vector<1x64xf32>
    %298 = vector.broadcast %297 : vector<1x64xf32> to vector<8x64xf32>
    %299 = arith.addf %295, %298 : vector<8x64xf32>
    %cst_137 = arith.constant 0.000000e+00 : f32
    %300 = vector.broadcast %cst_137 : f32 to vector<8x64xf32>
    %301 = arith.maximumf %299, %300 : vector<8x64xf32>
    %c0_138 = arith.constant 0 : index
    %c0_139 = arith.constant 0 : index
    %c0_140 = arith.constant 0 : index
    %302 = vector.load %arg19[%c0_138, %c0_139, %c0_140] : memref<2x64x32xf32, #tpu.memory_space<vmem>>, vector<1x64x32xf32>
    %303 = vector.shape_cast %302 : vector<1x64x32xf32> to vector<64x32xf32>
    %cst_141 = arith.constant dense<0.000000e+00> : vector<8x32xf32>
    %304 = tpu.matmul %301, %303, %cst_141 {dimension_numbers = #tpu.dot_dimension_numbers<[1], [0], [0], [1], [0, 0, 1, 1], [], []>} : vector<8x64xf32>, vector<64x32xf32>, vector<8x32xf32> -> vector<8x32xf32>
    %305 = arith.addf %267, %304 : vector<8x32xf32>
    %c0_142 = arith.constant 0 : index
    %c0_143 = arith.constant 0 : index
    %c0_144 = arith.constant 0 : index
    %306 = vector.load %arg20[%c0_142, %c0_143, %c0_144] : memref<2x1x32xf32, #tpu.memory_space<vmem>>, vector<1x1x32xf32>
    %307 = vector.shape_cast %306 : vector<1x1x32xf32> to vector<1x32xf32>
    %308 = vector.broadcast %307 : vector<1x32xf32> to vector<8x32xf32>
    %309 = arith.addf %305, %308 : vector<8x32xf32>
    %c1_145 = arith.constant 1 : index
    %c0_146 = arith.constant 0 : index
    %c0_147 = arith.constant 0 : index
    %c0_148 = arith.constant 0 : index
    %310 = vector.load %arg5[%c1_145, %c0_146, %c0_147, %c0_148] : memref<2x3x1x32xf32, #tpu.memory_space<vmem>>, vector<1x1x1x32xf32>
    %311 = vector.shape_cast %310 : vector<1x1x1x32xf32> to vector<1x32xf32>
    %c1_149 = arith.constant 1 : index
    %c0_150 = arith.constant 0 : index
    %c0_151 = arith.constant 0 : index
    %c0_152 = arith.constant 0 : index
    %312 = vector.load %arg6[%c1_149, %c0_150, %c0_151, %c0_152] : memref<2x3x1x32xf32, #tpu.memory_space<vmem>>, vector<1x1x1x32xf32>
    %313 = vector.shape_cast %312 : vector<1x1x1x32xf32> to vector<1x32xf32>
    %cst_153 = arith.constant dense<0.000000e+00> : vector<8xf32>
    %314 = vector.multi_reduction <add>, %309, %cst_153 [1] : vector<8x32xf32> to vector<8xf32>
    %315 = vector.shape_cast %314 : vector<8xf32> to vector<8x1xf32>
    %cst_154 = arith.constant 3.200000e+01 : f32
    %316 = vector.broadcast %cst_154 : f32 to vector<8x1xf32>
    %317 = arith.divf %315, %316 : vector<8x1xf32>
    %318 = vector.broadcast %317 : vector<8x1xf32> to vector<8x32xf32>
    %319 = arith.subf %309, %318 : vector<8x32xf32>
    %320 = arith.mulf %319, %319 : vector<8x32xf32>
    %cst_155 = arith.constant dense<0.000000e+00> : vector<8xf32>
    %321 = vector.multi_reduction <add>, %320, %cst_155 [1] : vector<8x32xf32> to vector<8xf32>
    %322 = vector.shape_cast %321 : vector<8xf32> to vector<8x1xf32>
    %cst_156 = arith.constant 3.100000e+01 : f32
    %323 = vector.broadcast %cst_156 : f32 to vector<8x1xf32>
    %324 = arith.divf %322, %323 : vector<8x1xf32>
    %325 = math.sqrt %324 : vector<8x1xf32>
    %cst_157 = arith.constant 9.99999997E-7 : f32
    %326 = vector.broadcast %cst_157 : f32 to vector<8x1xf32>
    %327 = arith.addf %325, %326 : vector<8x1xf32>
    %328 = tpu.reciprocal %327 {approx = true} : vector<8x1xf32> -> vector<8x1xf32>
    %329 = vector.broadcast %311 : vector<1x32xf32> to vector<8x32xf32>
    %330 = arith.mulf %329, %319 : vector<8x32xf32>
    %331 = vector.broadcast %328 : vector<8x1xf32> to vector<8x32xf32>
    %332 = arith.mulf %330, %331 : vector<8x32xf32>
    %333 = vector.broadcast %313 : vector<1x32xf32> to vector<8x32xf32>
    %334 = arith.addf %332, %333 : vector<8x32xf32>
    %c1_158 = arith.constant 1 : index
    %c0_159 = arith.constant 0 : index
    %c0_160 = arith.constant 0 : index
    %335 = vector.load %arg7[%c1_158, %c0_159, %c0_160] : memref<2x32x96xf32, #tpu.memory_space<vmem>>, vector<1x32x96xf32>
    %336 = vector.shape_cast %335 : vector<1x32x96xf32> to vector<32x96xf32>
    %cst_161 = arith.constant dense<0.000000e+00> : vector<8x96xf32>
    %337 = tpu.matmul %334, %336, %cst_161 {dimension_numbers = #tpu.dot_dimension_numbers<[1], [0], [0], [1], [0, 0, 1, 1], [], []>} : vector<8x32xf32>, vector<32x96xf32>, vector<8x96xf32> -> vector<8x96xf32>
    %c1_162 = arith.constant 1 : index
    %c0_163 = arith.constant 0 : index
    %c0_164 = arith.constant 0 : index
    %338 = vector.load %arg8[%c1_162, %c0_163, %c0_164] : memref<2x1x96xf32, #tpu.memory_space<vmem>>, vector<1x1x96xf32>
    %339 = vector.shape_cast %338 : vector<1x1x96xf32> to vector<1x96xf32>
    %340 = vector.broadcast %339 : vector<1x96xf32> to vector<8x96xf32>
    %341 = arith.addf %337, %340 : vector<8x96xf32>
    %342 = vector.extract_strided_slice %341 {offsets = [0, 0], sizes = [8, 32], strides = [1, 1]} : vector<8x96xf32> to vector<8x32xf32>
    %343 = vector.extract_strided_slice %341 {offsets = [0, 32], sizes = [8, 32], strides = [1, 1]} : vector<8x96xf32> to vector<8x32xf32>
    %344 = vector.extract_strided_slice %341 {offsets = [0, 64], sizes = [8, 32], strides = [1, 1]} : vector<8x96xf32> to vector<8x32xf32>
    %c1_165 = arith.constant 1 : index
    %c0_166 = arith.constant 0 : index
    %c0_167 = arith.constant 0 : index
    %345 = vector.load %arg9[%c1_165, %c0_166, %c0_167] : memref<2x32x32xf32, #tpu.memory_space<vmem>>, vector<1x32x32xf32>
    %346 = vector.shape_cast %345 : vector<1x32x32xf32> to vector<32x32xf32>
    %c1_168 = arith.constant 1 : index
    %c0_169 = arith.constant 0 : index
    %c0_170 = arith.constant 0 : index
    %347 = vector.load %arg10[%c1_168, %c0_169, %c0_170] : memref<2x1x32xf32, #tpu.memory_space<vmem>>, vector<1x1x32xf32>
    %348 = vector.shape_cast %347 : vector<1x1x32xf32> to vector<1x32xf32>
    %cst_171 = arith.constant 0.000000e+00 : f32
    %349 = vector.broadcast %cst_171 : f32 to vector<8x32xf32>
    %350 = vector.extract_strided_slice %342 {offsets = [0, 0], sizes = [8, 8], strides = [1, 1]} : vector<8x32xf32> to vector<8x8xf32>
    %351 = vector.extract_strided_slice %343 {offsets = [0, 0], sizes = [8, 8], strides = [1, 1]} : vector<8x32xf32> to vector<8x8xf32>
    %352 = vector.extract_strided_slice %344 {offsets = [0, 0], sizes = [8, 8], strides = [1, 1]} : vector<8x32xf32> to vector<8x8xf32>
    %cst_172 = arith.constant dense<0.000000e+00> : vector<8x8xf32>
    %353 = tpu.matmul %350, %351, %cst_172 {dimension_numbers = #tpu.dot_dimension_numbers<[1], [1], [0], [0], [0, 0, 1, 0], [], []>} : vector<8x8xf32>, vector<8x8xf32>, vector<8x8xf32> -> vector<8x8xf32>
    %cst_173 = arith.constant 0.353553385 : f32
    %354 = vector.broadcast %cst_173 : f32 to vector<8x8xf32>
    %355 = arith.mulf %353, %354 : vector<8x8xf32>
    %356 = arith.addf %355, %5 : vector<8x8xf32>
    %cst_174 = arith.constant dense<0xFF800000> : vector<8xf32>
    %357 = vector.multi_reduction <maximumf>, %356, %cst_174 [1] : vector<8x8xf32> to vector<8xf32>
    %358 = vector.shape_cast %357 : vector<8xf32> to vector<8x1xf32>
    %359 = vector.broadcast %358 : vector<8x1xf32> to vector<8x8xf32>
    %360 = arith.subf %356, %359 : vector<8x8xf32>
    %361 = math.exp %360 : vector<8x8xf32>
    %cst_175 = arith.constant dense<0.000000e+00> : vector<8xf32>
    %362 = vector.multi_reduction <add>, %361, %cst_175 [1] : vector<8x8xf32> to vector<8xf32>
    %363 = vector.shape_cast %362 : vector<8xf32> to vector<8x1xf32>
    %364 = tpu.reciprocal %363 {approx = true} : vector<8x1xf32> -> vector<8x1xf32>
    %365 = vector.broadcast %364 : vector<8x1xf32> to vector<8x8xf32>
    %366 = arith.mulf %361, %365 : vector<8x8xf32>
    %cst_176 = arith.constant dense<0.000000e+00> : vector<8x8xf32>
    %367 = tpu.matmul %366, %352, %cst_176 {dimension_numbers = #tpu.dot_dimension_numbers<[1], [0], [0], [1], [0, 0, 1, 1], [], []>} : vector<8x8xf32>, vector<8x8xf32>, vector<8x8xf32> -> vector<8x8xf32>
    %368 = vector.extract_strided_slice %346 {offsets = [0, 0], sizes = [8, 32], strides = [1, 1]} : vector<32x32xf32> to vector<8x32xf32>
    %cst_177 = arith.constant dense<0.000000e+00> : vector<8x32xf32>
    %369 = tpu.matmul %367, %368, %cst_177 {dimension_numbers = #tpu.dot_dimension_numbers<[1], [0], [0], [1], [0, 0, 1, 1], [], []>} : vector<8x8xf32>, vector<8x32xf32>, vector<8x32xf32> -> vector<8x32xf32>
    %370 = arith.addf %349, %369 : vector<8x32xf32>
    %371 = vector.extract_strided_slice %342 {offsets = [0, 8], sizes = [8, 8], strides = [1, 1]} : vector<8x32xf32> to vector<8x8xf32>
    %372 = vector.extract_strided_slice %343 {offsets = [0, 8], sizes = [8, 8], strides = [1, 1]} : vector<8x32xf32> to vector<8x8xf32>
    %373 = vector.extract_strided_slice %344 {offsets = [0, 8], sizes = [8, 8], strides = [1, 1]} : vector<8x32xf32> to vector<8x8xf32>
    %cst_178 = arith.constant dense<0.000000e+00> : vector<8x8xf32>
    %374 = tpu.matmul %371, %372, %cst_178 {dimension_numbers = #tpu.dot_dimension_numbers<[1], [1], [0], [0], [0, 0, 1, 0], [], []>} : vector<8x8xf32>, vector<8x8xf32>, vector<8x8xf32> -> vector<8x8xf32>
    %cst_179 = arith.constant 0.353553385 : f32
    %375 = vector.broadcast %cst_179 : f32 to vector<8x8xf32>
    %376 = arith.mulf %374, %375 : vector<8x8xf32>
    %377 = arith.addf %376, %5 : vector<8x8xf32>
    %cst_180 = arith.constant dense<0xFF800000> : vector<8xf32>
    %378 = vector.multi_reduction <maximumf>, %377, %cst_180 [1] : vector<8x8xf32> to vector<8xf32>
    %379 = vector.shape_cast %378 : vector<8xf32> to vector<8x1xf32>
    %380 = vector.broadcast %379 : vector<8x1xf32> to vector<8x8xf32>
    %381 = arith.subf %377, %380 : vector<8x8xf32>
    %382 = math.exp %381 : vector<8x8xf32>
    %cst_181 = arith.constant dense<0.000000e+00> : vector<8xf32>
    %383 = vector.multi_reduction <add>, %382, %cst_181 [1] : vector<8x8xf32> to vector<8xf32>
    %384 = vector.shape_cast %383 : vector<8xf32> to vector<8x1xf32>
    %385 = tpu.reciprocal %384 {approx = true} : vector<8x1xf32> -> vector<8x1xf32>
    %386 = vector.broadcast %385 : vector<8x1xf32> to vector<8x8xf32>
    %387 = arith.mulf %382, %386 : vector<8x8xf32>
    %cst_182 = arith.constant dense<0.000000e+00> : vector<8x8xf32>
    %388 = tpu.matmul %387, %373, %cst_182 {dimension_numbers = #tpu.dot_dimension_numbers<[1], [0], [0], [1], [0, 0, 1, 1], [], []>} : vector<8x8xf32>, vector<8x8xf32>, vector<8x8xf32> -> vector<8x8xf32>
    %389 = vector.extract_strided_slice %346 {offsets = [8, 0], sizes = [8, 32], strides = [1, 1]} : vector<32x32xf32> to vector<8x32xf32>
    %cst_183 = arith.constant dense<0.000000e+00> : vector<8x32xf32>
    %390 = tpu.matmul %388, %389, %cst_183 {dimension_numbers = #tpu.dot_dimension_numbers<[1], [0], [0], [1], [0, 0, 1, 1], [], []>} : vector<8x8xf32>, vector<8x32xf32>, vector<8x32xf32> -> vector<8x32xf32>
    %391 = arith.addf %370, %390 : vector<8x32xf32>
    %392 = vector.extract_strided_slice %342 {offsets = [0, 16], sizes = [8, 8], strides = [1, 1]} : vector<8x32xf32> to vector<8x8xf32>
    %393 = vector.extract_strided_slice %343 {offsets = [0, 16], sizes = [8, 8], strides = [1, 1]} : vector<8x32xf32> to vector<8x8xf32>
    %394 = vector.extract_strided_slice %344 {offsets = [0, 16], sizes = [8, 8], strides = [1, 1]} : vector<8x32xf32> to vector<8x8xf32>
    %cst_184 = arith.constant dense<0.000000e+00> : vector<8x8xf32>
    %395 = tpu.matmul %392, %393, %cst_184 {dimension_numbers = #tpu.dot_dimension_numbers<[1], [1], [0], [0], [0, 0, 1, 0], [], []>} : vector<8x8xf32>, vector<8x8xf32>, vector<8x8xf32> -> vector<8x8xf32>
    %cst_185 = arith.constant 0.353553385 : f32
    %396 = vector.broadcast %cst_185 : f32 to vector<8x8xf32>
    %397 = arith.mulf %395, %396 : vector<8x8xf32>
    %398 = arith.addf %397, %5 : vector<8x8xf32>
    %cst_186 = arith.constant dense<0xFF800000> : vector<8xf32>
    %399 = vector.multi_reduction <maximumf>, %398, %cst_186 [1] : vector<8x8xf32> to vector<8xf32>
    %400 = vector.shape_cast %399 : vector<8xf32> to vector<8x1xf32>
    %401 = vector.broadcast %400 : vector<8x1xf32> to vector<8x8xf32>
    %402 = arith.subf %398, %401 : vector<8x8xf32>
    %403 = math.exp %402 : vector<8x8xf32>
    %cst_187 = arith.constant dense<0.000000e+00> : vector<8xf32>
    %404 = vector.multi_reduction <add>, %403, %cst_187 [1] : vector<8x8xf32> to vector<8xf32>
    %405 = vector.shape_cast %404 : vector<8xf32> to vector<8x1xf32>
    %406 = tpu.reciprocal %405 {approx = true} : vector<8x1xf32> -> vector<8x1xf32>
    %407 = vector.broadcast %406 : vector<8x1xf32> to vector<8x8xf32>
    %408 = arith.mulf %403, %407 : vector<8x8xf32>
    %cst_188 = arith.constant dense<0.000000e+00> : vector<8x8xf32>
    %409 = tpu.matmul %408, %394, %cst_188 {dimension_numbers = #tpu.dot_dimension_numbers<[1], [0], [0], [1], [0, 0, 1, 1], [], []>} : vector<8x8xf32>, vector<8x8xf32>, vector<8x8xf32> -> vector<8x8xf32>
    %410 = vector.extract_strided_slice %346 {offsets = [16, 0], sizes = [8, 32], strides = [1, 1]} : vector<32x32xf32> to vector<8x32xf32>
    %cst_189 = arith.constant dense<0.000000e+00> : vector<8x32xf32>
    %411 = tpu.matmul %409, %410, %cst_189 {dimension_numbers = #tpu.dot_dimension_numbers<[1], [0], [0], [1], [0, 0, 1, 1], [], []>} : vector<8x8xf32>, vector<8x32xf32>, vector<8x32xf32> -> vector<8x32xf32>
    %412 = arith.addf %391, %411 : vector<8x32xf32>
    %413 = vector.extract_strided_slice %342 {offsets = [0, 24], sizes = [8, 8], strides = [1, 1]} : vector<8x32xf32> to vector<8x8xf32>
    %414 = vector.extract_strided_slice %343 {offsets = [0, 24], sizes = [8, 8], strides = [1, 1]} : vector<8x32xf32> to vector<8x8xf32>
    %415 = vector.extract_strided_slice %344 {offsets = [0, 24], sizes = [8, 8], strides = [1, 1]} : vector<8x32xf32> to vector<8x8xf32>
    %cst_190 = arith.constant dense<0.000000e+00> : vector<8x8xf32>
    %416 = tpu.matmul %413, %414, %cst_190 {dimension_numbers = #tpu.dot_dimension_numbers<[1], [1], [0], [0], [0, 0, 1, 0], [], []>} : vector<8x8xf32>, vector<8x8xf32>, vector<8x8xf32> -> vector<8x8xf32>
    %cst_191 = arith.constant 0.353553385 : f32
    %417 = vector.broadcast %cst_191 : f32 to vector<8x8xf32>
    %418 = arith.mulf %416, %417 : vector<8x8xf32>
    %419 = arith.addf %418, %5 : vector<8x8xf32>
    %cst_192 = arith.constant dense<0xFF800000> : vector<8xf32>
    %420 = vector.multi_reduction <maximumf>, %419, %cst_192 [1] : vector<8x8xf32> to vector<8xf32>
    %421 = vector.shape_cast %420 : vector<8xf32> to vector<8x1xf32>
    %422 = vector.broadcast %421 : vector<8x1xf32> to vector<8x8xf32>
    %423 = arith.subf %419, %422 : vector<8x8xf32>
    %424 = math.exp %423 : vector<8x8xf32>
    %cst_193 = arith.constant dense<0.000000e+00> : vector<8xf32>
    %425 = vector.multi_reduction <add>, %424, %cst_193 [1] : vector<8x8xf32> to vector<8xf32>
    %426 = vector.shape_cast %425 : vector<8xf32> to vector<8x1xf32>
    %427 = tpu.reciprocal %426 {approx = true} : vector<8x1xf32> -> vector<8x1xf32>
    %428 = vector.broadcast %427 : vector<8x1xf32> to vector<8x8xf32>
    %429 = arith.mulf %424, %428 : vector<8x8xf32>
    %cst_194 = arith.constant dense<0.000000e+00> : vector<8x8xf32>
    %430 = tpu.matmul %429, %415, %cst_194 {dimension_numbers = #tpu.dot_dimension_numbers<[1], [0], [0], [1], [0, 0, 1, 1], [], []>} : vector<8x8xf32>, vector<8x8xf32>, vector<8x8xf32> -> vector<8x8xf32>
    %431 = vector.extract_strided_slice %346 {offsets = [24, 0], sizes = [8, 32], strides = [1, 1]} : vector<32x32xf32> to vector<8x32xf32>
    %cst_195 = arith.constant dense<0.000000e+00> : vector<8x32xf32>
    %432 = tpu.matmul %430, %431, %cst_195 {dimension_numbers = #tpu.dot_dimension_numbers<[1], [0], [0], [1], [0, 0, 1, 1], [], []>} : vector<8x8xf32>, vector<8x32xf32>, vector<8x32xf32> -> vector<8x32xf32>
    %433 = arith.addf %412, %432 : vector<8x32xf32>
    %434 = vector.broadcast %348 : vector<1x32xf32> to vector<8x32xf32>
    %435 = arith.addf %433, %434 : vector<8x32xf32>
    %436 = arith.addf %309, %435 : vector<8x32xf32>
    %c1_196 = arith.constant 1 : index
    %c1_197 = arith.constant 1 : index
    %c0_198 = arith.constant 0 : index
    %c0_199 = arith.constant 0 : index
    %437 = vector.load %arg5[%c1_196, %c1_197, %c0_198, %c0_199] : memref<2x3x1x32xf32, #tpu.memory_space<vmem>>, vector<1x1x1x32xf32>
    %438 = vector.shape_cast %437 : vector<1x1x1x32xf32> to vector<1x32xf32>
    %c1_200 = arith.constant 1 : index
    %c1_201 = arith.constant 1 : index
    %c0_202 = arith.constant 0 : index
    %c0_203 = arith.constant 0 : index
    %439 = vector.load %arg6[%c1_200, %c1_201, %c0_202, %c0_203] : memref<2x3x1x32xf32, #tpu.memory_space<vmem>>, vector<1x1x1x32xf32>
    %440 = vector.shape_cast %439 : vector<1x1x1x32xf32> to vector<1x32xf32>
    %cst_204 = arith.constant dense<0.000000e+00> : vector<8xf32>
    %441 = vector.multi_reduction <add>, %436, %cst_204 [1] : vector<8x32xf32> to vector<8xf32>
    %442 = vector.shape_cast %441 : vector<8xf32> to vector<8x1xf32>
    %cst_205 = arith.constant 3.200000e+01 : f32
    %443 = vector.broadcast %cst_205 : f32 to vector<8x1xf32>
    %444 = arith.divf %442, %443 : vector<8x1xf32>
    %445 = vector.broadcast %444 : vector<8x1xf32> to vector<8x32xf32>
    %446 = arith.subf %436, %445 : vector<8x32xf32>
    %447 = arith.mulf %446, %446 : vector<8x32xf32>
    %cst_206 = arith.constant dense<0.000000e+00> : vector<8xf32>
    %448 = vector.multi_reduction <add>, %447, %cst_206 [1] : vector<8x32xf32> to vector<8xf32>
    %449 = vector.shape_cast %448 : vector<8xf32> to vector<8x1xf32>
    %cst_207 = arith.constant 3.100000e+01 : f32
    %450 = vector.broadcast %cst_207 : f32 to vector<8x1xf32>
    %451 = arith.divf %449, %450 : vector<8x1xf32>
    %452 = math.sqrt %451 : vector<8x1xf32>
    %cst_208 = arith.constant 9.99999997E-7 : f32
    %453 = vector.broadcast %cst_208 : f32 to vector<8x1xf32>
    %454 = arith.addf %452, %453 : vector<8x1xf32>
    %455 = tpu.reciprocal %454 {approx = true} : vector<8x1xf32> -> vector<8x1xf32>
    %456 = vector.broadcast %438 : vector<1x32xf32> to vector<8x32xf32>
    %457 = arith.mulf %456, %446 : vector<8x32xf32>
    %458 = vector.broadcast %455 : vector<8x1xf32> to vector<8x32xf32>
    %459 = arith.mulf %457, %458 : vector<8x32xf32>
    %460 = vector.broadcast %440 : vector<1x32xf32> to vector<8x32xf32>
    %461 = arith.addf %459, %460 : vector<8x32xf32>
    %c1_209 = arith.constant 1 : index
    %c0_210 = arith.constant 0 : index
    %c0_211 = arith.constant 0 : index
    %462 = vector.load %arg11[%c1_209, %c0_210, %c0_211] : memref<2x32x32xf32, #tpu.memory_space<vmem>>, vector<1x32x32xf32>
    %463 = vector.shape_cast %462 : vector<1x32x32xf32> to vector<32x32xf32>
    %cst_212 = arith.constant dense<0.000000e+00> : vector<8x32xf32>
    %464 = tpu.matmul %461, %463, %cst_212 {dimension_numbers = #tpu.dot_dimension_numbers<[1], [0], [0], [1], [0, 0, 1, 1], [], []>} : vector<8x32xf32>, vector<32x32xf32>, vector<8x32xf32> -> vector<8x32xf32>
    %c1_213 = arith.constant 1 : index
    %c0_214 = arith.constant 0 : index
    %c0_215 = arith.constant 0 : index
    %465 = vector.load %arg12[%c1_213, %c0_214, %c0_215] : memref<2x1x32xf32, #tpu.memory_space<vmem>>, vector<1x1x32xf32>
    %466 = vector.shape_cast %465 : vector<1x1x32xf32> to vector<1x32xf32>
    %467 = vector.broadcast %466 : vector<1x32xf32> to vector<8x32xf32>
    %468 = arith.addf %464, %467 : vector<8x32xf32>
    %c1_216 = arith.constant 1 : index
    %c0_217 = arith.constant 0 : index
    %c0_218 = arith.constant 0 : index
    %469 = vector.load %arg13[%c1_216, %c0_217, %c0_218] : memref<2x32x64xf32, #tpu.memory_space<vmem>>, vector<1x32x64xf32>
    %470 = vector.shape_cast %469 : vector<1x32x64xf32> to vector<32x64xf32>
    %cst_219 = arith.constant dense<0.000000e+00> : vector<16x64xf32>
    %471 = tpu.matmul %3, %470, %cst_219 {dimension_numbers = #tpu.dot_dimension_numbers<[1], [0], [0], [1], [0, 0, 1, 1], [], []>} : vector<16x32xf32>, vector<32x64xf32>, vector<16x64xf32> -> vector<16x64xf32>
    %c1_220 = arith.constant 1 : index
    %c0_221 = arith.constant 0 : index
    %c0_222 = arith.constant 0 : index
    %472 = vector.load %arg14[%c1_220, %c0_221, %c0_222] : memref<2x1x64xf32, #tpu.memory_space<vmem>>, vector<1x1x64xf32>
    %473 = vector.shape_cast %472 : vector<1x1x64xf32> to vector<1x64xf32>
    %474 = vector.broadcast %473 : vector<1x64xf32> to vector<16x64xf32>
    %475 = arith.addf %471, %474 : vector<16x64xf32>
    %476 = vector.extract_strided_slice %475 {offsets = [0, 0], sizes = [16, 32], strides = [1, 1]} : vector<16x64xf32> to vector<16x32xf32>
    %477 = vector.extract_strided_slice %475 {offsets = [0, 32], sizes = [16, 32], strides = [1, 1]} : vector<16x64xf32> to vector<16x32xf32>
    %c1_223 = arith.constant 1 : index
    %c0_224 = arith.constant 0 : index
    %c0_225 = arith.constant 0 : index
    %478 = vector.load %arg15[%c1_223, %c0_224, %c0_225] : memref<2x32x32xf32, #tpu.memory_space<vmem>>, vector<1x32x32xf32>
    %479 = vector.shape_cast %478 : vector<1x32x32xf32> to vector<32x32xf32>
    %c1_226 = arith.constant 1 : index
    %c0_227 = arith.constant 0 : index
    %c0_228 = arith.constant 0 : index
    %480 = vector.load %arg16[%c1_226, %c0_227, %c0_228] : memref<2x1x32xf32, #tpu.memory_space<vmem>>, vector<1x1x32xf32>
    %481 = vector.shape_cast %480 : vector<1x1x32xf32> to vector<1x32xf32>
    %cst_229 = arith.constant 0.000000e+00 : f32
    %482 = vector.broadcast %cst_229 : f32 to vector<8x32xf32>
    %483 = vector.extract_strided_slice %468 {offsets = [0, 0], sizes = [8, 8], strides = [1, 1]} : vector<8x32xf32> to vector<8x8xf32>
    %484 = vector.extract_strided_slice %476 {offsets = [0, 0], sizes = [16, 8], strides = [1, 1]} : vector<16x32xf32> to vector<16x8xf32>
    %485 = vector.extract_strided_slice %477 {offsets = [0, 0], sizes = [16, 8], strides = [1, 1]} : vector<16x32xf32> to vector<16x8xf32>
    %cst_230 = arith.constant dense<0.000000e+00> : vector<8x16xf32>
    %486 = tpu.matmul %483, %484, %cst_230 {dimension_numbers = #tpu.dot_dimension_numbers<[1], [1], [0], [0], [0, 0, 1, 0], [], []>} : vector<8x8xf32>, vector<16x8xf32>, vector<8x16xf32> -> vector<8x16xf32>
    %cst_231 = arith.constant 0.353553385 : f32
    %487 = vector.broadcast %cst_231 : f32 to vector<8x16xf32>
    %488 = arith.mulf %486, %487 : vector<8x16xf32>
    %489 = arith.addf %488, %7 : vector<8x16xf32>
    %cst_232 = arith.constant dense<0xFF800000> : vector<8xf32>
    %490 = vector.multi_reduction <maximumf>, %489, %cst_232 [1] : vector<8x16xf32> to vector<8xf32>
    %491 = vector.shape_cast %490 : vector<8xf32> to vector<8x1xf32>
    %492 = vector.broadcast %491 : vector<8x1xf32> to vector<8x16xf32>
    %493 = arith.subf %489, %492 : vector<8x16xf32>
    %494 = math.exp %493 : vector<8x16xf32>
    %cst_233 = arith.constant dense<0.000000e+00> : vector<8xf32>
    %495 = vector.multi_reduction <add>, %494, %cst_233 [1] : vector<8x16xf32> to vector<8xf32>
    %496 = vector.shape_cast %495 : vector<8xf32> to vector<8x1xf32>
    %497 = tpu.reciprocal %496 {approx = true} : vector<8x1xf32> -> vector<8x1xf32>
    %498 = vector.broadcast %497 : vector<8x1xf32> to vector<8x16xf32>
    %499 = arith.mulf %494, %498 : vector<8x16xf32>
    %cst_234 = arith.constant dense<0.000000e+00> : vector<8x8xf32>
    %500 = tpu.matmul %499, %485, %cst_234 {dimension_numbers = #tpu.dot_dimension_numbers<[1], [0], [0], [1], [0, 0, 1, 1], [], []>} : vector<8x16xf32>, vector<16x8xf32>, vector<8x8xf32> -> vector<8x8xf32>
    %501 = vector.extract_strided_slice %479 {offsets = [0, 0], sizes = [8, 32], strides = [1, 1]} : vector<32x32xf32> to vector<8x32xf32>
    %cst_235 = arith.constant dense<0.000000e+00> : vector<8x32xf32>
    %502 = tpu.matmul %500, %501, %cst_235 {dimension_numbers = #tpu.dot_dimension_numbers<[1], [0], [0], [1], [0, 0, 1, 1], [], []>} : vector<8x8xf32>, vector<8x32xf32>, vector<8x32xf32> -> vector<8x32xf32>
    %503 = arith.addf %482, %502 : vector<8x32xf32>
    %504 = vector.extract_strided_slice %468 {offsets = [0, 8], sizes = [8, 8], strides = [1, 1]} : vector<8x32xf32> to vector<8x8xf32>
    %505 = vector.extract_strided_slice %476 {offsets = [0, 8], sizes = [16, 8], strides = [1, 1]} : vector<16x32xf32> to vector<16x8xf32>
    %506 = vector.extract_strided_slice %477 {offsets = [0, 8], sizes = [16, 8], strides = [1, 1]} : vector<16x32xf32> to vector<16x8xf32>
    %cst_236 = arith.constant dense<0.000000e+00> : vector<8x16xf32>
    %507 = tpu.matmul %504, %505, %cst_236 {dimension_numbers = #tpu.dot_dimension_numbers<[1], [1], [0], [0], [0, 0, 1, 0], [], []>} : vector<8x8xf32>, vector<16x8xf32>, vector<8x16xf32> -> vector<8x16xf32>
    %cst_237 = arith.constant 0.353553385 : f32
    %508 = vector.broadcast %cst_237 : f32 to vector<8x16xf32>
    %509 = arith.mulf %507, %508 : vector<8x16xf32>
    %510 = arith.addf %509, %7 : vector<8x16xf32>
    %cst_238 = arith.constant dense<0xFF800000> : vector<8xf32>
    %511 = vector.multi_reduction <maximumf>, %510, %cst_238 [1] : vector<8x16xf32> to vector<8xf32>
    %512 = vector.shape_cast %511 : vector<8xf32> to vector<8x1xf32>
    %513 = vector.broadcast %512 : vector<8x1xf32> to vector<8x16xf32>
    %514 = arith.subf %510, %513 : vector<8x16xf32>
    %515 = math.exp %514 : vector<8x16xf32>
    %cst_239 = arith.constant dense<0.000000e+00> : vector<8xf32>
    %516 = vector.multi_reduction <add>, %515, %cst_239 [1] : vector<8x16xf32> to vector<8xf32>
    %517 = vector.shape_cast %516 : vector<8xf32> to vector<8x1xf32>
    %518 = tpu.reciprocal %517 {approx = true} : vector<8x1xf32> -> vector<8x1xf32>
    %519 = vector.broadcast %518 : vector<8x1xf32> to vector<8x16xf32>
    %520 = arith.mulf %515, %519 : vector<8x16xf32>
    %cst_240 = arith.constant dense<0.000000e+00> : vector<8x8xf32>
    %521 = tpu.matmul %520, %506, %cst_240 {dimension_numbers = #tpu.dot_dimension_numbers<[1], [0], [0], [1], [0, 0, 1, 1], [], []>} : vector<8x16xf32>, vector<16x8xf32>, vector<8x8xf32> -> vector<8x8xf32>
    %522 = vector.extract_strided_slice %479 {offsets = [8, 0], sizes = [8, 32], strides = [1, 1]} : vector<32x32xf32> to vector<8x32xf32>
    %cst_241 = arith.constant dense<0.000000e+00> : vector<8x32xf32>
    %523 = tpu.matmul %521, %522, %cst_241 {dimension_numbers = #tpu.dot_dimension_numbers<[1], [0], [0], [1], [0, 0, 1, 1], [], []>} : vector<8x8xf32>, vector<8x32xf32>, vector<8x32xf32> -> vector<8x32xf32>
    %524 = arith.addf %503, %523 : vector<8x32xf32>
    %525 = vector.extract_strided_slice %468 {offsets = [0, 16], sizes = [8, 8], strides = [1, 1]} : vector<8x32xf32> to vector<8x8xf32>
    %526 = vector.extract_strided_slice %476 {offsets = [0, 16], sizes = [16, 8], strides = [1, 1]} : vector<16x32xf32> to vector<16x8xf32>
    %527 = vector.extract_strided_slice %477 {offsets = [0, 16], sizes = [16, 8], strides = [1, 1]} : vector<16x32xf32> to vector<16x8xf32>
    %cst_242 = arith.constant dense<0.000000e+00> : vector<8x16xf32>
    %528 = tpu.matmul %525, %526, %cst_242 {dimension_numbers = #tpu.dot_dimension_numbers<[1], [1], [0], [0], [0, 0, 1, 0], [], []>} : vector<8x8xf32>, vector<16x8xf32>, vector<8x16xf32> -> vector<8x16xf32>
    %cst_243 = arith.constant 0.353553385 : f32
    %529 = vector.broadcast %cst_243 : f32 to vector<8x16xf32>
    %530 = arith.mulf %528, %529 : vector<8x16xf32>
    %531 = arith.addf %530, %7 : vector<8x16xf32>
    %cst_244 = arith.constant dense<0xFF800000> : vector<8xf32>
    %532 = vector.multi_reduction <maximumf>, %531, %cst_244 [1] : vector<8x16xf32> to vector<8xf32>
    %533 = vector.shape_cast %532 : vector<8xf32> to vector<8x1xf32>
    %534 = vector.broadcast %533 : vector<8x1xf32> to vector<8x16xf32>
    %535 = arith.subf %531, %534 : vector<8x16xf32>
    %536 = math.exp %535 : vector<8x16xf32>
    %cst_245 = arith.constant dense<0.000000e+00> : vector<8xf32>
    %537 = vector.multi_reduction <add>, %536, %cst_245 [1] : vector<8x16xf32> to vector<8xf32>
    %538 = vector.shape_cast %537 : vector<8xf32> to vector<8x1xf32>
    %539 = tpu.reciprocal %538 {approx = true} : vector<8x1xf32> -> vector<8x1xf32>
    %540 = vector.broadcast %539 : vector<8x1xf32> to vector<8x16xf32>
    %541 = arith.mulf %536, %540 : vector<8x16xf32>
    %cst_246 = arith.constant dense<0.000000e+00> : vector<8x8xf32>
    %542 = tpu.matmul %541, %527, %cst_246 {dimension_numbers = #tpu.dot_dimension_numbers<[1], [0], [0], [1], [0, 0, 1, 1], [], []>} : vector<8x16xf32>, vector<16x8xf32>, vector<8x8xf32> -> vector<8x8xf32>
    %543 = vector.extract_strided_slice %479 {offsets = [16, 0], sizes = [8, 32], strides = [1, 1]} : vector<32x32xf32> to vector<8x32xf32>
    %cst_247 = arith.constant dense<0.000000e+00> : vector<8x32xf32>
    %544 = tpu.matmul %542, %543, %cst_247 {dimension_numbers = #tpu.dot_dimension_numbers<[1], [0], [0], [1], [0, 0, 1, 1], [], []>} : vector<8x8xf32>, vector<8x32xf32>, vector<8x32xf32> -> vector<8x32xf32>
    %545 = arith.addf %524, %544 : vector<8x32xf32>
    %546 = vector.extract_strided_slice %468 {offsets = [0, 24], sizes = [8, 8], strides = [1, 1]} : vector<8x32xf32> to vector<8x8xf32>
    %547 = vector.extract_strided_slice %476 {offsets = [0, 24], sizes = [16, 8], strides = [1, 1]} : vector<16x32xf32> to vector<16x8xf32>
    %548 = vector.extract_strided_slice %477 {offsets = [0, 24], sizes = [16, 8], strides = [1, 1]} : vector<16x32xf32> to vector<16x8xf32>
    %cst_248 = arith.constant dense<0.000000e+00> : vector<8x16xf32>
    %549 = tpu.matmul %546, %547, %cst_248 {dimension_numbers = #tpu.dot_dimension_numbers<[1], [1], [0], [0], [0, 0, 1, 0], [], []>} : vector<8x8xf32>, vector<16x8xf32>, vector<8x16xf32> -> vector<8x16xf32>
    %cst_249 = arith.constant 0.353553385 : f32
    %550 = vector.broadcast %cst_249 : f32 to vector<8x16xf32>
    %551 = arith.mulf %549, %550 : vector<8x16xf32>
    %552 = arith.addf %551, %7 : vector<8x16xf32>
    %cst_250 = arith.constant dense<0xFF800000> : vector<8xf32>
    %553 = vector.multi_reduction <maximumf>, %552, %cst_250 [1] : vector<8x16xf32> to vector<8xf32>
    %554 = vector.shape_cast %553 : vector<8xf32> to vector<8x1xf32>
    %555 = vector.broadcast %554 : vector<8x1xf32> to vector<8x16xf32>
    %556 = arith.subf %552, %555 : vector<8x16xf32>
    %557 = math.exp %556 : vector<8x16xf32>
    %cst_251 = arith.constant dense<0.000000e+00> : vector<8xf32>
    %558 = vector.multi_reduction <add>, %557, %cst_251 [1] : vector<8x16xf32> to vector<8xf32>
    %559 = vector.shape_cast %558 : vector<8xf32> to vector<8x1xf32>
    %560 = tpu.reciprocal %559 {approx = true} : vector<8x1xf32> -> vector<8x1xf32>
    %561 = vector.broadcast %560 : vector<8x1xf32> to vector<8x16xf32>
    %562 = arith.mulf %557, %561 : vector<8x16xf32>
    %cst_252 = arith.constant dense<0.000000e+00> : vector<8x8xf32>
    %563 = tpu.matmul %562, %548, %cst_252 {dimension_numbers = #tpu.dot_dimension_numbers<[1], [0], [0], [1], [0, 0, 1, 1], [], []>} : vector<8x16xf32>, vector<16x8xf32>, vector<8x8xf32> -> vector<8x8xf32>
    %564 = vector.extract_strided_slice %479 {offsets = [24, 0], sizes = [8, 32], strides = [1, 1]} : vector<32x32xf32> to vector<8x32xf32>
    %cst_253 = arith.constant dense<0.000000e+00> : vector<8x32xf32>
    %565 = tpu.matmul %563, %564, %cst_253 {dimension_numbers = #tpu.dot_dimension_numbers<[1], [0], [0], [1], [0, 0, 1, 1], [], []>} : vector<8x8xf32>, vector<8x32xf32>, vector<8x32xf32> -> vector<8x32xf32>
    %566 = arith.addf %545, %565 : vector<8x32xf32>
    %567 = vector.broadcast %481 : vector<1x32xf32> to vector<8x32xf32>
    %568 = arith.addf %566, %567 : vector<8x32xf32>
    %569 = arith.addf %436, %568 : vector<8x32xf32>
    %c1_254 = arith.constant 1 : index
    %c2_255 = arith.constant 2 : index
    %c0_256 = arith.constant 0 : index
    %c0_257 = arith.constant 0 : index
    %570 = vector.load %arg5[%c1_254, %c2_255, %c0_256, %c0_257] : memref<2x3x1x32xf32, #tpu.memory_space<vmem>>, vector<1x1x1x32xf32>
    %571 = vector.shape_cast %570 : vector<1x1x1x32xf32> to vector<1x32xf32>
    %c1_258 = arith.constant 1 : index
    %c2_259 = arith.constant 2 : index
    %c0_260 = arith.constant 0 : index
    %c0_261 = arith.constant 0 : index
    %572 = vector.load %arg6[%c1_258, %c2_259, %c0_260, %c0_261] : memref<2x3x1x32xf32, #tpu.memory_space<vmem>>, vector<1x1x1x32xf32>
    %573 = vector.shape_cast %572 : vector<1x1x1x32xf32> to vector<1x32xf32>
    %cst_262 = arith.constant dense<0.000000e+00> : vector<8xf32>
    %574 = vector.multi_reduction <add>, %569, %cst_262 [1] : vector<8x32xf32> to vector<8xf32>
    %575 = vector.shape_cast %574 : vector<8xf32> to vector<8x1xf32>
    %cst_263 = arith.constant 3.200000e+01 : f32
    %576 = vector.broadcast %cst_263 : f32 to vector<8x1xf32>
    %577 = arith.divf %575, %576 : vector<8x1xf32>
    %578 = vector.broadcast %577 : vector<8x1xf32> to vector<8x32xf32>
    %579 = arith.subf %569, %578 : vector<8x32xf32>
    %580 = arith.mulf %579, %579 : vector<8x32xf32>
    %cst_264 = arith.constant dense<0.000000e+00> : vector<8xf32>
    %581 = vector.multi_reduction <add>, %580, %cst_264 [1] : vector<8x32xf32> to vector<8xf32>
    %582 = vector.shape_cast %581 : vector<8xf32> to vector<8x1xf32>
    %cst_265 = arith.constant 3.100000e+01 : f32
    %583 = vector.broadcast %cst_265 : f32 to vector<8x1xf32>
    %584 = arith.divf %582, %583 : vector<8x1xf32>
    %585 = math.sqrt %584 : vector<8x1xf32>
    %cst_266 = arith.constant 9.99999997E-7 : f32
    %586 = vector.broadcast %cst_266 : f32 to vector<8x1xf32>
    %587 = arith.addf %585, %586 : vector<8x1xf32>
    %588 = tpu.reciprocal %587 {approx = true} : vector<8x1xf32> -> vector<8x1xf32>
    %589 = vector.broadcast %571 : vector<1x32xf32> to vector<8x32xf32>
    %590 = arith.mulf %589, %579 : vector<8x32xf32>
    %591 = vector.broadcast %588 : vector<8x1xf32> to vector<8x32xf32>
    %592 = arith.mulf %590, %591 : vector<8x32xf32>
    %593 = vector.broadcast %573 : vector<1x32xf32> to vector<8x32xf32>
    %594 = arith.addf %592, %593 : vector<8x32xf32>
    %c1_267 = arith.constant 1 : index
    %c0_268 = arith.constant 0 : index
    %c0_269 = arith.constant 0 : index
    %595 = vector.load %arg17[%c1_267, %c0_268, %c0_269] : memref<2x32x64xf32, #tpu.memory_space<vmem>>, vector<1x32x64xf32>
    %596 = vector.shape_cast %595 : vector<1x32x64xf32> to vector<32x64xf32>
    %cst_270 = arith.constant dense<0.000000e+00> : vector<8x64xf32>
    %597 = tpu.matmul %594, %596, %cst_270 {dimension_numbers = #tpu.dot_dimension_numbers<[1], [0], [0], [1], [0, 0, 1, 1], [], []>} : vector<8x32xf32>, vector<32x64xf32>, vector<8x64xf32> -> vector<8x64xf32>
    %c1_271 = arith.constant 1 : index
    %c0_272 = arith.constant 0 : index
    %c0_273 = arith.constant 0 : index
    %598 = vector.load %arg18[%c1_271, %c0_272, %c0_273] : memref<2x1x64xf32, #tpu.memory_space<vmem>>, vector<1x1x64xf32>
    %599 = vector.shape_cast %598 : vector<1x1x64xf32> to vector<1x64xf32>
    %600 = vector.broadcast %599 : vector<1x64xf32> to vector<8x64xf32>
    %601 = arith.addf %597, %600 : vector<8x64xf32>
    %cst_274 = arith.constant 0.000000e+00 : f32
    %602 = vector.broadcast %cst_274 : f32 to vector<8x64xf32>
    %603 = arith.maximumf %601, %602 : vector<8x64xf32>
    %c1_275 = arith.constant 1 : index
    %c0_276 = arith.constant 0 : index
    %c0_277 = arith.constant 0 : index
    %604 = vector.load %arg19[%c1_275, %c0_276, %c0_277] : memref<2x64x32xf32, #tpu.memory_space<vmem>>, vector<1x64x32xf32>
    %605 = vector.shape_cast %604 : vector<1x64x32xf32> to vector<64x32xf32>
    %cst_278 = arith.constant dense<0.000000e+00> : vector<8x32xf32>
    %606 = tpu.matmul %603, %605, %cst_278 {dimension_numbers = #tpu.dot_dimension_numbers<[1], [0], [0], [1], [0, 0, 1, 1], [], []>} : vector<8x64xf32>, vector<64x32xf32>, vector<8x32xf32> -> vector<8x32xf32>
    %607 = arith.addf %569, %606 : vector<8x32xf32>
    %c1_279 = arith.constant 1 : index
    %c0_280 = arith.constant 0 : index
    %c0_281 = arith.constant 0 : index
    %608 = vector.load %arg20[%c1_279, %c0_280, %c0_281] : memref<2x1x32xf32, #tpu.memory_space<vmem>>, vector<1x1x32xf32>
    %609 = vector.shape_cast %608 : vector<1x1x32xf32> to vector<1x32xf32>
    %610 = vector.broadcast %609 : vector<1x32xf32> to vector<8x32xf32>
    %611 = arith.addf %607, %610 : vector<8x32xf32>
    %c0_282 = arith.constant 0 : index
    %c0_283 = arith.constant 0 : index
    %612 = vector.load %arg21[%c0_282, %c0_283] : memref<1x32xf32, #tpu.memory_space<vmem>>, vector<1x32xf32>
    %c0_284 = arith.constant 0 : index
    %c0_285 = arith.constant 0 : index
    %613 = vector.load %arg22[%c0_284, %c0_285] : memref<1x32xf32, #tpu.memory_space<vmem>>, vector<1x32xf32>
    %cst_286 = arith.constant dense<0.000000e+00> : vector<8xf32>
    %614 = vector.multi_reduction <add>, %611, %cst_286 [1] : vector<8x32xf32> to vector<8xf32>
    %615 = vector.shape_cast %614 : vector<8xf32> to vector<8x1xf32>
    %cst_287 = arith.constant 3.200000e+01 : f32
    %616 = vector.broadcast %cst_287 : f32 to vector<8x1xf32>
    %617 = arith.divf %615, %616 : vector<8x1xf32>
    %618 = vector.broadcast %617 : vector<8x1xf32> to vector<8x32xf32>
    %619 = arith.subf %611, %618 : vector<8x32xf32>
    %620 = arith.mulf %619, %619 : vector<8x32xf32>
    %cst_288 = arith.constant dense<0.000000e+00> : vector<8xf32>
    %621 = vector.multi_reduction <add>, %620, %cst_288 [1] : vector<8x32xf32> to vector<8xf32>
    %622 = vector.shape_cast %621 : vector<8xf32> to vector<8x1xf32>
    %cst_289 = arith.constant 3.100000e+01 : f32
    %623 = vector.broadcast %cst_289 : f32 to vector<8x1xf32>
    %624 = arith.divf %622, %623 : vector<8x1xf32>
    %625 = math.sqrt %624 : vector<8x1xf32>
    %cst_290 = arith.constant 9.99999997E-7 : f32
    %626 = vector.broadcast %cst_290 : f32 to vector<8x1xf32>
    %627 = arith.addf %625, %626 : vector<8x1xf32>
    %628 = tpu.reciprocal %627 {approx = true} : vector<8x1xf32> -> vector<8x1xf32>
    %629 = vector.broadcast %612 : vector<1x32xf32> to vector<8x32xf32>
    %630 = arith.mulf %629, %619 : vector<8x32xf32>
    %631 = vector.broadcast %628 : vector<8x1xf32> to vector<8x32xf32>
    %632 = arith.mulf %630, %631 : vector<8x32xf32>
    %633 = vector.broadcast %613 : vector<1x32xf32> to vector<8x32xf32>
    %634 = arith.addf %632, %633 : vector<8x32xf32>
    %c0_291 = arith.constant 0 : index
    %c0_292 = arith.constant 0 : index
    %c0_293 = arith.constant 0 : index
    %635 = vector.load %arg23[%c0_291, %c0_292, %c0_293] : memref<1x8x32xf32, #tpu.memory_space<vmem>>, vector<1x8x32xf32>
    %636 = vector.shape_cast %635 : vector<1x8x32xf32> to vector<8x32xf32>
    %637 = vector.shape_cast %634 : vector<8x32xf32> to vector<1x8x32xf32>
    tpu.vector_store %arg23[%c0_291, %c0_292, %c0_293], %637 {strides = array<i32>} : memref<1x8x32xf32, #tpu.memory_space<vmem>>, vector<1x8x32xf32>,
    return
  }
  func.func @transform_0(%arg0: i32) -> (i32, i32, i32) {
    %c0_i32 = arith.constant 0 : i32
    %c0_i32_0 = arith.constant 0 : i32
    %c0_i32_1 = arith.constant 0 : i32
    return %arg0, %c0_i32, %c0_i32_0 : i32, i32, i32
  }
  func.func @transform_1(%arg0: i32) -> (i32, i32, i32) {
    %c0_i32 = arith.constant 0 : i32
    %c0_i32_0 = arith.constant 0 : i32
    %c0_i32_1 = arith.constant 0 : i32
    return %arg0, %c0_i32, %c0_i32_0 : i32, i32, i32
  }
  func.func @transform_2(%arg0: i32) -> (i32, i32, i32) {
    %c0_i32 = arith.constant 0 : i32
    %c0_i32_0 = arith.constant 0 : i32
    %c0_i32_1 = arith.constant 0 : i32
    return %arg0, %c0_i32, %c0_i32_0 : i32, i32, i32
  }
  func.func @transform_3(%arg0: i32) -> (i32, i32, i32) {
    %c0_i32 = arith.constant 0 : i32
    %c0_i32_0 = arith.constant 0 : i32
    %c0_i32_1 = arith.constant 0 : i32
    return %arg0, %c0_i32, %c0_i32_0 : i32, i32, i32
  }
  func.func @transform_4(%arg0: i32) -> (i32, i32, i32, i32) {
    %c0_i32 = arith.constant 0 : i32
    %c0_i32_0 = arith.constant 0 : i32
    %c0_i32_1 = arith.constant 0 : i32
    %c0_i32_2 = arith.constant 0 : i32
    %c0_i32_3 = arith.constant 0 : i32
    return %c0_i32, %c0_i32_0, %c0_i32_1, %c0_i32_2 : i32, i32, i32, i32
  }
  func.func @transform_5(%arg0: i32) -> (i32, i32, i32, i32) {
    %c0_i32 = arith.constant 0 : i32
    %c0_i32_0 = arith.constant 0 : i32
    %c0_i32_1 = arith.constant 0 : i32
    %c0_i32_2 = arith.constant 0 : i32
    %c0_i32_3 = arith.constant 0 : i32
    return %c0_i32, %c0_i32_0, %c0_i32_1, %c0_i32_2 : i32, i32, i32, i32
  }
  func.func @transform_6(%arg0: i32) -> (i32, i32, i32) {
    %c0_i32 = arith.constant 0 : i32
    %c0_i32_0 = arith.constant 0 : i32
    %c0_i32_1 = arith.constant 0 : i32
    %c0_i32_2 = arith.constant 0 : i32
    return %c0_i32, %c0_i32_0, %c0_i32_1 : i32, i32, i32
  }
  func.func @transform_7(%arg0: i32) -> (i32, i32, i32) {
    %c0_i32 = arith.constant 0 : i32
    %c0_i32_0 = arith.constant 0 : i32
    %c0_i32_1 = arith.constant 0 : i32
    %c0_i32_2 = arith.constant 0 : i32
    return %c0_i32, %c0_i32_0, %c0_i32_1 : i32, i32, i32
  }
  func.func @transform_8(%arg0: i32) -> (i32, i32, i32) {
    %c0_i32 = arith.constant 0 : i32
    %c0_i32_0 = arith.constant 0 : i32
    %c0_i32_1 = arith.constant 0 : i32
    %c0_i32_2 = arith.constant 0 : i32
    return %c0_i32, %c0_i32_0, %c0_i32_1 : i32, i32, i32
  }
  func.func @transform_9(%arg0: i32) -> (i32, i32, i32) {
    %c0_i32 = arith.constant 0 : i32
    %c0_i32_0 = arith.constant 0 : i32
    %c0_i32_1 = arith.constant 0 : i32
    %c0_i32_2 = arith.constant 0 : i32
    return %c0_i32, %c0_i32_0, %c0_i32_1 : i32, i32, i32
  }
  func.func @transform_10(%arg0: i32) -> (i32, i32, i32) {
    %c0_i32 = arith.constant 0 : i32
    %c0_i32_0 = arith.constant 0 : i32
    %c0_i32_1 = arith.constant 0 : i32
    %c0_i32_2 = arith.constant 0 : i32
    return %c0_i32, %c0_i32_0, %c0_i32_1 : i32, i32, i32
  }
  func.func @transform_11(%arg0: i32) -> (i32, i32, i32) {
    %c0_i32 = arith.constant 0 : i32
    %c0_i32_0 = arith.constant 0 : i32
    %c0_i32_1 = arith.constant 0 : i32
    %c0_i32_2 = arith.constant 0 : i32
    return %c0_i32, %c0_i32_0, %c0_i32_1 : i32, i32, i32
  }
  func.func @transform_12(%arg0: i32) -> (i32, i32, i32) {
    %c0_i32 = arith.constant 0 : i32
    %c0_i32_0 = arith.constant 0 : i32
    %c0_i32_1 = arith.constant 0 : i32
    %c0_i32_2 = arith.constant 0 : i32
    return %c0_i32, %c0_i32_0, %c0_i32_1 : i32, i32, i32
  }
  func.func @transform_13(%arg0: i32) -> (i32, i32, i32) {
    %c0_i32 = arith.constant 0 : i32
    %c0_i32_0 = arith.constant 0 : i32
    %c0_i32_1 = arith.constant 0 : i32
    %c0_i32_2 = arith.constant 0 : i32
    return %c0_i32, %c0_i32_0, %c0_i32_1 : i32, i32, i32
  }
  func.func @transform_14(%arg0: i32) -> (i32, i32, i32) {
    %c0_i32 = arith.constant 0 : i32
    %c0_i32_0 = arith.constant 0 : i32
    %c0_i32_1 = arith.constant 0 : i32
    %c0_i32_2 = arith.constant 0 : i32
    return %c0_i32, %c0_i32_0, %c0_i32_1 : i32, i32, i32
  }
  func.func @transform_15(%arg0: i32) -> (i32, i32, i32) {
    %c0_i32 = arith.constant 0 : i32
    %c0_i32_0 = arith.constant 0 : i32
    %c0_i32_1 = arith.constant 0 : i32
    %c0_i32_2 = arith.constant 0 : i32
    return %c0_i32, %c0_i32_0, %c0_i32_1 : i32, i32, i32
  }
  func.func @transform_16(%arg0: i32) -> (i32, i32, i32) {
    %c0_i32 = arith.constant 0 : i32
    %c0_i32_0 = arith.constant 0 : i32
    %c0_i32_1 = arith.constant 0 : i32
    %c0_i32_2 = arith.constant 0 : i32
    return %c0_i32, %c0_i32_0, %c0_i32_1 : i32, i32, i32
  }
  func.func @transform_17(%arg0: i32) -> (i32, i32, i32) {
    %c0_i32 = arith.constant 0 : i32
    %c0_i32_0 = arith.constant 0 : i32
    %c0_i32_1 = arith.constant 0 : i32
    %c0_i32_2 = arith.constant 0 : i32
    return %c0_i32, %c0_i32_0, %c0_i32_1 : i32, i32, i32
  }
  func.func @transform_18(%arg0: i32) -> (i32, i32, i32) {
    %c0_i32 = arith.constant 0 : i32
    %c0_i32_0 = arith.constant 0 : i32
    %c0_i32_1 = arith.constant 0 : i32
    %c0_i32_2 = arith.constant 0 : i32
    return %c0_i32, %c0_i32_0, %c0_i32_1 : i32, i32, i32
  }
  func.func @transform_19(%arg0: i32) -> (i32, i32, i32) {
    %c0_i32 = arith.constant 0 : i32
    %c0_i32_0 = arith.constant 0 : i32
    %c0_i32_1 = arith.constant 0 : i32
    %c0_i32_2 = arith.constant 0 : i32
    return %c0_i32, %c0_i32_0, %c0_i32_1 : i32, i32, i32
  }
  func.func @transform_20(%arg0: i32) -> (i32, i32) {
    %c0_i32 = arith.constant 0 : i32
    %c0_i32_0 = arith.constant 0 : i32
    %c0_i32_1 = arith.constant 0 : i32
    return %c0_i32, %c0_i32_0 : i32, i32
  }
  func.func @transform_21(%arg0: i32) -> (i32, i32) {
    %c0_i32 = arith.constant 0 : i32
    %c0_i32_0 = arith.constant 0 : i32
    %c0_i32_1 = arith.constant 0 : i32
    return %c0_i32, %c0_i32_0 : i32, i32
  }
  func.func @transform_22(%arg0: i32) -> (i32, i32, i32) {
    %c0_i32 = arith.constant 0 : i32
    %c0_i32_0 = arith.constant 0 : i32
    %c0_i32_1 = arith.constant 0 : i32
    return %arg0, %c0_i32, %c0_i32_0 : i32, i32, i32
  }
}

</mosaic_0001>

<llo_original>
// kernel: decoder_forward.1
$region0: #{decoder_forward.1}
  #allocation0 [shape = 'u32[]', space=smem, size = 0x4, offset = 0x4, fixed_abs, tag = 'smem constant byte address 0x4 - core index']
  #allocation1 [shape = 'u32[144,128]{1,0:T(1,128)}', space=vmem, size = 0x12000, scoped, tag = 'internal scratch']
  %s0 = inlined_call_operand.vmem [shape: f32[2,8,32], index: 0, kind: input, shape index: {}]
  %s1 = inlined_call_operand.vmem [shape: f32[2,16,32], index: 1, kind: input, shape index: {}]
  %s2 = inlined_call_operand.vmem [shape: f32[2,8,8], index: 2, kind: input, shape index: {}]
  %s3 = inlined_call_operand.vmem [shape: f32[2,8,16], index: 3, kind: input, shape index: {}]
  %s4 = inlined_call_operand.vmem [shape: f32[2,3,1,32], index: 4, kind: input, shape index: {}]
  %s5 = inlined_call_operand.vmem [shape: f32[2,3,1,32], index: 5, kind: input, shape index: {}]
  %s6 = inlined_call_operand.vmem [shape: f32[2,32,96], index: 6, kind: input, shape index: {}]
  %s7 = inlined_call_operand.vmem [shape: f32[2,1,96], index: 7, kind: input, shape index: {}]
  %s8 = inlined_call_operand.vmem [shape: f32[2,32,32], index: 8, kind: input, shape index: {}]
  %s9 = inlined_call_operand.vmem [shape: f32[2,1,32], index: 9, kind: input, shape index: {}]
  %s10 = inlined_call_operand.vmem [shape: f32[2,32,32], index: 10, kind: input, shape index: {}]
  %s11 = inlined_call_operand.vmem [shape: f32[2,1,32], index: 11, kind: input, shape index: {}]
  %s12 = inlined_call_operand.vmem [shape: f32[2,32,64], index: 12, kind: input, shape index: {}]
  %s13 = inlined_call_operand.vmem [shape: f32[2,1,64], index: 13, kind: input, shape index: {}]
  %s14 = inlined_call_operand.vmem [shape: f32[2,32,32], index: 14, kind: input, shape index: {}]
  %s15 = inlined_call_operand.vmem [shape: f32[2,1,32], index: 15, kind: input, shape index: {}]
  %s16 = inlined_call_operand.vmem [shape: f32[2,32,64], index: 16, kind: input, shape index: {}]
  %s17 = inlined_call_operand.vmem [shape: f32[2,1,64], index: 17, kind: input, shape index: {}]
  %s18 = inlined_call_operand.vmem [shape: f32[2,64,32], index: 18, kind: input, shape index: {}]
  %s19 = inlined_call_operand.vmem [shape: f32[2,1,32], index: 19, kind: input, shape index: {}]
  %s20 = inlined_call_operand.vmem [shape: f32[1,32], index: 20, kind: input, shape index: {}]
  %s21 = inlined_call_operand.vmem [shape: f32[1,32], index: 21, kind: input, shape index: {}]
  %s22 = inlined_call_operand.hbm [shape: f32[2,8,32], index: 22, kind: output, shape index: {}]
  %s23 = sld [smem:[#allocation0]]
  $region121: #{decoder_forward.1} parent=0
    _
  %s25 = ssub.s32 1, %s23
  %s26 = scalar_select 0, %s25, %s23
  $region1: #{decoder_forward.1} parent=0
    #allocation2 [shape = 'u8[8192]{0}', space=vmem, size = 0x2000, scoped, tag = 'output window, operand 0']
    #allocation3 [shape = 's32[2]{0}', space=sflag, size = 0x8, scoped, tag = 'scoped memory for decoder_forward.1']
    %27 = vsyncpa [#allocation3], 0
    %s28 = scalar_lea.sflag [#allocation3], 1
    %29 = vsyncpa %s28, 0
    loop: start=0, step=1, limit=4
    $region2: #{decoder_forward.1} parent=1 // loop_pre_header
      _
    $region3: #{decoder_forward.1} parent=1 // loop_header
      %s31 = sphi 0, %s35
      %p32 = scmp.ge.s32.totalorder %s31, 4
      %s41 = sphi 0, %s43
      %s44 = sphi 0, %s41
      %s45 = sphi 0, %s44
      %s61 = sphi 0, %s45
      %s67 = sphi 0, %s69
      %s70 = sphi 0, %s67
      %s71 = sphi 0, %s70
      %s87 = sphi 0, %s71
      %s93 = sphi 0, %s95
      %s96 = sphi 0, %s93
      %s97 = sphi 0, %s96
      %s113 = sphi 0, %s97
      %s119 = sphi 0, %s121
      %s122 = sphi 0, %s119
      %s123 = sphi 0, %s122
      %s139 = sphi 0, %s123
      %s143 = sphi 0, %s143
      %s145 = sphi 0, %s143
      %s146 = sphi 0, %s145
      %s160 = sphi 0, %s146
      %s164 = sphi 0, %s164
      %s166 = sphi 0, %s164
      %s167 = sphi 0, %s166
      %s181 = sphi 0, %s167
      %s185 = sphi 0, %s185
      %s187 = sphi 0, %s185
      %s188 = sphi 0, %s187
      %s202 = sphi 0, %s188
      %s206 = sphi 0, %s206
      %s208 = sphi 0, %s206
      %s209 = sphi 0, %s208
      %s223 = sphi 0, %s209
      %s227 = sphi 0, %s227
      %s229 = sphi 0, %s227
      %s230 = sphi 0, %s229
      %s244 = sphi 0, %s230
      %s248 = sphi 0, %s248
      %s250 = sphi 0, %s248
      %s251 = sphi 0, %s250
      %s265 = sphi 0, %s251
      %s269 = sphi 0, %s269
      %s271 = sphi 0, %s269
      %s272 = sphi 0, %s271
      %s286 = sphi 0, %s272
      %s290 = sphi 0, %s290
      %s292 = sphi 0, %s290
      %s293 = sphi 0, %s292
      %s307 = sphi 0, %s293
      %s311 = sphi 0, %s311
      %s313 = sphi 0, %s311
      %s314 = sphi 0, %s313
      %s328 = sphi 0, %s314
      %s332 = sphi 0, %s332
      %s334 = sphi 0, %s332
      %s335 = sphi 0, %s334
      %s349 = sphi 0, %s335
      %s353 = sphi 0, %s353
      %s355 = sphi 0, %s353
      %s356 = sphi 0, %s355
      %s370 = sphi 0, %s356
      %s374 = sphi 0, %s374
      %s376 = sphi 0, %s374
      %s377 = sphi 0, %s376
      %s391 = sphi 0, %s377
      %s395 = sphi 0, %s395
      %s397 = sphi 0, %s395
      %s398 = sphi 0, %s397
      %s412 = sphi 0, %s398
      %s416 = sphi 0, %s416
      %s418 = sphi 0, %s416
      %s419 = sphi 0, %s418
      %s433 = sphi 0, %s419
      %s437 = sphi 0, %s437
      %s439 = sphi 0, %s437
      %s440 = sphi 0, %s439
      %s454 = sphi 0, %s440
      %s458 = sphi 0, %s458
      %s460 = sphi 0, %s458
      %s461 = sphi 0, %s460
      %s475 = sphi 0, %s461
      %s479 = sphi 0, %s479
      %s481 = sphi 0, %s479
      %s482 = sphi 0, %s481
      %s496 = sphi 0, %s482
      %s500 = sphi 0, %s500
      %s502 = sphi 0, %s500
      %s503 = sphi 0, %s502
      %s517 = sphi 0, %s503
      %s523 = sphi 0, %s525
      %s526 = sphi 0, %s523
      %s527 = sphi 0, %s526
      %s543 = sphi 0, %s527
    $region4: #{decoder_forward.1} parent=1 // loop_header_branch
      %34 = sbr.rel (%p32) target = $region8
    $region5: #{decoder_forward.1} parent=1 // loop_body
      %s36 = ssub.s32 %s31, 1
      %s37 = ssub.s32 %s31, 2
      %s38 = sadd.s32 %s31, 1
      %s39 = ssub.s32 %s31, %s38
      %p40 = scmp.eq.s32.totalorder %s39, 0
      %s42 = sadd.s32 %s41, 1
      %s43 = scalar_select %p40, %s41, %s42
      %p46 = pneg %p40
      %p47 = scmp.eq.s32.totalorder %s31, 1
      %p48 = por %p46, %p47
      %p49 = scmp.ne.s32.totalorder %s41, %s44
      %p50 = scmp.eq.s32.totalorder %s31, 0
      %p51 = por %p49, %p50
      %p52 = scmp.ne.s32.totalorder %s41, %s44
      %p53 = scmp.eq.s32.totalorder %s36, 1
      %p54 = por %p52, %p53
      %p55 = scmp.ne.s32.totalorder %s44, %s45
      %p56 = scmp.eq.s32.totalorder %s36, 0
      %p57 = por %p55, %p56
      %p58 = scmp.ne.s32.totalorder %s44, %s45
      %p59 = scmp.eq.s32.totalorder %s37, 1
      %p60 = por %p58, %p59
      %p62 = scmp.ne.s32.totalorder %s45, %s61
      %p63 = scmp.eq.s32.totalorder %s37, 0
      %p64 = por %p62, %p63
      %s65 = ssub.s32 %s31, %s38
      %p66 = scmp.eq.s32.totalorder %s65, 0
      %s68 = sadd.s32 %s67, 1
      %s69 = scalar_select %p66, %s67, %s68
      %p72 = pneg %p66
      %p73 = scmp.eq.s32.totalorder %s31, 1
      %p74 = por %p72, %p73
      %p75 = scmp.ne.s32.totalorder %s67, %s70
      %p76 = scmp.eq.s32.totalorder %s31, 0
      %p77 = por %p75, %p76
      %p78 = scmp.ne.s32.totalorder %s67, %s70
      %p79 = scmp.eq.s32.totalorder %s36, 1
      %p80 = por %p78, %p79
      %p81 = scmp.ne.s32.totalorder %s70, %s71
      %p82 = scmp.eq.s32.totalorder %s36, 0
      %p83 = por %p81, %p82
      %p84 = scmp.ne.s32.totalorder %s70, %s71
      %p85 = scmp.eq.s32.totalorder %s37, 1
      %p86 = por %p84, %p85
      %p88 = scmp.ne.s32.totalorder %s71, %s87
      %p89 = scmp.eq.s32.totalorder %s37, 0
      %p90 = por %p88, %p89
      %s91 = ssub.s32 %s31, %s38
      %p92 = scmp.eq.s32.totalorder %s91, 0
      %s94 = sadd.s32 %s93, 1
      %s95 = scalar_select %p92, %s93, %s94
      %p98 = pneg %p92
      %p99 = scmp.eq.s32.totalorder %s31, 1
      %p100 = por %p98, %p99
      %p101 = scmp.ne.s32.totalorder %s93, %s96
      %p102 = scmp.eq.s32.totalorder %s31, 0
      %p103 = por %p101, %p102
      %p104 = scmp.ne.s32.totalorder %s93, %s96
      %p105 = scmp.eq.s32.totalorder %s36, 1
      %p106 = por %p104, %p105
      %p107 = scmp.ne.s32.totalorder %s96, %s97
      %p108 = scmp.eq.s32.totalorder %s36, 0
      %p109 = por %p107, %p108
      %p110 = scmp.ne.s32.totalorder %s96, %s97
      %p111 = scmp.eq.s32.totalorder %s37, 1
      %p112 = por %p110, %p111
      %p114 = scmp.ne.s32.totalorder %s97, %s113
      %p115 = scmp.eq.s32.totalorder %s37, 0
      %p116 = por %p114, %p115
      %s117 = ssub.s32 %s31, %s38
      %p118 = scmp.eq.s32.totalorder %s117, 0
      %s120 = sadd.s32 %s119, 1
      %s121 = scalar_select %p118, %s119, %s120
      %p124 = pneg %p118
      %p125 = scmp.eq.s32.totalorder %s31, 1
      %p126 = por %p124, %p125
      %p127 = scmp.ne.s32.totalorder %s119, %s122
      %p128 = scmp.eq.s32.totalorder %s31, 0
      %p129 = por %p127, %p128
      %p130 = scmp.ne.s32.totalorder %s119, %s122
      %p131 = scmp.eq.s32.totalorder %s36, 1
      %p132 = por %p130, %p131
      %p133 = scmp.ne.s32.totalorder %s122, %s123
      %p134 = scmp.eq.s32.totalorder %s36, 0
      %p135 = por %p133, %p134
      %p136 = scmp.ne.s32.totalorder %s122, %s123
      %p137 = scmp.eq.s32.totalorder %s37, 1
      %p138 = por %p136, %p137
      %p140 = scmp.ne.s32.totalorder %s123, %s139
      %p141 = scmp.eq.s32.totalorder %s37, 0
      %p142 = por %p140, %p141
      %s144 = sadd.s32 %s143, 1
      %p147 = scmp.eq.s32.totalorder %s31, 1
      %p148 = scmp.ne.s32.totalorder %s143, %s145
      %p149 = scmp.eq.s32.totalorder %s31, 0
      %p150 = por %p148, %p149
      %p151 = scmp.ne.s32.totalorder %s143, %s145
      %p152 = scmp.eq.s32.totalorder %s36, 1
      %p153 = por %p151, %p152
      %p154 = scmp.ne.s32.totalorder %s145, %s146
      %p155 = scmp.eq.s32.totalorder %s36, 0
      %p156 = por %p154, %p155
      %p157 = scmp.ne.s32.totalorder %s145, %s146
      %p158 = scmp.eq.s32.totalorder %s37, 1
      %p159 = por %p157, %p158
      %p161 = scmp.ne.s32.totalorder %s146, %s160
      %p162 = scmp.eq.s32.totalorder %s37, 0
      %p163 = por %p161, %p162
      %s165 = sadd.s32 %s164, 1
      %p168 = scmp.eq.s32.totalorder %s31, 1
      %p169 = scmp.ne.s32.totalorder %s164, %s166
      %p170 = scmp.eq.s32.totalorder %s31, 0
      %p171 = por %p169, %p170
      %p172 = scmp.ne.s32.totalorder %s164, %s166
      %p173 = scmp.eq.s32.totalorder %s36, 1
      %p174 = por %p172, %p173
      %p175 = scmp.ne.s32.totalorder %s166, %s167
      %p176 = scmp.eq.s32.totalorder %s36, 0
      %p177 = por %p175, %p176
      %p178 = scmp.ne.s32.totalorder %s166, %s167
      %p179 = scmp.eq.s32.totalorder %s37, 1
      %p180 = por %p178, %p179
      %p182 = scmp.ne.s32.totalorder %s167, %s181
      %p183 = scmp.eq.s32.totalorder %s37, 0
      %p184 = por %p182, %p183
      %s186 = sadd.s32 %s185, 1
      %p189 = scmp.eq.s32.totalorder %s31, 1
      %p190 = scmp.ne.s32.totalorder %s185, %s187
      %p191 = scmp.eq.s32.totalorder %s31, 0
      %p192 = por %p190, %p191
      %p193 = scmp.ne.s32.totalorder %s185, %s187
      %p194 = scmp.eq.s32.totalorder %s36, 1
      %p195 = por %p193, %p194
      %p196 = scmp.ne.s32.totalorder %s187, %s188
      %p197 = scmp.eq.s32.totalorder %s36, 0
      %p198 = por %p196, %p197
      %p199 = scmp.ne.s32.totalorder %s187, %s188
      %p200 = scmp.eq.s32.totalorder %s37, 1
      %p201 = por %p199, %p200
      %p203 = scmp.ne.s32.totalorder %s188, %s202
      %p204 = scmp.eq.s32.totalorder %s37, 0
      %p205 = por %p203, %p204
      %s207 = sadd.s32 %s206, 1
      %p210 = scmp.eq.s32.totalorder %s31, 1
      %p211 = scmp.ne.s32.totalorder %s206, %s208
      %p212 = scmp.eq.s32.totalorder %s31, 0
      %p213 = por %p211, %p212
      %p214 = scmp.ne.s32.totalorder %s206, %s208
      %p215 = scmp.eq.s32.totalorder %s36, 1
      %p216 = por %p214, %p215
      %p217 = scmp.ne.s32.totalorder %s208, %s209
      %p218 = scmp.eq.s32.totalorder %s36, 0
      %p219 = por %p217, %p218
      %p220 = scmp.ne.s32.totalorder %s208, %s209
      %p221 = scmp.eq.s32.totalorder %s37, 1
      %p222 = por %p220, %p221
      %p224 = scmp.ne.s32.totalorder %s209, %s223
      %p225 = scmp.eq.s32.totalorder %s37, 0
      %p226 = por %p224, %p225
      %s228 = sadd.s32 %s227, 1
      %p231 = scmp.eq.s32.totalorder %s31, 1
      %p232 = scmp.ne.s32.totalorder %s227, %s229
      %p233 = scmp.eq.s32.totalorder %s31, 0
      %p234 = por %p232, %p233
      %p235 = scmp.ne.s32.totalorder %s227, %s229
      %p236 = scmp.eq.s32.totalorder %s36, 1
      %p237 = por %p235, %p236
      %p238 = scmp.ne.s32.totalorder %s229, %s230
      %p239 = scmp.eq.s32.totalorder %s36, 0
      %p240 = por %p238, %p239
      %p241 = scmp.ne.s32.totalorder %s229, %s230
      %p242 = scmp.eq.s32.totalorder %s37, 1
      %p243 = por %p241, %p242
      %p245 = scmp.ne.s32.totalorder %s230, %s244
      %p246 = scmp.eq.s32.totalorder %s37, 0
      %p247 = por %p245, %p246
      %s249 = sadd.s32 %s248, 1
      %p252 = scmp.eq.s32.totalorder %s31, 1
      %p253 = scmp.ne.s32.totalorder %s248, %s250
      %p254 = scmp.eq.s32.totalorder %s31, 0
      %p255 = por %p253, %p254
      %p256 = scmp.ne.s32.totalorder %s248, %s250
      %p257 = scmp.eq.s32.totalorder %s36, 1
      %p258 = por %p256, %p257
      %p259 = scmp.ne.s32.totalorder %s250, %s251
      %p260 = scmp.eq.s32.totalorder %s36, 0
      %p261 = por %p259, %p260
      %p262 = scmp.ne.s32.totalorder %s250, %s251
      %p263 = scmp.eq.s32.totalorder %s37, 1
      %p264 = por %p262, %p263
      %p266 = scmp.ne.s32.totalorder %s251, %s265
      %p267 = scmp.eq.s32.totalorder %s37, 0
      %p268 = por %p266, %p267
      %s270 = sadd.s32 %s269, 1
      %p273 = scmp.eq.s32.totalorder %s31, 1
      %p274 = scmp.ne.s32.totalorder %s269, %s271
      %p275 = scmp.eq.s32.totalorder %s31, 0
      %p276 = por %p274, %p275
      %p277 = scmp.ne.s32.totalorder %s269, %s271
      %p278 = scmp.eq.s32.totalorder %s36, 1
      %p279 = por %p277, %p278
      %p280 = scmp.ne.s32.totalorder %s271, %s272
      %p281 = scmp.eq.s32.totalorder %s36, 0
      %p282 = por %p280, %p281
      %p283 = scmp.ne.s32.totalorder %s271, %s272
      %p284 = scmp.eq.s32.totalorder %s37, 1
      %p285 = por %p283, %p284
      %p287 = scmp.ne.s32.totalorder %s272, %s286
      %p288 = scmp.eq.s32.totalorder %s37, 0
      %p289 = por %p287, %p288
      %s291 = sadd.s32 %s290, 1
      %p294 = scmp.eq.s32.totalorder %s31, 1
      %p295 = scmp.ne.s32.totalorder %s290, %s292
      %p296 = scmp.eq.s32.totalorder %s31, 0
      %p297 = por %p295, %p296
      %p298 = scmp.ne.s32.totalorder %s290, %s292
      %p299 = scmp.eq.s32.totalorder %s36, 1
      %p300 = por %p298, %p299
      %p301 = scmp.ne.s32.totalorder %s292, %s293
      %p302 = scmp.eq.s32.totalorder %s36, 0
      %p303 = por %p301, %p302
      %p304 = scmp.ne.s32.totalorder %s292, %s293
      %p305 = scmp.eq.s32.totalorder %s37, 1
      %p306 = por %p304, %p305
      %p308 = scmp.ne.s32.totalorder %s293, %s307
      %p309 = scmp.eq.s32.totalorder %s37, 0
      %p310 = por %p308, %p309
      %s312 = sadd.s32 %s311, 1
      %p315 = scmp.eq.s32.totalorder %s31, 1
      %p316 = scmp.ne.s32.totalorder %s311, %s313
      %p317 = scmp.eq.s32.totalorder %s31, 0
      %p318 = por %p316, %p317
      %p319 = scmp.ne.s32.totalorder %s311, %s313
      %p320 = scmp.eq.s32.totalorder %s36, 1
      %p321 = por %p319, %p320
      %p322 = scmp.ne.s32.totalorder %s313, %s314
      %p323 = scmp.eq.s32.totalorder %s36, 0
      %p324 = por %p322, %p323
      %p325 = scmp.ne.s32.totalorder %s313, %s314
      %p326 = scmp.eq.s32.totalorder %s37, 1
      %p327 = por %p325, %p326
      %p329 = scmp.ne.s32.totalorder %s314, %s328
      %p330 = scmp.eq.s32.totalorder %s37, 0
      %p331 = por %p329, %p330
      %s333 = sadd.s32 %s332, 1
      %p336 = scmp.eq.s32.totalorder %s31, 1
      %p337 = scmp.ne.s32.totalorder %s332, %s334
      %p338 = scmp.eq.s32.totalorder %s31, 0
      %p339 = por %p337, %p338
      %p340 = scmp.ne.s32.totalorder %s332, %s334
      %p341 = scmp.eq.s32.totalorder %s36, 1
      %p342 = por %p340, %p341
      %p343 = scmp.ne.s32.totalorder %s334, %s335
      %p344 = scmp.eq.s32.totalorder %s36, 0
      %p345 = por %p343, %p344
      %p346 = scmp.ne.s32.totalorder %s334, %s335
      %p347 = scmp.eq.s32.totalorder %s37, 1
      %p348 = por %p346, %p347
      %p350 = scmp.ne.s32.totalorder %s335, %s349
      %p351 = scmp.eq.s32.totalorder %s37, 0
      %p352 = por %p350, %p351
      %s354 = sadd.s32 %s353, 1
      %p357 = scmp.eq.s32.totalorder %s31, 1
      %p358 = scmp.ne.s32.totalorder %s353, %s355
      %p359 = scmp.eq.s32.totalorder %s31, 0
      %p360 = por %p358, %p359
      %p361 = scmp.ne.s32.totalorder %s353, %s355
      %p362 = scmp.eq.s32.totalorder %s36, 1
      %p363 = por %p361, %p362
      %p364 = scmp.ne.s32.totalorder %s355, %s356
      %p365 = scmp.eq.s32.totalorder %s36, 0
      %p366 = por %p364, %p365
      %p367 = scmp.ne.s32.totalorder %s355, %s356
      %p368 = scmp.eq.s32.totalorder %s37, 1
      %p369 = por %p367, %p368
      %p371 = scmp.ne.s32.totalorder %s356, %s370
      %p372 = scmp.eq.s32.totalorder %s37, 0
      %p373 = por %p371, %p372
      %s375 = sadd.s32 %s374, 1
      %p378 = scmp.eq.s32.totalorder %s31, 1
      %p379 = scmp.ne.s32.totalorder %s374, %s376
      %p380 = scmp.eq.s32.totalorder %s31, 0
      %p381 = por %p379, %p380
      %p382 = scmp.ne.s32.totalorder %s374, %s376
      %p383 = scmp.eq.s32.totalorder %s36, 1
      %p384 = por %p382, %p383
      %p385 = scmp.ne.s32.totalorder %s376, %s377
      %p386 = scmp.eq.s32.totalorder %s36, 0
      %p387 = por %p385, %p386
      %p388 = scmp.ne.s32.totalorder %s376, %s377
      %p389 = scmp.eq.s32.totalorder %s37, 1
      %p390 = por %p388, %p389
      %p392 = scmp.ne.s32.totalorder %s377, %s391
      %p393 = scmp.eq.s32.totalorder %s37, 0
      %p394 = por %p392, %p393
      %s396 = sadd.s32 %s395, 1
      %p399 = scmp.eq.s32.totalorder %s31, 1
      %p400 = scmp.ne.s32.totalorder %s395, %s397
      %p401 = scmp.eq.s32.totalorder %s31, 0
      %p402 = por %p400, %p401
      %p403 = scmp.ne.s32.totalorder %s395, %s397
      %p404 = scmp.eq.s32.totalorder %s36, 1
      %p405 = por %p403, %p404
      %p406 = scmp.ne.s32.totalorder %s397, %s398
      %p407 = scmp.eq.s32.totalorder %s36, 0
      %p408 = por %p406, %p407
      %p409 = scmp.ne.s32.totalorder %s397, %s398
      %p410 = scmp.eq.s32.totalorder %s37, 1
      %p411 = por %p409, %p410
      %p413 = scmp.ne.s32.totalorder %s398, %s412
      %p414 = scmp.eq.s32.totalorder %s37, 0
      %p415 = por %p413, %p414
      %s417 = sadd.s32 %s416, 1
      %p420 = scmp.eq.s32.totalorder %s31, 1
      %p421 = scmp.ne.s32.totalorder %s416, %s418
      %p422 = scmp.eq.s32.totalorder %s31, 0
      %p423 = por %p421, %p422
      %p424 = scmp.ne.s32.totalorder %s416, %s418
      %p425 = scmp.eq.s32.totalorder %s36, 1
      %p426 = por %p424, %p425
      %p427 = scmp.ne.s32.totalorder %s418, %s419
      %p428 = scmp.eq.s32.totalorder %s36, 0
      %p429 = por %p427, %p428
      %p430 = scmp.ne.s32.totalorder %s418, %s419
      %p431 = scmp.eq.s32.totalorder %s37, 1
      %p432 = por %p430, %p431
      %p434 = scmp.ne.s32.totalorder %s419, %s433
      %p435 = scmp.eq.s32.totalorder %s37, 0
      %p436 = por %p434, %p435
      %s438 = sadd.s32 %s437, 1
      %p441 = scmp.eq.s32.totalorder %s31, 1
      %p442 = scmp.ne.s32.totalorder %s437, %s439
      %p443 = scmp.eq.s32.totalorder %s31, 0
      %p444 = por %p442, %p443
      %p445 = scmp.ne.s32.totalorder %s437, %s439
      %p446 = scmp.eq.s32.totalorder %s36, 1
      %p447 = por %p445, %p446
      %p448 = scmp.ne.s32.totalorder %s439, %s440
      %p449 = scmp.eq.s32.totalorder %s36, 0
      %p450 = por %p448, %p449
      %p451 = scmp.ne.s32.totalorder %s439, %s440
      %p452 = scmp.eq.s32.totalorder %s37, 1
      %p453 = por %p451, %p452
      %p455 = scmp.ne.s32.totalorder %s440, %s454
      %p456 = scmp.eq.s32.totalorder %s37, 0
      %p457 = por %p455, %p456
      %s459 = sadd.s32 %s458, 1
      %p462 = scmp.eq.s32.totalorder %s31, 1
      %p463 = scmp.ne.s32.totalorder %s458, %s460
      %p464 = scmp.eq.s32.totalorder %s31, 0
      %p465 = por %p463, %p464
      %p466 = scmp.ne.s32.totalorder %s458, %s460
      %p467 = scmp.eq.s32.totalorder %s36, 1
      %p468 = por %p466, %p467
      %p469 = scmp.ne.s32.totalorder %s460, %s461
      %p470 = scmp.eq.s32.totalorder %s36, 0
      %p471 = por %p469, %p470
      %p472 = scmp.ne.s32.totalorder %s460, %s461
      %p473 = scmp.eq.s32.totalorder %s37, 1
      %p474 = por %p472, %p473
      %p476 = scmp.ne.s32.totalorder %s461, %s475
      %p477 = scmp.eq.s32.totalorder %s37, 0
      %p478 = por %p476, %p477
      %s480 = sadd.s32 %s479, 1
      %p483 = scmp.eq.s32.totalorder %s31, 1
      %p484 = scmp.ne.s32.totalorder %s479, %s481
      %p485 = scmp.eq.s32.totalorder %s31, 0
      %p486 = por %p484, %p485
      %p487 = scmp.ne.s32.totalorder %s479, %s481
      %p488 = scmp.eq.s32.totalorder %s36, 1
      %p489 = por %p487, %p488
      %p490 = scmp.ne.s32.totalorder %s481, %s482
      %p491 = scmp.eq.s32.totalorder %s36, 0
      %p492 = por %p490, %p491
      %p493 = scmp.ne.s32.totalorder %s481, %s482
      %p494 = scmp.eq.s32.totalorder %s37, 1
      %p495 = por %p493, %p494
      %p497 = scmp.ne.s32.totalorder %s482, %s496
      %p498 = scmp.eq.s32.totalorder %s37, 0
      %p499 = por %p497, %p498
      %s501 = sadd.s32 %s500, 1
      %p504 = scmp.eq.s32.totalorder %s31, 1
      %p505 = scmp.ne.s32.totalorder %s500, %s502
      %p506 = scmp.eq.s32.totalorder %s31, 0
      %p507 = por %p505, %p506
      %p508 = scmp.ne.s32.totalorder %s500, %s502
      %p509 = scmp.eq.s32.totalorder %s36, 1
      %p510 = por %p508, %p509
      %p511 = scmp.ne.s32.totalorder %s502, %s503
      %p512 = scmp.eq.s32.totalorder %s36, 0
      %p513 = por %p511, %p512
      %p514 = scmp.ne.s32.totalorder %s502, %s503
      %p515 = scmp.eq.s32.totalorder %s37, 1
      %p516 = por %p514, %p515
      %p518 = scmp.ne.s32.totalorder %s503, %s517
      %p519 = scmp.eq.s32.totalorder %s37, 0
      %p520 = por %p518, %p519
      %s521 = ssub.s32 %s31, %s38
      %p522 = scmp.eq.s32.totalorder %s521, 0
      %s524 = sadd.s32 %s523, 1
      %s525 = scalar_select %p522, %s523, %s524
      %p528 = pneg %p522
      %p529 = scmp.eq.s32.totalorder %s31, 1
      %p530 = por %p528, %p529
      %p531 = scmp.ne.s32.totalorder %s523, %s526
      %p532 = scmp.eq.s32.totalorder %s31, 0
      %p533 = por %p531, %p532
      %p534 = scmp.ne.s32.totalorder %s523, %s526
      %p535 = scmp.eq.s32.totalorder %s36, 1
      %p536 = por %p534, %p535
      %p537 = scmp.ne.s32.totalorder %s526, %s527
      %p538 = scmp.eq.s32.totalorder %s36, 0
      %p539 = por %p537, %p538
      %p540 = scmp.ne.s32.totalorder %s526, %s527
      %p541 = scmp.eq.s32.totalorder %s37, 1
      %p542 = por %p540, %p541
      %p544 = scmp.ne.s32.totalorder %s527, %s543
      %p545 = scmp.eq.s32.totalorder %s37, 0
      %p546 = por %p544, %p545
      %p547 = scmp.le.s32.totalorder 1, %s31
      %p548 = scmp.lt.s32.totalorder %s31, 3
      %p549 = pnand %p547, %p548
      %p550 = pneg %p549
      // Predicated region
      $region9: #{decoder_forward.1} parent=5 // pred_check
        _
      $region10: #{decoder_forward.1} parent=5 // pred_check_branch
        %552 = sbr.rel (%p549) target = $region12
      $region11: #{decoder_forward.1} parent=5 // pred_region
        %s553 = ssub.s32 %s31, 1
        // Predicated region
        $region13: #{decoder_forward.1} parent=11 // pred_check
          %p554 = pneg %p156
        $region14: #{decoder_forward.1} parent=11 // pred_check_branch
          %556 = sbr.rel (%p554) target = $region16
        $region15: #{decoder_forward.1} parent=11 // pred_region
          _
        $region16: #{decoder_forward.1} parent=11 // pred_fallthru
          _
        // Predicated region
        $region17: #{decoder_forward.1} parent=11 // pred_check
          %p557 = pneg %p177
        $region18: #{decoder_forward.1} parent=11 // pred_check_branch
          %559 = sbr.rel (%p557) target = $region20
        $region19: #{decoder_forward.1} parent=11 // pred_region
          _
        $region20: #{decoder_forward.1} parent=11 // pred_fallthru
          _
        // Predicated region
        $region21: #{decoder_forward.1} parent=11 // pred_check
          %p560 = pneg %p198
        $region22: #{decoder_forward.1} parent=11 // pred_check_branch
          %562 = sbr.rel (%p560) target = $region24
        $region23: #{decoder_forward.1} parent=11 // pred_region
          _
        $region24: #{decoder_forward.1} parent=11 // pred_fallthru
          _
        // Predicated region
        $region25: #{decoder_forward.1} parent=11 // pred_check
          %p563 = pneg %p219
        $region26: #{decoder_forward.1} parent=11 // pred_check_branch
          %565 = sbr.rel (%p563) target = $region28
        $region27: #{decoder_forward.1} parent=11 // pred_region
          _
        $region28: #{decoder_forward.1} parent=11 // pred_fallthru
          _
        // Predicated region
        $region29: #{decoder_forward.1} parent=11 // pred_check
          %p566 = pneg %p240
        $region30: #{decoder_forward.1} parent=11 // pred_check_branch
          %568 = sbr.rel (%p566) target = $region32
        $region31: #{decoder_forward.1} parent=11 // pred_region
          _
        $region32: #{decoder_forward.1} parent=11 // pred_fallthru
          _
        // Predicated region
        $region33: #{decoder_forward.1} parent=11 // pred_check
          %p569 = pneg %p261
        $region34: #{decoder_forward.1} parent=11 // pred_check_branch
          %571 = sbr.rel (%p569) target = $region36
        $region35: #{decoder_forward.1} parent=11 // pred_region
          _
        $region36: #{decoder_forward.1} parent=11 // pred_fallthru
          _
        // Predicated region
        $region37: #{decoder_forward.1} parent=11 // pred_check
          %p572 = pneg %p282
        $region38: #{decoder_forward.1} parent=11 // pred_check_branch
          %574 = sbr.rel (%p572) target = $region40
        $region39: #{decoder_forward.1} parent=11 // pred_region
          _
        $region40: #{decoder_forward.1} parent=11 // pred_fallthru
          _
        // Predicated region
        $region41: #{decoder_forward.1} parent=11 // pred_check
          %p575 = pneg %p303
        $region42: #{decoder_forward.1} parent=11 // pred_check_branch
          %577 = sbr.rel (%p575) target = $region44
        $region43: #{decoder_forward.1} parent=11 // pred_region
          _
        $region44: #{decoder_forward.1} parent=11 // pred_fallthru
          _
        // Predicated region
        $region45: #{decoder_forward.1} parent=11 // pred_check
          %p578 = pneg %p324
        $region46: #{decoder_forward.1} parent=11 // pred_check_branch
          %580 = sbr.rel (%p578) target = $region48
        $region47: #{decoder_forward.1} parent=11 // pred_region
          _
        $region48: #{decoder_forward.1} parent=11 // pred_fallthru
          _
        // Predicated region
        $region49: #{decoder_forward.1} parent=11 // pred_check
          %p581 = pneg %p345
        $region50: #{decoder_forward.1} parent=11 // pred_check_branch
          %583 = sbr.rel (%p581) target = $region52
        $region51: #{decoder_forward.1} parent=11 // pred_region
          _
        $region52: #{decoder_forward.1} parent=11 // pred_fallthru
          _
        // Predicated region
        $region53: #{decoder_forward.1} parent=11 // pred_check
          %p584 = pneg %p366
        $region54: #{decoder_forward.1} parent=11 // pred_check_branch
          %586 = sbr.rel (%p584) target = $region56
        $region55: #{decoder_forward.1} parent=11 // pred_region
          _
        $region56: #{decoder_forward.1} parent=11 // pred_fallthru
          _
        // Predicated region
        $region57: #{decoder_forward.1} parent=11 // pred_check
          %p587 = pneg %p387
        $region58: #{decoder_forward.1} parent=11 // pred_check_branch
          %589 = sbr.rel (%p587) target = $region60
        $region59: #{decoder_forward.1} parent=11 // pred_region
          _
        $region60: #{decoder_forward.1} parent=11 // pred_fallthru
          _
        // Predicated region
        $region61: #{decoder_forward.1} parent=11 // pred_check
          %p590 = pneg %p408
        $region62: #{decoder_forward.1} parent=11 // pred_check_branch
          %592 = sbr.rel (%p590) target = $region64
        $region63: #{decoder_forward.1} parent=11 // pred_region
          _
        $region64: #{decoder_forward.1} parent=11 // pred_fallthru
          _
        // Predicated region
        $region65: #{decoder_forward.1} parent=11 // pred_check
          %p593 = pneg %p429
        $region66: #{decoder_forward.1} parent=11 // pred_check_branch
          %595 = sbr.rel (%p593) target = $region68
        $region67: #{decoder_forward.1} parent=11 // pred_region
          _
        $region68: #{decoder_forward.1} parent=11 // pred_fallthru
          _
        // Predicated region
        $region69: #{decoder_forward.1} parent=11 // pred_check
          %p596 = pneg %p450
        $region70: #{decoder_forward.1} parent=11 // pred_check_branch
          %598 = sbr.rel (%p596) target = $region72
        $region71: #{decoder_forward.1} parent=11 // pred_region
          _
        $region72: #{decoder_forward.1} parent=11 // pred_fallthru
          _
        // Predicated region
        $region73: #{decoder_forward.1} parent=11 // pred_check
          %p599 = pneg %p471
        $region74: #{decoder_forward.1} parent=11 // pred_check_branch
          %601 = sbr.rel (%p599) target = $region76
        $region75: #{decoder_forward.1} parent=11 // pred_region
          _
        $region76: #{decoder_forward.1} parent=11 // pred_fallthru
          _
        // Predicated region
        $region77: #{decoder_forward.1} parent=11 // pred_check
          %p602 = pneg %p492
        $region78: #{decoder_forward.1} parent=11 // pred_check_branch
          %604 = sbr.rel (%p602) target = $region80
        $region79: #{decoder_forward.1} parent=11 // pred_region
          _
        $region80: #{decoder_forward.1} parent=11 // pred_fallthru
          _
        // Predicated region
        $region81: #{decoder_forward.1} parent=11 // pred_check
          %p605 = pneg %p513
        $region82: #{decoder_forward.1} parent=11 // pred_check_branch
          %607 = sbr.rel (%p605) target = $region84
        $region83: #{decoder_forward.1} parent=11 // pred_region
          _
        $region84: #{decoder_forward.1} parent=11 // pred_fallthru
          _
      $region12: #{decoder_forward.1} parent=5 // pred_fallthru
        _
      %p608 = scmp.lt.s32.totalorder %s31, 2
      // Predicated region
      $region85: #{decoder_forward.1} parent=5 // pred_check
        %p609 = pneg %p608
      $region86: #{decoder_forward.1} parent=5 // pred_check_branch
        %611 = sbr.rel (%p609) target = $region88
      $region87: #{decoder_forward.1} parent=5 // pred_region
        // Predicated region
        $region89: #{decoder_forward.1} parent=87 // pred_check
          %p612 = pneg %p51
        $region90: #{decoder_forward.1} parent=87 // pred_check_branch
          %614 = sbr.rel (%p612) target = $region92
        $region91: #{decoder_forward.1} parent=87 // pred_region
          %p615 = scmp.lt.s32.totalorder %s31, 1
          %s616 = scalar_select %p615, %s31, 1
          %s617 = smul.addr %s616, 8
          %s618 = scalar_lea.vmem %s0, %s617
        $region92: #{decoder_forward.1} parent=87 // pred_fallthru
          _
        // Predicated region
        $region93: #{decoder_forward.1} parent=87 // pred_check
          %p619 = pneg %p77
        $region94: #{decoder_forward.1} parent=87 // pred_check_branch
          %621 = sbr.rel (%p619) target = $region96
        $region95: #{decoder_forward.1} parent=87 // pred_region
          %p622 = scmp.lt.s32.totalorder %s31, 1
          %s623 = scalar_select %p622, %s31, 1
          %s624 = smul.addr %s623, 2
          %s625 = smul.addr %s624, 8
          %s626 = scalar_lea.vmem %s1, %s625
        $region96: #{decoder_forward.1} parent=87 // pred_fallthru
          _
        // Predicated region
        $region97: #{decoder_forward.1} parent=87 // pred_check
          %p627 = pneg %p103
        $region98: #{decoder_forward.1} parent=87 // pred_check_branch
          %629 = sbr.rel (%p627) target = $region100
        $region99: #{decoder_forward.1} parent=87 // pred_region
          %p630 = scmp.lt.s32.totalorder %s31, 1
          %s631 = scalar_select %p630, %s31, 1
          %s632 = smul.addr %s631, 8
          %s633 = scalar_lea.vmem %s2, %s632
        $region100: #{decoder_forward.1} parent=87 // pred_fallthru
          _
        // Predicated region
        $region101: #{decoder_forward.1} parent=87 // pred_check
          %p634 = pneg %p129
        $region102: #{decoder_forward.1} parent=87 // pred_check_branch
          %636 = sbr.rel (%p634) target = $region104
        $region103: #{decoder_forward.1} parent=87 // pred_region
          %p637 = scmp.lt.s32.totalorder %s31, 1
          %s638 = scalar_select %p637, %s31, 1
          %s639 = smul.addr %s638, 8
          %s640 = scalar_lea.vmem %s3, %s639
        $region104: #{decoder_forward.1} parent=87 // pred_fallthru
          _
      $region88: #{decoder_forward.1} parent=5 // pred_fallthru
        _
      %p641 = scmp.le.s32.totalorder 1, %s31
      %p642 = scmp.lt.s32.totalorder %s31, 3
      %p643 = pnand %p641, %p642
      %p644 = pneg %p643
      // Predicated region
      $region105: #{decoder_forward.1} parent=5 // pred_check
        _
      $region106: #{decoder_forward.1} parent=5 // pred_check_branch
        %646 = sbr.rel (%p643) target = $region108
      $region107: #{decoder_forward.1} parent=5 // pred_region
        %s647 = ssub.s32 %s31, 1
        %p648 = scmp.lt.s32.totalorder %s36, 1
        %s649 = scalar_select %p648, %s36, 1
        %s650 = smul.addr %s649, 8
        %s651 = scalar_lea.vmem %s0, %s650
        %p652 = pneg %p57
        %p653 = pneg %p54
        %p654 = scmp.lt.s32.totalorder %s36, 1
        %s655 = scalar_select %p654, %s36, 1
        %s656 = smul.addr %s655, 2
        %s657 = smul.addr %s656, 8
        %s658 = scalar_lea.vmem %s1, %s657
        %p659 = pneg %p83
        %p660 = pneg %p80
        %p661 = scmp.lt.s32.totalorder %s36, 1
        %s662 = scalar_select %p661, %s36, 1
        %s663 = smul.addr %s662, 8
        %s664 = scalar_lea.vmem %s2, %s663
        %p665 = pneg %p109
        %p666 = pneg %p106
        %p667 = scmp.lt.s32.totalorder %s36, 1
        %s668 = scalar_select %p667, %s36, 1
        %s669 = smul.addr %s668, 8
        %s670 = scalar_lea.vmem %s3, %s669
        %p671 = pneg %p135
        %p672 = pneg %p132
        %p673 = pneg %p156
        %p674 = pneg %p153
        %p675 = pneg %p177
        %p676 = pneg %p174
        %p677 = pneg %p198
        %p678 = pneg %p195
        %p679 = pneg %p219
        %p680 = pneg %p216
        %p681 = pneg %p240
        %p682 = pneg %p237
        %p683 = pneg %p261
        %p684 = pneg %p258
        %p685 = pneg %p282
        %p686 = pneg %p279
        %p687 = pneg %p303
        %p688 = pneg %p300
        %p689 = pneg %p324
        %p690 = pneg %p321
        %p691 = pneg %p345
        %p692 = pneg %p342
        %p693 = pneg %p366
        %p694 = pneg %p363
        %p695 = pneg %p387
        %p696 = pneg %p384
        %p697 = pneg %p408
        %p698 = pneg %p405
        %p699 = pneg %p429
        %p700 = pneg %p426
        %p701 = pneg %p450
        %p702 = pneg %p447
        %p703 = pneg %p471
        %p704 = pneg %p468
        %p705 = pneg %p492
        %p706 = pneg %p489
        %p707 = pneg %p513
        %p708 = pneg %p510
        %p709 = pneg %p539
        %p710 = pneg %p536
        %s711 = sand.u32 %s526, 1
        %s712 = scalar_lea.sflag [#allocation3], %s711
        %s713 = sand.u32 %s526, 1
        %s714 = smul.addr %s713, 8
        %s715 = scalar_lea.vmem [#allocation2], %s714
        %p716 = scmp.lt.s32.totalorder %s36, 1
        %s717 = scalar_select %p716, %s36, 1
        %s718 = smul.addr %s717, 8
        %s719 = scalar_lea.vmem %s0, %s718
        %p720 = scmp.lt.s32.totalorder %s36, 1
        %s721 = scalar_select %p720, %s36, 1
        %s722 = smul.addr %s721, 2
        %s723 = smul.addr %s722, 8
        %s724 = scalar_lea.vmem %s1, %s723
        %p725 = scmp.lt.s32.totalorder %s36, 1
        %s726 = scalar_select %p725, %s36, 1
        %s727 = smul.addr %s726, 8
        %s728 = scalar_lea.vmem %s2, %s727
        %p729 = scmp.lt.s32.totalorder %s36, 1
        %s730 = scalar_select %p729, %s36, 1
        %s731 = smul.addr %s730, 8
        %s732 = scalar_lea.vmem %s3, %s731
        %v733 = vld [vmem:[%s719] sm:$0xff]
        %v734 = vld [vmem:[%s724] sm:$0xff]
        %v735 = vld [vmem:[%s724 + $0x8] sm:$0xff]
        %v736 = vld [vmem:[%s728] sm:$0xff]
        %v737 = vld [vmem:[%s732] sm:$0xff]
        %v738 = vld [vmem:[%s4] sm:$0x1]
        %v739 = vld [vmem:[%s5] sm:$0x1]
        %vm740 = vcmask 261120
        %v741 = vsel %vm740, %v733, 0.0
        %742 = vadd.xlane.f32.xlu0 %v741
        %v743 = vpop.xlane.xlu0 %742
        %v744 = vrcp.pop 32.0
        %v745 = vmul.f32 %v743, %v744
        %v746 = vsub.f32 %v733, %v745
        %v747 = vmul.f32 %v746, %v746
        %v748 = vsel %vm740, %v747, 0.0
        %749 = vadd.xlane.f32.xlu0 %v748
        %v750 = vpop.xlane.xlu0 %749
        %v751 = vrcp.pop 31.0
        %v752 = vmul.f32 %v750, %v751
        %v753 = vrsqrt.pop %v752
        %v754 = vmul.f32 %v752, %v753
        %vm755 = vcmp.eq.f32.partialorder %v752, inf
        %v756 = vsel %vm755, %v752, %v754
        %vm757 = vcmp.eq.f32.partialorder %v752, 0.0
        %v758 = vand.u32 %v752, 2147483648
        %v759 = vsel %vm757, %v758, %v756
        %v760 = vadd.f32 %v759, 1e-06
        %v761 = vrcp.pop %v760
        %v763 = vlaneseq
        %v764 = vshrl.u32 %v763, 7
        %v765 = vsub.s32 0, %v764
        %v766 = vrot.slane %v738, %v765
        %v768 = vmul.f32 %v766, %v746
        %v769 = vmul.f32 %v768, %v761
        %v771 = vlaneseq
        %v772 = vshrl.u32 %v771, 7
        %v773 = vsub.s32 0, %v772
        %v774 = vrot.slane %v739, %v773
        %v776 = vadd.f32 %v769, %v774
        %v777 = vld [vmem:[%s6] sm:$0xff]
        %v778 = vld [vmem:[%s6 + $0x8] sm:$0xff]
        %v779 = vld [vmem:[%s6 + $0x10] sm:$0xff]
        %v780 = vld [vmem:[%s6 + $0x18] sm:$0xff]
        %v781 = vld [vmem:[%s7] sm:$0x1]
        %v783 = vlaneseq
        %v784 = vshrl.u32 %v783, 7
        %v785 = vsub.s32 0, %v784
        %v786 = vrot.slane %v781, %v785
        %v789 = vsel %vm740, %v776, 0
        %791 = vmatprep.subr.mxu0 0.0
        %792 = vmatpush1.msra.mxu0 0.0
        %793 = vmatprep.subr.mxu0 0.0
        %794 = vmatpush1.msra.mxu0 0.0
        %795 = vmatprep.subr.mxu0 0.0
        %796 = vmatpush1.msra.mxu0 0.0
        %797 = vmatprep.subr.mxu0 0.0
        %798 = vmatpush1.msra.mxu0 0.0
        %799 = vmatprep.subr.mxu0 0.0
        %800 = vmatpush1.msra.mxu0 0.0
        %801 = vmatprep.subr.mxu0 0.0
        %802 = vmatpush1.msra.mxu0 0.0
        %803 = vmatprep.subr.mxu0 0.0
        %804 = vmatpush1.msra.mxu0 0.0
        %805 = vmatprep.subr.mxu0 0.0
        %806 = vmatpush1.msra.mxu0 0.0
        %807 = vmatprep.subr.mxu0 0.0
        %808 = vmatpush1.msra.mxu0 0.0
        %809 = vmatprep.subr.mxu0 0.0
        %810 = vmatpush1.msra.mxu0 0.0
        %811 = vmatprep.subr.mxu0 0.0
        %812 = vmatpush1.msra.mxu0 0.0
        %813 = vmatprep.subr.mxu0 0.0
        %814 = vmatpush1.msra.mxu0 0.0
        %815 = vmatprep.subr.mxu0 0.0
        %816 = vmatpush1.msra.mxu0 %v780
        %817 = vmatprep.subr.mxu0 0.0
        %818 = vmatpush1.msra.mxu0 %v779
        %819 = vmatprep.subr.mxu0 0.0
        %820 = vmatpush1.msra.mxu0 %v778
        %821 = vmatprep.subr.mxu0 0.0
        %822 = vmatpush1.msra.mxu0 %v777
        %823 = vmatprep.subr.mxu0 0.0
        %824 = vmatpush2.msra.mxu0 0.0
        %825 = vmatprep.subr.mxu0 0.0
        %826 = vmatpush2.msra.mxu0 0.0
        %827 = vmatprep.subr.mxu0 0.0
        %828 = vmatpush2.msra.mxu0 0.0
        %829 = vmatprep.subr.mxu0 0.0
        %830 = vmatpush2.msra.mxu0 0.0
        %831 = vmatprep.subr.mxu0 0.0
        %832 = vmatpush2.msra.mxu0 0.0
        %833 = vmatprep.subr.mxu0 0.0
        %834 = vmatpush2.msra.mxu0 0.0
        %835 = vmatprep.subr.mxu0 0.0
        %836 = vmatpush2.msra.mxu0 0.0
        %837 = vmatprep.subr.mxu0 0.0
        %838 = vmatpush2.msra.mxu0 0.0
        %839 = vmatprep.subr.mxu0 0.0
        %840 = vmatpush2.msra.mxu0 0.0
        %841 = vmatprep.subr.mxu0 0.0
        %842 = vmatpush2.msra.mxu0 0.0
        %843 = vmatprep.subr.mxu0 0.0
        %844 = vmatpush2.msra.mxu0 0.0
        %845 = vmatprep.subr.mxu0 0.0
        %846 = vmatpush2.msra.mxu0 0.0
        %847 = vmatprep.subr.mxu0 0.0
        %848 = vmatpush2.msra.mxu0 0.0
        %849 = vmatprep.subr.mxu0 0.0
        %850 = vmatpush2.msra.mxu0 0.0
        %851 = vmatprep.subr.mxu0 0.0
        %852 = vmatpush2.msra.mxu0 0.0
        %853 = vmatprep.subr.mxu0 0.0
        %854 = vmatpush2.msra.mxu0 0.0
        %855 = vmatprep.mubr.f32.mxu0 0.0
        %856 = vmatmul.mubr.f32.gmra.mxu0 %v789
        %v857 = vpop.f32.mrf.mxu0
        %v858 = vadd.f32 %v786, %v857
        %v859 = vpop.f32.mrf.mxu0
        %860 = vdwg.mxu0
        %v861 = vld [vmem:[%s8] sm:$0xff]
        %v862 = vld [vmem:[%s8 + $0x8] sm:$0xff]
        %v863 = vld [vmem:[%s8 + $0x10] sm:$0xff]
        %v864 = vld [vmem:[%s8 + $0x18] sm:$0xff]
        %v865 = vld [vmem:[%s9] sm:$0x1]
        %867 = vrot.lane.b32.xlu0 %v858, 96
        %v868 = vpop.permute.xlu0 %867
        %vm869 = vcmask 64512
        %v870 = vsel %vm869, %v858, 0
        %v872 = vsel %vm869, %v868, 0
        %874 = vmatprep.subr.mxu0 0.0
        %875 = vmatpush1.xpose.msra.mxu0 0.0
        %876 = vmatprep.subr.mxu0 0.0
        %877 = vmatpush1.xpose.msra.mxu0 0.0
        %878 = vmatprep.subr.mxu0 0.0
        %879 = vmatpush1.xpose.msra.mxu0 0.0
        %880 = vmatprep.subr.mxu0 0.0
        %881 = vmatpush1.xpose.msra.mxu0 0.0
        %882 = vmatprep.subr.mxu0 0.0
        %883 = vmatpush1.xpose.msra.mxu0 0.0
        %884 = vmatprep.subr.mxu0 0.0
        %885 = vmatpush1.xpose.msra.mxu0 0.0
        %886 = vmatprep.subr.mxu0 0.0
        %887 = vmatpush1.xpose.msra.mxu0 0.0
        %888 = vmatprep.subr.mxu0 0.0
        %889 = vmatpush1.xpose.msra.mxu0 0.0
        %890 = vmatprep.subr.mxu0 0.0
        %891 = vmatpush1.xpose.msra.mxu0 0.0
        %892 = vmatprep.subr.mxu0 0.0
        %893 = vmatpush1.xpose.msra.mxu0 0.0
        %894 = vmatprep.subr.mxu0 0.0
        %895 = vmatpush1.xpose.msra.mxu0 0.0
        %896 = vmatprep.subr.mxu0 0.0
        %897 = vmatpush1.xpose.msra.mxu0 0.0
        %898 = vmatprep.subr.mxu0 0.0
        %899 = vmatpush1.xpose.msra.mxu0 0.0
        %900 = vmatprep.subr.mxu0 0.0
        %901 = vmatpush1.xpose.msra.mxu0 0.0
        %902 = vmatprep.subr.mxu0 0.0
        %903 = vmatpush1.xpose.msra.mxu0 0.0
        %904 = vmatprep.subr.mxu0 0.0
        %905 = vmatpush1.xpose.msra.mxu0 %v872
        %906 = vmatprep.subr.mxu0 0.0
        %907 = vmatpush2.xpose.msra.mxu0 0.0
        %908 = vmatprep.subr.mxu0 0.0
        %909 = vmatpush2.xpose.msra.mxu0 0.0
        %910 = vmatprep.subr.mxu0 0.0
        %911 = vmatpush2.xpose.msra.mxu0 0.0
        %912 = vmatprep.subr.mxu0 0.0
        %913 = vmatpush2.xpose.msra.mxu0 0.0
        %914 = vmatprep.subr.mxu0 0.0
        %915 = vmatpush2.xpose.msra.mxu0 0.0
        %916 = vmatprep.subr.mxu0 0.0
        %917 = vmatpush2.xpose.msra.mxu0 0.0
        %918 = vmatprep.subr.mxu0 0.0
        %919 = vmatpush2.xpose.msra.mxu0 0.0
        %920 = vmatprep.subr.mxu0 0.0
        %921 = vmatpush2.xpose.msra.mxu0 0.0
        %922 = vmatprep.subr.mxu0 0.0
        %923 = vmatpush2.xpose.msra.mxu0 0.0
        %924 = vmatprep.subr.mxu0 0.0
        %925 = vmatpush2.xpose.msra.mxu0 0.0
        %926 = vmatprep.subr.mxu0 0.0
        %927 = vmatpush2.xpose.msra.mxu0 0.0
        %928 = vmatprep.subr.mxu0 0.0
        %929 = vmatpush2.xpose.msra.mxu0 0.0
        %930 = vmatprep.subr.mxu0 0.0
        %931 = vmatpush2.xpose.msra.mxu0 0.0
        %932 = vmatprep.subr.mxu0 0.0
        %933 = vmatpush2.xpose.msra.mxu0 0.0
        %934 = vmatprep.subr.mxu0 0.0
        %935 = vmatpush2.xpose.msra.mxu0 0.0
        %936 = vmatprep.subr.mxu0 0.0
        %937 = vmatpush2.xpose.msra.mxu0 0.0
        %938 = vmatprep.mubr.f32.mxu0 0.0
        %939 = vmatmul.mubr.f32.gmra.mxu0 %v870
        %v940 = vpop.f32.mrf.mxu0
        %v941 = vadd.f32 0.0, %v940
        %v942 = vpop.f32.mrf.mxu0
        %943 = vdwg.mxu0
        %v944 = vmul.f32 %v941, 0.35355338
        %v945 = vadd.f32 %v944, %v736
        %v946 = vsel %vm869, %v945, -inf
        %947 = vmax.xlane.f32.xlu0 %v946
        %v948 = vpop.xlane.xlu0 %947
        %v949 = vsub.f32 %v945, %v948
        %v950 = vmul.f32 %v949, 1.442695
        %v951 = vpow.pop %v950
        %v952 = vsel %vm869, %v951, 0.0
        %953 = vadd.xlane.f32.xlu0 %v952
        %v954 = vpop.xlane.xlu0 %953
        %v955 = vrcp.pop %v954
        %v956 = vmul.f32 %v951, %v955
        %957 = vrot.lane.b32.xlu0 %v858, 64
        %v958 = vpop.permute.xlu0 %957
        %v961 = vsel %vm869, %v956, 0
        %963 = vmatprep.subr.mxu0 0.0
        %964 = vmatpush1.msra.mxu0 0.0
        %965 = vmatprep.subr.mxu0 0.0
        %966 = vmatpush1.msra.mxu0 0.0
        %967 = vmatprep.subr.mxu0 0.0
        %968 = vmatpush1.msra.mxu0 0.0
        %969 = vmatprep.subr.mxu0 0.0
        %970 = vmatpush1.msra.mxu0 0.0
        %971 = vmatprep.subr.mxu0 0.0
        %972 = vmatpush1.msra.mxu0 0.0
        %973 = vmatprep.subr.mxu0 0.0
        %974 = vmatpush1.msra.mxu0 0.0
        %975 = vmatprep.subr.mxu0 0.0
        %976 = vmatpush1.msra.mxu0 0.0
        %977 = vmatprep.subr.mxu0 0.0
        %978 = vmatpush1.msra.mxu0 0.0
        %979 = vmatprep.subr.mxu0 0.0
        %980 = vmatpush1.msra.mxu0 0.0
        %981 = vmatprep.subr.mxu0 0.0
        %982 = vmatpush1.msra.mxu0 0.0
        %983 = vmatprep.subr.mxu0 0.0
        %984 = vmatpush1.msra.mxu0 0.0
        %985 = vmatprep.subr.mxu0 0.0
        %986 = vmatpush1.msra.mxu0 0.0
        %987 = vmatprep.subr.mxu0 0.0
        %988 = vmatpush1.msra.mxu0 0.0
        %989 = vmatprep.subr.mxu0 0.0
        %990 = vmatpush1.msra.mxu0 0.0
        %991 = vmatprep.subr.mxu0 0.0
        %992 = vmatpush1.msra.mxu0 0.0
        %993 = vmatprep.subr.mxu0 0.0
        %994 = vmatpush1.msra.mxu0 %v958
        %995 = vmatprep.subr.mxu0 0.0
        %996 = vmatpush2.msra.mxu0 0.0
        %997 = vmatprep.subr.mxu0 0.0
        %998 = vmatpush2.msra.mxu0 0.0
        %999 = vmatprep.subr.mxu0 0.0
        %1000 = vmatpush2.msra.mxu0 0.0
        %1001 = vmatprep.subr.mxu0 0.0
        %1002 = vmatpush2.msra.mxu0 0.0
        %1003 = vmatprep.subr.mxu0 0.0
        %1004 = vmatpush2.msra.mxu0 0.0
        %1005 = vmatprep.subr.mxu0 0.0
        %1006 = vmatpush2.msra.mxu0 0.0
        %1007 = vmatprep.subr.mxu0 0.0
        %1008 = vmatpush2.msra.mxu0 0.0
        %1009 = vmatprep.subr.mxu0 0.0
        %1010 = vmatpush2.msra.mxu0 0.0
        %1011 = vmatprep.subr.mxu0 0.0
        %1012 = vmatpush2.msra.mxu0 0.0
        %1013 = vmatprep.subr.mxu0 0.0
        %1014 = vmatpush2.msra.mxu0 0.0
        %1015 = vmatprep.subr.mxu0 0.0
        %1016 = vmatpush2.msra.mxu0 0.0
        %1017 = vmatprep.subr.mxu0 0.0
        %1018 = vmatpush2.msra.mxu0 0.0
        %1019 = vmatprep.subr.mxu0 0.0
        %1020 = vmatpush2.msra.mxu0 0.0
        %1021 = vmatprep.subr.mxu0 0.0
        %1022 = vmatpush2.msra.mxu0 0.0
        %1023 = vmatprep.subr.mxu0 0.0
        %1024 = vmatpush2.msra.mxu0 0.0
        %1025 = vmatprep.subr.mxu0 0.0
        %1026 = vmatpush2.msra.mxu0 0.0
        %1027 = vmatprep.mubr.f32.mxu0 0.0
        %1028 = vmatmul.mubr.f32.gmra.mxu0 %v961
        %v1029 = vpop.f32.mrf.mxu0
        %v1030 = vadd.f32 0.0, %v1029
        %v1031 = vpop.f32.mrf.mxu0
        %1032 = vdwg.mxu0
        %1033 = vrot.lane.b32.xlu0 %v858, 120
        %v1034 = vpop.permute.xlu0 %1033
        %1035 = vrot.lane.b32.xlu0 %v858, 88
        %v1036 = vpop.permute.xlu0 %1035
        %v1037 = vsel %vm869, %v1034, 0
        %v1039 = vsel %vm869, %v1036, 0
        %1041 = vmatprep.subr.mxu0 0.0
        %1042 = vmatpush1.xpose.msra.mxu0 0.0
        %1043 = vmatprep.subr.mxu0 0.0
        %1044 = vmatpush1.xpose.msra.mxu0 0.0
        %1045 = vmatprep.subr.mxu0 0.0
        %1046 = vmatpush1.xpose.msra.mxu0 0.0
        %1047 = vmatprep.subr.mxu0 0.0
        %1048 = vmatpush1.xpose.msra.mxu0 0.0
        %1049 = vmatprep.subr.mxu0 0.0
        %1050 = vmatpush1.xpose.msra.mxu0 0.0
        %1051 = vmatprep.subr.mxu0 0.0
        %1052 = vmatpush1.xpose.msra.mxu0 0.0
        %1053 = vmatprep.subr.mxu0 0.0
        %1054 = vmatpush1.xpose.msra.mxu0 0.0
        %1055 = vmatprep.subr.mxu0 0.0
        %1056 = vmatpush1.xpose.msra.mxu0 0.0
        %1057 = vmatprep.subr.mxu0 0.0
        %1058 = vmatpush1.xpose.msra.mxu0 0.0
        %1059 = vmatprep.subr.mxu0 0.0
        %1060 = vmatpush1.xpose.msra.mxu0 0.0
        %1061 = vmatprep.subr.mxu0 0.0
        %1062 = vmatpush1.xpose.msra.mxu0 0.0
        %1063 = vmatprep.subr.mxu0 0.0
        %1064 = vmatpush1.xpose.msra.mxu0 0.0
        %1065 = vmatprep.subr.mxu0 0.0
        %1066 = vmatpush1.xpose.msra.mxu0 0.0
        %1067 = vmatprep.subr.mxu0 0.0
        %1068 = vmatpush1.xpose.msra.mxu0 0.0
        %1069 = vmatprep.subr.mxu0 0.0
        %1070 = vmatpush1.xpose.msra.mxu0 0.0
        %1071 = vmatprep.subr.mxu0 0.0
        %1072 = vmatpush1.xpose.msra.mxu0 %v1039
        %1073 = vmatprep.subr.mxu0 0.0
        %1074 = vmatpush2.xpose.msra.mxu0 0.0
        %1075 = vmatprep.subr.mxu0 0.0
        %1076 = vmatpush2.xpose.msra.mxu0 0.0
        %1077 = vmatprep.subr.mxu0 0.0
        %1078 = vmatpush2.xpose.msra.mxu0 0.0
        %1079 = vmatprep.subr.mxu0 0.0
        %1080 = vmatpush2.xpose.msra.mxu0 0.0
        %1081 = vmatprep.subr.mxu0 0.0
        %1082 = vmatpush2.xpose.msra.mxu0 0.0
        %1083 = vmatprep.subr.mxu0 0.0
        %1084 = vmatpush2.xpose.msra.mxu0 0.0
        %1085 = vmatprep.subr.mxu0 0.0
        %1086 = vmatpush2.xpose.msra.mxu0 0.0
        %1087 = vmatprep.subr.mxu0 0.0
        %1088 = vmatpush2.xpose.msra.mxu0 0.0
        %1089 = vmatprep.subr.mxu0 0.0
        %1090 = vmatpush2.xpose.msra.mxu0 0.0
        %1091 = vmatprep.subr.mxu0 0.0
        %1092 = vmatpush2.xpose.msra.mxu0 0.0
        %1093 = vmatprep.subr.mxu0 0.0
        %1094 = vmatpush2.xpose.msra.mxu0 0.0
        %1095 = vmatprep.subr.mxu0 0.0
        %1096 = vmatpush2.xpose.msra.mxu0 0.0
        %1097 = vmatprep.subr.mxu0 0.0
        %1098 = vmatpush2.xpose.msra.mxu0 0.0
        %1099 = vmatprep.subr.mxu0 0.0
        %1100 = vmatpush2.xpose.msra.mxu0 0.0
        %1101 = vmatprep.subr.mxu0 0.0
        %1102 = vmatpush2.xpose.msra.mxu0 0.0
        %1103 = vmatprep.subr.mxu0 0.0
        %1104 = vmatpush2.xpose.msra.mxu0 0.0
        %1105 = vmatprep.mubr.f32.mxu0 0.0
        %1106 = vmatmul.mubr.f32.gmra.mxu0 %v1037
        %v1107 = vpop.f32.mrf.mxu0
        %v1108 = vadd.f32 0.0, %v1107
        %v1109 = vpop.f32.mrf.mxu0
        %1110 = vdwg.mxu0
        %v1111 = vmul.f32 %v1108, 0.35355338
        %v1112 = vadd.f32 %v1111, %v736
        %v1113 = vsel %vm869, %v1112, -inf
        %1114 = vmax.xlane.f32.xlu0 %v1113
        %v1115 = vpop.xlane.xlu0 %1114
        %v1116 = vsub.f32 %v1112, %v1115
        %v1117 = vmul.f32 %v1116, 1.442695
        %v1118 = vpow.pop %v1117
        %v1119 = vsel %vm869, %v1118, 0.0
        %1120 = vadd.xlane.f32.xlu0 %v1119
        %v1121 = vpop.xlane.xlu0 %1120
        %v1122 = vrcp.pop %v1121
        %v1123 = vmul.f32 %v1118, %v1122
        %1124 = vrot.lane.b32.xlu0 %v858, 56
        %v1125 = vpop.permute.xlu0 %1124
        %v1128 = vsel %vm869, %v1123, 0
        %1130 = vmatprep.subr.mxu0 0.0
        %1131 = vmatpush1.msra.mxu0 0.0
        %1132 = vmatprep.subr.mxu0 0.0
        %1133 = vmatpush1.msra.mxu0 0.0
        %1134 = vmatprep.subr.mxu0 0.0
        %1135 = vmatpush1.msra.mxu0 0.0
        %1136 = vmatprep.subr.mxu0 0.0
        %1137 = vmatpush1.msra.mxu0 0.0
        %1138 = vmatprep.subr.mxu0 0.0
        %1139 = vmatpush1.msra.mxu0 0.0
        %1140 = vmatprep.subr.mxu0 0.0
        %1141 = vmatpush1.msra.mxu0 0.0
        %1142 = vmatprep.subr.mxu0 0.0
        %1143 = vmatpush1.msra.mxu0 0.0
        %1144 = vmatprep.subr.mxu0 0.0
        %1145 = vmatpush1.msra.mxu0 0.0
        %1146 = vmatprep.subr.mxu0 0.0
        %1147 = vmatpush1.msra.mxu0 0.0
        %1148 = vmatprep.subr.mxu0 0.0
        %1149 = vmatpush1.msra.mxu0 0.0
        %1150 = vmatprep.subr.mxu0 0.0
        %1151 = vmatpush1.msra.mxu0 0.0
        %1152 = vmatprep.subr.mxu0 0.0
        %1153 = vmatpush1.msra.mxu0 0.0
        %1154 = vmatprep.subr.mxu0 0.0
        %1155 = vmatpush1.msra.mxu0 0.0
        %1156 = vmatprep.subr.mxu0 0.0
        %1157 = vmatpush1.msra.mxu0 0.0
        %1158 = vmatprep.subr.mxu0 0.0
        %1159 = vmatpush1.msra.mxu0 0.0
        %1160 = vmatprep.subr.mxu0 0.0
        %1161 = vmatpush1.msra.mxu0 %v1125
        %1162 = vmatprep.subr.mxu0 0.0
        %1163 = vmatpush2.msra.mxu0 0.0
        %1164 = vmatprep.subr.mxu0 0.0
        %1165 = vmatpush2.msra.mxu0 0.0
        %1166 = vmatprep.subr.mxu0 0.0
        %1167 = vmatpush2.msra.mxu0 0.0
        %1168 = vmatprep.subr.mxu0 0.0
        %1169 = vmatpush2.msra.mxu0 0.0
        %1170 = vmatprep.subr.mxu0 0.0
        %1171 = vmatpush2.msra.mxu0 0.0
        %1172 = vmatprep.subr.mxu0 0.0
        %1173 = vmatpush2.msra.mxu0 0.0
        %1174 = vmatprep.subr.mxu0 0.0
        %1175 = vmatpush2.msra.mxu0 0.0
        %1176 = vmatprep.subr.mxu0 0.0
        %1177 = vmatpush2.msra.mxu0 0.0
        %1178 = vmatprep.subr.mxu0 0.0
        %1179 = vmatpush2.msra.mxu0 0.0
        %1180 = vmatprep.subr.mxu0 0.0
        %1181 = vmatpush2.msra.mxu0 0.0
        %1182 = vmatprep.subr.mxu0 0.0
        %1183 = vmatpush2.msra.mxu0 0.0
        %1184 = vmatprep.subr.mxu0 0.0
        %1185 = vmatpush2.msra.mxu0 0.0
        %1186 = vmatprep.subr.mxu0 0.0
        %1187 = vmatpush2.msra.mxu0 0.0
        %1188 = vmatprep.subr.mxu0 0.0
        %1189 = vmatpush2.msra.mxu0 0.0
        %1190 = vmatprep.subr.mxu0 0.0
        %1191 = vmatpush2.msra.mxu0 0.0
        %1192 = vmatprep.subr.mxu0 0.0
        %1193 = vmatpush2.msra.mxu0 0.0
        %1194 = vmatprep.mubr.f32.mxu0 0.0
        %1195 = vmatmul.mubr.f32.gmra.mxu0 %v1128
        %v1196 = vpop.f32.mrf.mxu0
        %v1197 = vadd.f32 0.0, %v1196
        %v1198 = vpop.f32.mrf.mxu0
        %1199 = vdwg.mxu0
        %v1201 = vsel %vm869, %v1197, 0
        %1203 = vmatprep.subr.mxu0 0.0
        %1204 = vmatpush1.msra.mxu0 0.0
        %1205 = vmatprep.subr.mxu0 0.0
        %1206 = vmatpush1.msra.mxu0 0.0
        %1207 = vmatprep.subr.mxu0 0.0
        %1208 = vmatpush1.msra.mxu0 0.0
        %1209 = vmatprep.subr.mxu0 0.0
        %1210 = vmatpush1.msra.mxu0 0.0
        %1211 = vmatprep.subr.mxu0 0.0
        %1212 = vmatpush1.msra.mxu0 0.0
        %1213 = vmatprep.subr.mxu0 0.0
        %1214 = vmatpush1.msra.mxu0 0.0
        %1215 = vmatprep.subr.mxu0 0.0
        %1216 = vmatpush1.msra.mxu0 0.0
        %1217 = vmatprep.subr.mxu0 0.0
        %1218 = vmatpush1.msra.mxu0 0.0
        %1219 = vmatprep.subr.mxu0 0.0
        %1220 = vmatpush1.msra.mxu0 0.0
        %1221 = vmatprep.subr.mxu0 0.0
        %1222 = vmatpush1.msra.mxu0 0.0
        %1223 = vmatprep.subr.mxu0 0.0
        %1224 = vmatpush1.msra.mxu0 0.0
        %1225 = vmatprep.subr.mxu0 0.0
        %1226 = vmatpush1.msra.mxu0 0.0
        %1227 = vmatprep.subr.mxu0 0.0
        %1228 = vmatpush1.msra.mxu0 0.0
        %1229 = vmatprep.subr.mxu0 0.0
        %1230 = vmatpush1.msra.mxu0 0.0
        %1231 = vmatprep.subr.mxu0 0.0
        %1232 = vmatpush1.msra.mxu0 0.0
        %1233 = vmatprep.subr.mxu0 0.0
        %1234 = vmatpush1.msra.mxu0 %v862
        %1235 = vmatprep.subr.mxu0 0.0
        %1236 = vmatpush2.msra.mxu0 0.0
        %1237 = vmatprep.subr.mxu0 0.0
        %1238 = vmatpush2.msra.mxu0 0.0
        %1239 = vmatprep.subr.mxu0 0.0
        %1240 = vmatpush2.msra.mxu0 0.0
        %1241 = vmatprep.subr.mxu0 0.0
        %1242 = vmatpush2.msra.mxu0 0.0
        %1243 = vmatprep.subr.mxu0 0.0
        %1244 = vmatpush2.msra.mxu0 0.0
        %1245 = vmatprep.subr.mxu0 0.0
        %1246 = vmatpush2.msra.mxu0 0.0
        %1247 = vmatprep.subr.mxu0 0.0
        %1248 = vmatpush2.msra.mxu0 0.0
        %1249 = vmatprep.subr.mxu0 0.0
        %1250 = vmatpush2.msra.mxu0 0.0
        %1251 = vmatprep.subr.mxu0 0.0
        %1252 = vmatpush2.msra.mxu0 0.0
        %1253 = vmatprep.subr.mxu0 0.0
        %1254 = vmatpush2.msra.mxu0 0.0
        %1255 = vmatprep.subr.mxu0 0.0
        %1256 = vmatpush2.msra.mxu0 0.0
        %1257 = vmatprep.subr.mxu0 0.0
        %1258 = vmatpush2.msra.mxu0 0.0
        %1259 = vmatprep.subr.mxu0 0.0
        %1260 = vmatpush2.msra.mxu0 0.0
        %1261 = vmatprep.subr.mxu0 0.0
        %1262 = vmatpush2.msra.mxu0 0.0
        %1263 = vmatprep.subr.mxu0 0.0
        %1264 = vmatpush2.msra.mxu0 0.0
        %1265 = vmatprep.subr.mxu0 0.0
        %1266 = vmatpush2.msra.mxu0 0.0
        %1267 = vmatprep.mubr.f32.mxu0 0.0
        %1268 = vmatmul.mubr.f32.gmra.mxu0 %v1201
        %v1269 = vpop.f32.mrf.mxu0
        %v1270 = vadd.f32 0.0, %v1269
        %v1271 = vpop.f32.mrf.mxu0
        %1272 = vdwg.mxu0
        %v1274 = vsel %vm869, %v1030, 0
        %1276 = vmatprep.subr.mxu0 0.0
        %1277 = vmatpush1.msra.mxu0 0.0
        %1278 = vmatprep.subr.mxu0 0.0
        %1279 = vmatpush1.msra.mxu0 0.0
        %1280 = vmatprep.subr.mxu0 0.0
        %1281 = vmatpush1.msra.mxu0 0.0
        %1282 = vmatprep.subr.mxu0 0.0
        %1283 = vmatpush1.msra.mxu0 0.0
        %1284 = vmatprep.subr.mxu0 0.0
        %1285 = vmatpush1.msra.mxu0 0.0
        %1286 = vmatprep.subr.mxu0 0.0
        %1287 = vmatpush1.msra.mxu0 0.0
        %1288 = vmatprep.subr.mxu0 0.0
        %1289 = vmatpush1.msra.mxu0 0.0
        %1290 = vmatprep.subr.mxu0 0.0
        %1291 = vmatpush1.msra.mxu0 0.0
        %1292 = vmatprep.subr.mxu0 0.0
        %1293 = vmatpush1.msra.mxu0 0.0
        %1294 = vmatprep.subr.mxu0 0.0
        %1295 = vmatpush1.msra.mxu0 0.0
        %1296 = vmatprep.subr.mxu0 0.0
        %1297 = vmatpush1.msra.mxu0 0.0
        %1298 = vmatprep.subr.mxu0 0.0
        %1299 = vmatpush1.msra.mxu0 0.0
        %1300 = vmatprep.subr.mxu0 0.0
        %1301 = vmatpush1.msra.mxu0 0.0
        %1302 = vmatprep.subr.mxu0 0.0
        %1303 = vmatpush1.msra.mxu0 0.0
        %1304 = vmatprep.subr.mxu0 0.0
        %1305 = vmatpush1.msra.mxu0 0.0
        %1306 = vmatprep.subr.mxu0 0.0
        %1307 = vmatpush1.msra.mxu0 %v861
        %1308 = vmatprep.subr.mxu0 0.0
        %1309 = vmatpush2.msra.mxu0 0.0
        %1310 = vmatprep.subr.mxu0 0.0
        %1311 = vmatpush2.msra.mxu0 0.0
        %1312 = vmatprep.subr.mxu0 0.0
        %1313 = vmatpush2.msra.mxu0 0.0
        %1314 = vmatprep.subr.mxu0 0.0
        %1315 = vmatpush2.msra.mxu0 0.0
        %1316 = vmatprep.subr.mxu0 0.0
        %1317 = vmatpush2.msra.mxu0 0.0
        %1318 = vmatprep.subr.mxu0 0.0
        %1319 = vmatpush2.msra.mxu0 0.0
        %1320 = vmatprep.subr.mxu0 0.0
        %1321 = vmatpush2.msra.mxu0 0.0
        %1322 = vmatprep.subr.mxu0 0.0
        %1323 = vmatpush2.msra.mxu0 0.0
        %1324 = vmatprep.subr.mxu0 0.0
        %1325 = vmatpush2.msra.mxu0 0.0
        %1326 = vmatprep.subr.mxu0 0.0
        %1327 = vmatpush2.msra.mxu0 0.0
        %1328 = vmatprep.subr.mxu0 0.0
        %1329 = vmatpush2.msra.mxu0 0.0
        %1330 = vmatprep.subr.mxu0 0.0
        %1331 = vmatpush2.msra.mxu0 0.0
        %1332 = vmatprep.subr.mxu0 0.0
        %1333 = vmatpush2.msra.mxu0 0.0
        %1334 = vmatprep.subr.mxu0 0.0
        %1335 = vmatpush2.msra.mxu0 0.0
        %1336 = vmatprep.subr.mxu0 0.0
        %1337 = vmatpush2.msra.mxu0 0.0
        %1338 = vmatprep.subr.mxu0 0.0
        %1339 = vmatpush2.msra.mxu0 0.0
        %1340 = vmatprep.mubr.f32.mxu0 0.0
        %1341 = vmatmul.mubr.f32.gmra.mxu0 %v1274
        %v1342 = vpop.f32.mrf.mxu0
        %v1343 = vadd.f32 %v1270, %v1342
        %v1344 = vpop.f32.mrf.mxu0
        %1345 = vdwg.mxu0
        %1346 = vrot.lane.b32.xlu0 %v858, 112
        %v1347 = vpop.permute.xlu0 %1346
        %1348 = vrot.lane.b32.xlu0 %v858, 80
        %v1349 = vpop.permute.xlu0 %1348
        %v1350 = vsel %vm869, %v1347, 0
        %v1352 = vsel %vm869, %v1349, 0
        %1354 = vmatprep.subr.mxu0 0.0
        %1355 = vmatpush1.xpose.msra.mxu0 0.0
        %1356 = vmatprep.subr.mxu0 0.0
        %1357 = vmatpush1.xpose.msra.mxu0 0.0
        %1358 = vmatprep.subr.mxu0 0.0
        %1359 = vmatpush1.xpose.msra.mxu0 0.0
        %1360 = vmatprep.subr.mxu0 0.0
        %1361 = vmatpush1.xpose.msra.mxu0 0.0
        %1362 = vmatprep.subr.mxu0 0.0
        %1363 = vmatpush1.xpose.msra.mxu0 0.0
        %1364 = vmatprep.subr.mxu0 0.0
        %1365 = vmatpush1.xpose.msra.mxu0 0.0
        %1366 = vmatprep.subr.mxu0 0.0
        %1367 = vmatpush1.xpose.msra.mxu0 0.0
        %1368 = vmatprep.subr.mxu0 0.0
        %1369 = vmatpush1.xpose.msra.mxu0 0.0
        %1370 = vmatprep.subr.mxu0 0.0
        %1371 = vmatpush1.xpose.msra.mxu0 0.0
        %1372 = vmatprep.subr.mxu0 0.0
        %1373 = vmatpush1.xpose.msra.mxu0 0.0
        %1374 = vmatprep.subr.mxu0 0.0
        %1375 = vmatpush1.xpose.msra.mxu0 0.0
        %1376 = vmatprep.subr.mxu0 0.0
        %1377 = vmatpush1.xpose.msra.mxu0 0.0
        %1378 = vmatprep.subr.mxu0 0.0
        %1379 = vmatpush1.xpose.msra.mxu0 0.0
        %1380 = vmatprep.subr.mxu0 0.0
        %1381 = vmatpush1.xpose.msra.mxu0 0.0
        %1382 = vmatprep.subr.mxu0 0.0
        %1383 = vmatpush1.xpose.msra.mxu0 0.0
        %1384 = vmatprep.subr.mxu0 0.0
        %1385 = vmatpush1.xpose.msra.mxu0 %v1352
        %1386 = vmatprep.subr.mxu0 0.0
        %1387 = vmatpush2.xpose.msra.mxu0 0.0
        %1388 = vmatprep.subr.mxu0 0.0
        %1389 = vmatpush2.xpose.msra.mxu0 0.0
        %1390 = vmatprep.subr.mxu0 0.0
        %1391 = vmatpush2.xpose.msra.mxu0 0.0
        %1392 = vmatprep.subr.mxu0 0.0
        %1393 = vmatpush2.xpose.msra.mxu0 0.0
        %1394 = vmatprep.subr.mxu0 0.0
        %1395 = vmatpush2.xpose.msra.mxu0 0.0
        %1396 = vmatprep.subr.mxu0 0.0
        %1397 = vmatpush2.xpose.msra.mxu0 0.0
        %1398 = vmatprep.subr.mxu0 0.0
        %1399 = vmatpush2.xpose.msra.mxu0 0.0
        %1400 = vmatprep.subr.mxu0 0.0
        %1401 = vmatpush2.xpose.msra.mxu0 0.0
        %1402 = vmatprep.subr.mxu0 0.0
        %1403 = vmatpush2.xpose.msra.mxu0 0.0
        %1404 = vmatprep.subr.mxu0 0.0
        %1405 = vmatpush2.xpose.msra.mxu0 0.0
        %1406 = vmatprep.subr.mxu0 0.0
        %1407 = vmatpush2.xpose.msra.mxu0 0.0
        %1408 = vmatprep.subr.mxu0 0.0
        %1409 = vmatpush2.xpose.msra.mxu0 0.0
        %1410 = vmatprep.subr.mxu0 0.0
        %1411 = vmatpush2.xpose.msra.mxu0 0.0
        %1412 = vmatprep.subr.mxu0 0.0
        %1413 = vmatpush2.xpose.msra.mxu0 0.0
        %1414 = vmatprep.subr.mxu0 0.0
        %1415 = vmatpush2.xpose.msra.mxu0 0.0
        %1416 = vmatprep.subr.mxu0 0.0
        %1417 = vmatpush2.xpose.msra.mxu0 0.0
        %1418 = vmatprep.mubr.f32.mxu0 0.0
        %1419 = vmatmul.mubr.f32.gmra.mxu0 %v1350
        %v1420 = vpop.f32.mrf.mxu0
        %v1421 = vadd.f32 0.0, %v1420
        %v1422 = vpop.f32.mrf.mxu0
        %1423 = vdwg.mxu0
        %v1424 = vmul.f32 %v1421, 0.35355338
        %v1425 = vadd.f32 %v1424, %v736
        %v1426 = vsel %vm869, %v1425, -inf
        %1427 = vmax.xlane.f32.xlu0 %v1426
        %v1428 = vpop.xlane.xlu0 %1427
        %v1429 = vsub.f32 %v1425, %v1428
        %v1430 = vmul.f32 %v1429, 1.442695
        %v1431 = vpow.pop %v1430
        %v1432 = vsel %vm869, %v1431, 0.0
        %1433 = vadd.xlane.f32.xlu0 %v1432
        %v1434 = vpop.xlane.xlu0 %1433
        %v1435 = vrcp.pop %v1434
        %v1436 = vmul.f32 %v1431, %v1435
        %1437 = vrot.lane.b32.xlu0 %v858, 48
        %v1438 = vpop.permute.xlu0 %1437
        %v1441 = vsel %vm869, %v1436, 0
        %1443 = vmatprep.subr.mxu0 0.0
        %1444 = vmatpush1.msra.mxu0 0.0
        %1445 = vmatprep.subr.mxu0 0.0
        %1446 = vmatpush1.msra.mxu0 0.0
        %1447 = vmatprep.subr.mxu0 0.0
        %1448 = vmatpush1.msra.mxu0 0.0
        %1449 = vmatprep.subr.mxu0 0.0
        %1450 = vmatpush1.msra.mxu0 0.0
        %1451 = vmatprep.subr.mxu0 0.0
        %1452 = vmatpush1.msra.mxu0 0.0
        %1453 = vmatprep.subr.mxu0 0.0
        %1454 = vmatpush1.msra.mxu0 0.0
        %1455 = vmatprep.subr.mxu0 0.0
        %1456 = vmatpush1.msra.mxu0 0.0
        %1457 = vmatprep.subr.mxu0 0.0
        %1458 = vmatpush1.msra.mxu0 0.0
        %1459 = vmatprep.subr.mxu0 0.0
        %1460 = vmatpush1.msra.mxu0 0.0
        %1461 = vmatprep.subr.mxu0 0.0
        %1462 = vmatpush1.msra.mxu0 0.0
        %1463 = vmatprep.subr.mxu0 0.0
        %1464 = vmatpush1.msra.mxu0 0.0
        %1465 = vmatprep.subr.mxu0 0.0
        %1466 = vmatpush1.msra.mxu0 0.0
        %1467 = vmatprep.subr.mxu0 0.0
        %1468 = vmatpush1.msra.mxu0 0.0
        %1469 = vmatprep.subr.mxu0 0.0
        %1470 = vmatpush1.msra.mxu0 0.0
        %1471 = vmatprep.subr.mxu0 0.0
        %1472 = vmatpush1.msra.mxu0 0.0
        %1473 = vmatprep.subr.mxu0 0.0
        %1474 = vmatpush1.msra.mxu0 %v1438
        %1475 = vmatprep.subr.mxu0 0.0
        %1476 = vmatpush2.msra.mxu0 0.0
        %1477 = vmatprep.subr.mxu0 0.0
        %1478 = vmatpush2.msra.mxu0 0.0
        %1479 = vmatprep.subr.mxu0 0.0
        %1480 = vmatpush2.msra.mxu0 0.0
        %1481 = vmatprep.subr.mxu0 0.0
        %1482 = vmatpush2.msra.mxu0 0.0
        %1483 = vmatprep.subr.mxu0 0.0
        %1484 = vmatpush2.msra.mxu0 0.0
        %1485 = vmatprep.subr.mxu0 0.0
        %1486 = vmatpush2.msra.mxu0 0.0
        %1487 = vmatprep.subr.mxu0 0.0
        %1488 = vmatpush2.msra.mxu0 0.0
        %1489 = vmatprep.subr.mxu0 0.0
        %1490 = vmatpush2.msra.mxu0 0.0
        %1491 = vmatprep.subr.mxu0 0.0
        %1492 = vmatpush2.msra.mxu0 0.0
        %1493 = vmatprep.subr.mxu0 0.0
        %1494 = vmatpush2.msra.mxu0 0.0
        %1495 = vmatprep.subr.mxu0 0.0
        %1496 = vmatpush2.msra.mxu0 0.0
        %1497 = vmatprep.subr.mxu0 0.0
        %1498 = vmatpush2.msra.mxu0 0.0
        %1499 = vmatprep.subr.mxu0 0.0
        %1500 = vmatpush2.msra.mxu0 0.0
        %1501 = vmatprep.subr.mxu0 0.0
        %1502 = vmatpush2.msra.mxu0 0.0
        %1503 = vmatprep.subr.mxu0 0.0
        %1504 = vmatpush2.msra.mxu0 0.0
        %1505 = vmatprep.subr.mxu0 0.0
        %1506 = vmatpush2.msra.mxu0 0.0
        %1507 = vmatprep.mubr.f32.mxu0 0.0
        %1508 = vmatmul.mubr.f32.gmra.mxu0 %v1441
        %v1509 = vpop.f32.mrf.mxu0
        %v1510 = vadd.f32 0.0, %v1509
        %v1511 = vpop.f32.mrf.mxu0
        %1512 = vdwg.mxu0
        %v1514 = vsel %vm869, %v1510, 0
        %1516 = vmatprep.subr.mxu0 0.0
        %1517 = vmatpush1.msra.mxu0 0.0
        %1518 = vmatprep.subr.mxu0 0.0
        %1519 = vmatpush1.msra.mxu0 0.0
        %1520 = vmatprep.subr.mxu0 0.0
        %1521 = vmatpush1.msra.mxu0 0.0
        %1522 = vmatprep.subr.mxu0 0.0
        %1523 = vmatpush1.msra.mxu0 0.0
        %1524 = vmatprep.subr.mxu0 0.0
        %1525 = vmatpush1.msra.mxu0 0.0
        %1526 = vmatprep.subr.mxu0 0.0
        %1527 = vmatpush1.msra.mxu0 0.0
        %1528 = vmatprep.subr.mxu0 0.0
        %1529 = vmatpush1.msra.mxu0 0.0
        %1530 = vmatprep.subr.mxu0 0.0
        %1531 = vmatpush1.msra.mxu0 0.0
        %1532 = vmatprep.subr.mxu0 0.0
        %1533 = vmatpush1.msra.mxu0 0.0
        %1534 = vmatprep.subr.mxu0 0.0
        %1535 = vmatpush1.msra.mxu0 0.0
        %1536 = vmatprep.subr.mxu0 0.0
        %1537 = vmatpush1.msra.mxu0 0.0
        %1538 = vmatprep.subr.mxu0 0.0
        %1539 = vmatpush1.msra.mxu0 0.0
        %1540 = vmatprep.subr.mxu0 0.0
        %1541 = vmatpush1.msra.mxu0 0.0
        %1542 = vmatprep.subr.mxu0 0.0
        %1543 = vmatpush1.msra.mxu0 0.0
        %1544 = vmatprep.subr.mxu0 0.0
        %1545 = vmatpush1.msra.mxu0 0.0
        %1546 = vmatprep.subr.mxu0 0.0
        %1547 = vmatpush1.msra.mxu0 %v863
        %1548 = vmatprep.subr.mxu0 0.0
        %1549 = vmatpush2.msra.mxu0 0.0
        %1550 = vmatprep.subr.mxu0 0.0
        %1551 = vmatpush2.msra.mxu0 0.0
        %1552 = vmatprep.subr.mxu0 0.0
        %1553 = vmatpush2.msra.mxu0 0.0
        %1554 = vmatprep.subr.mxu0 0.0
        %1555 = vmatpush2.msra.mxu0 0.0
        %1556 = vmatprep.subr.mxu0 0.0
        %1557 = vmatpush2.msra.mxu0 0.0
        %1558 = vmatprep.subr.mxu0 0.0
        %1559 = vmatpush2.msra.mxu0 0.0
        %1560 = vmatprep.subr.mxu0 0.0
        %1561 = vmatpush2.msra.mxu0 0.0
        %1562 = vmatprep.subr.mxu0 0.0
        %1563 = vmatpush2.msra.mxu0 0.0
        %1564 = vmatprep.subr.mxu0 0.0
        %1565 = vmatpush2.msra.mxu0 0.0
        %1566 = vmatprep.subr.mxu0 0.0
        %1567 = vmatpush2.msra.mxu0 0.0
        %1568 = vmatprep.subr.mxu0 0.0
        %1569 = vmatpush2.msra.mxu0 0.0
        %1570 = vmatprep.subr.mxu0 0.0
        %1571 = vmatpush2.msra.mxu0 0.0
        %1572 = vmatprep.subr.mxu0 0.0
        %1573 = vmatpush2.msra.mxu0 0.0
        %1574 = vmatprep.subr.mxu0 0.0
        %1575 = vmatpush2.msra.mxu0 0.0
        %1576 = vmatprep.subr.mxu0 0.0
        %1577 = vmatpush2.msra.mxu0 0.0
        %1578 = vmatprep.subr.mxu0 0.0
        %1579 = vmatpush2.msra.mxu0 0.0
        %1580 = vmatprep.mubr.f32.mxu0 0.0
        %1581 = vmatmul.mubr.f32.gmra.mxu0 %v1514
        %v1582 = vpop.f32.mrf.mxu0
        %v1583 = vadd.f32 0.0, %v1582
        %v1584 = vpop.f32.mrf.mxu0
        %1585 = vdwg.mxu0
        %v1586 = vadd.f32 %v1343, %v1583
        %1587 = vrot.lane.b32.xlu0 %v858, 104
        %v1588 = vpop.permute.xlu0 %1587
        %1589 = vrot.lane.b32.xlu0 %v858, 72
        %v1590 = vpop.permute.xlu0 %1589
        %v1591 = vsel %vm869, %v1588, 0
        %v1593 = vsel %vm869, %v1590, 0
        %1595 = vmatprep.subr.mxu0 0.0
        %1596 = vmatpush1.xpose.msra.mxu0 0.0
        %1597 = vmatprep.subr.mxu0 0.0
        %1598 = vmatpush1.xpose.msra.mxu0 0.0
        %1599 = vmatprep.subr.mxu0 0.0
        %1600 = vmatpush1.xpose.msra.mxu0 0.0
        %1601 = vmatprep.subr.mxu0 0.0
        %1602 = vmatpush1.xpose.msra.mxu0 0.0
        %1603 = vmatprep.subr.mxu0 0.0
        %1604 = vmatpush1.xpose.msra.mxu0 0.0
        %1605 = vmatprep.subr.mxu0 0.0
        %1606 = vmatpush1.xpose.msra.mxu0 0.0
        %1607 = vmatprep.subr.mxu0 0.0
        %1608 = vmatpush1.xpose.msra.mxu0 0.0
        %1609 = vmatprep.subr.mxu0 0.0
        %1610 = vmatpush1.xpose.msra.mxu0 0.0
        %1611 = vmatprep.subr.mxu0 0.0
        %1612 = vmatpush1.xpose.msra.mxu0 0.0
        %1613 = vmatprep.subr.mxu0 0.0
        %1614 = vmatpush1.xpose.msra.mxu0 0.0
        %1615 = vmatprep.subr.mxu0 0.0
        %1616 = vmatpush1.xpose.msra.mxu0 0.0
        %1617 = vmatprep.subr.mxu0 0.0
        %1618 = vmatpush1.xpose.msra.mxu0 0.0
        %1619 = vmatprep.subr.mxu0 0.0
        %1620 = vmatpush1.xpose.msra.mxu0 0.0
        %1621 = vmatprep.subr.mxu0 0.0
        %1622 = vmatpush1.xpose.msra.mxu0 0.0
        %1623 = vmatprep.subr.mxu0 0.0
        %1624 = vmatpush1.xpose.msra.mxu0 0.0
        %1625 = vmatprep.subr.mxu0 0.0
        %1626 = vmatpush1.xpose.msra.mxu0 %v1593
        %1627 = vmatprep.subr.mxu0 0.0
        %1628 = vmatpush2.xpose.msra.mxu0 0.0
        %1629 = vmatprep.subr.mxu0 0.0
        %1630 = vmatpush2.xpose.msra.mxu0 0.0
        %1631 = vmatprep.subr.mxu0 0.0
        %1632 = vmatpush2.xpose.msra.mxu0 0.0
        %1633 = vmatprep.subr.mxu0 0.0
        %1634 = vmatpush2.xpose.msra.mxu0 0.0
        %1635 = vmatprep.subr.mxu0 0.0
        %1636 = vmatpush2.xpose.msra.mxu0 0.0
        %1637 = vmatprep.subr.mxu0 0.0
        %1638 = vmatpush2.xpose.msra.mxu0 0.0
        %1639 = vmatprep.subr.mxu0 0.0
        %1640 = vmatpush2.xpose.msra.mxu0 0.0
        %1641 = vmatprep.subr.mxu0 0.0
        %1642 = vmatpush2.xpose.msra.mxu0 0.0
        %1643 = vmatprep.subr.mxu0 0.0
        %1644 = vmatpush2.xpose.msra.mxu0 0.0
        %1645 = vmatprep.subr.mxu0 0.0
        %1646 = vmatpush2.xpose.msra.mxu0 0.0
        %1647 = vmatprep.subr.mxu0 0.0
        %1648 = vmatpush2.xpose.msra.mxu0 0.0
        %1649 = vmatprep.subr.mxu0 0.0
        %1650 = vmatpush2.xpose.msra.mxu0 0.0
        %1651 = vmatprep.subr.mxu0 0.0
        %1652 = vmatpush2.xpose.msra.mxu0 0.0
        %1653 = vmatprep.subr.mxu0 0.0
        %1654 = vmatpush2.xpose.msra.mxu0 0.0
        %1655 = vmatprep.subr.mxu0 0.0
        %1656 = vmatpush2.xpose.msra.mxu0 0.0
        %1657 = vmatprep.subr.mxu0 0.0
        %1658 = vmatpush2.xpose.msra.mxu0 0.0
        %1659 = vmatprep.mubr.f32.mxu0 0.0
        %1660 = vmatmul.mubr.f32.gmra.mxu0 %v1591
        %v1661 = vpop.f32.mrf.mxu0
        %v1662 = vadd.f32 0.0, %v1661
        %v1663 = vpop.f32.mrf.mxu0
        %1664 = vdwg.mxu0
        %v1665 = vmul.f32 %v1662, 0.35355338
        %v1666 = vadd.f32 %v1665, %v736
        %v1667 = vsel %vm869, %v1666, -inf
        %1668 = vmax.xlane.f32.xlu0 %v1667
        %v1669 = vpop.xlane.xlu0 %1668
        %v1670 = vsub.f32 %v1666, %v1669
        %v1671 = vmul.f32 %v1670, 1.442695
        %v1672 = vpow.pop %v1671
        %v1673 = vsel %vm869, %v1672, 0.0
        %1674 = vadd.xlane.f32.xlu0 %v1673
        %v1675 = vpop.xlane.xlu0 %1674
        %v1676 = vrcp.pop %v1675
        %v1677 = vmul.f32 %v1672, %v1676
        %1678 = vrot.lane.b32.xlu0 %v858, 40
        %v1679 = vpop.permute.xlu0 %1678
        %v1682 = vsel %vm869, %v1677, 0
        %1684 = vmatprep.subr.mxu0 0.0
        %1685 = vmatpush1.msra.mxu0 0.0
        %1686 = vmatprep.subr.mxu0 0.0
        %1687 = vmatpush1.msra.mxu0 0.0
        %1688 = vmatprep.subr.mxu0 0.0
        %1689 = vmatpush1.msra.mxu0 0.0
        %1690 = vmatprep.subr.mxu0 0.0
        %1691 = vmatpush1.msra.mxu0 0.0
        %1692 = vmatprep.subr.mxu0 0.0
        %1693 = vmatpush1.msra.mxu0 0.0
        %1694 = vmatprep.subr.mxu0 0.0
        %1695 = vmatpush1.msra.mxu0 0.0
        %1696 = vmatprep.subr.mxu0 0.0
        %1697 = vmatpush1.msra.mxu0 0.0
        %1698 = vmatprep.subr.mxu0 0.0
        %1699 = vmatpush1.msra.mxu0 0.0
        %1700 = vmatprep.subr.mxu0 0.0
        %1701 = vmatpush1.msra.mxu0 0.0
        %1702 = vmatprep.subr.mxu0 0.0
        %1703 = vmatpush1.msra.mxu0 0.0
        %1704 = vmatprep.subr.mxu0 0.0
        %1705 = vmatpush1.msra.mxu0 0.0
        %1706 = vmatprep.subr.mxu0 0.0
        %1707 = vmatpush1.msra.mxu0 0.0
        %1708 = vmatprep.subr.mxu0 0.0
        %1709 = vmatpush1.msra.mxu0 0.0
        %1710 = vmatprep.subr.mxu0 0.0
        %1711 = vmatpush1.msra.mxu0 0.0
        %1712 = vmatprep.subr.mxu0 0.0
        %1713 = vmatpush1.msra.mxu0 0.0
        %1714 = vmatprep.subr.mxu0 0.0
        %1715 = vmatpush1.msra.mxu0 %v1679
        %1716 = vmatprep.subr.mxu0 0.0
        %1717 = vmatpush2.msra.mxu0 0.0
        %1718 = vmatprep.subr.mxu0 0.0
        %1719 = vmatpush2.msra.mxu0 0.0
        %1720 = vmatprep.subr.mxu0 0.0
        %1721 = vmatpush2.msra.mxu0 0.0
        %1722 = vmatprep.subr.mxu0 0.0
        %1723 = vmatpush2.msra.mxu0 0.0
        %1724 = vmatprep.subr.mxu0 0.0
        %1725 = vmatpush2.msra.mxu0 0.0
        %1726 = vmatprep.subr.mxu0 0.0
        %1727 = vmatpush2.msra.mxu0 0.0
        %1728 = vmatprep.subr.mxu0 0.0
        %1729 = vmatpush2.msra.mxu0 0.0
        %1730 = vmatprep.subr.mxu0 0.0
        %1731 = vmatpush2.msra.mxu0 0.0
        %1732 = vmatprep.subr.mxu0 0.0
        %1733 = vmatpush2.msra.mxu0 0.0
        %1734 = vmatprep.subr.mxu0 0.0
        %1735 = vmatpush2.msra.mxu0 0.0
        %1736 = vmatprep.subr.mxu0 0.0
        %1737 = vmatpush2.msra.mxu0 0.0
        %1738 = vmatprep.subr.mxu0 0.0
        %1739 = vmatpush2.msra.mxu0 0.0
        %1740 = vmatprep.subr.mxu0 0.0
        %1741 = vmatpush2.msra.mxu0 0.0
        %1742 = vmatprep.subr.mxu0 0.0
        %1743 = vmatpush2.msra.mxu0 0.0
        %1744 = vmatprep.subr.mxu0 0.0
        %1745 = vmatpush2.msra.mxu0 0.0
        %1746 = vmatprep.subr.mxu0 0.0
        %1747 = vmatpush2.msra.mxu0 0.0
        %1748 = vmatprep.mubr.f32.mxu0 0.0
        %1749 = vmatmul.mubr.f32.gmra.mxu0 %v1682
        %v1750 = vpop.f32.mrf.mxu0
        %v1751 = vadd.f32 0.0, %v1750
        %v1752 = vpop.f32.mrf.mxu0
        %1753 = vdwg.mxu0
        %v1755 = vsel %vm869, %v1751, 0
        %1757 = vmatprep.subr.mxu0 0.0
        %1758 = vmatpush1.msra.mxu0 0.0
        %1759 = vmatprep.subr.mxu0 0.0
        %1760 = vmatpush1.msra.mxu0 0.0
        %1761 = vmatprep.subr.mxu0 0.0
        %1762 = vmatpush1.msra.mxu0 0.0
        %1763 = vmatprep.subr.mxu0 0.0
        %1764 = vmatpush1.msra.mxu0 0.0
        %1765 = vmatprep.subr.mxu0 0.0
        %1766 = vmatpush1.msra.mxu0 0.0
        %1767 = vmatprep.subr.mxu0 0.0
        %1768 = vmatpush1.msra.mxu0 0.0
        %1769 = vmatprep.subr.mxu0 0.0
        %1770 = vmatpush1.msra.mxu0 0.0
        %1771 = vmatprep.subr.mxu0 0.0
        %1772 = vmatpush1.msra.mxu0 0.0
        %1773 = vmatprep.subr.mxu0 0.0
        %1774 = vmatpush1.msra.mxu0 0.0
        %1775 = vmatprep.subr.mxu0 0.0
        %1776 = vmatpush1.msra.mxu0 0.0
        %1777 = vmatprep.subr.mxu0 0.0
        %1778 = vmatpush1.msra.mxu0 0.0
        %1779 = vmatprep.subr.mxu0 0.0
        %1780 = vmatpush1.msra.mxu0 0.0
        %1781 = vmatprep.subr.mxu0 0.0
        %1782 = vmatpush1.msra.mxu0 0.0
        %1783 = vmatprep.subr.mxu0 0.0
        %1784 = vmatpush1.msra.mxu0 0.0
        %1785 = vmatprep.subr.mxu0 0.0
        %1786 = vmatpush1.msra.mxu0 0.0
        %1787 = vmatprep.subr.mxu0 0.0
        %1788 = vmatpush1.msra.mxu0 %v864
        %1789 = vmatprep.subr.mxu0 0.0
        %1790 = vmatpush2.msra.mxu0 0.0
        %1791 = vmatprep.subr.mxu0 0.0
        %1792 = vmatpush2.msra.mxu0 0.0
        %1793 = vmatprep.subr.mxu0 0.0
        %1794 = vmatpush2.msra.mxu0 0.0
        %1795 = vmatprep.subr.mxu0 0.0
        %1796 = vmatpush2.msra.mxu0 0.0
        %1797 = vmatprep.subr.mxu0 0.0
        %1798 = vmatpush2.msra.mxu0 0.0
        %1799 = vmatprep.subr.mxu0 0.0
        %1800 = vmatpush2.msra.mxu0 0.0
        %1801 = vmatprep.subr.mxu0 0.0
        %1802 = vmatpush2.msra.mxu0 0.0
        %1803 = vmatprep.subr.mxu0 0.0
        %1804 = vmatpush2.msra.mxu0 0.0
        %1805 = vmatprep.subr.mxu0 0.0
        %1806 = vmatpush2.msra.mxu0 0.0
        %1807 = vmatprep.subr.mxu0 0.0
        %1808 = vmatpush2.msra.mxu0 0.0
        %1809 = vmatprep.subr.mxu0 0.0
        %1810 = vmatpush2.msra.mxu0 0.0
        %1811 = vmatprep.subr.mxu0 0.0
        %1812 = vmatpush2.msra.mxu0 0.0
        %1813 = vmatprep.subr.mxu0 0.0
        %1814 = vmatpush2.msra.mxu0 0.0
        %1815 = vmatprep.subr.mxu0 0.0
        %1816 = vmatpush2.msra.mxu0 0.0
        %1817 = vmatprep.subr.mxu0 0.0
        %1818 = vmatpush2.msra.mxu0 0.0
        %1819 = vmatprep.subr.mxu0 0.0
        %1820 = vmatpush2.msra.mxu0 0.0
        %1821 = vmatprep.mubr.f32.mxu0 0.0
        %1822 = vmatmul.mubr.f32.gmra.mxu0 %v1755
        %v1823 = vpop.f32.mrf.mxu0
        %v1824 = vadd.f32 0.0, %v1823
        %v1825 = vpop.f32.mrf.mxu0
        %1826 = vdwg.mxu0
        %v1827 = vadd.f32 %v1586, %v1824
        %v1829 = vlaneseq
        %v1830 = vshrl.u32 %v1829, 7
        %v1831 = vsub.s32 0, %v1830
        %v1832 = vrot.slane %v865, %v1831
        %v1834 = vadd.f32 %v1827, %v1832
        %v1835 = vadd.f32 %v733, %v1834
        %s1836 = scalar_lea.vmem %s4, 1
        %v1837 = vld [vmem:[%s1836] sm:$0x1]
        %s1838 = scalar_lea.vmem %s5, 1
        %v1839 = vld [vmem:[%s1838] sm:$0x1]
        %v1840 = vsel %vm740, %v1835, 0.0
        %1841 = vadd.xlane.f32.xlu0 %v1840
        %v1842 = vpop.xlane.xlu0 %1841
        %v1843 = vmul.f32 %v1842, %v744
        %v1844 = vsub.f32 %v1835, %v1843
        %v1845 = vmul.f32 %v1844, %v1844
        %v1846 = vsel %vm740, %v1845, 0.0
        %1847 = vadd.xlane.f32.xlu0 %v1846
        %v1848 = vpop.xlane.xlu0 %1847
        %v1849 = vmul.f32 %v1848, %v751
        %v1850 = vrsqrt.pop %v1849
        %v1851 = vmul.f32 %v1849, %v1850
        %vm1852 = vcmp.eq.f32.partialorder %v1849, inf
        %v1853 = vsel %vm1852, %v1849, %v1851
        %vm1854 = vcmp.eq.f32.partialorder %v1849, 0.0
        %v1855 = vand.u32 %v1849, 2147483648
        %v1856 = vsel %vm1854, %v1855, %v1853
        %v1857 = vadd.f32 %v1856, 1e-06
        %v1858 = vrcp.pop %v1857
        %v1860 = vlaneseq
        %v1861 = vshrl.u32 %v1860, 7
        %v1862 = vsub.s32 0, %v1861
        %v1863 = vrot.slane %v1837, %v1862
        %v1865 = vmul.f32 %v1863, %v1844
        %v1866 = vmul.f32 %v1865, %v1858
        %v1868 = vlaneseq
        %v1869 = vshrl.u32 %v1868, 7
        %v1870 = vsub.s32 0, %v1869
        %v1871 = vrot.slane %v1839, %v1870
        %v1873 = vadd.f32 %v1866, %v1871
        %v1874 = vld [vmem:[%s10] sm:$0xff]
        %v1875 = vld [vmem:[%s10 + $0x8] sm:$0xff]
        %v1876 = vld [vmem:[%s10 + $0x10] sm:$0xff]
        %v1877 = vld [vmem:[%s10 + $0x18] sm:$0xff]
        %v1878 = vld [vmem:[%s11] sm:$0x1]
        %v1880 = vlaneseq
        %v1881 = vshrl.u32 %v1880, 7
        %v1882 = vsub.s32 0, %v1881
        %v1883 = vrot.slane %v1878, %v1882
        %v1886 = vsel %vm740, %v1873, 0
        %1888 = vmatprep.subr.mxu0 0.0
        %1889 = vmatpush1.msra.mxu0 0.0
        %1890 = vmatprep.subr.mxu0 0.0
        %1891 = vmatpush1.msra.mxu0 0.0
        %1892 = vmatprep.subr.mxu0 0.0
        %1893 = vmatpush1.msra.mxu0 0.0
        %1894 = vmatprep.subr.mxu0 0.0
        %1895 = vmatpush1.msra.mxu0 0.0
        %1896 = vmatprep.subr.mxu0 0.0
        %1897 = vmatpush1.msra.mxu0 0.0
        %1898 = vmatprep.subr.mxu0 0.0
        %1899 = vmatpush1.msra.mxu0 0.0
        %1900 = vmatprep.subr.mxu0 0.0
        %1901 = vmatpush1.msra.mxu0 0.0
        %1902 = vmatprep.subr.mxu0 0.0
        %1903 = vmatpush1.msra.mxu0 0.0
        %1904 = vmatprep.subr.mxu0 0.0
        %1905 = vmatpush1.msra.mxu0 0.0
        %1906 = vmatprep.subr.mxu0 0.0
        %1907 = vmatpush1.msra.mxu0 0.0
        %1908 = vmatprep.subr.mxu0 0.0
        %1909 = vmatpush1.msra.mxu0 0.0
        %1910 = vmatprep.subr.mxu0 0.0
        %1911 = vmatpush1.msra.mxu0 0.0
        %1912 = vmatprep.subr.mxu0 0.0
        %1913 = vmatpush1.msra.mxu0 %v1877
        %1914 = vmatprep.subr.mxu0 0.0
        %1915 = vmatpush1.msra.mxu0 %v1876
        %1916 = vmatprep.subr.mxu0 0.0
        %1917 = vmatpush1.msra.mxu0 %v1875
        %1918 = vmatprep.subr.mxu0 0.0
        %1919 = vmatpush1.msra.mxu0 %v1874
        %1920 = vmatprep.subr.mxu0 0.0
        %1921 = vmatpush2.msra.mxu0 0.0
        %1922 = vmatprep.subr.mxu0 0.0
        %1923 = vmatpush2.msra.mxu0 0.0
        %1924 = vmatprep.subr.mxu0 0.0
        %1925 = vmatpush2.msra.mxu0 0.0
        %1926 = vmatprep.subr.mxu0 0.0
        %1927 = vmatpush2.msra.mxu0 0.0
        %1928 = vmatprep.subr.mxu0 0.0
        %1929 = vmatpush2.msra.mxu0 0.0
        %1930 = vmatprep.subr.mxu0 0.0
        %1931 = vmatpush2.msra.mxu0 0.0
        %1932 = vmatprep.subr.mxu0 0.0
        %1933 = vmatpush2.msra.mxu0 0.0
        %1934 = vmatprep.subr.mxu0 0.0
        %1935 = vmatpush2.msra.mxu0 0.0
        %1936 = vmatprep.subr.mxu0 0.0
        %1937 = vmatpush2.msra.mxu0 0.0
        %1938 = vmatprep.subr.mxu0 0.0
        %1939 = vmatpush2.msra.mxu0 0.0
        %1940 = vmatprep.subr.mxu0 0.0
        %1941 = vmatpush2.msra.mxu0 0.0
        %1942 = vmatprep.subr.mxu0 0.0
        %1943 = vmatpush2.msra.mxu0 0.0
        %1944 = vmatprep.subr.mxu0 0.0
        %1945 = vmatpush2.msra.mxu0 0.0
        %1946 = vmatprep.subr.mxu0 0.0
        %1947 = vmatpush2.msra.mxu0 0.0
        %1948 = vmatprep.subr.mxu0 0.0
        %1949 = vmatpush2.msra.mxu0 0.0
        %1950 = vmatprep.subr.mxu0 0.0
        %1951 = vmatpush2.msra.mxu0 0.0
        %1952 = vmatprep.mubr.f32.mxu0 0.0
        %1953 = vmatmul.mubr.f32.gmra.mxu0 %v1886
        %v1954 = vpop.f32.mrf.mxu0
        %v1955 = vadd.f32 %v1883, %v1954
        %v1956 = vpop.f32.mrf.mxu0
        %1957 = vdwg.mxu0
        %v1958 = vld [vmem:[%s12] sm:$0xff]
        %v1959 = vld [vmem:[%s12 + $0x8] sm:$0xff]
        %v1960 = vld [vmem:[%s12 + $0x10] sm:$0xff]
        %v1961 = vld [vmem:[%s12 + $0x18] sm:$0xff]
        %v1962 = vld [vmem:[%s13] sm:$0x1]
        %v1964 = vlaneseq
        %v1965 = vshrl.u32 %v1964, 7
        %v1966 = vsub.s32 0, %v1965
        %v1967 = vrot.slane %v1962, %v1966
        %v1970 = vsel %vm740, %v734, 0
        %v1973 = vsel %vm740, %v735, 0
        %1975 = vmatprep.subr.mxu0 0.0
        %1976 = vmatpush1.msra.mxu0 0.0
        %1977 = vmatprep.subr.mxu0 0.0
        %1978 = vmatpush1.msra.mxu0 0.0
        %1979 = vmatprep.subr.mxu0 0.0
        %1980 = vmatpush1.msra.mxu0 0.0
        %1981 = vmatprep.subr.mxu0 0.0
        %1982 = vmatpush1.msra.mxu0 0.0
        %1983 = vmatprep.subr.mxu0 0.0
        %1984 = vmatpush1.msra.mxu0 0.0
        %1985 = vmatprep.subr.mxu0 0.0
        %1986 = vmatpush1.msra.mxu0 0.0
        %1987 = vmatprep.subr.mxu0 0.0
        %1988 = vmatpush1.msra.mxu0 0.0
        %1989 = vmatprep.subr.mxu0 0.0
        %1990 = vmatpush1.msra.mxu0 0.0
        %1991 = vmatprep.subr.mxu0 0.0
        %1992 = vmatpush1.msra.mxu0 0.0
        %1993 = vmatprep.subr.mxu0 0.0
        %1994 = vmatpush1.msra.mxu0 0.0
        %1995 = vmatprep.subr.mxu0 0.0
        %1996 = vmatpush1.msra.mxu0 0.0
        %1997 = vmatprep.subr.mxu0 0.0
        %1998 = vmatpush1.msra.mxu0 0.0
        %1999 = vmatprep.subr.mxu0 0.0
        %2000 = vmatpush1.msra.mxu0 %v1961
        %2001 = vmatprep.subr.mxu0 0.0
        %2002 = vmatpush1.msra.mxu0 %v1960
        %2003 = vmatprep.subr.mxu0 0.0
        %2004 = vmatpush1.msra.mxu0 %v1959
        %2005 = vmatprep.subr.mxu0 0.0
        %2006 = vmatpush1.msra.mxu0 %v1958
        %2007 = vmatprep.subr.mxu0 0.0
        %2008 = vmatpush2.msra.mxu0 0.0
        %2009 = vmatprep.subr.mxu0 0.0
        %2010 = vmatpush2.msra.mxu0 0.0
        %2011 = vmatprep.subr.mxu0 0.0
        %2012 = vmatpush2.msra.mxu0 0.0
        %2013 = vmatprep.subr.mxu0 0.0
        %2014 = vmatpush2.msra.mxu0 0.0
        %2015 = vmatprep.subr.mxu0 0.0
        %2016 = vmatpush2.msra.mxu0 0.0
        %2017 = vmatprep.subr.mxu0 0.0
        %2018 = vmatpush2.msra.mxu0 0.0
        %2019 = vmatprep.subr.mxu0 0.0
        %2020 = vmatpush2.msra.mxu0 0.0
        %2021 = vmatprep.subr.mxu0 0.0
        %2022 = vmatpush2.msra.mxu0 0.0
        %2023 = vmatprep.subr.mxu0 0.0
        %2024 = vmatpush2.msra.mxu0 0.0
        %2025 = vmatprep.subr.mxu0 0.0
        %2026 = vmatpush2.msra.mxu0 0.0
        %2027 = vmatprep.subr.mxu0 0.0
        %2028 = vmatpush2.msra.mxu0 0.0
        %2029 = vmatprep.subr.mxu0 0.0
        %2030 = vmatpush2.msra.mxu0 0.0
        %2031 = vmatprep.subr.mxu0 0.0
        %2032 = vmatpush2.msra.mxu0 0.0
        %2033 = vmatprep.subr.mxu0 0.0
        %2034 = vmatpush2.msra.mxu0 0.0
        %2035 = vmatprep.subr.mxu0 0.0
        %2036 = vmatpush2.msra.mxu0 0.0
        %2037 = vmatprep.subr.mxu0 0.0
        %2038 = vmatpush2.msra.mxu0 0.0
        %2039 = vmatprep.mubr.f32.mxu0 0.0
        %2040 = vmatmul.mubr.f32.gmra.mxu0 %v1970
        %v2041 = vpop.f32.mrf.mxu0
        %v2042 = vadd.f32 %v1967, %v2041
        %v2043 = vpop.f32.mrf.mxu0
        %2044 = vmatprep.mubr.f32.mxu0 0.0
        %2045 = vmatmul.mubr.f32.gmra.mxu0 %v1973
        %v2046 = vpop.f32.mrf.mxu0
        %v2047 = vadd.f32 %v1967, %v2046
        %v2048 = vpop.f32.mrf.mxu0
        %2049 = vdwg.mxu0
        %v2050 = vld [vmem:[%s14] sm:$0xff]
        %v2051 = vld [vmem:[%s14 + $0x8] sm:$0xff]
        %v2052 = vld [vmem:[%s14 + $0x10] sm:$0xff]
        %v2053 = vld [vmem:[%s14 + $0x18] sm:$0xff]
        %v2054 = vld [vmem:[%s15] sm:$0x1]
        %v2056 = vsel %vm869, %v1955, 0
        %v2059 = vsel %vm869, %v2042, 0
        %v2062 = vsel %vm869, %v2047, 0
        %2064 = vmatprep.subr.mxu0 0.0
        %2065 = vmatpush1.xpose.msra.mxu0 0.0
        %2066 = vmatprep.subr.mxu0 0.0
        %2067 = vmatpush1.xpose.msra.mxu0 0.0
        %2068 = vmatprep.subr.mxu0 0.0
        %2069 = vmatpush1.xpose.msra.mxu0 0.0
        %2070 = vmatprep.subr.mxu0 0.0
        %2071 = vmatpush1.xpose.msra.mxu0 0.0
        %2072 = vmatprep.subr.mxu0 0.0
        %2073 = vmatpush1.xpose.msra.mxu0 0.0
        %2074 = vmatprep.subr.mxu0 0.0
        %2075 = vmatpush1.xpose.msra.mxu0 0.0
        %2076 = vmatprep.subr.mxu0 0.0
        %2077 = vmatpush1.xpose.msra.mxu0 0.0
        %2078 = vmatprep.subr.mxu0 0.0
        %2079 = vmatpush1.xpose.msra.mxu0 0.0
        %2080 = vmatprep.subr.mxu0 0.0
        %2081 = vmatpush1.xpose.msra.mxu0 0.0
        %2082 = vmatprep.subr.mxu0 0.0
        %2083 = vmatpush1.xpose.msra.mxu0 0.0
        %2084 = vmatprep.subr.mxu0 0.0
        %2085 = vmatpush1.xpose.msra.mxu0 0.0
        %2086 = vmatprep.subr.mxu0 0.0
        %2087 = vmatpush1.xpose.msra.mxu0 0.0
        %2088 = vmatprep.subr.mxu0 0.0
        %2089 = vmatpush1.xpose.msra.mxu0 0.0
        %2090 = vmatprep.subr.mxu0 0.0
        %2091 = vmatpush1.xpose.msra.mxu0 0.0
        %2092 = vmatprep.subr.mxu0 0.0
        %2093 = vmatpush1.xpose.msra.mxu0 %v2062
        %2094 = vmatprep.subr.mxu0 0.0
        %2095 = vmatpush1.xpose.msra.mxu0 %v2059
        %2096 = vmatprep.subr.mxu0 0.0
        %2097 = vmatpush2.xpose.msra.mxu0 0.0
        %2098 = vmatprep.subr.mxu0 0.0
        %2099 = vmatpush2.xpose.msra.mxu0 0.0
        %2100 = vmatprep.subr.mxu0 0.0
        %2101 = vmatpush2.xpose.msra.mxu0 0.0
        %2102 = vmatprep.subr.mxu0 0.0
        %2103 = vmatpush2.xpose.msra.mxu0 0.0
        %2104 = vmatprep.subr.mxu0 0.0
        %2105 = vmatpush2.xpose.msra.mxu0 0.0
        %2106 = vmatprep.subr.mxu0 0.0
        %2107 = vmatpush2.xpose.msra.mxu0 0.0
        %2108 = vmatprep.subr.mxu0 0.0
        %2109 = vmatpush2.xpose.msra.mxu0 0.0
        %2110 = vmatprep.subr.mxu0 0.0
        %2111 = vmatpush2.xpose.msra.mxu0 0.0
        %2112 = vmatprep.subr.mxu0 0.0
        %2113 = vmatpush2.xpose.msra.mxu0 0.0
        %2114 = vmatprep.subr.mxu0 0.0
        %2115 = vmatpush2.xpose.msra.mxu0 0.0
        %2116 = vmatprep.subr.mxu0 0.0
        %2117 = vmatpush2.xpose.msra.mxu0 0.0
        %2118 = vmatprep.subr.mxu0 0.0
        %2119 = vmatpush2.xpose.msra.mxu0 0.0
        %2120 = vmatprep.subr.mxu0 0.0
        %2121 = vmatpush2.xpose.msra.mxu0 0.0
        %2122 = vmatprep.subr.mxu0 0.0
        %2123 = vmatpush2.xpose.msra.mxu0 0.0
        %2124 = vmatprep.subr.mxu0 0.0
        %2125 = vmatpush2.xpose.msra.mxu0 0.0
        %2126 = vmatprep.subr.mxu0 0.0
        %2127 = vmatpush2.xpose.msra.mxu0 0.0
        %2128 = vmatprep.mubr.f32.mxu0 0.0
        %2129 = vmatmul.mubr.f32.gmra.mxu0 %v2056
        %v2130 = vpop.f32.mrf.mxu0
        %v2131 = vadd.f32 0.0, %v2130
        %v2132 = vpop.f32.mrf.mxu0
        %2133 = vdwg.mxu0
        %v2134 = vmul.f32 %v2131, 0.35355338
        %v2135 = vadd.f32 %v2134, %v737
        %vm2136 = vcmask 130048
        %v2137 = vsel %vm2136, %v2135, -inf
        %2138 = vmax.xlane.f32.xlu0 %v2137
        %v2139 = vpop.xlane.xlu0 %2138
        %v2140 = vsub.f32 %v2135, %v2139
        %v2141 = vmul.f32 %v2140, 1.442695
        %v2142 = vpow.pop %v2141
        %v2143 = vsel %vm2136, %v2142, 0.0
        %2144 = vadd.xlane.f32.xlu0 %v2143
        %v2145 = vpop.xlane.xlu0 %2144
        %v2146 = vrcp.pop %v2145
        %v2147 = vmul.f32 %v2142, %v2146
        %2148 = vrot.lane.b32.xlu0 %v2042, 96
        %v2149 = vpop.permute.xlu0 %2148
        %2150 = vrot.lane.b32.xlu0 %v2047, 96
        %v2151 = vpop.permute.xlu0 %2150
        %v2155 = vsel %vm2136, %v2147, 0
        %2157 = vmatprep.subr.mxu0 0.0
        %2158 = vmatpush1.msra.mxu0 0.0
        %2159 = vmatprep.subr.mxu0 0.0
        %2160 = vmatpush1.msra.mxu0 0.0
        %2161 = vmatprep.subr.mxu0 0.0
        %2162 = vmatpush1.msra.mxu0 0.0
        %2163 = vmatprep.subr.mxu0 0.0
        %2164 = vmatpush1.msra.mxu0 0.0
        %2165 = vmatprep.subr.mxu0 0.0
        %2166 = vmatpush1.msra.mxu0 0.0
        %2167 = vmatprep.subr.mxu0 0.0
        %2168 = vmatpush1.msra.mxu0 0.0
        %2169 = vmatprep.subr.mxu0 0.0
        %2170 = vmatpush1.msra.mxu0 0.0
        %2171 = vmatprep.subr.mxu0 0.0
        %2172 = vmatpush1.msra.mxu0 0.0
        %2173 = vmatprep.subr.mxu0 0.0
        %2174 = vmatpush1.msra.mxu0 0.0
        %2175 = vmatprep.subr.mxu0 0.0
        %2176 = vmatpush1.msra.mxu0 0.0
        %2177 = vmatprep.subr.mxu0 0.0
        %2178 = vmatpush1.msra.mxu0 0.0
        %2179 = vmatprep.subr.mxu0 0.0
        %2180 = vmatpush1.msra.mxu0 0.0
        %2181 = vmatprep.subr.mxu0 0.0
        %2182 = vmatpush1.msra.mxu0 0.0
        %2183 = vmatprep.subr.mxu0 0.0
        %2184 = vmatpush1.msra.mxu0 0.0
        %2185 = vmatprep.subr.mxu0 0.0
        %2186 = vmatpush1.msra.mxu0 %v2151
        %2187 = vmatprep.subr.mxu0 0.0
        %2188 = vmatpush1.msra.mxu0 %v2149
        %2189 = vmatprep.subr.mxu0 0.0
        %2190 = vmatpush2.msra.mxu0 0.0
        %2191 = vmatprep.subr.mxu0 0.0
        %2192 = vmatpush2.msra.mxu0 0.0
        %2193 = vmatprep.subr.mxu0 0.0
        %2194 = vmatpush2.msra.mxu0 0.0
        %2195 = vmatprep.subr.mxu0 0.0
        %2196 = vmatpush2.msra.mxu0 0.0
        %2197 = vmatprep.subr.mxu0 0.0
        %2198 = vmatpush2.msra.mxu0 0.0
        %2199 = vmatprep.subr.mxu0 0.0
        %2200 = vmatpush2.msra.mxu0 0.0
        %2201 = vmatprep.subr.mxu0 0.0
        %2202 = vmatpush2.msra.mxu0 0.0
        %2203 = vmatprep.subr.mxu0 0.0
        %2204 = vmatpush2.msra.mxu0 0.0
        %2205 = vmatprep.subr.mxu0 0.0
        %2206 = vmatpush2.msra.mxu0 0.0
        %2207 = vmatprep.subr.mxu0 0.0
        %2208 = vmatpush2.msra.mxu0 0.0
        %2209 = vmatprep.subr.mxu0 0.0
        %2210 = vmatpush2.msra.mxu0 0.0
        %2211 = vmatprep.subr.mxu0 0.0
        %2212 = vmatpush2.msra.mxu0 0.0
        %2213 = vmatprep.subr.mxu0 0.0
        %2214 = vmatpush2.msra.mxu0 0.0
        %2215 = vmatprep.subr.mxu0 0.0
        %2216 = vmatpush2.msra.mxu0 0.0
        %2217 = vmatprep.subr.mxu0 0.0
        %2218 = vmatpush2.msra.mxu0 0.0
        %2219 = vmatprep.subr.mxu0 0.0
        %2220 = vmatpush2.msra.mxu0 0.0
        %2221 = vmatprep.mubr.f32.mxu0 0.0
        %2222 = vmatmul.mubr.f32.gmra.mxu0 %v2155
        %v2223 = vpop.f32.mrf.mxu0
        %v2224 = vadd.f32 0.0, %v2223
        %v2225 = vpop.f32.mrf.mxu0
        %2226 = vdwg.mxu0
        %2227 = vrot.lane.b32.xlu0 %v1955, 120
        %v2228 = vpop.permute.xlu0 %2227
        %2229 = vrot.lane.b32.xlu0 %v2042, 120
        %v2230 = vpop.permute.xlu0 %2229
        %2231 = vrot.lane.b32.xlu0 %v2047, 120
        %v2232 = vpop.permute.xlu0 %2231
        %v2233 = vsel %vm869, %v2228, 0
        %v2235 = vsel %vm869, %v2230, 0
        %v2237 = vsel %vm869, %v2232, 0
        %2239 = vmatprep.subr.mxu0 0.0
        %2240 = vmatpush1.xpose.msra.mxu0 0.0
        %2241 = vmatprep.subr.mxu0 0.0
        %2242 = vmatpush1.xpose.msra.mxu0 0.0
        %2243 = vmatprep.subr.mxu0 0.0
        %2244 = vmatpush1.xpose.msra.mxu0 0.0
        %2245 = vmatprep.subr.mxu0 0.0
        %2246 = vmatpush1.xpose.msra.mxu0 0.0
        %2247 = vmatprep.subr.mxu0 0.0
        %2248 = vmatpush1.xpose.msra.mxu0 0.0
        %2249 = vmatprep.subr.mxu0 0.0
        %2250 = vmatpush1.xpose.msra.mxu0 0.0
        %2251 = vmatprep.subr.mxu0 0.0
        %2252 = vmatpush1.xpose.msra.mxu0 0.0
        %2253 = vmatprep.subr.mxu0 0.0
        %2254 = vmatpush1.xpose.msra.mxu0 0.0
        %2255 = vmatprep.subr.mxu0 0.0
        %2256 = vmatpush1.xpose.msra.mxu0 0.0
        %2257 = vmatprep.subr.mxu0 0.0
        %2258 = vmatpush1.xpose.msra.mxu0 0.0
        %2259 = vmatprep.subr.mxu0 0.0
        %2260 = vmatpush1.xpose.msra.mxu0 0.0
        %2261 = vmatprep.subr.mxu0 0.0
        %2262 = vmatpush1.xpose.msra.mxu0 0.0
        %2263 = vmatprep.subr.mxu0 0.0
        %2264 = vmatpush1.xpose.msra.mxu0 0.0
        %2265 = vmatprep.subr.mxu0 0.0
        %2266 = vmatpush1.xpose.msra.mxu0 0.0
        %2267 = vmatprep.subr.mxu0 0.0
        %2268 = vmatpush1.xpose.msra.mxu0 %v2237
        %2269 = vmatprep.subr.mxu0 0.0
        %2270 = vmatpush1.xpose.msra.mxu0 %v2235
        %2271 = vmatprep.subr.mxu0 0.0
        %2272 = vmatpush2.xpose.msra.mxu0 0.0
        %2273 = vmatprep.subr.mxu0 0.0
        %2274 = vmatpush2.xpose.msra.mxu0 0.0
        %2275 = vmatprep.subr.mxu0 0.0
        %2276 = vmatpush2.xpose.msra.mxu0 0.0
        %2277 = vmatprep.subr.mxu0 0.0
        %2278 = vmatpush2.xpose.msra.mxu0 0.0
        %2279 = vmatprep.subr.mxu0 0.0
        %2280 = vmatpush2.xpose.msra.mxu0 0.0
        %2281 = vmatprep.subr.mxu0 0.0
        %2282 = vmatpush2.xpose.msra.mxu0 0.0
        %2283 = vmatprep.subr.mxu0 0.0
        %2284 = vmatpush2.xpose.msra.mxu0 0.0
        %2285 = vmatprep.subr.mxu0 0.0
        %2286 = vmatpush2.xpose.msra.mxu0 0.0
        %2287 = vmatprep.subr.mxu0 0.0
        %2288 = vmatpush2.xpose.msra.mxu0 0.0
        %2289 = vmatprep.subr.mxu0 0.0
        %2290 = vmatpush2.xpose.msra.mxu0 0.0
        %2291 = vmatprep.subr.mxu0 0.0
        %2292 = vmatpush2.xpose.msra.mxu0 0.0
        %2293 = vmatprep.subr.mxu0 0.0
        %2294 = vmatpush2.xpose.msra.mxu0 0.0
        %2295 = vmatprep.subr.mxu0 0.0
        %2296 = vmatpush2.xpose.msra.mxu0 0.0
        %2297 = vmatprep.subr.mxu0 0.0
        %2298 = vmatpush2.xpose.msra.mxu0 0.0
        %2299 = vmatprep.subr.mxu0 0.0
        %2300 = vmatpush2.xpose.msra.mxu0 0.0
        %2301 = vmatprep.subr.mxu0 0.0
        %2302 = vmatpush2.xpose.msra.mxu0 0.0
        %2303 = vmatprep.mubr.f32.mxu0 0.0
        %2304 = vmatmul.mubr.f32.gmra.mxu0 %v2233
        %v2305 = vpop.f32.mrf.mxu0
        %v2306 = vadd.f32 0.0, %v2305
        %v2307 = vpop.f32.mrf.mxu0
        %2308 = vdwg.mxu0
        %v2309 = vmul.f32 %v2306, 0.35355338
        %v2310 = vadd.f32 %v2309, %v737
        %v2311 = vsel %vm2136, %v2310, -inf
        %2312 = vmax.xlane.f32.xlu0 %v2311
        %v2313 = vpop.xlane.xlu0 %2312
        %v2314 = vsub.f32 %v2310, %v2313
        %v2315 = vmul.f32 %v2314, 1.442695
        %v2316 = vpow.pop %v2315
        %v2317 = vsel %vm2136, %v2316, 0.0
        %2318 = vadd.xlane.f32.xlu0 %v2317
        %v2319 = vpop.xlane.xlu0 %2318
        %v2320 = vrcp.pop %v2319
        %v2321 = vmul.f32 %v2316, %v2320
        %2322 = vrot.lane.b32.xlu0 %v2042, 88
        %v2323 = vpop.permute.xlu0 %2322
        %2324 = vrot.lane.b32.xlu0 %v2047, 88
        %v2325 = vpop.permute.xlu0 %2324
        %v2329 = vsel %vm2136, %v2321, 0
        %2331 = vmatprep.subr.mxu0 0.0
        %2332 = vmatpush1.msra.mxu0 0.0
        %2333 = vmatprep.subr.mxu0 0.0
        %2334 = vmatpush1.msra.mxu0 0.0
        %2335 = vmatprep.subr.mxu0 0.0
        %2336 = vmatpush1.msra.mxu0 0.0
        %2337 = vmatprep.subr.mxu0 0.0
        %2338 = vmatpush1.msra.mxu0 0.0
        %2339 = vmatprep.subr.mxu0 0.0
        %2340 = vmatpush1.msra.mxu0 0.0
        %2341 = vmatprep.subr.mxu0 0.0
        %2342 = vmatpush1.msra.mxu0 0.0
        %2343 = vmatprep.subr.mxu0 0.0
        %2344 = vmatpush1.msra.mxu0 0.0
        %2345 = vmatprep.subr.mxu0 0.0
        %2346 = vmatpush1.msra.mxu0 0.0
        %2347 = vmatprep.subr.mxu0 0.0
        %2348 = vmatpush1.msra.mxu0 0.0
        %2349 = vmatprep.subr.mxu0 0.0
        %2350 = vmatpush1.msra.mxu0 0.0
        %2351 = vmatprep.subr.mxu0 0.0
        %2352 = vmatpush1.msra.mxu0 0.0
        %2353 = vmatprep.subr.mxu0 0.0
        %2354 = vmatpush1.msra.mxu0 0.0
        %2355 = vmatprep.subr.mxu0 0.0
        %2356 = vmatpush1.msra.mxu0 0.0
        %2357 = vmatprep.subr.mxu0 0.0
        %2358 = vmatpush1.msra.mxu0 0.0
        %2359 = vmatprep.subr.mxu0 0.0
        %2360 = vmatpush1.msra.mxu0 %v2325
        %2361 = vmatprep.subr.mxu0 0.0
        %2362 = vmatpush1.msra.mxu0 %v2323
        %2363 = vmatprep.subr.mxu0 0.0
        %2364 = vmatpush2.msra.mxu0 0.0
        %2365 = vmatprep.subr.mxu0 0.0
        %2366 = vmatpush2.msra.mxu0 0.0
        %2367 = vmatprep.subr.mxu0 0.0
        %2368 = vmatpush2.msra.mxu0 0.0
        %2369 = vmatprep.subr.mxu0 0.0
        %2370 = vmatpush2.msra.mxu0 0.0
        %2371 = vmatprep.subr.mxu0 0.0
        %2372 = vmatpush2.msra.mxu0 0.0
        %2373 = vmatprep.subr.mxu0 0.0
        %2374 = vmatpush2.msra.mxu0 0.0
        %2375 = vmatprep.subr.mxu0 0.0
        %2376 = vmatpush2.msra.mxu0 0.0
        %2377 = vmatprep.subr.mxu0 0.0
        %2378 = vmatpush2.msra.mxu0 0.0
        %2379 = vmatprep.subr.mxu0 0.0
        %2380 = vmatpush2.msra.mxu0 0.0
        %2381 = vmatprep.subr.mxu0 0.0
        %2382 = vmatpush2.msra.mxu0 0.0
        %2383 = vmatprep.subr.mxu0 0.0
        %2384 = vmatpush2.msra.mxu0 0.0
        %2385 = vmatprep.subr.mxu0 0.0
        %2386 = vmatpush2.msra.mxu0 0.0
        %2387 = vmatprep.subr.mxu0 0.0
        %2388 = vmatpush2.msra.mxu0 0.0
        %2389 = vmatprep.subr.mxu0 0.0
        %2390 = vmatpush2.msra.mxu0 0.0
        %2391 = vmatprep.subr.mxu0 0.0
        %2392 = vmatpush2.msra.mxu0 0.0
        %2393 = vmatprep.subr.mxu0 0.0
        %2394 = vmatpush2.msra.mxu0 0.0
        %2395 = vmatprep.mubr.f32.mxu0 0.0
        %2396 = vmatmul.mubr.f32.gmra.mxu0 %v2329
        %v2397 = vpop.f32.mrf.mxu0
        %v2398 = vadd.f32 0.0, %v2397
        %v2399 = vpop.f32.mrf.mxu0
        %2400 = vdwg.mxu0
        %v2402 = vsel %vm869, %v2398, 0
        %2404 = vmatprep.subr.mxu0 0.0
        %2405 = vmatpush1.msra.mxu0 0.0
        %2406 = vmatprep.subr.mxu0 0.0
        %2407 = vmatpush1.msra.mxu0 0.0
        %2408 = vmatprep.subr.mxu0 0.0
        %2409 = vmatpush1.msra.mxu0 0.0
        %2410 = vmatprep.subr.mxu0 0.0
        %2411 = vmatpush1.msra.mxu0 0.0
        %2412 = vmatprep.subr.mxu0 0.0
        %2413 = vmatpush1.msra.mxu0 0.0
        %2414 = vmatprep.subr.mxu0 0.0
        %2415 = vmatpush1.msra.mxu0 0.0
        %2416 = vmatprep.subr.mxu0 0.0
        %2417 = vmatpush1.msra.mxu0 0.0
        %2418 = vmatprep.subr.mxu0 0.0
        %2419 = vmatpush1.msra.mxu0 0.0
        %2420 = vmatprep.subr.mxu0 0.0
        %2421 = vmatpush1.msra.mxu0 0.0
        %2422 = vmatprep.subr.mxu0 0.0
        %2423 = vmatpush1.msra.mxu0 0.0
        %2424 = vmatprep.subr.mxu0 0.0
        %2425 = vmatpush1.msra.mxu0 0.0
        %2426 = vmatprep.subr.mxu0 0.0
        %2427 = vmatpush1.msra.mxu0 0.0
        %2428 = vmatprep.subr.mxu0 0.0
        %2429 = vmatpush1.msra.mxu0 0.0
        %2430 = vmatprep.subr.mxu0 0.0
        %2431 = vmatpush1.msra.mxu0 0.0
        %2432 = vmatprep.subr.mxu0 0.0
        %2433 = vmatpush1.msra.mxu0 0.0
        %2434 = vmatprep.subr.mxu0 0.0
        %2435 = vmatpush1.msra.mxu0 %v2051
        %2436 = vmatprep.subr.mxu0 0.0
        %2437 = vmatpush2.msra.mxu0 0.0
        %2438 = vmatprep.subr.mxu0 0.0
        %2439 = vmatpush2.msra.mxu0 0.0
        %2440 = vmatprep.subr.mxu0 0.0
        %2441 = vmatpush2.msra.mxu0 0.0
        %2442 = vmatprep.subr.mxu0 0.0
        %2443 = vmatpush2.msra.mxu0 0.0
        %2444 = vmatprep.subr.mxu0 0.0
        %2445 = vmatpush2.msra.mxu0 0.0
        %2446 = vmatprep.subr.mxu0 0.0
        %2447 = vmatpush2.msra.mxu0 0.0
        %2448 = vmatprep.subr.mxu0 0.0
        %2449 = vmatpush2.msra.mxu0 0.0
        %2450 = vmatprep.subr.mxu0 0.0
        %2451 = vmatpush2.msra.mxu0 0.0
        %2452 = vmatprep.subr.mxu0 0.0
        %2453 = vmatpush2.msra.mxu0 0.0
        %2454 = vmatprep.subr.mxu0 0.0
        %2455 = vmatpush2.msra.mxu0 0.0
        %2456 = vmatprep.subr.mxu0 0.0
        %2457 = vmatpush2.msra.mxu0 0.0
        %2458 = vmatprep.subr.mxu0 0.0
        %2459 = vmatpush2.msra.mxu0 0.0
        %2460 = vmatprep.subr.mxu0 0.0
        %2461 = vmatpush2.msra.mxu0 0.0
        %2462 = vmatprep.subr.mxu0 0.0
        %2463 = vmatpush2.msra.mxu0 0.0
        %2464 = vmatprep.subr.mxu0 0.0
        %2465 = vmatpush2.msra.mxu0 0.0
        %2466 = vmatprep.subr.mxu0 0.0
        %2467 = vmatpush2.msra.mxu0 0.0
        %2468 = vmatprep.mubr.f32.mxu0 0.0
        %2469 = vmatmul.mubr.f32.gmra.mxu0 %v2402
        %v2470 = vpop.f32.mrf.mxu0
        %v2471 = vadd.f32 0.0, %v2470
        %v2472 = vpop.f32.mrf.mxu0
        %2473 = vdwg.mxu0
        %v2475 = vsel %vm869, %v2224, 0
        %2477 = vmatprep.subr.mxu0 0.0
        %2478 = vmatpush1.msra.mxu0 0.0
        %2479 = vmatprep.subr.mxu0 0.0
        %2480 = vmatpush1.msra.mxu0 0.0
        %2481 = vmatprep.subr.mxu0 0.0
        %2482 = vmatpush1.msra.mxu0 0.0
        %2483 = vmatprep.subr.mxu0 0.0
        %2484 = vmatpush1.msra.mxu0 0.0
        %2485 = vmatprep.subr.mxu0 0.0
        %2486 = vmatpush1.msra.mxu0 0.0
        %2487 = vmatprep.subr.mxu0 0.0
        %2488 = vmatpush1.msra.mxu0 0.0
        %2489 = vmatprep.subr.mxu0 0.0
        %2490 = vmatpush1.msra.mxu0 0.0
        %2491 = vmatprep.subr.mxu0 0.0
        %2492 = vmatpush1.msra.mxu0 0.0
        %2493 = vmatprep.subr.mxu0 0.0
        %2494 = vmatpush1.msra.mxu0 0.0
        %2495 = vmatprep.subr.mxu0 0.0
        %2496 = vmatpush1.msra.mxu0 0.0
        %2497 = vmatprep.subr.mxu0 0.0
        %2498 = vmatpush1.msra.mxu0 0.0
        %2499 = vmatprep.subr.mxu0 0.0
        %2500 = vmatpush1.msra.mxu0 0.0
        %2501 = vmatprep.subr.mxu0 0.0
        %2502 = vmatpush1.msra.mxu0 0.0
        %2503 = vmatprep.subr.mxu0 0.0
        %2504 = vmatpush1.msra.mxu0 0.0
        %2505 = vmatprep.subr.mxu0 0.0
        %2506 = vmatpush1.msra.mxu0 0.0
        %2507 = vmatprep.subr.mxu0 0.0
        %2508 = vmatpush1.msra.mxu0 %v2050
        %2509 = vmatprep.subr.mxu0 0.0
        %2510 = vmatpush2.msra.mxu0 0.0
        %2511 = vmatprep.subr.mxu0 0.0
        %2512 = vmatpush2.msra.mxu0 0.0
        %2513 = vmatprep.subr.mxu0 0.0
        %2514 = vmatpush2.msra.mxu0 0.0
        %2515 = vmatprep.subr.mxu0 0.0
        %2516 = vmatpush2.msra.mxu0 0.0
        %2517 = vmatprep.subr.mxu0 0.0
        %2518 = vmatpush2.msra.mxu0 0.0
        %2519 = vmatprep.subr.mxu0 0.0
        %2520 = vmatpush2.msra.mxu0 0.0
        %2521 = vmatprep.subr.mxu0 0.0
        %2522 = vmatpush2.msra.mxu0 0.0
        %2523 = vmatprep.subr.mxu0 0.0
        %2524 = vmatpush2.msra.mxu0 0.0
        %2525 = vmatprep.subr.mxu0 0.0
        %2526 = vmatpush2.msra.mxu0 0.0
        %2527 = vmatprep.subr.mxu0 0.0
        %2528 = vmatpush2.msra.mxu0 0.0
        %2529 = vmatprep.subr.mxu0 0.0
        %2530 = vmatpush2.msra.mxu0 0.0
        %2531 = vmatprep.subr.mxu0 0.0
        %2532 = vmatpush2.msra.mxu0 0.0
        %2533 = vmatprep.subr.mxu0 0.0
        %2534 = vmatpush2.msra.mxu0 0.0
        %2535 = vmatprep.subr.mxu0 0.0
        %2536 = vmatpush2.msra.mxu0 0.0
        %2537 = vmatprep.subr.mxu0 0.0
        %2538 = vmatpush2.msra.mxu0 0.0
        %2539 = vmatprep.subr.mxu0 0.0
        %2540 = vmatpush2.msra.mxu0 0.0
        %2541 = vmatprep.mubr.f32.mxu0 0.0
        %2542 = vmatmul.mubr.f32.gmra.mxu0 %v2475
        %v2543 = vpop.f32.mrf.mxu0
        %v2544 = vadd.f32 %v2471, %v2543
        %v2545 = vpop.f32.mrf.mxu0
        %2546 = vdwg.mxu0
        %2547 = vrot.lane.b32.xlu0 %v1955, 112
        %v2548 = vpop.permute.xlu0 %2547
        %2549 = vrot.lane.b32.xlu0 %v2042, 112
        %v2550 = vpop.permute.xlu0 %2549
        %2551 = vrot.lane.b32.xlu0 %v2047, 112
        %v2552 = vpop.permute.xlu0 %2551
        %v2553 = vsel %vm869, %v2548, 0
        %v2555 = vsel %vm869, %v2550, 0
        %v2557 = vsel %vm869, %v2552, 0
        %2559 = vmatprep.subr.mxu0 0.0
        %2560 = vmatpush1.xpose.msra.mxu0 0.0
        %2561 = vmatprep.subr.mxu0 0.0
        %2562 = vmatpush1.xpose.msra.mxu0 0.0
        %2563 = vmatprep.subr.mxu0 0.0
        %2564 = vmatpush1.xpose.msra.mxu0 0.0
        %2565 = vmatprep.subr.mxu0 0.0
        %2566 = vmatpush1.xpose.msra.mxu0 0.0
        %2567 = vmatprep.subr.mxu0 0.0
        %2568 = vmatpush1.xpose.msra.mxu0 0.0
        %2569 = vmatprep.subr.mxu0 0.0
        %2570 = vmatpush1.xpose.msra.mxu0 0.0
        %2571 = vmatprep.subr.mxu0 0.0
        %2572 = vmatpush1.xpose.msra.mxu0 0.0
        %2573 = vmatprep.subr.mxu0 0.0
        %2574 = vmatpush1.xpose.msra.mxu0 0.0
        %2575 = vmatprep.subr.mxu0 0.0
        %2576 = vmatpush1.xpose.msra.mxu0 0.0
        %2577 = vmatprep.subr.mxu0 0.0
        %2578 = vmatpush1.xpose.msra.mxu0 0.0
        %2579 = vmatprep.subr.mxu0 0.0
        %2580 = vmatpush1.xpose.msra.mxu0 0.0
        %2581 = vmatprep.subr.mxu0 0.0
        %2582 = vmatpush1.xpose.msra.mxu0 0.0
        %2583 = vmatprep.subr.mxu0 0.0
        %2584 = vmatpush1.xpose.msra.mxu0 0.0
        %2585 = vmatprep.subr.mxu0 0.0
        %2586 = vmatpush1.xpose.msra.mxu0 0.0
        %2587 = vmatprep.subr.mxu0 0.0
        %2588 = vmatpush1.xpose.msra.mxu0 %v2557
        %2589 = vmatprep.subr.mxu0 0.0
        %2590 = vmatpush1.xpose.msra.mxu0 %v2555
        %2591 = vmatprep.subr.mxu0 0.0
        %2592 = vmatpush2.xpose.msra.mxu0 0.0
        %2593 = vmatprep.subr.mxu0 0.0
        %2594 = vmatpush2.xpose.msra.mxu0 0.0
        %2595 = vmatprep.subr.mxu0 0.0
        %2596 = vmatpush2.xpose.msra.mxu0 0.0
        %2597 = vmatprep.subr.mxu0 0.0
        %2598 = vmatpush2.xpose.msra.mxu0 0.0
        %2599 = vmatprep.subr.mxu0 0.0
        %2600 = vmatpush2.xpose.msra.mxu0 0.0
        %2601 = vmatprep.subr.mxu0 0.0
        %2602 = vmatpush2.xpose.msra.mxu0 0.0
        %2603 = vmatprep.subr.mxu0 0.0
        %2604 = vmatpush2.xpose.msra.mxu0 0.0
        %2605 = vmatprep.subr.mxu0 0.0
        %2606 = vmatpush2.xpose.msra.mxu0 0.0
        %2607 = vmatprep.subr.mxu0 0.0
        %2608 = vmatpush2.xpose.msra.mxu0 0.0
        %2609 = vmatprep.subr.mxu0 0.0
        %2610 = vmatpush2.xpose.msra.mxu0 0.0
        %2611 = vmatprep.subr.mxu0 0.0
        %2612 = vmatpush2.xpose.msra.mxu0 0.0
        %2613 = vmatprep.subr.mxu0 0.0
        %2614 = vmatpush2.xpose.msra.mxu0 0.0
        %2615 = vmatprep.subr.mxu0 0.0
        %2616 = vmatpush2.xpose.msra.mxu0 0.0
        %2617 = vmatprep.subr.mxu0 0.0
        %2618 = vmatpush2.xpose.msra.mxu0 0.0
        %2619 = vmatprep.subr.mxu0 0.0
        %2620 = vmatpush2.xpose.msra.mxu0 0.0
        %2621 = vmatprep.subr.mxu0 0.0
        %2622 = vmatpush2.xpose.msra.mxu0 0.0
        %2623 = vmatprep.mubr.f32.mxu0 0.0
        %2624 = vmatmul.mubr.f32.gmra.mxu0 %v2553
        %v2625 = vpop.f32.mrf.mxu0
        %v2626 = vadd.f32 0.0, %v2625
        %v2627 = vpop.f32.mrf.mxu0
        %2628 = vdwg.mxu0
        %v2629 = vmul.f32 %v2626, 0.35355338
        %v2630 = vadd.f32 %v2629, %v737
        %v2631 = vsel %vm2136, %v2630, -inf
        %2632 = vmax.xlane.f32.xlu0 %v2631
        %v2633 = vpop.xlane.xlu0 %2632
        %v2634 = vsub.f32 %v2630, %v2633
        %v2635 = vmul.f32 %v2634, 1.442695
        %v2636 = vpow.pop %v2635
        %v2637 = vsel %vm2136, %v2636, 0.0
        %2638 = vadd.xlane.f32.xlu0 %v2637
        %v2639 = vpop.xlane.xlu0 %2638
        %v2640 = vrcp.pop %v2639
        %v2641 = vmul.f32 %v2636, %v2640
        %2642 = vrot.lane.b32.xlu0 %v2042, 80
        %v2643 = vpop.permute.xlu0 %2642
        %2644 = vrot.lane.b32.xlu0 %v2047, 80
        %v2645 = vpop.permute.xlu0 %2644
        %v2649 = vsel %vm2136, %v2641, 0
        %2651 = vmatprep.subr.mxu0 0.0
        %2652 = vmatpush1.msra.mxu0 0.0
        %2653 = vmatprep.subr.mxu0 0.0
        %2654 = vmatpush1.msra.mxu0 0.0
        %2655 = vmatprep.subr.mxu0 0.0
        %2656 = vmatpush1.msra.mxu0 0.0
        %2657 = vmatprep.subr.mxu0 0.0
        %2658 = vmatpush1.msra.mxu0 0.0
        %2659 = vmatprep.subr.mxu0 0.0
        %2660 = vmatpush1.msra.mxu0 0.0
        %2661 = vmatprep.subr.mxu0 0.0
        %2662 = vmatpush1.msra.mxu0 0.0
        %2663 = vmatprep.subr.mxu0 0.0
        %2664 = vmatpush1.msra.mxu0 0.0
        %2665 = vmatprep.subr.mxu0 0.0
        %2666 = vmatpush1.msra.mxu0 0.0
        %2667 = vmatprep.subr.mxu0 0.0
        %2668 = vmatpush1.msra.mxu0 0.0
        %2669 = vmatprep.subr.mxu0 0.0
        %2670 = vmatpush1.msra.mxu0 0.0
        %2671 = vmatprep.subr.mxu0 0.0
        %2672 = vmatpush1.msra.mxu0 0.0
        %2673 = vmatprep.subr.mxu0 0.0
        %2674 = vmatpush1.msra.mxu0 0.0
        %2675 = vmatprep.subr.mxu0 0.0
        %2676 = vmatpush1.msra.mxu0 0.0
        %2677 = vmatprep.subr.mxu0 0.0
        %2678 = vmatpush1.msra.mxu0 0.0
        %2679 = vmatprep.subr.mxu0 0.0
        %2680 = vmatpush1.msra.mxu0 %v2645
        %2681 = vmatprep.subr.mxu0 0.0
        %2682 = vmatpush1.msra.mxu0 %v2643
        %2683 = vmatprep.subr.mxu0 0.0
        %2684 = vmatpush2.msra.mxu0 0.0
        %2685 = vmatprep.subr.mxu0 0.0
        %2686 = vmatpush2.msra.mxu0 0.0
        %2687 = vmatprep.subr.mxu0 0.0
        %2688 = vmatpush2.msra.mxu0 0.0
        %2689 = vmatprep.subr.mxu0 0.0
        %2690 = vmatpush2.msra.mxu0 0.0
        %2691 = vmatprep.subr.mxu0 0.0
        %2692 = vmatpush2.msra.mxu0 0.0
        %2693 = vmatprep.subr.mxu0 0.0
        %2694 = vmatpush2.msra.mxu0 0.0
        %2695 = vmatprep.subr.mxu0 0.0
        %2696 = vmatpush2.msra.mxu0 0.0
        %2697 = vmatprep.subr.mxu0 0.0
        %2698 = vmatpush2.msra.mxu0 0.0
        %2699 = vmatprep.subr.mxu0 0.0
        %2700 = vmatpush2.msra.mxu0 0.0
        %2701 = vmatprep.subr.mxu0 0.0
        %2702 = vmatpush2.msra.mxu0 0.0
        %2703 = vmatprep.subr.mxu0 0.0
        %2704 = vmatpush2.msra.mxu0 0.0
        %2705 = vmatprep.subr.mxu0 0.0
        %2706 = vmatpush2.msra.mxu0 0.0
        %2707 = vmatprep.subr.mxu0 0.0
        %2708 = vmatpush2.msra.mxu0 0.0
        %2709 = vmatprep.subr.mxu0 0.0
        %2710 = vmatpush2.msra.mxu0 0.0
        %2711 = vmatprep.subr.mxu0 0.0
        %2712 = vmatpush2.msra.mxu0 0.0
        %2713 = vmatprep.subr.mxu0 0.0
        %2714 = vmatpush2.msra.mxu0 0.0
        %2715 = vmatprep.mubr.f32.mxu0 0.0
        %2716 = vmatmul.mubr.f32.gmra.mxu0 %v2649
        %v2717 = vpop.f32.mrf.mxu0
        %v2718 = vadd.f32 0.0, %v2717
        %v2719 = vpop.f32.mrf.mxu0
        %2720 = vdwg.mxu0
        %v2722 = vsel %vm869, %v2718, 0
        %2724 = vmatprep.subr.mxu0 0.0
        %2725 = vmatpush1.msra.mxu0 0.0
        %2726 = vmatprep.subr.mxu0 0.0
        %2727 = vmatpush1.msra.mxu0 0.0
        %2728 = vmatprep.subr.mxu0 0.0
        %2729 = vmatpush1.msra.mxu0 0.0
        %2730 = vmatprep.subr.mxu0 0.0
        %2731 = vmatpush1.msra.mxu0 0.0
        %2732 = vmatprep.subr.mxu0 0.0
        %2733 = vmatpush1.msra.mxu0 0.0
        %2734 = vmatprep.subr.mxu0 0.0
        %2735 = vmatpush1.msra.mxu0 0.0
        %2736 = vmatprep.subr.mxu0 0.0
        %2737 = vmatpush1.msra.mxu0 0.0
        %2738 = vmatprep.subr.mxu0 0.0
        %2739 = vmatpush1.msra.mxu0 0.0
        %2740 = vmatprep.subr.mxu0 0.0
        %2741 = vmatpush1.msra.mxu0 0.0
        %2742 = vmatprep.subr.mxu0 0.0
        %2743 = vmatpush1.msra.mxu0 0.0
        %2744 = vmatprep.subr.mxu0 0.0
        %2745 = vmatpush1.msra.mxu0 0.0
        %2746 = vmatprep.subr.mxu0 0.0
        %2747 = vmatpush1.msra.mxu0 0.0
        %2748 = vmatprep.subr.mxu0 0.0
        %2749 = vmatpush1.msra.mxu0 0.0
        %2750 = vmatprep.subr.mxu0 0.0
        %2751 = vmatpush1.msra.mxu0 0.0
        %2752 = vmatprep.subr.mxu0 0.0
        %2753 = vmatpush1.msra.mxu0 0.0
        %2754 = vmatprep.subr.mxu0 0.0
        %2755 = vmatpush1.msra.mxu0 %v2052
        %2756 = vmatprep.subr.mxu0 0.0
        %2757 = vmatpush2.msra.mxu0 0.0
        %2758 = vmatprep.subr.mxu0 0.0
        %2759 = vmatpush2.msra.mxu0 0.0
        %2760 = vmatprep.subr.mxu0 0.0
        %2761 = vmatpush2.msra.mxu0 0.0
        %2762 = vmatprep.subr.mxu0 0.0
        %2763 = vmatpush2.msra.mxu0 0.0
        %2764 = vmatprep.subr.mxu0 0.0
        %2765 = vmatpush2.msra.mxu0 0.0
        %2766 = vmatprep.subr.mxu0 0.0
        %2767 = vmatpush2.msra.mxu0 0.0
        %2768 = vmatprep.subr.mxu0 0.0
        %2769 = vmatpush2.msra.mxu0 0.0
        %2770 = vmatprep.subr.mxu0 0.0
        %2771 = vmatpush2.msra.mxu0 0.0
        %2772 = vmatprep.subr.mxu0 0.0
        %2773 = vmatpush2.msra.mxu0 0.0
        %2774 = vmatprep.subr.mxu0 0.0
        %2775 = vmatpush2.msra.mxu0 0.0
        %2776 = vmatprep.subr.mxu0 0.0
        %2777 = vmatpush2.msra.mxu0 0.0
        %2778 = vmatprep.subr.mxu0 0.0
        %2779 = vmatpush2.msra.mxu0 0.0
        %2780 = vmatprep.subr.mxu0 0.0
        %2781 = vmatpush2.msra.mxu0 0.0
        %2782 = vmatprep.subr.mxu0 0.0
        %2783 = vmatpush2.msra.mxu0 0.0
        %2784 = vmatprep.subr.mxu0 0.0
        %2785 = vmatpush2.msra.mxu0 0.0
        %2786 = vmatprep.subr.mxu0 0.0
        %2787 = vmatpush2.msra.mxu0 0.0
        %2788 = vmatprep.mubr.f32.mxu0 0.0
        %2789 = vmatmul.mubr.f32.gmra.mxu0 %v2722
        %v2790 = vpop.f32.mrf.mxu0
        %v2791 = vadd.f32 0.0, %v2790
        %v2792 = vpop.f32.mrf.mxu0
        %2793 = vdwg.mxu0
        %v2794 = vadd.f32 %v2544, %v2791
        %2795 = vrot.lane.b32.xlu0 %v1955, 104
        %v2796 = vpop.permute.xlu0 %2795
        %2797 = vrot.lane.b32.xlu0 %v2042, 104
        %v2798 = vpop.permute.xlu0 %2797
        %2799 = vrot.lane.b32.xlu0 %v2047, 104
        %v2800 = vpop.permute.xlu0 %2799
        %v2801 = vsel %vm869, %v2796, 0
        %v2803 = vsel %vm869, %v2798, 0
        %v2805 = vsel %vm869, %v2800, 0
        %2807 = vmatprep.subr.mxu0 0.0
        %2808 = vmatpush1.xpose.msra.mxu0 0.0
        %2809 = vmatprep.subr.mxu0 0.0
        %2810 = vmatpush1.xpose.msra.mxu0 0.0
        %2811 = vmatprep.subr.mxu0 0.0
        %2812 = vmatpush1.xpose.msra.mxu0 0.0
        %2813 = vmatprep.subr.mxu0 0.0
        %2814 = vmatpush1.xpose.msra.mxu0 0.0
        %2815 = vmatprep.subr.mxu0 0.0
        %2816 = vmatpush1.xpose.msra.mxu0 0.0
        %2817 = vmatprep.subr.mxu0 0.0
        %2818 = vmatpush1.xpose.msra.mxu0 0.0
        %2819 = vmatprep.subr.mxu0 0.0
        %2820 = vmatpush1.xpose.msra.mxu0 0.0
        %2821 = vmatprep.subr.mxu0 0.0
        %2822 = vmatpush1.xpose.msra.mxu0 0.0
        %2823 = vmatprep.subr.mxu0 0.0
        %2824 = vmatpush1.xpose.msra.mxu0 0.0
        %2825 = vmatprep.subr.mxu0 0.0
        %2826 = vmatpush1.xpose.msra.mxu0 0.0
        %2827 = vmatprep.subr.mxu0 0.0
        %2828 = vmatpush1.xpose.msra.mxu0 0.0
        %2829 = vmatprep.subr.mxu0 0.0
        %2830 = vmatpush1.xpose.msra.mxu0 0.0
        %2831 = vmatprep.subr.mxu0 0.0
        %2832 = vmatpush1.xpose.msra.mxu0 0.0
        %2833 = vmatprep.subr.mxu0 0.0
        %2834 = vmatpush1.xpose.msra.mxu0 0.0
        %2835 = vmatprep.subr.mxu0 0.0
        %2836 = vmatpush1.xpose.msra.mxu0 %v2805
        %2837 = vmatprep.subr.mxu0 0.0
        %2838 = vmatpush1.xpose.msra.mxu0 %v2803
        %2839 = vmatprep.subr.mxu0 0.0
        %2840 = vmatpush2.xpose.msra.mxu0 0.0
        %2841 = vmatprep.subr.mxu0 0.0
        %2842 = vmatpush2.xpose.msra.mxu0 0.0
        %2843 = vmatprep.subr.mxu0 0.0
        %2844 = vmatpush2.xpose.msra.mxu0 0.0
        %2845 = vmatprep.subr.mxu0 0.0
        %2846 = vmatpush2.xpose.msra.mxu0 0.0
        %2847 = vmatprep.subr.mxu0 0.0
        %2848 = vmatpush2.xpose.msra.mxu0 0.0
        %2849 = vmatprep.subr.mxu0 0.0
        %2850 = vmatpush2.xpose.msra.mxu0 0.0
        %2851 = vmatprep.subr.mxu0 0.0
        %2852 = vmatpush2.xpose.msra.mxu0 0.0
        %2853 = vmatprep.subr.mxu0 0.0
        %2854 = vmatpush2.xpose.msra.mxu0 0.0
        %2855 = vmatprep.subr.mxu0 0.0
        %2856 = vmatpush2.xpose.msra.mxu0 0.0
        %2857 = vmatprep.subr.mxu0 0.0
        %2858 = vmatpush2.xpose.msra.mxu0 0.0
        %2859 = vmatprep.subr.mxu0 0.0
        %2860 = vmatpush2.xpose.msra.mxu0 0.0
        %2861 = vmatprep.subr.mxu0 0.0
        %2862 = vmatpush2.xpose.msra.mxu0 0.0
        %2863 = vmatprep.subr.mxu0 0.0
        %2864 = vmatpush2.xpose.msra.mxu0 0.0
        %2865 = vmatprep.subr.mxu0 0.0
        %2866 = vmatpush2.xpose.msra.mxu0 0.0
        %2867 = vmatprep.subr.mxu0 0.0
        %2868 = vmatpush2.xpose.msra.mxu0 0.0
        %2869 = vmatprep.subr.mxu0 0.0
        %2870 = vmatpush2.xpose.msra.mxu0 0.0
        %2871 = vmatprep.mubr.f32.mxu0 0.0
        %2872 = vmatmul.mubr.f32.gmra.mxu0 %v2801
        %v2873 = vpop.f32.mrf.mxu0
        %v2874 = vadd.f32 0.0, %v2873
        %v2875 = vpop.f32.mrf.mxu0
        %2876 = vdwg.mxu0
        %v2877 = vmul.f32 %v2874, 0.35355338
        %v2878 = vadd.f32 %v2877, %v737
        %v2879 = vsel %vm2136, %v2878, -inf
        %2880 = vmax.xlane.f32.xlu0 %v2879
        %v2881 = vpop.xlane.xlu0 %2880
        %v2882 = vsub.f32 %v2878, %v2881
        %v2883 = vmul.f32 %v2882, 1.442695
        %v2884 = vpow.pop %v2883
        %v2885 = vsel %vm2136, %v2884, 0.0
        %2886 = vadd.xlane.f32.xlu0 %v2885
        %v2887 = vpop.xlane.xlu0 %2886
        %v2888 = vrcp.pop %v2887
        %v2889 = vmul.f32 %v2884, %v2888
        %2890 = vrot.lane.b32.xlu0 %v2042, 72
        %v2891 = vpop.permute.xlu0 %2890
        %2892 = vrot.lane.b32.xlu0 %v2047, 72
        %v2893 = vpop.permute.xlu0 %2892
        %v2897 = vsel %vm2136, %v2889, 0
        %2899 = vmatprep.subr.mxu0 0.0
        %2900 = vmatpush1.msra.mxu0 0.0
        %2901 = vmatprep.subr.mxu0 0.0
        %2902 = vmatpush1.msra.mxu0 0.0
        %2903 = vmatprep.subr.mxu0 0.0
        %2904 = vmatpush1.msra.mxu0 0.0
        %2905 = vmatprep.subr.mxu0 0.0
        %2906 = vmatpush1.msra.mxu0 0.0
        %2907 = vmatprep.subr.mxu0 0.0
        %2908 = vmatpush1.msra.mxu0 0.0
        %2909 = vmatprep.subr.mxu0 0.0
        %2910 = vmatpush1.msra.mxu0 0.0
        %2911 = vmatprep.subr.mxu0 0.0
        %2912 = vmatpush1.msra.mxu0 0.0
        %2913 = vmatprep.subr.mxu0 0.0
        %2914 = vmatpush1.msra.mxu0 0.0
        %2915 = vmatprep.subr.mxu0 0.0
        %2916 = vmatpush1.msra.mxu0 0.0
        %2917 = vmatprep.subr.mxu0 0.0
        %2918 = vmatpush1.msra.mxu0 0.0
        %2919 = vmatprep.subr.mxu0 0.0
        %2920 = vmatpush1.msra.mxu0 0.0
        %2921 = vmatprep.subr.mxu0 0.0
        %2922 = vmatpush1.msra.mxu0 0.0
        %2923 = vmatprep.subr.mxu0 0.0
        %2924 = vmatpush1.msra.mxu0 0.0
        %2925 = vmatprep.subr.mxu0 0.0
        %2926 = vmatpush1.msra.mxu0 0.0
        %2927 = vmatprep.subr.mxu0 0.0
        %2928 = vmatpush1.msra.mxu0 %v2893
        %2929 = vmatprep.subr.mxu0 0.0
        %2930 = vmatpush1.msra.mxu0 %v2891
        %2931 = vmatprep.subr.mxu0 0.0
        %2932 = vmatpush2.msra.mxu0 0.0
        %2933 = vmatprep.subr.mxu0 0.0
        %2934 = vmatpush2.msra.mxu0 0.0
        %2935 = vmatprep.subr.mxu0 0.0
        %2936 = vmatpush2.msra.mxu0 0.0
        %2937 = vmatprep.subr.mxu0 0.0
        %2938 = vmatpush2.msra.mxu0 0.0
        %2939 = vmatprep.subr.mxu0 0.0
        %2940 = vmatpush2.msra.mxu0 0.0
        %2941 = vmatprep.subr.mxu0 0.0
        %2942 = vmatpush2.msra.mxu0 0.0
        %2943 = vmatprep.subr.mxu0 0.0
        %2944 = vmatpush2.msra.mxu0 0.0
        %2945 = vmatprep.subr.mxu0 0.0
        %2946 = vmatpush2.msra.mxu0 0.0
        %2947 = vmatprep.subr.mxu0 0.0
        %2948 = vmatpush2.msra.mxu0 0.0
        %2949 = vmatprep.subr.mxu0 0.0
        %2950 = vmatpush2.msra.mxu0 0.0
        %2951 = vmatprep.subr.mxu0 0.0
        %2952 = vmatpush2.msra.mxu0 0.0
        %2953 = vmatprep.subr.mxu0 0.0
        %2954 = vmatpush2.msra.mxu0 0.0
        %2955 = vmatprep.subr.mxu0 0.0
        %2956 = vmatpush2.msra.mxu0 0.0
        %2957 = vmatprep.subr.mxu0 0.0
        %2958 = vmatpush2.msra.mxu0 0.0
        %2959 = vmatprep.subr.mxu0 0.0
        %2960 = vmatpush2.msra.mxu0 0.0
        %2961 = vmatprep.subr.mxu0 0.0
        %2962 = vmatpush2.msra.mxu0 0.0
        %2963 = vmatprep.mubr.f32.mxu0 0.0
        %2964 = vmatmul.mubr.f32.gmra.mxu0 %v2897
        %v2965 = vpop.f32.mrf.mxu0
        %v2966 = vadd.f32 0.0, %v2965
        %v2967 = vpop.f32.mrf.mxu0
        %2968 = vdwg.mxu0
        %v2970 = vsel %vm869, %v2966, 0
        %2972 = vmatprep.subr.mxu0 0.0
        %2973 = vmatpush1.msra.mxu0 0.0
        %2974 = vmatprep.subr.mxu0 0.0
        %2975 = vmatpush1.msra.mxu0 0.0
        %2976 = vmatprep.subr.mxu0 0.0
        %2977 = vmatpush1.msra.mxu0 0.0
        %2978 = vmatprep.subr.mxu0 0.0
        %2979 = vmatpush1.msra.mxu0 0.0
        %2980 = vmatprep.subr.mxu0 0.0
        %2981 = vmatpush1.msra.mxu0 0.0
        %2982 = vmatprep.subr.mxu0 0.0
        %2983 = vmatpush1.msra.mxu0 0.0
        %2984 = vmatprep.subr.mxu0 0.0
        %2985 = vmatpush1.msra.mxu0 0.0
        %2986 = vmatprep.subr.mxu0 0.0
        %2987 = vmatpush1.msra.mxu0 0.0
        %2988 = vmatprep.subr.mxu0 0.0
        %2989 = vmatpush1.msra.mxu0 0.0
        %2990 = vmatprep.subr.mxu0 0.0
        %2991 = vmatpush1.msra.mxu0 0.0
        %2992 = vmatprep.subr.mxu0 0.0
        %2993 = vmatpush1.msra.mxu0 0.0
        %2994 = vmatprep.subr.mxu0 0.0
        %2995 = vmatpush1.msra.mxu0 0.0
        %2996 = vmatprep.subr.mxu0 0.0
        %2997 = vmatpush1.msra.mxu0 0.0
        %2998 = vmatprep.subr.mxu0 0.0
        %2999 = vmatpush1.msra.mxu0 0.0
        %3000 = vmatprep.subr.mxu0 0.0
        %3001 = vmatpush1.msra.mxu0 0.0
        %3002 = vmatprep.subr.mxu0 0.0
        %3003 = vmatpush1.msra.mxu0 %v2053
        %3004 = vmatprep.subr.mxu0 0.0
        %3005 = vmatpush2.msra.mxu0 0.0
        %3006 = vmatprep.subr.mxu0 0.0
        %3007 = vmatpush2.msra.mxu0 0.0
        %3008 = vmatprep.subr.mxu0 0.0
        %3009 = vmatpush2.msra.mxu0 0.0
        %3010 = vmatprep.subr.mxu0 0.0
        %3011 = vmatpush2.msra.mxu0 0.0
        %3012 = vmatprep.subr.mxu0 0.0
        %3013 = vmatpush2.msra.mxu0 0.0
        %3014 = vmatprep.subr.mxu0 0.0
        %3015 = vmatpush2.msra.mxu0 0.0
        %3016 = vmatprep.subr.mxu0 0.0
        %3017 = vmatpush2.msra.mxu0 0.0
        %3018 = vmatprep.subr.mxu0 0.0
        %3019 = vmatpush2.msra.mxu0 0.0
        %3020 = vmatprep.subr.mxu0 0.0
        %3021 = vmatpush2.msra.mxu0 0.0
        %3022 = vmatprep.subr.mxu0 0.0
        %3023 = vmatpush2.msra.mxu0 0.0
        %3024 = vmatprep.subr.mxu0 0.0
        %3025 = vmatpush2.msra.mxu0 0.0
        %3026 = vmatprep.subr.mxu0 0.0
        %3027 = vmatpush2.msra.mxu0 0.0
        %3028 = vmatprep.subr.mxu0 0.0
        %3029 = vmatpush2.msra.mxu0 0.0
        %3030 = vmatprep.subr.mxu0 0.0
        %3031 = vmatpush2.msra.mxu0 0.0
        %3032 = vmatprep.subr.mxu0 0.0
        %3033 = vmatpush2.msra.mxu0 0.0
        %3034 = vmatprep.subr.mxu0 0.0
        %3035 = vmatpush2.msra.mxu0 0.0
        %3036 = vmatprep.mubr.f32.mxu0 0.0
        %3037 = vmatmul.mubr.f32.gmra.mxu0 %v2970
        %v3038 = vpop.f32.mrf.mxu0
        %v3039 = vadd.f32 0.0, %v3038
        %v3040 = vpop.f32.mrf.mxu0
        %3041 = vdwg.mxu0
        %v3042 = vadd.f32 %v2794, %v3039
        %v3044 = vlaneseq
        %v3045 = vshrl.u32 %v3044, 7
        %v3046 = vsub.s32 0, %v3045
        %v3047 = vrot.slane %v2054, %v3046
        %v3049 = vadd.f32 %v3042, %v3047
        %v3050 = vadd.f32 %v1835, %v3049
        %s3051 = scalar_lea.vmem %s4, 2
        %v3052 = vld [vmem:[%s3051] sm:$0x1]
        %s3053 = scalar_lea.vmem %s5, 2
        %v3054 = vld [vmem:[%s3053] sm:$0x1]
        %v3055 = vsel %vm740, %v3050, 0.0
        %3056 = vadd.xlane.f32.xlu0 %v3055
        %v3057 = vpop.xlane.xlu0 %3056
        %v3058 = vmul.f32 %v3057, %v744
        %v3059 = vsub.f32 %v3050, %v3058
        %v3060 = vmul.f32 %v3059, %v3059
        %v3061 = vsel %vm740, %v3060, 0.0
        %3062 = vadd.xlane.f32.xlu0 %v3061
        %v3063 = vpop.xlane.xlu0 %3062
        %v3064 = vmul.f32 %v3063, %v751
        %v3065 = vrsqrt.pop %v3064
        %v3066 = vmul.f32 %v3064, %v3065
        %vm3067 = vcmp.eq.f32.partialorder %v3064, inf
        %v3068 = vsel %vm3067, %v3064, %v3066
        %vm3069 = vcmp.eq.f32.partialorder %v3064, 0.0
        %v3070 = vand.u32 %v3064, 2147483648
        %v3071 = vsel %vm3069, %v3070, %v3068
        %v3072 = vadd.f32 %v3071, 1e-06
        %v3073 = vrcp.pop %v3072
        %v3075 = vlaneseq
        %v3076 = vshrl.u32 %v3075, 7
        %v3077 = vsub.s32 0, %v3076
        %v3078 = vrot.slane %v3052, %v3077
        %v3080 = vmul.f32 %v3078, %v3059
        %v3081 = vmul.f32 %v3080, %v3073
        %v3083 = vlaneseq
        %v3084 = vshrl.u32 %v3083, 7
        %v3085 = vsub.s32 0, %v3084
        %v3086 = vrot.slane %v3054, %v3085
        %v3088 = vadd.f32 %v3081, %v3086
        %v3089 = vld [vmem:[%s16] sm:$0xff]
        %v3090 = vld [vmem:[%s16 + $0x8] sm:$0xff]
        %v3091 = vld [vmem:[%s16 + $0x10] sm:$0xff]
        %v3092 = vld [vmem:[%s16 + $0x18] sm:$0xff]
        %v3093 = vld [vmem:[%s17] sm:$0x1]
        %v3095 = vlaneseq
        %v3096 = vshrl.u32 %v3095, 7
        %v3097 = vsub.s32 0, %v3096
        %v3098 = vrot.slane %v3093, %v3097
        %v3101 = vsel %vm740, %v3088, 0
        %3103 = vmatprep.subr.mxu0 0.0
        %3104 = vmatpush1.msra.mxu0 0.0
        %3105 = vmatprep.subr.mxu0 0.0
        %3106 = vmatpush1.msra.mxu0 0.0
        %3107 = vmatprep.subr.mxu0 0.0
        %3108 = vmatpush1.msra.mxu0 0.0
        %3109 = vmatprep.subr.mxu0 0.0
        %3110 = vmatpush1.msra.mxu0 0.0
        %3111 = vmatprep.subr.mxu0 0.0
        %3112 = vmatpush1.msra.mxu0 0.0
        %3113 = vmatprep.subr.mxu0 0.0
        %3114 = vmatpush1.msra.mxu0 0.0
        %3115 = vmatprep.subr.mxu0 0.0
        %3116 = vmatpush1.msra.mxu0 0.0
        %3117 = vmatprep.subr.mxu0 0.0
        %3118 = vmatpush1.msra.mxu0 0.0
        %3119 = vmatprep.subr.mxu0 0.0
        %3120 = vmatpush1.msra.mxu0 0.0
        %3121 = vmatprep.subr.mxu0 0.0
        %3122 = vmatpush1.msra.mxu0 0.0
        %3123 = vmatprep.subr.mxu0 0.0
        %3124 = vmatpush1.msra.mxu0 0.0
        %3125 = vmatprep.subr.mxu0 0.0
        %3126 = vmatpush1.msra.mxu0 0.0
        %3127 = vmatprep.subr.mxu0 0.0
        %3128 = vmatpush1.msra.mxu0 %v3092
        %3129 = vmatprep.subr.mxu0 0.0
        %3130 = vmatpush1.msra.mxu0 %v3091
        %3131 = vmatprep.subr.mxu0 0.0
        %3132 = vmatpush1.msra.mxu0 %v3090
        %3133 = vmatprep.subr.mxu0 0.0
        %3134 = vmatpush1.msra.mxu0 %v3089
        %3135 = vmatprep.subr.mxu0 0.0
        %3136 = vmatpush2.msra.mxu0 0.0
        %3137 = vmatprep.subr.mxu0 0.0
        %3138 = vmatpush2.msra.mxu0 0.0
        %3139 = vmatprep.subr.mxu0 0.0
        %3140 = vmatpush2.msra.mxu0 0.0
        %3141 = vmatprep.subr.mxu0 0.0
        %3142 = vmatpush2.msra.mxu0 0.0
        %3143 = vmatprep.subr.mxu0 0.0
        %3144 = vmatpush2.msra.mxu0 0.0
        %3145 = vmatprep.subr.mxu0 0.0
        %3146 = vmatpush2.msra.mxu0 0.0
        %3147 = vmatprep.subr.mxu0 0.0
        %3148 = vmatpush2.msra.mxu0 0.0
        %3149 = vmatprep.subr.mxu0 0.0
        %3150 = vmatpush2.msra.mxu0 0.0
        %3151 = vmatprep.subr.mxu0 0.0
        %3152 = vmatpush2.msra.mxu0 0.0
        %3153 = vmatprep.subr.mxu0 0.0
        %3154 = vmatpush2.msra.mxu0 0.0
        %3155 = vmatprep.subr.mxu0 0.0
        %3156 = vmatpush2.msra.mxu0 0.0
        %3157 = vmatprep.subr.mxu0 0.0
        %3158 = vmatpush2.msra.mxu0 0.0
        %3159 = vmatprep.subr.mxu0 0.0
        %3160 = vmatpush2.msra.mxu0 0.0
        %3161 = vmatprep.subr.mxu0 0.0
        %3162 = vmatpush2.msra.mxu0 0.0
        %3163 = vmatprep.subr.mxu0 0.0
        %3164 = vmatpush2.msra.mxu0 0.0
        %3165 = vmatprep.subr.mxu0 0.0
        %3166 = vmatpush2.msra.mxu0 0.0
        %3167 = vmatprep.mubr.f32.mxu0 0.0
        %3168 = vmatmul.mubr.f32.gmra.mxu0 %v3101
        %v3169 = vpop.f32.mrf.mxu0
        %v3170 = vadd.f32 %v3098, %v3169
        %v3171 = vpop.f32.mrf.mxu0
        %3172 = vdwg.mxu0
        %v3173 = vmax.f32 %v3170, 0.0
        %v3174 = vld [vmem:[%s18] sm:$0xff]
        %v3175 = vld [vmem:[%s18 + $0x8] sm:$0xff]
        %v3176 = vld [vmem:[%s18 + $0x10] sm:$0xff]
        %v3177 = vld [vmem:[%s18 + $0x18] sm:$0xff]
        %v3178 = vld [vmem:[%s18 + $0x20] sm:$0xff]
        %v3179 = vld [vmem:[%s18 + $0x28] sm:$0xff]
        %v3180 = vld [vmem:[%s18 + $0x30] sm:$0xff]
        %v3181 = vld [vmem:[%s18 + $0x38] sm:$0xff]
        %vm3182 = vcmask 523264
        %v3184 = vsel %vm3182, %v3173, 0
        %3186 = vmatprep.subr.mxu0 0.0
        %3187 = vmatpush1.msra.mxu0 0.0
        %3188 = vmatprep.subr.mxu0 0.0
        %3189 = vmatpush1.msra.mxu0 0.0
        %3190 = vmatprep.subr.mxu0 0.0
        %3191 = vmatpush1.msra.mxu0 0.0
        %3192 = vmatprep.subr.mxu0 0.0
        %3193 = vmatpush1.msra.mxu0 0.0
        %3194 = vmatprep.subr.mxu0 0.0
        %3195 = vmatpush1.msra.mxu0 0.0
        %3196 = vmatprep.subr.mxu0 0.0
        %3197 = vmatpush1.msra.mxu0 0.0
        %3198 = vmatprep.subr.mxu0 0.0
        %3199 = vmatpush1.msra.mxu0 0.0
        %3200 = vmatprep.subr.mxu0 0.0
        %3201 = vmatpush1.msra.mxu0 0.0
        %3202 = vmatprep.subr.mxu0 0.0
        %3203 = vmatpush1.msra.mxu0 %v3181
        %3204 = vmatprep.subr.mxu0 0.0
        %3205 = vmatpush1.msra.mxu0 %v3180
        %3206 = vmatprep.subr.mxu0 0.0
        %3207 = vmatpush1.msra.mxu0 %v3179
        %3208 = vmatprep.subr.mxu0 0.0
        %3209 = vmatpush1.msra.mxu0 %v3178
        %3210 = vmatprep.subr.mxu0 0.0
        %3211 = vmatpush1.msra.mxu0 %v3177
        %3212 = vmatprep.subr.mxu0 0.0
        %3213 = vmatpush1.msra.mxu0 %v3176
        %3214 = vmatprep.subr.mxu0 0.0
        %3215 = vmatpush1.msra.mxu0 %v3175
        %3216 = vmatprep.subr.mxu0 0.0
        %3217 = vmatpush1.msra.mxu0 %v3174
        %3218 = vmatprep.subr.mxu0 0.0
        %3219 = vmatpush2.msra.mxu0 0.0
        %3220 = vmatprep.subr.mxu0 0.0
        %3221 = vmatpush2.msra.mxu0 0.0
        %3222 = vmatprep.subr.mxu0 0.0
        %3223 = vmatpush2.msra.mxu0 0.0
        %3224 = vmatprep.subr.mxu0 0.0
        %3225 = vmatpush2.msra.mxu0 0.0
        %3226 = vmatprep.subr.mxu0 0.0
        %3227 = vmatpush2.msra.mxu0 0.0
        %3228 = vmatprep.subr.mxu0 0.0
        %3229 = vmatpush2.msra.mxu0 0.0
        %3230 = vmatprep.subr.mxu0 0.0
        %3231 = vmatpush2.msra.mxu0 0.0
        %3232 = vmatprep.subr.mxu0 0.0
        %3233 = vmatpush2.msra.mxu0 0.0
        %3234 = vmatprep.subr.mxu0 0.0
        %3235 = vmatpush2.msra.mxu0 0.0
        %3236 = vmatprep.subr.mxu0 0.0
        %3237 = vmatpush2.msra.mxu0 0.0
        %3238 = vmatprep.subr.mxu0 0.0
        %3239 = vmatpush2.msra.mxu0 0.0
        %3240 = vmatprep.subr.mxu0 0.0
        %3241 = vmatpush2.msra.mxu0 0.0
        %3242 = vmatprep.subr.mxu0 0.0
        %3243 = vmatpush2.msra.mxu0 0.0
        %3244 = vmatprep.subr.mxu0 0.0
        %3245 = vmatpush2.msra.mxu0 0.0
        %3246 = vmatprep.subr.mxu0 0.0
        %3247 = vmatpush2.msra.mxu0 0.0
        %3248 = vmatprep.subr.mxu0 0.0
        %3249 = vmatpush2.msra.mxu0 0.0
        %3250 = vmatprep.mubr.f32.mxu0 0.0
        %3251 = vmatmul.mubr.f32.gmra.mxu0 %v3184
        %v3252 = vpop.f32.mrf.mxu0
        %v3253 = vadd.f32 0.0, %v3252
        %v3254 = vpop.f32.mrf.mxu0
        %3255 = vdwg.mxu0
        %v3256 = vadd.f32 %v3050, %v3253
        %v3257 = vld [vmem:[%s19] sm:$0x1]
        %v3259 = vlaneseq
        %v3260 = vshrl.u32 %v3259, 7
        %v3261 = vsub.s32 0, %v3260
        %v3262 = vrot.slane %v3257, %v3261
        %v3264 = vadd.f32 %v3256, %v3262
        %s3265 = scalar_lea.vmem %s4, 3
        %v3266 = vld [vmem:[%s3265] sm:$0x1]
        %s3267 = scalar_lea.vmem %s5, 3
        %v3268 = vld [vmem:[%s3267] sm:$0x1]
        %v3269 = vsel %vm740, %v3264, 0.0
        %3270 = vadd.xlane.f32.xlu0 %v3269
        %v3271 = vpop.xlane.xlu0 %3270
        %v3272 = vmul.f32 %v3271, %v744
        %v3273 = vsub.f32 %v3264, %v3272
        %v3274 = vmul.f32 %v3273, %v3273
        %v3275 = vsel %vm740, %v3274, 0.0
        %3276 = vadd.xlane.f32.xlu0 %v3275
        %v3277 = vpop.xlane.xlu0 %3276
        %v3278 = vmul.f32 %v3277, %v751
        %v3279 = vrsqrt.pop %v3278
        %v3280 = vmul.f32 %v3278, %v3279
        %vm3281 = vcmp.eq.f32.partialorder %v3278, inf
        %v3282 = vsel %vm3281, %v3278, %v3280
        %vm3283 = vcmp.eq.f32.partialorder %v3278, 0.0
        %v3284 = vand.u32 %v3278, 2147483648
        %v3285 = vsel %vm3283, %v3284, %v3282
        %v3286 = vadd.f32 %v3285, 1e-06
        %v3287 = vrcp.pop %v3286
        %v3289 = vlaneseq
        %v3290 = vshrl.u32 %v3289, 7
        %v3291 = vsub.s32 0, %v3290
        %v3292 = vrot.slane %v3266, %v3291
        %v3294 = vmul.f32 %v3292, %v3273
        %v3295 = vmul.f32 %v3294, %v3287
        %v3297 = vlaneseq
        %v3298 = vshrl.u32 %v3297, 7
        %v3299 = vsub.s32 0, %v3298
        %v3300 = vrot.slane %v3268, %v3299
        %v3302 = vadd.f32 %v3295, %v3300
        %s3303 = scalar_lea.vmem %s6, 32
        %v3304 = vld [vmem:[%s3303] sm:$0xff]
        %v3305 = vld [vmem:[%s3303 + $0x8] sm:$0xff]
        %v3306 = vld [vmem:[%s3303 + $0x10] sm:$0xff]
        %v3307 = vld [vmem:[%s3303 + $0x18] sm:$0xff]
        %s3308 = scalar_lea.vmem %s7, 1
        %v3309 = vld [vmem:[%s3308] sm:$0x1]
        %v3311 = vlaneseq
        %v3312 = vshrl.u32 %v3311, 7
        %v3313 = vsub.s32 0, %v3312
        %v3314 = vrot.slane %v3309, %v3313
        %v3317 = vsel %vm740, %v3302, 0
        %3319 = vmatprep.subr.mxu0 0.0
        %3320 = vmatpush1.msra.mxu0 0.0
        %3321 = vmatprep.subr.mxu0 0.0
        %3322 = vmatpush1.msra.mxu0 0.0
        %3323 = vmatprep.subr.mxu0 0.0
        %3324 = vmatpush1.msra.mxu0 0.0
        %3325 = vmatprep.subr.mxu0 0.0
        %3326 = vmatpush1.msra.mxu0 0.0
        %3327 = vmatprep.subr.mxu0 0.0
        %3328 = vmatpush1.msra.mxu0 0.0
        %3329 = vmatprep.subr.mxu0 0.0
        %3330 = vmatpush1.msra.mxu0 0.0
        %3331 = vmatprep.subr.mxu0 0.0
        %3332 = vmatpush1.msra.mxu0 0.0
        %3333 = vmatprep.subr.mxu0 0.0
        %3334 = vmatpush1.msra.mxu0 0.0
        %3335 = vmatprep.subr.mxu0 0.0
        %3336 = vmatpush1.msra.mxu0 0.0
        %3337 = vmatprep.subr.mxu0 0.0
        %3338 = vmatpush1.msra.mxu0 0.0
        %3339 = vmatprep.subr.mxu0 0.0
        %3340 = vmatpush1.msra.mxu0 0.0
        %3341 = vmatprep.subr.mxu0 0.0
        %3342 = vmatpush1.msra.mxu0 0.0
        %3343 = vmatprep.subr.mxu0 0.0
        %3344 = vmatpush1.msra.mxu0 %v3307
        %3345 = vmatprep.subr.mxu0 0.0
        %3346 = vmatpush1.msra.mxu0 %v3306
        %3347 = vmatprep.subr.mxu0 0.0
        %3348 = vmatpush1.msra.mxu0 %v3305
        %3349 = vmatprep.subr.mxu0 0.0
        %3350 = vmatpush1.msra.mxu0 %v3304
        %3351 = vmatprep.subr.mxu0 0.0
        %3352 = vmatpush2.msra.mxu0 0.0
        %3353 = vmatprep.subr.mxu0 0.0
        %3354 = vmatpush2.msra.mxu0 0.0
        %3355 = vmatprep.subr.mxu0 0.0
        %3356 = vmatpush2.msra.mxu0 0.0
        %3357 = vmatprep.subr.mxu0 0.0
        %3358 = vmatpush2.msra.mxu0 0.0
        %3359 = vmatprep.subr.mxu0 0.0
        %3360 = vmatpush2.msra.mxu0 0.0
        %3361 = vmatprep.subr.mxu0 0.0
        %3362 = vmatpush2.msra.mxu0 0.0
        %3363 = vmatprep.subr.mxu0 0.0
        %3364 = vmatpush2.msra.mxu0 0.0
        %3365 = vmatprep.subr.mxu0 0.0
        %3366 = vmatpush2.msra.mxu0 0.0
        %3367 = vmatprep.subr.mxu0 0.0
        %3368 = vmatpush2.msra.mxu0 0.0
        %3369 = vmatprep.subr.mxu0 0.0
        %3370 = vmatpush2.msra.mxu0 0.0
        %3371 = vmatprep.subr.mxu0 0.0
        %3372 = vmatpush2.msra.mxu0 0.0
        %3373 = vmatprep.subr.mxu0 0.0
        %3374 = vmatpush2.msra.mxu0 0.0
        %3375 = vmatprep.subr.mxu0 0.0
        %3376 = vmatpush2.msra.mxu0 0.0
        %3377 = vmatprep.subr.mxu0 0.0
        %3378 = vmatpush2.msra.mxu0 0.0
        %3379 = vmatprep.subr.mxu0 0.0
        %3380 = vmatpush2.msra.mxu0 0.0
        %3381 = vmatprep.subr.mxu0 0.0
        %3382 = vmatpush2.msra.mxu0 0.0
        %3383 = vmatprep.mubr.f32.mxu0 0.0
        %3384 = vmatmul.mubr.f32.gmra.mxu0 %v3317
        %v3385 = vpop.f32.mrf.mxu0
        %v3386 = vadd.f32 %v3314, %v3385
        %v3387 = vpop.f32.mrf.mxu0
        %3388 = vdwg.mxu0
        %s3389 = scalar_lea.vmem %s8, 32
        %v3390 = vld [vmem:[%s3389] sm:$0xff]
        %v3391 = vld [vmem:[%s3389 + $0x8] sm:$0xff]
        %v3392 = vld [vmem:[%s3389 + $0x10] sm:$0xff]
        %v3393 = vld [vmem:[%s3389 + $0x18] sm:$0xff]
        %s3394 = scalar_lea.vmem %s9, 1
        %v3395 = vld [vmem:[%s3394] sm:$0x1]
        %3397 = vrot.lane.b32.xlu0 %v3386, 96
        %v3398 = vpop.permute.xlu0 %3397
        %v3399 = vsel %vm869, %v3386, 0
        %v3401 = vsel %vm869, %v3398, 0
        %3403 = vmatprep.subr.mxu0 0.0
        %3404 = vmatpush1.xpose.msra.mxu0 0.0
        %3405 = vmatprep.subr.mxu0 0.0
        %3406 = vmatpush1.xpose.msra.mxu0 0.0
        %3407 = vmatprep.subr.mxu0 0.0
        %3408 = vmatpush1.xpose.msra.mxu0 0.0
        %3409 = vmatprep.subr.mxu0 0.0
        %3410 = vmatpush1.xpose.msra.mxu0 0.0
        %3411 = vmatprep.subr.mxu0 0.0
        %3412 = vmatpush1.xpose.msra.mxu0 0.0
        %3413 = vmatprep.subr.mxu0 0.0
        %3414 = vmatpush1.xpose.msra.mxu0 0.0
        %3415 = vmatprep.subr.mxu0 0.0
        %3416 = vmatpush1.xpose.msra.mxu0 0.0
        %3417 = vmatprep.subr.mxu0 0.0
        %3418 = vmatpush1.xpose.msra.mxu0 0.0
        %3419 = vmatprep.subr.mxu0 0.0
        %3420 = vmatpush1.xpose.msra.mxu0 0.0
        %3421 = vmatprep.subr.mxu0 0.0
        %3422 = vmatpush1.xpose.msra.mxu0 0.0
        %3423 = vmatprep.subr.mxu0 0.0
        %3424 = vmatpush1.xpose.msra.mxu0 0.0
        %3425 = vmatprep.subr.mxu0 0.0
        %3426 = vmatpush1.xpose.msra.mxu0 0.0
        %3427 = vmatprep.subr.mxu0 0.0
        %3428 = vmatpush1.xpose.msra.mxu0 0.0
        %3429 = vmatprep.subr.mxu0 0.0
        %3430 = vmatpush1.xpose.msra.mxu0 0.0
        %3431 = vmatprep.subr.mxu0 0.0
        %3432 = vmatpush1.xpose.msra.mxu0 0.0
        %3433 = vmatprep.subr.mxu0 0.0
        %3434 = vmatpush1.xpose.msra.mxu0 %v3401
        %3435 = vmatprep.subr.mxu0 0.0
        %3436 = vmatpush2.xpose.msra.mxu0 0.0
        %3437 = vmatprep.subr.mxu0 0.0
        %3438 = vmatpush2.xpose.msra.mxu0 0.0
        %3439 = vmatprep.subr.mxu0 0.0
        %3440 = vmatpush2.xpose.msra.mxu0 0.0
        %3441 = vmatprep.subr.mxu0 0.0
        %3442 = vmatpush2.xpose.msra.mxu0 0.0
        %3443 = vmatprep.subr.mxu0 0.0
        %3444 = vmatpush2.xpose.msra.mxu0 0.0
        %3445 = vmatprep.subr.mxu0 0.0
        %3446 = vmatpush2.xpose.msra.mxu0 0.0
        %3447 = vmatprep.subr.mxu0 0.0
        %3448 = vmatpush2.xpose.msra.mxu0 0.0
        %3449 = vmatprep.subr.mxu0 0.0
        %3450 = vmatpush2.xpose.msra.mxu0 0.0
        %3451 = vmatprep.subr.mxu0 0.0
        %3452 = vmatpush2.xpose.msra.mxu0 0.0
        %3453 = vmatprep.subr.mxu0 0.0
        %3454 = vmatpush2.xpose.msra.mxu0 0.0
        %3455 = vmatprep.subr.mxu0 0.0
        %3456 = vmatpush2.xpose.msra.mxu0 0.0
        %3457 = vmatprep.subr.mxu0 0.0
        %3458 = vmatpush2.xpose.msra.mxu0 0.0
        %3459 = vmatprep.subr.mxu0 0.0
        %3460 = vmatpush2.xpose.msra.mxu0 0.0
        %3461 = vmatprep.subr.mxu0 0.0
        %3462 = vmatpush2.xpose.msra.mxu0 0.0
        %3463 = vmatprep.subr.mxu0 0.0
        %3464 = vmatpush2.xpose.msra.mxu0 0.0
        %3465 = vmatprep.subr.mxu0 0.0
        %3466 = vmatpush2.xpose.msra.mxu0 0.0
        %3467 = vmatprep.mubr.f32.mxu0 0.0
        %3468 = vmatmul.mubr.f32.gmra.mxu0 %v3399
        %v3469 = vpop.f32.mrf.mxu0
        %v3470 = vadd.f32 0.0, %v3469
        %v3471 = vpop.f32.mrf.mxu0
        %3472 = vdwg.mxu0
        %v3473 = vmul.f32 %v3470, 0.35355338
        %v3474 = vadd.f32 %v3473, %v736
        %v3475 = vsel %vm869, %v3474, -inf
        %3476 = vmax.xlane.f32.xlu0 %v3475
        %v3477 = vpop.xlane.xlu0 %3476
        %v3478 = vsub.f32 %v3474, %v3477
        %v3479 = vmul.f32 %v3478, 1.442695
        %v3480 = vpow.pop %v3479
        %v3481 = vsel %vm869, %v3480, 0.0
        %3482 = vadd.xlane.f32.xlu0 %v3481
        %v3483 = vpop.xlane.xlu0 %3482
        %v3484 = vrcp.pop %v3483
        %v3485 = vmul.f32 %v3480, %v3484
        %3486 = vrot.lane.b32.xlu0 %v3386, 64
        %v3487 = vpop.permute.xlu0 %3486
        %v3490 = vsel %vm869, %v3485, 0
        %3492 = vmatprep.subr.mxu0 0.0
        %3493 = vmatpush1.msra.mxu0 0.0
        %3494 = vmatprep.subr.mxu0 0.0
        %3495 = vmatpush1.msra.mxu0 0.0
        %3496 = vmatprep.subr.mxu0 0.0
        %3497 = vmatpush1.msra.mxu0 0.0
        %3498 = vmatprep.subr.mxu0 0.0
        %3499 = vmatpush1.msra.mxu0 0.0
        %3500 = vmatprep.subr.mxu0 0.0
        %3501 = vmatpush1.msra.mxu0 0.0
        %3502 = vmatprep.subr.mxu0 0.0
        %3503 = vmatpush1.msra.mxu0 0.0
        %3504 = vmatprep.subr.mxu0 0.0
        %3505 = vmatpush1.msra.mxu0 0.0
        %3506 = vmatprep.subr.mxu0 0.0
        %3507 = vmatpush1.msra.mxu0 0.0
        %3508 = vmatprep.subr.mxu0 0.0
        %3509 = vmatpush1.msra.mxu0 0.0
        %3510 = vmatprep.subr.mxu0 0.0
        %3511 = vmatpush1.msra.mxu0 0.0
        %3512 = vmatprep.subr.mxu0 0.0
        %3513 = vmatpush1.msra.mxu0 0.0
        %3514 = vmatprep.subr.mxu0 0.0
        %3515 = vmatpush1.msra.mxu0 0.0
        %3516 = vmatprep.subr.mxu0 0.0
        %3517 = vmatpush1.msra.mxu0 0.0
        %3518 = vmatprep.subr.mxu0 0.0
        %3519 = vmatpush1.msra.mxu0 0.0
        %3520 = vmatprep.subr.mxu0 0.0
        %3521 = vmatpush1.msra.mxu0 0.0
        %3522 = vmatprep.subr.mxu0 0.0
        %3523 = vmatpush1.msra.mxu0 %v3487
        %3524 = vmatprep.subr.mxu0 0.0
        %3525 = vmatpush2.msra.mxu0 0.0
        %3526 = vmatprep.subr.mxu0 0.0
        %3527 = vmatpush2.msra.mxu0 0.0
        %3528 = vmatprep.subr.mxu0 0.0
        %3529 = vmatpush2.msra.mxu0 0.0
        %3530 = vmatprep.subr.mxu0 0.0
        %3531 = vmatpush2.msra.mxu0 0.0
        %3532 = vmatprep.subr.mxu0 0.0
        %3533 = vmatpush2.msra.mxu0 0.0
        %3534 = vmatprep.subr.mxu0 0.0
        %3535 = vmatpush2.msra.mxu0 0.0
        %3536 = vmatprep.subr.mxu0 0.0
        %3537 = vmatpush2.msra.mxu0 0.0
        %3538 = vmatprep.subr.mxu0 0.0
        %3539 = vmatpush2.msra.mxu0 0.0
        %3540 = vmatprep.subr.mxu0 0.0
        %3541 = vmatpush2.msra.mxu0 0.0
        %3542 = vmatprep.subr.mxu0 0.0
        %3543 = vmatpush2.msra.mxu0 0.0
        %3544 = vmatprep.subr.mxu0 0.0
        %3545 = vmatpush2.msra.mxu0 0.0
        %3546 = vmatprep.subr.mxu0 0.0
        %3547 = vmatpush2.msra.mxu0 0.0
        %3548 = vmatprep.subr.mxu0 0.0
        %3549 = vmatpush2.msra.mxu0 0.0
        %3550 = vmatprep.subr.mxu0 0.0
        %3551 = vmatpush2.msra.mxu0 0.0
        %3552 = vmatprep.subr.mxu0 0.0
        %3553 = vmatpush2.msra.mxu0 0.0
        %3554 = vmatprep.subr.mxu0 0.0
        %3555 = vmatpush2.msra.mxu0 0.0
        %3556 = vmatprep.mubr.f32.mxu0 0.0
        %3557 = vmatmul.mubr.f32.gmra.mxu0 %v3490
        %v3558 = vpop.f32.mrf.mxu0
        %v3559 = vadd.f32 0.0, %v3558
        %v3560 = vpop.f32.mrf.mxu0
        %3561 = vdwg.mxu0
        %3562 = vrot.lane.b32.xlu0 %v3386, 120
        %v3563 = vpop.permute.xlu0 %3562
        %3564 = vrot.lane.b32.xlu0 %v3386, 88
        %v3565 = vpop.permute.xlu0 %3564
        %v3566 = vsel %vm869, %v3563, 0
        %v3568 = vsel %vm869, %v3565, 0
        %3570 = vmatprep.subr.mxu0 0.0
        %3571 = vmatpush1.xpose.msra.mxu0 0.0
        %3572 = vmatprep.subr.mxu0 0.0
        %3573 = vmatpush1.xpose.msra.mxu0 0.0
        %3574 = vmatprep.subr.mxu0 0.0
        %3575 = vmatpush1.xpose.msra.mxu0 0.0
        %3576 = vmatprep.subr.mxu0 0.0
        %3577 = vmatpush1.xpose.msra.mxu0 0.0
        %3578 = vmatprep.subr.mxu0 0.0
        %3579 = vmatpush1.xpose.msra.mxu0 0.0
        %3580 = vmatprep.subr.mxu0 0.0
        %3581 = vmatpush1.xpose.msra.mxu0 0.0
        %3582 = vmatprep.subr.mxu0 0.0
        %3583 = vmatpush1.xpose.msra.mxu0 0.0
        %3584 = vmatprep.subr.mxu0 0.0
        %3585 = vmatpush1.xpose.msra.mxu0 0.0
        %3586 = vmatprep.subr.mxu0 0.0
        %3587 = vmatpush1.xpose.msra.mxu0 0.0
        %3588 = vmatprep.subr.mxu0 0.0
        %3589 = vmatpush1.xpose.msra.mxu0 0.0
        %3590 = vmatprep.subr.mxu0 0.0
        %3591 = vmatpush1.xpose.msra.mxu0 0.0
        %3592 = vmatprep.subr.mxu0 0.0
        %3593 = vmatpush1.xpose.msra.mxu0 0.0
        %3594 = vmatprep.subr.mxu0 0.0
        %3595 = vmatpush1.xpose.msra.mxu0 0.0
        %3596 = vmatprep.subr.mxu0 0.0
        %3597 = vmatpush1.xpose.msra.mxu0 0.0
        %3598 = vmatprep.subr.mxu0 0.0
        %3599 = vmatpush1.xpose.msra.mxu0 0.0
        %3600 = vmatprep.subr.mxu0 0.0
        %3601 = vmatpush1.xpose.msra.mxu0 %v3568
        %3602 = vmatprep.subr.mxu0 0.0
        %3603 = vmatpush2.xpose.msra.mxu0 0.0
        %3604 = vmatprep.subr.mxu0 0.0
        %3605 = vmatpush2.xpose.msra.mxu0 0.0
        %3606 = vmatprep.subr.mxu0 0.0
        %3607 = vmatpush2.xpose.msra.mxu0 0.0
        %3608 = vmatprep.subr.mxu0 0.0
        %3609 = vmatpush2.xpose.msra.mxu0 0.0
        %3610 = vmatprep.subr.mxu0 0.0
        %3611 = vmatpush2.xpose.msra.mxu0 0.0
        %3612 = vmatprep.subr.mxu0 0.0
        %3613 = vmatpush2.xpose.msra.mxu0 0.0
        %3614 = vmatprep.subr.mxu0 0.0
        %3615 = vmatpush2.xpose.msra.mxu0 0.0
        %3616 = vmatprep.subr.mxu0 0.0
        %3617 = vmatpush2.xpose.msra.mxu0 0.0
        %3618 = vmatprep.subr.mxu0 0.0
        %3619 = vmatpush2.xpose.msra.mxu0 0.0
        %3620 = vmatprep.subr.mxu0 0.0
        %3621 = vmatpush2.xpose.msra.mxu0 0.0
        %3622 = vmatprep.subr.mxu0 0.0
        %3623 = vmatpush2.xpose.msra.mxu0 0.0
        %3624 = vmatprep.subr.mxu0 0.0
        %3625 = vmatpush2.xpose.msra.mxu0 0.0
        %3626 = vmatprep.subr.mxu0 0.0
        %3627 = vmatpush2.xpose.msra.mxu0 0.0
        %3628 = vmatprep.subr.mxu0 0.0
        %3629 = vmatpush2.xpose.msra.mxu0 0.0
        %3630 = vmatprep.subr.mxu0 0.0
        %3631 = vmatpush2.xpose.msra.mxu0 0.0
        %3632 = vmatprep.subr.mxu0 0.0
        %3633 = vmatpush2.xpose.msra.mxu0 0.0
        %3634 = vmatprep.mubr.f32.mxu0 0.0
        %3635 = vmatmul.mubr.f32.gmra.mxu0 %v3566
        %v3636 = vpop.f32.mrf.mxu0
        %v3637 = vadd.f32 0.0, %v3636
        %v3638 = vpop.f32.mrf.mxu0
        %3639 = vdwg.mxu0
        %v3640 = vmul.f32 %v3637, 0.35355338
        %v3641 = vadd.f32 %v3640, %v736
        %v3642 = vsel %vm869, %v3641, -inf
        %3643 = vmax.xlane.f32.xlu0 %v3642
        %v3644 = vpop.xlane.xlu0 %3643
        %v3645 = vsub.f32 %v3641, %v3644
        %v3646 = vmul.f32 %v3645, 1.442695
        %v3647 = vpow.pop %v3646
        %v3648 = vsel %vm869, %v3647, 0.0
        %3649 = vadd.xlane.f32.xlu0 %v3648
        %v3650 = vpop.xlane.xlu0 %3649
        %v3651 = vrcp.pop %v3650
        %v3652 = vmul.f32 %v3647, %v3651
        %3653 = vrot.lane.b32.xlu0 %v3386, 56
        %v3654 = vpop.permute.xlu0 %3653
        %v3657 = vsel %vm869, %v3652, 0
        %3659 = vmatprep.subr.mxu0 0.0
        %3660 = vmatpush1.msra.mxu0 0.0
        %3661 = vmatprep.subr.mxu0 0.0
        %3662 = vmatpush1.msra.mxu0 0.0
        %3663 = vmatprep.subr.mxu0 0.0
        %3664 = vmatpush1.msra.mxu0 0.0
        %3665 = vmatprep.subr.mxu0 0.0
        %3666 = vmatpush1.msra.mxu0 0.0
        %3667 = vmatprep.subr.mxu0 0.0
        %3668 = vmatpush1.msra.mxu0 0.0
        %3669 = vmatprep.subr.mxu0 0.0
        %3670 = vmatpush1.msra.mxu0 0.0
        %3671 = vmatprep.subr.mxu0 0.0
        %3672 = vmatpush1.msra.mxu0 0.0
        %3673 = vmatprep.subr.mxu0 0.0
        %3674 = vmatpush1.msra.mxu0 0.0
        %3675 = vmatprep.subr.mxu0 0.0
        %3676 = vmatpush1.msra.mxu0 0.0
        %3677 = vmatprep.subr.mxu0 0.0
        %3678 = vmatpush1.msra.mxu0 0.0
        %3679 = vmatprep.subr.mxu0 0.0
        %3680 = vmatpush1.msra.mxu0 0.0
        %3681 = vmatprep.subr.mxu0 0.0
        %3682 = vmatpush1.msra.mxu0 0.0
        %3683 = vmatprep.subr.mxu0 0.0
        %3684 = vmatpush1.msra.mxu0 0.0
        %3685 = vmatprep.subr.mxu0 0.0
        %3686 = vmatpush1.msra.mxu0 0.0
        %3687 = vmatprep.subr.mxu0 0.0
        %3688 = vmatpush1.msra.mxu0 0.0
        %3689 = vmatprep.subr.mxu0 0.0
        %3690 = vmatpush1.msra.mxu0 %v3654
        %3691 = vmatprep.subr.mxu0 0.0
        %3692 = vmatpush2.msra.mxu0 0.0
        %3693 = vmatprep.subr.mxu0 0.0
        %3694 = vmatpush2.msra.mxu0 0.0
        %3695 = vmatprep.subr.mxu0 0.0
        %3696 = vmatpush2.msra.mxu0 0.0
        %3697 = vmatprep.subr.mxu0 0.0
        %3698 = vmatpush2.msra.mxu0 0.0
        %3699 = vmatprep.subr.mxu0 0.0
        %3700 = vmatpush2.msra.mxu0 0.0
        %3701 = vmatprep.subr.mxu0 0.0
        %3702 = vmatpush2.msra.mxu0 0.0
        %3703 = vmatprep.subr.mxu0 0.0
        %3704 = vmatpush2.msra.mxu0 0.0
        %3705 = vmatprep.subr.mxu0 0.0
        %3706 = vmatpush2.msra.mxu0 0.0
        %3707 = vmatprep.subr.mxu0 0.0
        %3708 = vmatpush2.msra.mxu0 0.0
        %3709 = vmatprep.subr.mxu0 0.0
        %3710 = vmatpush2.msra.mxu0 0.0
        %3711 = vmatprep.subr.mxu0 0.0
        %3712 = vmatpush2.msra.mxu0 0.0
        %3713 = vmatprep.subr.mxu0 0.0
        %3714 = vmatpush2.msra.mxu0 0.0
        %3715 = vmatprep.subr.mxu0 0.0
        %3716 = vmatpush2.msra.mxu0 0.0
        %3717 = vmatprep.subr.mxu0 0.0
        %3718 = vmatpush2.msra.mxu0 0.0
        %3719 = vmatprep.subr.mxu0 0.0
        %3720 = vmatpush2.msra.mxu0 0.0
        %3721 = vmatprep.subr.mxu0 0.0
        %3722 = vmatpush2.msra.mxu0 0.0
        %3723 = vmatprep.mubr.f32.mxu0 0.0
        %3724 = vmatmul.mubr.f32.gmra.mxu0 %v3657
        %v3725 = vpop.f32.mrf.mxu0
        %v3726 = vadd.f32 0.0, %v3725
        %v3727 = vpop.f32.mrf.mxu0
        %3728 = vdwg.mxu0
        %v3730 = vsel %vm869, %v3726, 0
        %3732 = vmatprep.subr.mxu0 0.0
        %3733 = vmatpush1.msra.mxu0 0.0
        %3734 = vmatprep.subr.mxu0 0.0
        %3735 = vmatpush1.msra.mxu0 0.0
        %3736 = vmatprep.subr.mxu0 0.0
        %3737 = vmatpush1.msra.mxu0 0.0
        %3738 = vmatprep.subr.mxu0 0.0
        %3739 = vmatpush1.msra.mxu0 0.0
        %3740 = vmatprep.subr.mxu0 0.0
        %3741 = vmatpush1.msra.mxu0 0.0
        %3742 = vmatprep.subr.mxu0 0.0
        %3743 = vmatpush1.msra.mxu0 0.0
        %3744 = vmatprep.subr.mxu0 0.0
        %3745 = vmatpush1.msra.mxu0 0.0
        %3746 = vmatprep.subr.mxu0 0.0
        %3747 = vmatpush1.msra.mxu0 0.0
        %3748 = vmatprep.subr.mxu0 0.0
        %3749 = vmatpush1.msra.mxu0 0.0
        %3750 = vmatprep.subr.mxu0 0.0
        %3751 = vmatpush1.msra.mxu0 0.0
        %3752 = vmatprep.subr.mxu0 0.0
        %3753 = vmatpush1.msra.mxu0 0.0
        %3754 = vmatprep.subr.mxu0 0.0
        %3755 = vmatpush1.msra.mxu0 0.0
        %3756 = vmatprep.subr.mxu0 0.0
        %3757 = vmatpush1.msra.mxu0 0.0
        %3758 = vmatprep.subr.mxu0 0.0
        %3759 = vmatpush1.msra.mxu0 0.0
        %3760 = vmatprep.subr.mxu0 0.0
        %3761 = vmatpush1.msra.mxu0 0.0
        %3762 = vmatprep.subr.mxu0 0.0
        %3763 = vmatpush1.msra.mxu0 %v3391
        %3764 = vmatprep.subr.mxu0 0.0
        %3765 = vmatpush2.msra.mxu0 0.0
        %3766 = vmatprep.subr.mxu0 0.0
        %3767 = vmatpush2.msra.mxu0 0.0
        %3768 = vmatprep.subr.mxu0 0.0
        %3769 = vmatpush2.msra.mxu0 0.0
        %3770 = vmatprep.subr.mxu0 0.0
        %3771 = vmatpush2.msra.mxu0 0.0
        %3772 = vmatprep.subr.mxu0 0.0
        %3773 = vmatpush2.msra.mxu0 0.0
        %3774 = vmatprep.subr.mxu0 0.0
        %3775 = vmatpush2.msra.mxu0 0.0
        %3776 = vmatprep.subr.mxu0 0.0
        %3777 = vmatpush2.msra.mxu0 0.0
        %3778 = vmatprep.subr.mxu0 0.0
        %3779 = vmatpush2.msra.mxu0 0.0
        %3780 = vmatprep.subr.mxu0 0.0
        %3781 = vmatpush2.msra.mxu0 0.0
        %3782 = vmatprep.subr.mxu0 0.0
        %3783 = vmatpush2.msra.mxu0 0.0
        %3784 = vmatprep.subr.mxu0 0.0
        %3785 = vmatpush2.msra.mxu0 0.0
        %3786 = vmatprep.subr.mxu0 0.0
        %3787 = vmatpush2.msra.mxu0 0.0
        %3788 = vmatprep.subr.mxu0 0.0
        %3789 = vmatpush2.msra.mxu0 0.0
        %3790 = vmatprep.subr.mxu0 0.0
        %3791 = vmatpush2.msra.mxu0 0.0
        %3792 = vmatprep.subr.mxu0 0.0
        %3793 = vmatpush2.msra.mxu0 0.0
        %3794 = vmatprep.subr.mxu0 0.0
        %3795 = vmatpush2.msra.mxu0 0.0
        %3796 = vmatprep.mubr.f32.mxu0 0.0
        %3797 = vmatmul.mubr.f32.gmra.mxu0 %v3730
        %v3798 = vpop.f32.mrf.mxu0
        %v3799 = vadd.f32 0.0, %v3798
        %v3800 = vpop.f32.mrf.mxu0
        %3801 = vdwg.mxu0
        %v3803 = vsel %vm869, %v3559, 0
        %3805 = vmatprep.subr.mxu0 0.0
        %3806 = vmatpush1.msra.mxu0 0.0
        %3807 = vmatprep.subr.mxu0 0.0
        %3808 = vmatpush1.msra.mxu0 0.0
        %3809 = vmatprep.subr.mxu0 0.0
        %3810 = vmatpush1.msra.mxu0 0.0
        %3811 = vmatprep.subr.mxu0 0.0
        %3812 = vmatpush1.msra.mxu0 0.0
        %3813 = vmatprep.subr.mxu0 0.0
        %3814 = vmatpush1.msra.mxu0 0.0
        %3815 = vmatprep.subr.mxu0 0.0
        %3816 = vmatpush1.msra.mxu0 0.0
        %3817 = vmatprep.subr.mxu0 0.0
        %3818 = vmatpush1.msra.mxu0 0.0
        %3819 = vmatprep.subr.mxu0 0.0
        %3820 = vmatpush1.msra.mxu0 0.0
        %3821 = vmatprep.subr.mxu0 0.0
        %3822 = vmatpush1.msra.mxu0 0.0
        %3823 = vmatprep.subr.mxu0 0.0
        %3824 = vmatpush1.msra.mxu0 0.0
        %3825 = vmatprep.subr.mxu0 0.0
        %3826 = vmatpush1.msra.mxu0 0.0
        %3827 = vmatprep.subr.mxu0 0.0
        %3828 = vmatpush1.msra.mxu0 0.0
        %3829 = vmatprep.subr.mxu0 0.0
        %3830 = vmatpush1.msra.mxu0 0.0
        %3831 = vmatprep.subr.mxu0 0.0
        %3832 = vmatpush1.msra.mxu0 0.0
        %3833 = vmatprep.subr.mxu0 0.0
        %3834 = vmatpush1.msra.mxu0 0.0
        %3835 = vmatprep.subr.mxu0 0.0
        %3836 = vmatpush1.msra.mxu0 %v3390
        %3837 = vmatprep.subr.mxu0 0.0
        %3838 = vmatpush2.msra.mxu0 0.0
        %3839 = vmatprep.subr.mxu0 0.0
        %3840 = vmatpush2.msra.mxu0 0.0
        %3841 = vmatprep.subr.mxu0 0.0
        %3842 = vmatpush2.msra.mxu0 0.0
        %3843 = vmatprep.subr.mxu0 0.0
        %3844 = vmatpush2.msra.mxu0 0.0
        %3845 = vmatprep.subr.mxu0 0.0
        %3846 = vmatpush2.msra.mxu0 0.0
        %3847 = vmatprep.subr.mxu0 0.0
        %3848 = vmatpush2.msra.mxu0 0.0
        %3849 = vmatprep.subr.mxu0 0.0
        %3850 = vmatpush2.msra.mxu0 0.0
        %3851 = vmatprep.subr.mxu0 0.0
        %3852 = vmatpush2.msra.mxu0 0.0
        %3853 = vmatprep.subr.mxu0 0.0
        %3854 = vmatpush2.msra.mxu0 0.0
        %3855 = vmatprep.subr.mxu0 0.0
        %3856 = vmatpush2.msra.mxu0 0.0
        %3857 = vmatprep.subr.mxu0 0.0
        %3858 = vmatpush2.msra.mxu0 0.0
        %3859 = vmatprep.subr.mxu0 0.0
        %3860 = vmatpush2.msra.mxu0 0.0
        %3861 = vmatprep.subr.mxu0 0.0
        %3862 = vmatpush2.msra.mxu0 0.0
        %3863 = vmatprep.subr.mxu0 0.0
        %3864 = vmatpush2.msra.mxu0 0.0
        %3865 = vmatprep.subr.mxu0 0.0
        %3866 = vmatpush2.msra.mxu0 0.0
        %3867 = vmatprep.subr.mxu0 0.0
        %3868 = vmatpush2.msra.mxu0 0.0
        %3869 = vmatprep.mubr.f32.mxu0 0.0
        %3870 = vmatmul.mubr.f32.gmra.mxu0 %v3803
        %v3871 = vpop.f32.mrf.mxu0
        %v3872 = vadd.f32 %v3799, %v3871
        %v3873 = vpop.f32.mrf.mxu0
        %3874 = vdwg.mxu0
        %3875 = vrot.lane.b32.xlu0 %v3386, 112
        %v3876 = vpop.permute.xlu0 %3875
        %3877 = vrot.lane.b32.xlu0 %v3386, 80
        %v3878 = vpop.permute.xlu0 %3877
        %v3879 = vsel %vm869, %v3876, 0
        %v3881 = vsel %vm869, %v3878, 0
        %3883 = vmatprep.subr.mxu0 0.0
        %3884 = vmatpush1.xpose.msra.mxu0 0.0
        %3885 = vmatprep.subr.mxu0 0.0
        %3886 = vmatpush1.xpose.msra.mxu0 0.0
        %3887 = vmatprep.subr.mxu0 0.0
        %3888 = vmatpush1.xpose.msra.mxu0 0.0
        %3889 = vmatprep.subr.mxu0 0.0
        %3890 = vmatpush1.xpose.msra.mxu0 0.0
        %3891 = vmatprep.subr.mxu0 0.0
        %3892 = vmatpush1.xpose.msra.mxu0 0.0
        %3893 = vmatprep.subr.mxu0 0.0
        %3894 = vmatpush1.xpose.msra.mxu0 0.0
        %3895 = vmatprep.subr.mxu0 0.0
        %3896 = vmatpush1.xpose.msra.mxu0 0.0
        %3897 = vmatprep.subr.mxu0 0.0
        %3898 = vmatpush1.xpose.msra.mxu0 0.0
        %3899 = vmatprep.subr.mxu0 0.0
        %3900 = vmatpush1.xpose.msra.mxu0 0.0
        %3901 = vmatprep.subr.mxu0 0.0
        %3902 = vmatpush1.xpose.msra.mxu0 0.0
        %3903 = vmatprep.subr.mxu0 0.0
        %3904 = vmatpush1.xpose.msra.mxu0 0.0
        %3905 = vmatprep.subr.mxu0 0.0
        %3906 = vmatpush1.xpose.msra.mxu0 0.0
        %3907 = vmatprep.subr.mxu0 0.0
        %3908 = vmatpush1.xpose.msra.mxu0 0.0
        %3909 = vmatprep.subr.mxu0 0.0
        %3910 = vmatpush1.xpose.msra.mxu0 0.0
        %3911 = vmatprep.subr.mxu0 0.0
        %3912 = vmatpush1.xpose.msra.mxu0 0.0
        %3913 = vmatprep.subr.mxu0 0.0
        %3914 = vmatpush1.xpose.msra.mxu0 %v3881
        %3915 = vmatprep.subr.mxu0 0.0
        %3916 = vmatpush2.xpose.msra.mxu0 0.0
        %3917 = vmatprep.subr.mxu0 0.0
        %3918 = vmatpush2.xpose.msra.mxu0 0.0
        %3919 = vmatprep.subr.mxu0 0.0
        %3920 = vmatpush2.xpose.msra.mxu0 0.0
        %3921 = vmatprep.subr.mxu0 0.0
        %3922 = vmatpush2.xpose.msra.mxu0 0.0
        %3923 = vmatprep.subr.mxu0 0.0
        %3924 = vmatpush2.xpose.msra.mxu0 0.0
        %3925 = vmatprep.subr.mxu0 0.0
        %3926 = vmatpush2.xpose.msra.mxu0 0.0
        %3927 = vmatprep.subr.mxu0 0.0
        %3928 = vmatpush2.xpose.msra.mxu0 0.0
        %3929 = vmatprep.subr.mxu0 0.0
        %3930 = vmatpush2.xpose.msra.mxu0 0.0
        %3931 = vmatprep.subr.mxu0 0.0
        %3932 = vmatpush2.xpose.msra.mxu0 0.0
        %3933 = vmatprep.subr.mxu0 0.0
        %3934 = vmatpush2.xpose.msra.mxu0 0.0
        %3935 = vmatprep.subr.mxu0 0.0
        %3936 = vmatpush2.xpose.msra.mxu0 0.0
        %3937 = vmatprep.subr.mxu0 0.0
        %3938 = vmatpush2.xpose.msra.mxu0 0.0
        %3939 = vmatprep.subr.mxu0 0.0
        %3940 = vmatpush2.xpose.msra.mxu0 0.0
        %3941 = vmatprep.subr.mxu0 0.0
        %3942 = vmatpush2.xpose.msra.mxu0 0.0
        %3943 = vmatprep.subr.mxu0 0.0
        %3944 = vmatpush2.xpose.msra.mxu0 0.0
        %3945 = vmatprep.subr.mxu0 0.0
        %3946 = vmatpush2.xpose.msra.mxu0 0.0
        %3947 = vmatprep.mubr.f32.mxu0 0.0
        %3948 = vmatmul.mubr.f32.gmra.mxu0 %v3879
        %v3949 = vpop.f32.mrf.mxu0
        %v3950 = vadd.f32 0.0, %v3949
        %v3951 = vpop.f32.mrf.mxu0
        %3952 = vdwg.mxu0
        %v3953 = vmul.f32 %v3950, 0.35355338
        %v3954 = vadd.f32 %v3953, %v736
        %v3955 = vsel %vm869, %v3954, -inf
        %3956 = vmax.xlane.f32.xlu0 %v3955
        %v3957 = vpop.xlane.xlu0 %3956
        %v3958 = vsub.f32 %v3954, %v3957
        %v3959 = vmul.f32 %v3958, 1.442695
        %v3960 = vpow.pop %v3959
        %v3961 = vsel %vm869, %v3960, 0.0
        %3962 = vadd.xlane.f32.xlu0 %v3961
        %v3963 = vpop.xlane.xlu0 %3962
        %v3964 = vrcp.pop %v3963
        %v3965 = vmul.f32 %v3960, %v3964
        %3966 = vrot.lane.b32.xlu0 %v3386, 48
        %v3967 = vpop.permute.xlu0 %3966
        %v3970 = vsel %vm869, %v3965, 0
        %3972 = vmatprep.subr.mxu0 0.0
        %3973 = vmatpush1.msra.mxu0 0.0
        %3974 = vmatprep.subr.mxu0 0.0
        %3975 = vmatpush1.msra.mxu0 0.0
        %3976 = vmatprep.subr.mxu0 0.0
        %3977 = vmatpush1.msra.mxu0 0.0
        %3978 = vmatprep.subr.mxu0 0.0
        %3979 = vmatpush1.msra.mxu0 0.0
        %3980 = vmatprep.subr.mxu0 0.0
        %3981 = vmatpush1.msra.mxu0 0.0
        %3982 = vmatprep.subr.mxu0 0.0
        %3983 = vmatpush1.msra.mxu0 0.0
        %3984 = vmatprep.subr.mxu0 0.0
        %3985 = vmatpush1.msra.mxu0 0.0
        %3986 = vmatprep.subr.mxu0 0.0
        %3987 = vmatpush1.msra.mxu0 0.0
        %3988 = vmatprep.subr.mxu0 0.0
        %3989 = vmatpush1.msra.mxu0 0.0
        %3990 = vmatprep.subr.mxu0 0.0
        %3991 = vmatpush1.msra.mxu0 0.0
        %3992 = vmatprep.subr.mxu0 0.0
        %3993 = vmatpush1.msra.mxu0 0.0
        %3994 = vmatprep.subr.mxu0 0.0
        %3995 = vmatpush1.msra.mxu0 0.0
        %3996 = vmatprep.subr.mxu0 0.0
        %3997 = vmatpush1.msra.mxu0 0.0
        %3998 = vmatprep.subr.mxu0 0.0
        %3999 = vmatpush1.msra.mxu0 0.0
        %4000 = vmatprep.subr.mxu0 0.0
        %4001 = vmatpush1.msra.mxu0 0.0
        %4002 = vmatprep.subr.mxu0 0.0
        %4003 = vmatpush1.msra.mxu0 %v3967
        %4004 = vmatprep.subr.mxu0 0.0
        %4005 = vmatpush2.msra.mxu0 0.0
        %4006 = vmatprep.subr.mxu0 0.0
        %4007 = vmatpush2.msra.mxu0 0.0
        %4008 = vmatprep.subr.mxu0 0.0
        %4009 = vmatpush2.msra.mxu0 0.0
        %4010 = vmatprep.subr.mxu0 0.0
        %4011 = vmatpush2.msra.mxu0 0.0
        %4012 = vmatprep.subr.mxu0 0.0
        %4013 = vmatpush2.msra.mxu0 0.0
        %4014 = vmatprep.subr.mxu0 0.0
        %4015 = vmatpush2.msra.mxu0 0.0
        %4016 = vmatprep.subr.mxu0 0.0
        %4017 = vmatpush2.msra.mxu0 0.0
        %4018 = vmatprep.subr.mxu0 0.0
        %4019 = vmatpush2.msra.mxu0 0.0
        %4020 = vmatprep.subr.mxu0 0.0
        %4021 = vmatpush2.msra.mxu0 0.0
        %4022 = vmatprep.subr.mxu0 0.0
        %4023 = vmatpush2.msra.mxu0 0.0
        %4024 = vmatprep.subr.mxu0 0.0
        %4025 = vmatpush2.msra.mxu0 0.0
        %4026 = vmatprep.subr.mxu0 0.0
        %4027 = vmatpush2.msra.mxu0 0.0
        %4028 = vmatprep.subr.mxu0 0.0
        %4029 = vmatpush2.msra.mxu0 0.0
        %4030 = vmatprep.subr.mxu0 0.0
        %4031 = vmatpush2.msra.mxu0 0.0
        %4032 = vmatprep.subr.mxu0 0.0
        %4033 = vmatpush2.msra.mxu0 0.0
        %4034 = vmatprep.subr.mxu0 0.0
        %4035 = vmatpush2.msra.mxu0 0.0
        %4036 = vmatprep.mubr.f32.mxu0 0.0
        %4037 = vmatmul.mubr.f32.gmra.mxu0 %v3970
        %v4038 = vpop.f32.mrf.mxu0
        %v4039 = vadd.f32 0.0, %v4038
        %v4040 = vpop.f32.mrf.mxu0
        %4041 = vdwg.mxu0
        %v4043 = vsel %vm869, %v4039, 0
        %4045 = vmatprep.subr.mxu0 0.0
        %4046 = vmatpush1.msra.mxu0 0.0
        %4047 = vmatprep.subr.mxu0 0.0
        %4048 = vmatpush1.msra.mxu0 0.0
        %4049 = vmatprep.subr.mxu0 0.0
        %4050 = vmatpush1.msra.mxu0 0.0
        %4051 = vmatprep.subr.mxu0 0.0
        %4052 = vmatpush1.msra.mxu0 0.0
        %4053 = vmatprep.subr.mxu0 0.0
        %4054 = vmatpush1.msra.mxu0 0.0
        %4055 = vmatprep.subr.mxu0 0.0
        %4056 = vmatpush1.msra.mxu0 0.0
        %4057 = vmatprep.subr.mxu0 0.0
        %4058 = vmatpush1.msra.mxu0 0.0
        %4059 = vmatprep.subr.mxu0 0.0
        %4060 = vmatpush1.msra.mxu0 0.0
        %4061 = vmatprep.subr.mxu0 0.0
        %4062 = vmatpush1.msra.mxu0 0.0
        %4063 = vmatprep.subr.mxu0 0.0
        %4064 = vmatpush1.msra.mxu0 0.0
        %4065 = vmatprep.subr.mxu0 0.0
        %4066 = vmatpush1.msra.mxu0 0.0
        %4067 = vmatprep.subr.mxu0 0.0
        %4068 = vmatpush1.msra.mxu0 0.0
        %4069 = vmatprep.subr.mxu0 0.0
        %4070 = vmatpush1.msra.mxu0 0.0
        %4071 = vmatprep.subr.mxu0 0.0
        %4072 = vmatpush1.msra.mxu0 0.0
        %4073 = vmatprep.subr.mxu0 0.0
        %4074 = vmatpush1.msra.mxu0 0.0
        %4075 = vmatprep.subr.mxu0 0.0
        %4076 = vmatpush1.msra.mxu0 %v3392
        %4077 = vmatprep.subr.mxu0 0.0
        %4078 = vmatpush2.msra.mxu0 0.0
        %4079 = vmatprep.subr.mxu0 0.0
        %4080 = vmatpush2.msra.mxu0 0.0
        %4081 = vmatprep.subr.mxu0 0.0
        %4082 = vmatpush2.msra.mxu0 0.0
        %4083 = vmatprep.subr.mxu0 0.0
        %4084 = vmatpush2.msra.mxu0 0.0
        %4085 = vmatprep.subr.mxu0 0.0
        %4086 = vmatpush2.msra.mxu0 0.0
        %4087 = vmatprep.subr.mxu0 0.0
        %4088 = vmatpush2.msra.mxu0 0.0
        %4089 = vmatprep.subr.mxu0 0.0
        %4090 = vmatpush2.msra.mxu0 0.0
        %4091 = vmatprep.subr.mxu0 0.0
        %4092 = vmatpush2.msra.mxu0 0.0
        %4093 = vmatprep.subr.mxu0 0.0
        %4094 = vmatpush2.msra.mxu0 0.0
        %4095 = vmatprep.subr.mxu0 0.0
        %4096 = vmatpush2.msra.mxu0 0.0
        %4097 = vmatprep.subr.mxu0 0.0
        %4098 = vmatpush2.msra.mxu0 0.0
        %4099 = vmatprep.subr.mxu0 0.0
        %4100 = vmatpush2.msra.mxu0 0.0
        %4101 = vmatprep.subr.mxu0 0.0
        %4102 = vmatpush2.msra.mxu0 0.0
        %4103 = vmatprep.subr.mxu0 0.0
        %4104 = vmatpush2.msra.mxu0 0.0
        %4105 = vmatprep.subr.mxu0 0.0
        %4106 = vmatpush2.msra.mxu0 0.0
        %4107 = vmatprep.subr.mxu0 0.0
        %4108 = vmatpush2.msra.mxu0 0.0
        %4109 = vmatprep.mubr.f32.mxu0 0.0
        %4110 = vmatmul.mubr.f32.gmra.mxu0 %v4043
        %v4111 = vpop.f32.mrf.mxu0
        %v4112 = vadd.f32 0.0, %v4111
        %v4113 = vpop.f32.mrf.mxu0
        %4114 = vdwg.mxu0
        %v4115 = vadd.f32 %v3872, %v4112
        %4116 = vrot.lane.b32.xlu0 %v3386, 104
        %v4117 = vpop.permute.xlu0 %4116
        %4118 = vrot.lane.b32.xlu0 %v3386, 72
        %v4119 = vpop.permute.xlu0 %4118
        %v4120 = vsel %vm869, %v4117, 0
        %v4122 = vsel %vm869, %v4119, 0
        %4124 = vmatprep.subr.mxu0 0.0
        %4125 = vmatpush1.xpose.msra.mxu0 0.0
        %4126 = vmatprep.subr.mxu0 0.0
        %4127 = vmatpush1.xpose.msra.mxu0 0.0
        %4128 = vmatprep.subr.mxu0 0.0
        %4129 = vmatpush1.xpose.msra.mxu0 0.0
        %4130 = vmatprep.subr.mxu0 0.0
        %4131 = vmatpush1.xpose.msra.mxu0 0.0
        %4132 = vmatprep.subr.mxu0 0.0
        %4133 = vmatpush1.xpose.msra.mxu0 0.0
        %4134 = vmatprep.subr.mxu0 0.0
        %4135 = vmatpush1.xpose.msra.mxu0 0.0
        %4136 = vmatprep.subr.mxu0 0.0
        %4137 = vmatpush1.xpose.msra.mxu0 0.0
        %4138 = vmatprep.subr.mxu0 0.0
        %4139 = vmatpush1.xpose.msra.mxu0 0.0
        %4140 = vmatprep.subr.mxu0 0.0
        %4141 = vmatpush1.xpose.msra.mxu0 0.0
        %4142 = vmatprep.subr.mxu0 0.0
        %4143 = vmatpush1.xpose.msra.mxu0 0.0
        %4144 = vmatprep.subr.mxu0 0.0
        %4145 = vmatpush1.xpose.msra.mxu0 0.0
        %4146 = vmatprep.subr.mxu0 0.0
        %4147 = vmatpush1.xpose.msra.mxu0 0.0
        %4148 = vmatprep.subr.mxu0 0.0
        %4149 = vmatpush1.xpose.msra.mxu0 0.0
        %4150 = vmatprep.subr.mxu0 0.0
        %4151 = vmatpush1.xpose.msra.mxu0 0.0
        %4152 = vmatprep.subr.mxu0 0.0
        %4153 = vmatpush1.xpose.msra.mxu0 0.0
        %4154 = vmatprep.subr.mxu0 0.0
        %4155 = vmatpush1.xpose.msra.mxu0 %v4122
        %4156 = vmatprep.subr.mxu0 0.0
        %4157 = vmatpush2.xpose.msra.mxu0 0.0
        %4158 = vmatprep.subr.mxu0 0.0
        %4159 = vmatpush2.xpose.msra.mxu0 0.0
        %4160 = vmatprep.subr.mxu0 0.0
        %4161 = vmatpush2.xpose.msra.mxu0 0.0
        %4162 = vmatprep.subr.mxu0 0.0
        %4163 = vmatpush2.xpose.msra.mxu0 0.0
        %4164 = vmatprep.subr.mxu0 0.0
        %4165 = vmatpush2.xpose.msra.mxu0 0.0
        %4166 = vmatprep.subr.mxu0 0.0
        %4167 = vmatpush2.xpose.msra.mxu0 0.0
        %4168 = vmatprep.subr.mxu0 0.0
        %4169 = vmatpush2.xpose.msra.mxu0 0.0
        %4170 = vmatprep.subr.mxu0 0.0
        %4171 = vmatpush2.xpose.msra.mxu0 0.0
        %4172 = vmatprep.subr.mxu0 0.0
        %4173 = vmatpush2.xpose.msra.mxu0 0.0
        %4174 = vmatprep.subr.mxu0 0.0
        %4175 = vmatpush2.xpose.msra.mxu0 0.0
        %4176 = vmatprep.subr.mxu0 0.0
        %4177 = vmatpush2.xpose.msra.mxu0 0.0
        %4178 = vmatprep.subr.mxu0 0.0
        %4179 = vmatpush2.xpose.msra.mxu0 0.0
        %4180 = vmatprep.subr.mxu0 0.0
        %4181 = vmatpush2.xpose.msra.mxu0 0.0
        %4182 = vmatprep.subr.mxu0 0.0
        %4183 = vmatpush2.xpose.msra.mxu0 0.0
        %4184 = vmatprep.subr.mxu0 0.0
        %4185 = vmatpush2.xpose.msra.mxu0 0.0
        %4186 = vmatprep.subr.mxu0 0.0
        %4187 = vmatpush2.xpose.msra.mxu0 0.0
        %4188 = vmatprep.mubr.f32.mxu0 0.0
        %4189 = vmatmul.mubr.f32.gmra.mxu0 %v4120
        %v4190 = vpop.f32.mrf.mxu0
        %v4191 = vadd.f32 0.0, %v4190
        %v4192 = vpop.f32.mrf.mxu0
        %4193 = vdwg.mxu0
        %v4194 = vmul.f32 %v4191, 0.35355338
        %v4195 = vadd.f32 %v4194, %v736
        %v4196 = vsel %vm869, %v4195, -inf
        %4197 = vmax.xlane.f32.xlu0 %v4196
        %v4198 = vpop.xlane.xlu0 %4197
        %v4199 = vsub.f32 %v4195, %v4198
        %v4200 = vmul.f32 %v4199, 1.442695
        %v4201 = vpow.pop %v4200
        %v4202 = vsel %vm869, %v4201, 0.0
        %4203 = vadd.xlane.f32.xlu0 %v4202
        %v4204 = vpop.xlane.xlu0 %4203
        %v4205 = vrcp.pop %v4204
        %v4206 = vmul.f32 %v4201, %v4205
        %4207 = vrot.lane.b32.xlu0 %v3386, 40
        %v4208 = vpop.permute.xlu0 %4207
        %v4211 = vsel %vm869, %v4206, 0
        %4213 = vmatprep.subr.mxu0 0.0
        %4214 = vmatpush1.msra.mxu0 0.0
        %4215 = vmatprep.subr.mxu0 0.0
        %4216 = vmatpush1.msra.mxu0 0.0
        %4217 = vmatprep.subr.mxu0 0.0
        %4218 = vmatpush1.msra.mxu0 0.0
        %4219 = vmatprep.subr.mxu0 0.0
        %4220 = vmatpush1.msra.mxu0 0.0
        %4221 = vmatprep.subr.mxu0 0.0
        %4222 = vmatpush1.msra.mxu0 0.0
        %4223 = vmatprep.subr.mxu0 0.0
        %4224 = vmatpush1.msra.mxu0 0.0
        %4225 = vmatprep.subr.mxu0 0.0
        %4226 = vmatpush1.msra.mxu0 0.0
        %4227 = vmatprep.subr.mxu0 0.0
        %4228 = vmatpush1.msra.mxu0 0.0
        %4229 = vmatprep.subr.mxu0 0.0
        %4230 = vmatpush1.msra.mxu0 0.0
        %4231 = vmatprep.subr.mxu0 0.0
        %4232 = vmatpush1.msra.mxu0 0.0
        %4233 = vmatprep.subr.mxu0 0.0
        %4234 = vmatpush1.msra.mxu0 0.0
        %4235 = vmatprep.subr.mxu0 0.0
        %4236 = vmatpush1.msra.mxu0 0.0
        %4237 = vmatprep.subr.mxu0 0.0
        %4238 = vmatpush1.msra.mxu0 0.0
        %4239 = vmatprep.subr.mxu0 0.0
        %4240 = vmatpush1.msra.mxu0 0.0
        %4241 = vmatprep.subr.mxu0 0.0
        %4242 = vmatpush1.msra.mxu0 0.0
        %4243 = vmatprep.subr.mxu0 0.0
        %4244 = vmatpush1.msra.mxu0 %v4208
        %4245 = vmatprep.subr.mxu0 0.0
        %4246 = vmatpush2.msra.mxu0 0.0
        %4247 = vmatprep.subr.mxu0 0.0
        %4248 = vmatpush2.msra.mxu0 0.0
        %4249 = vmatprep.subr.mxu0 0.0
        %4250 = vmatpush2.msra.mxu0 0.0
        %4251 = vmatprep.subr.mxu0 0.0
        %4252 = vmatpush2.msra.mxu0 0.0
        %4253 = vmatprep.subr.mxu0 0.0
        %4254 = vmatpush2.msra.mxu0 0.0
        %4255 = vmatprep.subr.mxu0 0.0
        %4256 = vmatpush2.msra.mxu0 0.0
        %4257 = vmatprep.subr.mxu0 0.0
        %4258 = vmatpush2.msra.mxu0 0.0
        %4259 = vmatprep.subr.mxu0 0.0
        %4260 = vmatpush2.msra.mxu0 0.0
        %4261 = vmatprep.subr.mxu0 0.0
        %4262 = vmatpush2.msra.mxu0 0.0
        %4263 = vmatprep.subr.mxu0 0.0
        %4264 = vmatpush2.msra.mxu0 0.0
        %4265 = vmatprep.subr.mxu0 0.0
        %4266 = vmatpush2.msra.mxu0 0.0
        %4267 = vmatprep.subr.mxu0 0.0
        %4268 = vmatpush2.msra.mxu0 0.0
        %4269 = vmatprep.subr.mxu0 0.0
        %4270 = vmatpush2.msra.mxu0 0.0
        %4271 = vmatprep.subr.mxu0 0.0
        %4272 = vmatpush2.msra.mxu0 0.0
        %4273 = vmatprep.subr.mxu0 0.0
        %4274 = vmatpush2.msra.mxu0 0.0
        %4275 = vmatprep.subr.mxu0 0.0
        %4276 = vmatpush2.msra.mxu0 0.0
        %4277 = vmatprep.mubr.f32.mxu0 0.0
        %4278 = vmatmul.mubr.f32.gmra.mxu0 %v4211
        %v4279 = vpop.f32.mrf.mxu0
        %v4280 = vadd.f32 0.0, %v4279
        %v4281 = vpop.f32.mrf.mxu0
        %4282 = vdwg.mxu0
        %v4284 = vsel %vm869, %v4280, 0
        %4286 = vmatprep.subr.mxu0 0.0
        %4287 = vmatpush1.msra.mxu0 0.0
        %4288 = vmatprep.subr.mxu0 0.0
        %4289 = vmatpush1.msra.mxu0 0.0
        %4290 = vmatprep.subr.mxu0 0.0
        %4291 = vmatpush1.msra.mxu0 0.0
        %4292 = vmatprep.subr.mxu0 0.0
        %4293 = vmatpush1.msra.mxu0 0.0
        %4294 = vmatprep.subr.mxu0 0.0
        %4295 = vmatpush1.msra.mxu0 0.0
        %4296 = vmatprep.subr.mxu0 0.0
        %4297 = vmatpush1.msra.mxu0 0.0
        %4298 = vmatprep.subr.mxu0 0.0
        %4299 = vmatpush1.msra.mxu0 0.0
        %4300 = vmatprep.subr.mxu0 0.0
        %4301 = vmatpush1.msra.mxu0 0.0
        %4302 = vmatprep.subr.mxu0 0.0
        %4303 = vmatpush1.msra.mxu0 0.0
        %4304 = vmatprep.subr.mxu0 0.0
        %4305 = vmatpush1.msra.mxu0 0.0
        %4306 = vmatprep.subr.mxu0 0.0
        %4307 = vmatpush1.msra.mxu0 0.0
        %4308 = vmatprep.subr.mxu0 0.0
        %4309 = vmatpush1.msra.mxu0 0.0
        %4310 = vmatprep.subr.mxu0 0.0
        %4311 = vmatpush1.msra.mxu0 0.0
        %4312 = vmatprep.subr.mxu0 0.0
        %4313 = vmatpush1.msra.mxu0 0.0
        %4314 = vmatprep.subr.mxu0 0.0
        %4315 = vmatpush1.msra.mxu0 0.0
        %4316 = vmatprep.subr.mxu0 0.0
        %4317 = vmatpush1.msra.mxu0 %v3393
        %4318 = vmatprep.subr.mxu0 0.0
        %4319 = vmatpush2.msra.mxu0 0.0
        %4320 = vmatprep.subr.mxu0 0.0
        %4321 = vmatpush2.msra.mxu0 0.0
        %4322 = vmatprep.subr.mxu0 0.0
        %4323 = vmatpush2.msra.mxu0 0.0
        %4324 = vmatprep.subr.mxu0 0.0
        %4325 = vmatpush2.msra.mxu0 0.0
        %4326 = vmatprep.subr.mxu0 0.0
        %4327 = vmatpush2.msra.mxu0 0.0
        %4328 = vmatprep.subr.mxu0 0.0
        %4329 = vmatpush2.msra.mxu0 0.0
        %4330 = vmatprep.subr.mxu0 0.0
        %4331 = vmatpush2.msra.mxu0 0.0
        %4332 = vmatprep.subr.mxu0 0.0
        %4333 = vmatpush2.msra.mxu0 0.0
        %4334 = vmatprep.subr.mxu0 0.0
        %4335 = vmatpush2.msra.mxu0 0.0
        %4336 = vmatprep.subr.mxu0 0.0
        %4337 = vmatpush2.msra.mxu0 0.0
        %4338 = vmatprep.subr.mxu0 0.0
        %4339 = vmatpush2.msra.mxu0 0.0
        %4340 = vmatprep.subr.mxu0 0.0
        %4341 = vmatpush2.msra.mxu0 0.0
        %4342 = vmatprep.subr.mxu0 0.0
        %4343 = vmatpush2.msra.mxu0 0.0
        %4344 = vmatprep.subr.mxu0 0.0
        %4345 = vmatpush2.msra.mxu0 0.0
        %4346 = vmatprep.subr.mxu0 0.0
        %4347 = vmatpush2.msra.mxu0 0.0
        %4348 = vmatprep.subr.mxu0 0.0
        %4349 = vmatpush2.msra.mxu0 0.0
        %4350 = vmatprep.mubr.f32.mxu0 0.0
        %4351 = vmatmul.mubr.f32.gmra.mxu0 %v4284
        %v4352 = vpop.f32.mrf.mxu0
        %v4353 = vadd.f32 0.0, %v4352
        %v4354 = vpop.f32.mrf.mxu0
        %4355 = vdwg.mxu0
        %v4356 = vadd.f32 %v4115, %v4353
        %v4358 = vlaneseq
        %v4359 = vshrl.u32 %v4358, 7
        %v4360 = vsub.s32 0, %v4359
        %v4361 = vrot.slane %v3395, %v4360
        %v4363 = vadd.f32 %v4356, %v4361
        %v4364 = vadd.f32 %v3264, %v4363
        %s4365 = scalar_lea.vmem %s4, 4
        %v4366 = vld [vmem:[%s4365] sm:$0x1]
        %s4367 = scalar_lea.vmem %s5, 4
        %v4368 = vld [vmem:[%s4367] sm:$0x1]
        %v4369 = vsel %vm740, %v4364, 0.0
        %4370 = vadd.xlane.f32.xlu0 %v4369
        %v4371 = vpop.xlane.xlu0 %4370
        %v4372 = vmul.f32 %v4371, %v744
        %v4373 = vsub.f32 %v4364, %v4372
        %v4374 = vmul.f32 %v4373, %v4373
        %v4375 = vsel %vm740, %v4374, 0.0
        %4376 = vadd.xlane.f32.xlu0 %v4375
        %v4377 = vpop.xlane.xlu0 %4376
        %v4378 = vmul.f32 %v4377, %v751
        %v4379 = vrsqrt.pop %v4378
        %v4380 = vmul.f32 %v4378, %v4379
        %vm4381 = vcmp.eq.f32.partialorder %v4378, inf
        %v4382 = vsel %vm4381, %v4378, %v4380
        %vm4383 = vcmp.eq.f32.partialorder %v4378, 0.0
        %v4384 = vand.u32 %v4378, 2147483648
        %v4385 = vsel %vm4383, %v4384, %v4382
        %v4386 = vadd.f32 %v4385, 1e-06
        %v4387 = vrcp.pop %v4386
        %v4389 = vlaneseq
        %v4390 = vshrl.u32 %v4389, 7
        %v4391 = vsub.s32 0, %v4390
        %v4392 = vrot.slane %v4366, %v4391
        %v4394 = vmul.f32 %v4392, %v4373
        %v4395 = vmul.f32 %v4394, %v4387
        %v4397 = vlaneseq
        %v4398 = vshrl.u32 %v4397, 7
        %v4399 = vsub.s32 0, %v4398
        %v4400 = vrot.slane %v4368, %v4399
        %v4402 = vadd.f32 %v4395, %v4400
        %s4403 = scalar_lea.vmem %s10, 32
        %v4404 = vld [vmem:[%s4403] sm:$0xff]
        %v4405 = vld [vmem:[%s4403 + $0x8] sm:$0xff]
        %v4406 = vld [vmem:[%s4403 + $0x10] sm:$0xff]
        %v4407 = vld [vmem:[%s4403 + $0x18] sm:$0xff]
        %s4408 = scalar_lea.vmem %s11, 1
        %v4409 = vld [vmem:[%s4408] sm:$0x1]
        %v4411 = vlaneseq
        %v4412 = vshrl.u32 %v4411, 7
        %v4413 = vsub.s32 0, %v4412
        %v4414 = vrot.slane %v4409, %v4413
        %v4417 = vsel %vm740, %v4402, 0
        %4419 = vmatprep.subr.mxu0 0.0
        %4420 = vmatpush1.msra.mxu0 0.0
        %4421 = vmatprep.subr.mxu0 0.0
        %4422 = vmatpush1.msra.mxu0 0.0
        %4423 = vmatprep.subr.mxu0 0.0
        %4424 = vmatpush1.msra.mxu0 0.0
        %4425 = vmatprep.subr.mxu0 0.0
        %4426 = vmatpush1.msra.mxu0 0.0
        %4427 = vmatprep.subr.mxu0 0.0
        %4428 = vmatpush1.msra.mxu0 0.0
        %4429 = vmatprep.subr.mxu0 0.0
        %4430 = vmatpush1.msra.mxu0 0.0
        %4431 = vmatprep.subr.mxu0 0.0
        %4432 = vmatpush1.msra.mxu0 0.0
        %4433 = vmatprep.subr.mxu0 0.0
        %4434 = vmatpush1.msra.mxu0 0.0
        %4435 = vmatprep.subr.mxu0 0.0
        %4436 = vmatpush1.msra.mxu0 0.0
        %4437 = vmatprep.subr.mxu0 0.0
        %4438 = vmatpush1.msra.mxu0 0.0
        %4439 = vmatprep.subr.mxu0 0.0
        %4440 = vmatpush1.msra.mxu0 0.0
        %4441 = vmatprep.subr.mxu0 0.0
        %4442 = vmatpush1.msra.mxu0 0.0
        %4443 = vmatprep.subr.mxu0 0.0
        %4444 = vmatpush1.msra.mxu0 %v4407
        %4445 = vmatprep.subr.mxu0 0.0
        %4446 = vmatpush1.msra.mxu0 %v4406
        %4447 = vmatprep.subr.mxu0 0.0
        %4448 = vmatpush1.msra.mxu0 %v4405
        %4449 = vmatprep.subr.mxu0 0.0
        %4450 = vmatpush1.msra.mxu0 %v4404
        %4451 = vmatprep.subr.mxu0 0.0
        %4452 = vmatpush2.msra.mxu0 0.0
        %4453 = vmatprep.subr.mxu0 0.0
        %4454 = vmatpush2.msra.mxu0 0.0
        %4455 = vmatprep.subr.mxu0 0.0
        %4456 = vmatpush2.msra.mxu0 0.0
        %4457 = vmatprep.subr.mxu0 0.0
        %4458 = vmatpush2.msra.mxu0 0.0
        %4459 = vmatprep.subr.mxu0 0.0
        %4460 = vmatpush2.msra.mxu0 0.0
        %4461 = vmatprep.subr.mxu0 0.0
        %4462 = vmatpush2.msra.mxu0 0.0
        %4463 = vmatprep.subr.mxu0 0.0
        %4464 = vmatpush2.msra.mxu0 0.0
        %4465 = vmatprep.subr.mxu0 0.0
        %4466 = vmatpush2.msra.mxu0 0.0
        %4467 = vmatprep.subr.mxu0 0.0
        %4468 = vmatpush2.msra.mxu0 0.0
        %4469 = vmatprep.subr.mxu0 0.0
        %4470 = vmatpush2.msra.mxu0 0.0
        %4471 = vmatprep.subr.mxu0 0.0
        %4472 = vmatpush2.msra.mxu0 0.0
        %4473 = vmatprep.subr.mxu0 0.0
        %4474 = vmatpush2.msra.mxu0 0.0
        %4475 = vmatprep.subr.mxu0 0.0
        %4476 = vmatpush2.msra.mxu0 0.0
        %4477 = vmatprep.subr.mxu0 0.0
        %4478 = vmatpush2.msra.mxu0 0.0
        %4479 = vmatprep.subr.mxu0 0.0
        %4480 = vmatpush2.msra.mxu0 0.0
        %4481 = vmatprep.subr.mxu0 0.0
        %4482 = vmatpush2.msra.mxu0 0.0
        %4483 = vmatprep.mubr.f32.mxu0 0.0
        %4484 = vmatmul.mubr.f32.gmra.mxu0 %v4417
        %v4485 = vpop.f32.mrf.mxu0
        %v4486 = vadd.f32 %v4414, %v4485
        %v4487 = vpop.f32.mrf.mxu0
        %4488 = vdwg.mxu0
        %s4489 = scalar_lea.vmem %s12, 32
        %v4490 = vld [vmem:[%s4489] sm:$0xff]
        %v4491 = vld [vmem:[%s4489 + $0x8] sm:$0xff]
        %v4492 = vld [vmem:[%s4489 + $0x10] sm:$0xff]
        %v4493 = vld [vmem:[%s4489 + $0x18] sm:$0xff]
        %s4494 = scalar_lea.vmem %s13, 1
        %v4495 = vld [vmem:[%s4494] sm:$0x1]
        %v4497 = vlaneseq
        %v4498 = vshrl.u32 %v4497, 7
        %v4499 = vsub.s32 0, %v4498
        %v4500 = vrot.slane %v4495, %v4499
        %4502 = vmatprep.subr.mxu0 0.0
        %4503 = vmatpush1.msra.mxu0 0.0
        %4504 = vmatprep.subr.mxu0 0.0
        %4505 = vmatpush1.msra.mxu0 0.0
        %4506 = vmatprep.subr.mxu0 0.0
        %4507 = vmatpush1.msra.mxu0 0.0
        %4508 = vmatprep.subr.mxu0 0.0
        %4509 = vmatpush1.msra.mxu0 0.0
        %4510 = vmatprep.subr.mxu0 0.0
        %4511 = vmatpush1.msra.mxu0 0.0
        %4512 = vmatprep.subr.mxu0 0.0
        %4513 = vmatpush1.msra.mxu0 0.0
        %4514 = vmatprep.subr.mxu0 0.0
        %4515 = vmatpush1.msra.mxu0 0.0
        %4516 = vmatprep.subr.mxu0 0.0
        %4517 = vmatpush1.msra.mxu0 0.0
        %4518 = vmatprep.subr.mxu0 0.0
        %4519 = vmatpush1.msra.mxu0 0.0
        %4520 = vmatprep.subr.mxu0 0.0
        %4521 = vmatpush1.msra.mxu0 0.0
        %4522 = vmatprep.subr.mxu0 0.0
        %4523 = vmatpush1.msra.mxu0 0.0
        %4524 = vmatprep.subr.mxu0 0.0
        %4525 = vmatpush1.msra.mxu0 0.0
        %4526 = vmatprep.subr.mxu0 0.0
        %4527 = vmatpush1.msra.mxu0 %v4493
        %4528 = vmatprep.subr.mxu0 0.0
        %4529 = vmatpush1.msra.mxu0 %v4492
        %4530 = vmatprep.subr.mxu0 0.0
        %4531 = vmatpush1.msra.mxu0 %v4491
        %4532 = vmatprep.subr.mxu0 0.0
        %4533 = vmatpush1.msra.mxu0 %v4490
        %4534 = vmatprep.subr.mxu0 0.0
        %4535 = vmatpush2.msra.mxu0 0.0
        %4536 = vmatprep.subr.mxu0 0.0
        %4537 = vmatpush2.msra.mxu0 0.0
        %4538 = vmatprep.subr.mxu0 0.0
        %4539 = vmatpush2.msra.mxu0 0.0
        %4540 = vmatprep.subr.mxu0 0.0
        %4541 = vmatpush2.msra.mxu0 0.0
        %4542 = vmatprep.subr.mxu0 0.0
        %4543 = vmatpush2.msra.mxu0 0.0
        %4544 = vmatprep.subr.mxu0 0.0
        %4545 = vmatpush2.msra.mxu0 0.0
        %4546 = vmatprep.subr.mxu0 0.0
        %4547 = vmatpush2.msra.mxu0 0.0
        %4548 = vmatprep.subr.mxu0 0.0
        %4549 = vmatpush2.msra.mxu0 0.0
        %4550 = vmatprep.subr.mxu0 0.0
        %4551 = vmatpush2.msra.mxu0 0.0
        %4552 = vmatprep.subr.mxu0 0.0
        %4553 = vmatpush2.msra.mxu0 0.0
        %4554 = vmatprep.subr.mxu0 0.0
        %4555 = vmatpush2.msra.mxu0 0.0
        %4556 = vmatprep.subr.mxu0 0.0
        %4557 = vmatpush2.msra.mxu0 0.0
        %4558 = vmatprep.subr.mxu0 0.0
        %4559 = vmatpush2.msra.mxu0 0.0
        %4560 = vmatprep.subr.mxu0 0.0
        %4561 = vmatpush2.msra.mxu0 0.0
        %4562 = vmatprep.subr.mxu0 0.0
        %4563 = vmatpush2.msra.mxu0 0.0
        %4564 = vmatprep.subr.mxu0 0.0
        %4565 = vmatpush2.msra.mxu0 0.0
        %4566 = vmatprep.mubr.f32.mxu0 0.0
        %4567 = vmatmul.mubr.f32.gmra.mxu0 %v1970
        %v4568 = vpop.f32.mrf.mxu0
        %v4569 = vadd.f32 %v4500, %v4568
        %v4570 = vpop.f32.mrf.mxu0
        %4571 = vmatprep.mubr.f32.mxu0 0.0
        %4572 = vmatmul.mubr.f32.gmra.mxu0 %v1973
        %v4573 = vpop.f32.mrf.mxu0
        %v4574 = vadd.f32 %v4500, %v4573
        %v4575 = vpop.f32.mrf.mxu0
        %4576 = vdwg.mxu0
        %s4577 = scalar_lea.vmem %s14, 32
        %v4578 = vld [vmem:[%s4577] sm:$0xff]
        %v4579 = vld [vmem:[%s4577 + $0x8] sm:$0xff]
        %v4580 = vld [vmem:[%s4577 + $0x10] sm:$0xff]
        %v4581 = vld [vmem:[%s4577 + $0x18] sm:$0xff]
        %s4582 = scalar_lea.vmem %s15, 1
        %v4583 = vld [vmem:[%s4582] sm:$0x1]
        %v4585 = vsel %vm869, %v4486, 0
        %v4588 = vsel %vm869, %v4569, 0
        %v4591 = vsel %vm869, %v4574, 0
        %4593 = vmatprep.subr.mxu0 0.0
        %4594 = vmatpush1.xpose.msra.mxu0 0.0
        %4595 = vmatprep.subr.mxu0 0.0
        %4596 = vmatpush1.xpose.msra.mxu0 0.0
        %4597 = vmatprep.subr.mxu0 0.0
        %4598 = vmatpush1.xpose.msra.mxu0 0.0
        %4599 = vmatprep.subr.mxu0 0.0
        %4600 = vmatpush1.xpose.msra.mxu0 0.0
        %4601 = vmatprep.subr.mxu0 0.0
        %4602 = vmatpush1.xpose.msra.mxu0 0.0
        %4603 = vmatprep.subr.mxu0 0.0
        %4604 = vmatpush1.xpose.msra.mxu0 0.0
        %4605 = vmatprep.subr.mxu0 0.0
        %4606 = vmatpush1.xpose.msra.mxu0 0.0
        %4607 = vmatprep.subr.mxu0 0.0
        %4608 = vmatpush1.xpose.msra.mxu0 0.0
        %4609 = vmatprep.subr.mxu0 0.0
        %4610 = vmatpush1.xpose.msra.mxu0 0.0
        %4611 = vmatprep.subr.mxu0 0.0
        %4612 = vmatpush1.xpose.msra.mxu0 0.0
        %4613 = vmatprep.subr.mxu0 0.0
        %4614 = vmatpush1.xpose.msra.mxu0 0.0
        %4615 = vmatprep.subr.mxu0 0.0
        %4616 = vmatpush1.xpose.msra.mxu0 0.0
        %4617 = vmatprep.subr.mxu0 0.0
        %4618 = vmatpush1.xpose.msra.mxu0 0.0
        %4619 = vmatprep.subr.mxu0 0.0
        %4620 = vmatpush1.xpose.msra.mxu0 0.0
        %4621 = vmatprep.subr.mxu0 0.0
        %4622 = vmatpush1.xpose.msra.mxu0 %v4591
        %4623 = vmatprep.subr.mxu0 0.0
        %4624 = vmatpush1.xpose.msra.mxu0 %v4588
        %4625 = vmatprep.subr.mxu0 0.0
        %4626 = vmatpush2.xpose.msra.mxu0 0.0
        %4627 = vmatprep.subr.mxu0 0.0
        %4628 = vmatpush2.xpose.msra.mxu0 0.0
        %4629 = vmatprep.subr.mxu0 0.0
        %4630 = vmatpush2.xpose.msra.mxu0 0.0
        %4631 = vmatprep.subr.mxu0 0.0
        %4632 = vmatpush2.xpose.msra.mxu0 0.0
        %4633 = vmatprep.subr.mxu0 0.0
        %4634 = vmatpush2.xpose.msra.mxu0 0.0
        %4635 = vmatprep.subr.mxu0 0.0
        %4636 = vmatpush2.xpose.msra.mxu0 0.0
        %4637 = vmatprep.subr.mxu0 0.0
        %4638 = vmatpush2.xpose.msra.mxu0 0.0
        %4639 = vmatprep.subr.mxu0 0.0
        %4640 = vmatpush2.xpose.msra.mxu0 0.0
        %4641 = vmatprep.subr.mxu0 0.0
        %4642 = vmatpush2.xpose.msra.mxu0 0.0
        %4643 = vmatprep.subr.mxu0 0.0
        %4644 = vmatpush2.xpose.msra.mxu0 0.0
        %4645 = vmatprep.subr.mxu0 0.0
        %4646 = vmatpush2.xpose.msra.mxu0 0.0
        %4647 = vmatprep.subr.mxu0 0.0
        %4648 = vmatpush2.xpose.msra.mxu0 0.0
        %4649 = vmatprep.subr.mxu0 0.0
        %4650 = vmatpush2.xpose.msra.mxu0 0.0
        %4651 = vmatprep.subr.mxu0 0.0
        %4652 = vmatpush2.xpose.msra.mxu0 0.0
        %4653 = vmatprep.subr.mxu0 0.0
        %4654 = vmatpush2.xpose.msra.mxu0 0.0
        %4655 = vmatprep.subr.mxu0 0.0
        %4656 = vmatpush2.xpose.msra.mxu0 0.0
        %4657 = vmatprep.mubr.f32.mxu0 0.0
        %4658 = vmatmul.mubr.f32.gmra.mxu0 %v4585
        %v4659 = vpop.f32.mrf.mxu0
        %v4660 = vadd.f32 0.0, %v4659
        %v4661 = vpop.f32.mrf.mxu0
        %4662 = vdwg.mxu0
        %v4663 = vmul.f32 %v4660, 0.35355338
        %v4664 = vadd.f32 %v4663, %v737
        %v4665 = vsel %vm2136, %v4664, -inf
        %4666 = vmax.xlane.f32.xlu0 %v4665
        %v4667 = vpop.xlane.xlu0 %4666
        %v4668 = vsub.f32 %v4664, %v4667
        %v4669 = vmul.f32 %v4668, 1.442695
        %v4670 = vpow.pop %v4669
        %v4671 = vsel %vm2136, %v4670, 0.0
        %4672 = vadd.xlane.f32.xlu0 %v4671
        %v4673 = vpop.xlane.xlu0 %4672
        %v4674 = vrcp.pop %v4673
        %v4675 = vmul.f32 %v4670, %v4674
        %4676 = vrot.lane.b32.xlu0 %v4569, 96
        %v4677 = vpop.permute.xlu0 %4676
        %4678 = vrot.lane.b32.xlu0 %v4574, 96
        %v4679 = vpop.permute.xlu0 %4678
        %v4683 = vsel %vm2136, %v4675, 0
        %4685 = vmatprep.subr.mxu0 0.0
        %4686 = vmatpush1.msra.mxu0 0.0
        %4687 = vmatprep.subr.mxu0 0.0
        %4688 = vmatpush1.msra.mxu0 0.0
        %4689 = vmatprep.subr.mxu0 0.0
        %4690 = vmatpush1.msra.mxu0 0.0
        %4691 = vmatprep.subr.mxu0 0.0
        %4692 = vmatpush1.msra.mxu0 0.0
        %4693 = vmatprep.subr.mxu0 0.0
        %4694 = vmatpush1.msra.mxu0 0.0
        %4695 = vmatprep.subr.mxu0 0.0
        %4696 = vmatpush1.msra.mxu0 0.0
        %4697 = vmatprep.subr.mxu0 0.0
        %4698 = vmatpush1.msra.mxu0 0.0
        %4699 = vmatprep.subr.mxu0 0.0
        %4700 = vmatpush1.msra.mxu0 0.0
        %4701 = vmatprep.subr.mxu0 0.0
        %4702 = vmatpush1.msra.mxu0 0.0
        %4703 = vmatprep.subr.mxu0 0.0
        %4704 = vmatpush1.msra.mxu0 0.0
        %4705 = vmatprep.subr.mxu0 0.0
        %4706 = vmatpush1.msra.mxu0 0.0
        %4707 = vmatprep.subr.mxu0 0.0
        %4708 = vmatpush1.msra.mxu0 0.0
        %4709 = vmatprep.subr.mxu0 0.0
        %4710 = vmatpush1.msra.mxu0 0.0
        %4711 = vmatprep.subr.mxu0 0.0
        %4712 = vmatpush1.msra.mxu0 0.0
        %4713 = vmatprep.subr.mxu0 0.0
        %4714 = vmatpush1.msra.mxu0 %v4679
        %4715 = vmatprep.subr.mxu0 0.0
        %4716 = vmatpush1.msra.mxu0 %v4677
        %4717 = vmatprep.subr.mxu0 0.0
        %4718 = vmatpush2.msra.mxu0 0.0
        %4719 = vmatprep.subr.mxu0 0.0
        %4720 = vmatpush2.msra.mxu0 0.0
        %4721 = vmatprep.subr.mxu0 0.0
        %4722 = vmatpush2.msra.mxu0 0.0
        %4723 = vmatprep.subr.mxu0 0.0
        %4724 = vmatpush2.msra.mxu0 0.0
        %4725 = vmatprep.subr.mxu0 0.0
        %4726 = vmatpush2.msra.mxu0 0.0
        %4727 = vmatprep.subr.mxu0 0.0
        %4728 = vmatpush2.msra.mxu0 0.0
        %4729 = vmatprep.subr.mxu0 0.0
        %4730 = vmatpush2.msra.mxu0 0.0
        %4731 = vmatprep.subr.mxu0 0.0
        %4732 = vmatpush2.msra.mxu0 0.0
        %4733 = vmatprep.subr.mxu0 0.0
        %4734 = vmatpush2.msra.mxu0 0.0
        %4735 = vmatprep.subr.mxu0 0.0
        %4736 = vmatpush2.msra.mxu0 0.0
        %4737 = vmatprep.subr.mxu0 0.0
        %4738 = vmatpush2.msra.mxu0 0.0
        %4739 = vmatprep.subr.mxu0 0.0
        %4740 = vmatpush2.msra.mxu0 0.0
        %4741 = vmatprep.subr.mxu0 0.0
        %4742 = vmatpush2.msra.mxu0 0.0
        %4743 = vmatprep.subr.mxu0 0.0
        %4744 = vmatpush2.msra.mxu0 0.0
        %4745 = vmatprep.subr.mxu0 0.0
        %4746 = vmatpush2.msra.mxu0 0.0
        %4747 = vmatprep.subr.mxu0 0.0
        %4748 = vmatpush2.msra.mxu0 0.0
        %4749 = vmatprep.mubr.f32.mxu0 0.0
        %4750 = vmatmul.mubr.f32.gmra.mxu0 %v4683
        %v4751 = vpop.f32.mrf.mxu0
        %v4752 = vadd.f32 0.0, %v4751
        %v4753 = vpop.f32.mrf.mxu0
        %4754 = vdwg.mxu0
        %4755 = vrot.lane.b32.xlu0 %v4486, 120
        %v4756 = vpop.permute.xlu0 %4755
        %4757 = vrot.lane.b32.xlu0 %v4569, 120
        %v4758 = vpop.permute.xlu0 %4757
        %4759 = vrot.lane.b32.xlu0 %v4574, 120
        %v4760 = vpop.permute.xlu0 %4759
        %v4761 = vsel %vm869, %v4756, 0
        %v4763 = vsel %vm869, %v4758, 0
        %v4765 = vsel %vm869, %v4760, 0
        %4767 = vmatprep.subr.mxu0 0.0
        %4768 = vmatpush1.xpose.msra.mxu0 0.0
        %4769 = vmatprep.subr.mxu0 0.0
        %4770 = vmatpush1.xpose.msra.mxu0 0.0
        %4771 = vmatprep.subr.mxu0 0.0
        %4772 = vmatpush1.xpose.msra.mxu0 0.0
        %4773 = vmatprep.subr.mxu0 0.0
        %4774 = vmatpush1.xpose.msra.mxu0 0.0
        %4775 = vmatprep.subr.mxu0 0.0
        %4776 = vmatpush1.xpose.msra.mxu0 0.0
        %4777 = vmatprep.subr.mxu0 0.0
        %4778 = vmatpush1.xpose.msra.mxu0 0.0
        %4779 = vmatprep.subr.mxu0 0.0
        %4780 = vmatpush1.xpose.msra.mxu0 0.0
        %4781 = vmatprep.subr.mxu0 0.0
        %4782 = vmatpush1.xpose.msra.mxu0 0.0
        %4783 = vmatprep.subr.mxu0 0.0
        %4784 = vmatpush1.xpose.msra.mxu0 0.0
        %4785 = vmatprep.subr.mxu0 0.0
        %4786 = vmatpush1.xpose.msra.mxu0 0.0
        %4787 = vmatprep.subr.mxu0 0.0
        %4788 = vmatpush1.xpose.msra.mxu0 0.0
        %4789 = vmatprep.subr.mxu0 0.0
        %4790 = vmatpush1.xpose.msra.mxu0 0.0
        %4791 = vmatprep.subr.mxu0 0.0
        %4792 = vmatpush1.xpose.msra.mxu0 0.0
        %4793 = vmatprep.subr.mxu0 0.0
        %4794 = vmatpush1.xpose.msra.mxu0 0.0
        %4795 = vmatprep.subr.mxu0 0.0
        %4796 = vmatpush1.xpose.msra.mxu0 %v4765
        %4797 = vmatprep.subr.mxu0 0.0
        %4798 = vmatpush1.xpose.msra.mxu0 %v4763
        %4799 = vmatprep.subr.mxu0 0.0
        %4800 = vmatpush2.xpose.msra.mxu0 0.0
        %4801 = vmatprep.subr.mxu0 0.0
        %4802 = vmatpush2.xpose.msra.mxu0 0.0
        %4803 = vmatprep.subr.mxu0 0.0
        %4804 = vmatpush2.xpose.msra.mxu0 0.0
        %4805 = vmatprep.subr.mxu0 0.0
        %4806 = vmatpush2.xpose.msra.mxu0 0.0
        %4807 = vmatprep.subr.mxu0 0.0
        %4808 = vmatpush2.xpose.msra.mxu0 0.0
        %4809 = vmatprep.subr.mxu0 0.0
        %4810 = vmatpush2.xpose.msra.mxu0 0.0
        %4811 = vmatprep.subr.mxu0 0.0
        %4812 = vmatpush2.xpose.msra.mxu0 0.0
        %4813 = vmatprep.subr.mxu0 0.0
        %4814 = vmatpush2.xpose.msra.mxu0 0.0
        %4815 = vmatprep.subr.mxu0 0.0
        %4816 = vmatpush2.xpose.msra.mxu0 0.0
        %4817 = vmatprep.subr.mxu0 0.0
        %4818 = vmatpush2.xpose.msra.mxu0 0.0
        %4819 = vmatprep.subr.mxu0 0.0
        %4820 = vmatpush2.xpose.msra.mxu0 0.0
        %4821 = vmatprep.subr.mxu0 0.0
        %4822 = vmatpush2.xpose.msra.mxu0 0.0
        %4823 = vmatprep.subr.mxu0 0.0
        %4824 = vmatpush2.xpose.msra.mxu0 0.0
        %4825 = vmatprep.subr.mxu0 0.0
        %4826 = vmatpush2.xpose.msra.mxu0 0.0
        %4827 = vmatprep.subr.mxu0 0.0
        %4828 = vmatpush2.xpose.msra.mxu0 0.0
        %4829 = vmatprep.subr.mxu0 0.0
        %4830 = vmatpush2.xpose.msra.mxu0 0.0
        %4831 = vmatprep.mubr.f32.mxu0 0.0
        %4832 = vmatmul.mubr.f32.gmra.mxu0 %v4761
        %v4833 = vpop.f32.mrf.mxu0
        %v4834 = vadd.f32 0.0, %v4833
        %v4835 = vpop.f32.mrf.mxu0
        %4836 = vdwg.mxu0
        %v4837 = vmul.f32 %v4834, 0.35355338
        %v4838 = vadd.f32 %v4837, %v737
        %v4839 = vsel %vm2136, %v4838, -inf
        %4840 = vmax.xlane.f32.xlu0 %v4839
        %v4841 = vpop.xlane.xlu0 %4840
        %v4842 = vsub.f32 %v4838, %v4841
        %v4843 = vmul.f32 %v4842, 1.442695
        %v4844 = vpow.pop %v4843
        %v4845 = vsel %vm2136, %v4844, 0.0
        %4846 = vadd.xlane.f32.xlu0 %v4845
        %v4847 = vpop.xlane.xlu0 %4846
        %v4848 = vrcp.pop %v4847
        %v4849 = vmul.f32 %v4844, %v4848
        %4850 = vrot.lane.b32.xlu0 %v4569, 88
        %v4851 = vpop.permute.xlu0 %4850
        %4852 = vrot.lane.b32.xlu0 %v4574, 88
        %v4853 = vpop.permute.xlu0 %4852
        %v4857 = vsel %vm2136, %v4849, 0
        %4859 = vmatprep.subr.mxu0 0.0
        %4860 = vmatpush1.msra.mxu0 0.0
        %4861 = vmatprep.subr.mxu0 0.0
        %4862 = vmatpush1.msra.mxu0 0.0
        %4863 = vmatprep.subr.mxu0 0.0
        %4864 = vmatpush1.msra.mxu0 0.0
        %4865 = vmatprep.subr.mxu0 0.0
        %4866 = vmatpush1.msra.mxu0 0.0
        %4867 = vmatprep.subr.mxu0 0.0
        %4868 = vmatpush1.msra.mxu0 0.0
        %4869 = vmatprep.subr.mxu0 0.0
        %4870 = vmatpush1.msra.mxu0 0.0
        %4871 = vmatprep.subr.mxu0 0.0
        %4872 = vmatpush1.msra.mxu0 0.0
        %4873 = vmatprep.subr.mxu0 0.0
        %4874 = vmatpush1.msra.mxu0 0.0
        %4875 = vmatprep.subr.mxu0 0.0
        %4876 = vmatpush1.msra.mxu0 0.0
        %4877 = vmatprep.subr.mxu0 0.0
        %4878 = vmatpush1.msra.mxu0 0.0
        %4879 = vmatprep.subr.mxu0 0.0
        %4880 = vmatpush1.msra.mxu0 0.0
        %4881 = vmatprep.subr.mxu0 0.0
        %4882 = vmatpush1.msra.mxu0 0.0
        %4883 = vmatprep.subr.mxu0 0.0
        %4884 = vmatpush1.msra.mxu0 0.0
        %4885 = vmatprep.subr.mxu0 0.0
        %4886 = vmatpush1.msra.mxu0 0.0
        %4887 = vmatprep.subr.mxu0 0.0
        %4888 = vmatpush1.msra.mxu0 %v4853
        %4889 = vmatprep.subr.mxu0 0.0
        %4890 = vmatpush1.msra.mxu0 %v4851
        %4891 = vmatprep.subr.mxu0 0.0
        %4892 = vmatpush2.msra.mxu0 0.0
        %4893 = vmatprep.subr.mxu0 0.0
        %4894 = vmatpush2.msra.mxu0 0.0
        %4895 = vmatprep.subr.mxu0 0.0
        %4896 = vmatpush2.msra.mxu0 0.0
        %4897 = vmatprep.subr.mxu0 0.0
        %4898 = vmatpush2.msra.mxu0 0.0
        %4899 = vmatprep.subr.mxu0 0.0
        %4900 = vmatpush2.msra.mxu0 0.0
        %4901 = vmatprep.subr.mxu0 0.0
        %4902 = vmatpush2.msra.mxu0 0.0
        %4903 = vmatprep.subr.mxu0 0.0
        %4904 = vmatpush2.msra.mxu0 0.0
        %4905 = vmatprep.subr.mxu0 0.0
        %4906 = vmatpush2.msra.mxu0 0.0
        %4907 = vmatprep.subr.mxu0 0.0
        %4908 = vmatpush2.msra.mxu0 0.0
        %4909 = vmatprep.subr.mxu0 0.0
        %4910 = vmatpush2.msra.mxu0 0.0
        %4911 = vmatprep.subr.mxu0 0.0
        %4912 = vmatpush2.msra.mxu0 0.0
        %4913 = vmatprep.subr.mxu0 0.0
        %4914 = vmatpush2.msra.mxu0 0.0
        %4915 = vmatprep.subr.mxu0 0.0
        %4916 = vmatpush2.msra.mxu0 0.0
        %4917 = vmatprep.subr.mxu0 0.0
        %4918 = vmatpush2.msra.mxu0 0.0
        %4919 = vmatprep.subr.mxu0 0.0
        %4920 = vmatpush2.msra.mxu0 0.0
        %4921 = vmatprep.subr.mxu0 0.0
        %4922 = vmatpush2.msra.mxu0 0.0
        %4923 = vmatprep.mubr.f32.mxu0 0.0
        %4924 = vmatmul.mubr.f32.gmra.mxu0 %v4857
        %v4925 = vpop.f32.mrf.mxu0
        %v4926 = vadd.f32 0.0, %v4925
        %v4927 = vpop.f32.mrf.mxu0
        %4928 = vdwg.mxu0
        %v4930 = vsel %vm869, %v4926, 0
        %4932 = vmatprep.subr.mxu0 0.0
        %4933 = vmatpush1.msra.mxu0 0.0
        %4934 = vmatprep.subr.mxu0 0.0
        %4935 = vmatpush1.msra.mxu0 0.0
        %4936 = vmatprep.subr.mxu0 0.0
        %4937 = vmatpush1.msra.mxu0 0.0
        %4938 = vmatprep.subr.mxu0 0.0
        %4939 = vmatpush1.msra.mxu0 0.0
        %4940 = vmatprep.subr.mxu0 0.0
        %4941 = vmatpush1.msra.mxu0 0.0
        %4942 = vmatprep.subr.mxu0 0.0
        %4943 = vmatpush1.msra.mxu0 0.0
        %4944 = vmatprep.subr.mxu0 0.0
        %4945 = vmatpush1.msra.mxu0 0.0
        %4946 = vmatprep.subr.mxu0 0.0
        %4947 = vmatpush1.msra.mxu0 0.0
        %4948 = vmatprep.subr.mxu0 0.0
        %4949 = vmatpush1.msra.mxu0 0.0
        %4950 = vmatprep.subr.mxu0 0.0
        %4951 = vmatpush1.msra.mxu0 0.0
        %4952 = vmatprep.subr.mxu0 0.0
        %4953 = vmatpush1.msra.mxu0 0.0
        %4954 = vmatprep.subr.mxu0 0.0
        %4955 = vmatpush1.msra.mxu0 0.0
        %4956 = vmatprep.subr.mxu0 0.0
        %4957 = vmatpush1.msra.mxu0 0.0
        %4958 = vmatprep.subr.mxu0 0.0
        %4959 = vmatpush1.msra.mxu0 0.0
        %4960 = vmatprep.subr.mxu0 0.0
        %4961 = vmatpush1.msra.mxu0 0.0
        %4962 = vmatprep.subr.mxu0 0.0
        %4963 = vmatpush1.msra.mxu0 %v4579
        %4964 = vmatprep.subr.mxu0 0.0
        %4965 = vmatpush2.msra.mxu0 0.0
        %4966 = vmatprep.subr.mxu0 0.0
        %4967 = vmatpush2.msra.mxu0 0.0
        %4968 = vmatprep.subr.mxu0 0.0
        %4969 = vmatpush2.msra.mxu0 0.0
        %4970 = vmatprep.subr.mxu0 0.0
        %4971 = vmatpush2.msra.mxu0 0.0
        %4972 = vmatprep.subr.mxu0 0.0
        %4973 = vmatpush2.msra.mxu0 0.0
        %4974 = vmatprep.subr.mxu0 0.0
        %4975 = vmatpush2.msra.mxu0 0.0
        %4976 = vmatprep.subr.mxu0 0.0
        %4977 = vmatpush2.msra.mxu0 0.0
        %4978 = vmatprep.subr.mxu0 0.0
        %4979 = vmatpush2.msra.mxu0 0.0
        %4980 = vmatprep.subr.mxu0 0.0
        %4981 = vmatpush2.msra.mxu0 0.0
        %4982 = vmatprep.subr.mxu0 0.0
        %4983 = vmatpush2.msra.mxu0 0.0
        %4984 = vmatprep.subr.mxu0 0.0
        %4985 = vmatpush2.msra.mxu0 0.0
        %4986 = vmatprep.subr.mxu0 0.0
        %4987 = vmatpush2.msra.mxu0 0.0
        %4988 = vmatprep.subr.mxu0 0.0
        %4989 = vmatpush2.msra.mxu0 0.0
        %4990 = vmatprep.subr.mxu0 0.0
        %4991 = vmatpush2.msra.mxu0 0.0
        %4992 = vmatprep.subr.mxu0 0.0
        %4993 = vmatpush2.msra.mxu0 0.0
        %4994 = vmatprep.subr.mxu0 0.0
        %4995 = vmatpush2.msra.mxu0 0.0
        %4996 = vmatprep.mubr.f32.mxu0 0.0
        %4997 = vmatmul.mubr.f32.gmra.mxu0 %v4930
        %v4998 = vpop.f32.mrf.mxu0
        %v4999 = vadd.f32 0.0, %v4998
        %v5000 = vpop.f32.mrf.mxu0
        %5001 = vdwg.mxu0
        %v5003 = vsel %vm869, %v4752, 0
        %5005 = vmatprep.subr.mxu0 0.0
        %5006 = vmatpush1.msra.mxu0 0.0
        %5007 = vmatprep.subr.mxu0 0.0
        %5008 = vmatpush1.msra.mxu0 0.0
        %5009 = vmatprep.subr.mxu0 0.0
        %5010 = vmatpush1.msra.mxu0 0.0
        %5011 = vmatprep.subr.mxu0 0.0
        %5012 = vmatpush1.msra.mxu0 0.0
        %5013 = vmatprep.subr.mxu0 0.0
        %5014 = vmatpush1.msra.mxu0 0.0
        %5015 = vmatprep.subr.mxu0 0.0
        %5016 = vmatpush1.msra.mxu0 0.0
        %5017 = vmatprep.subr.mxu0 0.0
        %5018 = vmatpush1.msra.mxu0 0.0
        %5019 = vmatprep.subr.mxu0 0.0
        %5020 = vmatpush1.msra.mxu0 0.0
        %5021 = vmatprep.subr.mxu0 0.0
        %5022 = vmatpush1.msra.mxu0 0.0
        %5023 = vmatprep.subr.mxu0 0.0
        %5024 = vmatpush1.msra.mxu0 0.0
        %5025 = vmatprep.subr.mxu0 0.0
        %5026 = vmatpush1.msra.mxu0 0.0
        %5027 = vmatprep.subr.mxu0 0.0
        %5028 = vmatpush1.msra.mxu0 0.0
        %5029 = vmatprep.subr.mxu0 0.0
        %5030 = vmatpush1.msra.mxu0 0.0
        %5031 = vmatprep.subr.mxu0 0.0
        %5032 = vmatpush1.msra.mxu0 0.0
        %5033 = vmatprep.subr.mxu0 0.0
        %5034 = vmatpush1.msra.mxu0 0.0
        %5035 = vmatprep.subr.mxu0 0.0
        %5036 = vmatpush1.msra.mxu0 %v4578
        %5037 = vmatprep.subr.mxu0 0.0
        %5038 = vmatpush2.msra.mxu0 0.0
        %5039 = vmatprep.subr.mxu0 0.0
        %5040 = vmatpush2.msra.mxu0 0.0
        %5041 = vmatprep.subr.mxu0 0.0
        %5042 = vmatpush2.msra.mxu0 0.0
        %5043 = vmatprep.subr.mxu0 0.0
        %5044 = vmatpush2.msra.mxu0 0.0
        %5045 = vmatprep.subr.mxu0 0.0
        %5046 = vmatpush2.msra.mxu0 0.0
        %5047 = vmatprep.subr.mxu0 0.0
        %5048 = vmatpush2.msra.mxu0 0.0
        %5049 = vmatprep.subr.mxu0 0.0
        %5050 = vmatpush2.msra.mxu0 0.0
        %5051 = vmatprep.subr.mxu0 0.0
        %5052 = vmatpush2.msra.mxu0 0.0
        %5053 = vmatprep.subr.mxu0 0.0
        %5054 = vmatpush2.msra.mxu0 0.0
        %5055 = vmatprep.subr.mxu0 0.0
        %5056 = vmatpush2.msra.mxu0 0.0
        %5057 = vmatprep.subr.mxu0 0.0
        %5058 = vmatpush2.msra.mxu0 0.0
        %5059 = vmatprep.subr.mxu0 0.0
        %5060 = vmatpush2.msra.mxu0 0.0
        %5061 = vmatprep.subr.mxu0 0.0
        %5062 = vmatpush2.msra.mxu0 0.0
        %5063 = vmatprep.subr.mxu0 0.0
        %5064 = vmatpush2.msra.mxu0 0.0
        %5065 = vmatprep.subr.mxu0 0.0
        %5066 = vmatpush2.msra.mxu0 0.0
        %5067 = vmatprep.subr.mxu0 0.0
        %5068 = vmatpush2.msra.mxu0 0.0
        %5069 = vmatprep.mubr.f32.mxu0 0.0
        %5070 = vmatmul.mubr.f32.gmra.mxu0 %v5003
        %v5071 = vpop.f32.mrf.mxu0
        %v5072 = vadd.f32 %v4999, %v5071
        %v5073 = vpop.f32.mrf.mxu0
        %5074 = vdwg.mxu0
        %5075 = vrot.lane.b32.xlu0 %v4486, 112
        %v5076 = vpop.permute.xlu0 %5075
        %5077 = vrot.lane.b32.xlu0 %v4569, 112
        %v5078 = vpop.permute.xlu0 %5077
        %5079 = vrot.lane.b32.xlu0 %v4574, 112
        %v5080 = vpop.permute.xlu0 %5079
        %v5081 = vsel %vm869, %v5076, 0
        %v5083 = vsel %vm869, %v5078, 0
        %v5085 = vsel %vm869, %v5080, 0
        %5087 = vmatprep.subr.mxu0 0.0
        %5088 = vmatpush1.xpose.msra.mxu0 0.0
        %5089 = vmatprep.subr.mxu0 0.0
        %5090 = vmatpush1.xpose.msra.mxu0 0.0
        %5091 = vmatprep.subr.mxu0 0.0
        %5092 = vmatpush1.xpose.msra.mxu0 0.0
        %5093 = vmatprep.subr.mxu0 0.0
        %5094 = vmatpush1.xpose.msra.mxu0 0.0
        %5095 = vmatprep.subr.mxu0 0.0
        %5096 = vmatpush1.xpose.msra.mxu0 0.0
        %5097 = vmatprep.subr.mxu0 0.0
        %5098 = vmatpush1.xpose.msra.mxu0 0.0
        %5099 = vmatprep.subr.mxu0 0.0
        %5100 = vmatpush1.xpose.msra.mxu0 0.0
        %5101 = vmatprep.subr.mxu0 0.0
        %5102 = vmatpush1.xpose.msra.mxu0 0.0
        %5103 = vmatprep.subr.mxu0 0.0
        %5104 = vmatpush1.xpose.msra.mxu0 0.0
        %5105 = vmatprep.subr.mxu0 0.0
        %5106 = vmatpush1.xpose.msra.mxu0 0.0
        %5107 = vmatprep.subr.mxu0 0.0
        %5108 = vmatpush1.xpose.msra.mxu0 0.0
        %5109 = vmatprep.subr.mxu0 0.0
        %5110 = vmatpush1.xpose.msra.mxu0 0.0
        %5111 = vmatprep.subr.mxu0 0.0
        %5112 = vmatpush1.xpose.msra.mxu0 0.0
        %5113 = vmatprep.subr.mxu0 0.0
        %5114 = vmatpush1.xpose.msra.mxu0 0.0
        %5115 = vmatprep.subr.mxu0 0.0
        %5116 = vmatpush1.xpose.msra.mxu0 %v5085
        %5117 = vmatprep.subr.mxu0 0.0
        %5118 = vmatpush1.xpose.msra.mxu0 %v5083
        %5119 = vmatprep.subr.mxu0 0.0
        %5120 = vmatpush2.xpose.msra.mxu0 0.0
        %5121 = vmatprep.subr.mxu0 0.0
        %5122 = vmatpush2.xpose.msra.mxu0 0.0
        %5123 = vmatprep.subr.mxu0 0.0
        %5124 = vmatpush2.xpose.msra.mxu0 0.0
        %5125 = vmatprep.subr.mxu0 0.0
        %5126 = vmatpush2.xpose.msra.mxu0 0.0
        %5127 = vmatprep.subr.mxu0 0.0
        %5128 = vmatpush2.xpose.msra.mxu0 0.0
        %5129 = vmatprep.subr.mxu0 0.0
        %5130 = vmatpush2.xpose.msra.mxu0 0.0
        %5131 = vmatprep.subr.mxu0 0.0
        %5132 = vmatpush2.xpose.msra.mxu0 0.0
        %5133 = vmatprep.subr.mxu0 0.0
        %5134 = vmatpush2.xpose.msra.mxu0 0.0
        %5135 = vmatprep.subr.mxu0 0.0
        %5136 = vmatpush2.xpose.msra.mxu0 0.0
        %5137 = vmatprep.subr.mxu0 0.0
        %5138 = vmatpush2.xpose.msra.mxu0 0.0
        %5139 = vmatprep.subr.mxu0 0.0
        %5140 = vmatpush2.xpose.msra.mxu0 0.0
        %5141 = vmatprep.subr.mxu0 0.0
        %5142 = vmatpush2.xpose.msra.mxu0 0.0
        %5143 = vmatprep.subr.mxu0 0.0
        %5144 = vmatpush2.xpose.msra.mxu0 0.0
        %5145 = vmatprep.subr.mxu0 0.0
        %5146 = vmatpush2.xpose.msra.mxu0 0.0
        %5147 = vmatprep.subr.mxu0 0.0
        %5148 = vmatpush2.xpose.msra.mxu0 0.0
        %5149 = vmatprep.subr.mxu0 0.0
        %5150 = vmatpush2.xpose.msra.mxu0 0.0
        %5151 = vmatprep.mubr.f32.mxu0 0.0
        %5152 = vmatmul.mubr.f32.gmra.mxu0 %v5081
        %v5153 = vpop.f32.mrf.mxu0
        %v5154 = vadd.f32 0.0, %v5153
        %v5155 = vpop.f32.mrf.mxu0
        %5156 = vdwg.mxu0
        %v5157 = vmul.f32 %v5154, 0.35355338
        %v5158 = vadd.f32 %v5157, %v737
        %v5159 = vsel %vm2136, %v5158, -inf
        %5160 = vmax.xlane.f32.xlu0 %v5159
        %v5161 = vpop.xlane.xlu0 %5160
        %v5162 = vsub.f32 %v5158, %v5161
        %v5163 = vmul.f32 %v5162, 1.442695
        %v5164 = vpow.pop %v5163
        %v5165 = vsel %vm2136, %v5164, 0.0
        %5166 = vadd.xlane.f32.xlu0 %v5165
        %v5167 = vpop.xlane.xlu0 %5166
        %v5168 = vrcp.pop %v5167
        %v5169 = vmul.f32 %v5164, %v5168
        %5170 = vrot.lane.b32.xlu0 %v4569, 80
        %v5171 = vpop.permute.xlu0 %5170
        %5172 = vrot.lane.b32.xlu0 %v4574, 80
        %v5173 = vpop.permute.xlu0 %5172
        %v5177 = vsel %vm2136, %v5169, 0
        %5179 = vmatprep.subr.mxu0 0.0
        %5180 = vmatpush1.msra.mxu0 0.0
        %5181 = vmatprep.subr.mxu0 0.0
        %5182 = vmatpush1.msra.mxu0 0.0
        %5183 = vmatprep.subr.mxu0 0.0
        %5184 = vmatpush1.msra.mxu0 0.0
        %5185 = vmatprep.subr.mxu0 0.0
        %5186 = vmatpush1.msra.mxu0 0.0
        %5187 = vmatprep.subr.mxu0 0.0
        %5188 = vmatpush1.msra.mxu0 0.0
        %5189 = vmatprep.subr.mxu0 0.0
        %5190 = vmatpush1.msra.mxu0 0.0
        %5191 = vmatprep.subr.mxu0 0.0
        %5192 = vmatpush1.msra.mxu0 0.0
        %5193 = vmatprep.subr.mxu0 0.0
        %5194 = vmatpush1.msra.mxu0 0.0
        %5195 = vmatprep.subr.mxu0 0.0
        %5196 = vmatpush1.msra.mxu0 0.0
        %5197 = vmatprep.subr.mxu0 0.0
        %5198 = vmatpush1.msra.mxu0 0.0
        %5199 = vmatprep.subr.mxu0 0.0
        %5200 = vmatpush1.msra.mxu0 0.0
        %5201 = vmatprep.subr.mxu0 0.0
        %5202 = vmatpush1.msra.mxu0 0.0
        %5203 = vmatprep.subr.mxu0 0.0
        %5204 = vmatpush1.msra.mxu0 0.0
        %5205 = vmatprep.subr.mxu0 0.0
        %5206 = vmatpush1.msra.mxu0 0.0
        %5207 = vmatprep.subr.mxu0 0.0
        %5208 = vmatpush1.msra.mxu0 %v5173
        %5209 = vmatprep.subr.mxu0 0.0
        %5210 = vmatpush1.msra.mxu0 %v5171
        %5211 = vmatprep.subr.mxu0 0.0
        %5212 = vmatpush2.msra.mxu0 0.0
        %5213 = vmatprep.subr.mxu0 0.0
        %5214 = vmatpush2.msra.mxu0 0.0
        %5215 = vmatprep.subr.mxu0 0.0
        %5216 = vmatpush2.msra.mxu0 0.0
        %5217 = vmatprep.subr.mxu0 0.0
        %5218 = vmatpush2.msra.mxu0 0.0
        %5219 = vmatprep.subr.mxu0 0.0
        %5220 = vmatpush2.msra.mxu0 0.0
        %5221 = vmatprep.subr.mxu0 0.0
        %5222 = vmatpush2.msra.mxu0 0.0
        %5223 = vmatprep.subr.mxu0 0.0
        %5224 = vmatpush2.msra.mxu0 0.0
        %5225 = vmatprep.subr.mxu0 0.0
        %5226 = vmatpush2.msra.mxu0 0.0
        %5227 = vmatprep.subr.mxu0 0.0
        %5228 = vmatpush2.msra.mxu0 0.0
        %5229 = vmatprep.subr.mxu0 0.0
        %5230 = vmatpush2.msra.mxu0 0.0
        %5231 = vmatprep.subr.mxu0 0.0
        %5232 = vmatpush2.msra.mxu0 0.0
        %5233 = vmatprep.subr.mxu0 0.0
        %5234 = vmatpush2.msra.mxu0 0.0
        %5235 = vmatprep.subr.mxu0 0.0
        %5236 = vmatpush2.msra.mxu0 0.0
        %5237 = vmatprep.subr.mxu0 0.0
        %5238 = vmatpush2.msra.mxu0 0.0
        %5239 = vmatprep.subr.mxu0 0.0
        %5240 = vmatpush2.msra.mxu0 0.0
        %5241 = vmatprep.subr.mxu0 0.0
        %5242 = vmatpush2.msra.mxu0 0.0
        %5243 = vmatprep.mubr.f32.mxu0 0.0
        %5244 = vmatmul.mubr.f32.gmra.mxu0 %v5177
        %v5245 = vpop.f32.mrf.mxu0
        %v5246 = vadd.f32 0.0, %v5245
        %v5247 = vpop.f32.mrf.mxu0
        %5248 = vdwg.mxu0
        %v5250 = vsel %vm869, %v5246, 0
        %5252 = vmatprep.subr.mxu0 0.0
        %5253 = vmatpush1.msra.mxu0 0.0
        %5254 = vmatprep.subr.mxu0 0.0
        %5255 = vmatpush1.msra.mxu0 0.0
        %5256 = vmatprep.subr.mxu0 0.0
        %5257 = vmatpush1.msra.mxu0 0.0
        %5258 = vmatprep.subr.mxu0 0.0
        %5259 = vmatpush1.msra.mxu0 0.0
        %5260 = vmatprep.subr.mxu0 0.0
        %5261 = vmatpush1.msra.mxu0 0.0
        %5262 = vmatprep.subr.mxu0 0.0
        %5263 = vmatpush1.msra.mxu0 0.0
        %5264 = vmatprep.subr.mxu0 0.0
        %5265 = vmatpush1.msra.mxu0 0.0
        %5266 = vmatprep.subr.mxu0 0.0
        %5267 = vmatpush1.msra.mxu0 0.0
        %5268 = vmatprep.subr.mxu0 0.0
        %5269 = vmatpush1.msra.mxu0 0.0
        %5270 = vmatprep.subr.mxu0 0.0
        %5271 = vmatpush1.msra.mxu0 0.0
        %5272 = vmatprep.subr.mxu0 0.0
        %5273 = vmatpush1.msra.mxu0 0.0
        %5274 = vmatprep.subr.mxu0 0.0
        %5275 = vmatpush1.msra.mxu0 0.0
        %5276 = vmatprep.subr.mxu0 0.0
        %5277 = vmatpush1.msra.mxu0 0.0
        %5278 = vmatprep.subr.mxu0 0.0
        %5279 = vmatpush1.msra.mxu0 0.0
        %5280 = vmatprep.subr.mxu0 0.0
        %5281 = vmatpush1.msra.mxu0 0.0
        %5282 = vmatprep.subr.mxu0 0.0
        %5283 = vmatpush1.msra.mxu0 %v4580
        %5284 = vmatprep.subr.mxu0 0.0
        %5285 = vmatpush2.msra.mxu0 0.0
        %5286 = vmatprep.subr.mxu0 0.0
        %5287 = vmatpush2.msra.mxu0 0.0
        %5288 = vmatprep.subr.mxu0 0.0
        %5289 = vmatpush2.msra.mxu0 0.0
        %5290 = vmatprep.subr.mxu0 0.0
        %5291 = vmatpush2.msra.mxu0 0.0
        %5292 = vmatprep.subr.mxu0 0.0
        %5293 = vmatpush2.msra.mxu0 0.0
        %5294 = vmatprep.subr.mxu0 0.0
        %5295 = vmatpush2.msra.mxu0 0.0
        %5296 = vmatprep.subr.mxu0 0.0
        %5297 = vmatpush2.msra.mxu0 0.0
        %5298 = vmatprep.subr.mxu0 0.0
        %5299 = vmatpush2.msra.mxu0 0.0
        %5300 = vmatprep.subr.mxu0 0.0
        %5301 = vmatpush2.msra.mxu0 0.0
        %5302 = vmatprep.subr.mxu0 0.0
        %5303 = vmatpush2.msra.mxu0 0.0
        %5304 = vmatprep.subr.mxu0 0.0
        %5305 = vmatpush2.msra.mxu0 0.0
        %5306 = vmatprep.subr.mxu0 0.0
        %5307 = vmatpush2.msra.mxu0 0.0
        %5308 = vmatprep.subr.mxu0 0.0
        %5309 = vmatpush2.msra.mxu0 0.0
        %5310 = vmatprep.subr.mxu0 0.0
        %5311 = vmatpush2.msra.mxu0 0.0
        %5312 = vmatprep.subr.mxu0 0.0
        %5313 = vmatpush2.msra.mxu0 0.0
        %5314 = vmatprep.subr.mxu0 0.0
        %5315 = vmatpush2.msra.mxu0 0.0
        %5316 = vmatprep.mubr.f32.mxu0 0.0
        %5317 = vmatmul.mubr.f32.gmra.mxu0 %v5250
        %v5318 = vpop.f32.mrf.mxu0
        %v5319 = vadd.f32 0.0, %v5318
        %v5320 = vpop.f32.mrf.mxu0
        %5321 = vdwg.mxu0
        %v5322 = vadd.f32 %v5072, %v5319
        %5323 = vrot.lane.b32.xlu0 %v4486, 104
        %v5324 = vpop.permute.xlu0 %5323
        %5325 = vrot.lane.b32.xlu0 %v4569, 104
        %v5326 = vpop.permute.xlu0 %5325
        %5327 = vrot.lane.b32.xlu0 %v4574, 104
        %v5328 = vpop.permute.xlu0 %5327
        %v5329 = vsel %vm869, %v5324, 0
        %v5331 = vsel %vm869, %v5326, 0
        %v5333 = vsel %vm869, %v5328, 0
        %5335 = vmatprep.subr.mxu0 0.0
        %5336 = vmatpush1.xpose.msra.mxu0 0.0
        %5337 = vmatprep.subr.mxu0 0.0
        %5338 = vmatpush1.xpose.msra.mxu0 0.0
        %5339 = vmatprep.subr.mxu0 0.0
        %5340 = vmatpush1.xpose.msra.mxu0 0.0
        %5341 = vmatprep.subr.mxu0 0.0
        %5342 = vmatpush1.xpose.msra.mxu0 0.0
        %5343 = vmatprep.subr.mxu0 0.0
        %5344 = vmatpush1.xpose.msra.mxu0 0.0
        %5345 = vmatprep.subr.mxu0 0.0
        %5346 = vmatpush1.xpose.msra.mxu0 0.0
        %5347 = vmatprep.subr.mxu0 0.0
        %5348 = vmatpush1.xpose.msra.mxu0 0.0
        %5349 = vmatprep.subr.mxu0 0.0
        %5350 = vmatpush1.xpose.msra.mxu0 0.0
        %5351 = vmatprep.subr.mxu0 0.0
        %5352 = vmatpush1.xpose.msra.mxu0 0.0
        %5353 = vmatprep.subr.mxu0 0.0
        %5354 = vmatpush1.xpose.msra.mxu0 0.0
        %5355 = vmatprep.subr.mxu0 0.0
        %5356 = vmatpush1.xpose.msra.mxu0 0.0
        %5357 = vmatprep.subr.mxu0 0.0
        %5358 = vmatpush1.xpose.msra.mxu0 0.0
        %5359 = vmatprep.subr.mxu0 0.0
        %5360 = vmatpush1.xpose.msra.mxu0 0.0
        %5361 = vmatprep.subr.mxu0 0.0
        %5362 = vmatpush1.xpose.msra.mxu0 0.0
        %5363 = vmatprep.subr.mxu0 0.0
        %5364 = vmatpush1.xpose.msra.mxu0 %v5333
        %5365 = vmatprep.subr.mxu0 0.0
        %5366 = vmatpush1.xpose.msra.mxu0 %v5331
        %5367 = vmatprep.subr.mxu0 0.0
        %5368 = vmatpush2.xpose.msra.mxu0 0.0
        %5369 = vmatprep.subr.mxu0 0.0
        %5370 = vmatpush2.xpose.msra.mxu0 0.0
        %5371 = vmatprep.subr.mxu0 0.0
        %5372 = vmatpush2.xpose.msra.mxu0 0.0
        %5373 = vmatprep.subr.mxu0 0.0
        %5374 = vmatpush2.xpose.msra.mxu0 0.0
        %5375 = vmatprep.subr.mxu0 0.0
        %5376 = vmatpush2.xpose.msra.mxu0 0.0
        %5377 = vmatprep.subr.mxu0 0.0
        %5378 = vmatpush2.xpose.msra.mxu0 0.0
        %5379 = vmatprep.subr.mxu0 0.0
        %5380 = vmatpush2.xpose.msra.mxu0 0.0
        %5381 = vmatprep.subr.mxu0 0.0
        %5382 = vmatpush2.xpose.msra.mxu0 0.0
        %5383 = vmatprep.subr.mxu0 0.0
        %5384 = vmatpush2.xpose.msra.mxu0 0.0
        %5385 = vmatprep.subr.mxu0 0.0
        %5386 = vmatpush2.xpose.msra.mxu0 0.0
        %5387 = vmatprep.subr.mxu0 0.0
        %5388 = vmatpush2.xpose.msra.mxu0 0.0
        %5389 = vmatprep.subr.mxu0 0.0
        %5390 = vmatpush2.xpose.msra.mxu0 0.0
        %5391 = vmatprep.subr.mxu0 0.0
        %5392 = vmatpush2.xpose.msra.mxu0 0.0
        %5393 = vmatprep.subr.mxu0 0.0
        %5394 = vmatpush2.xpose.msra.mxu0 0.0
        %5395 = vmatprep.subr.mxu0 0.0
        %5396 = vmatpush2.xpose.msra.mxu0 0.0
        %5397 = vmatprep.subr.mxu0 0.0
        %5398 = vmatpush2.xpose.msra.mxu0 0.0
        %5399 = vmatprep.mubr.f32.mxu0 0.0
        %5400 = vmatmul.mubr.f32.gmra.mxu0 %v5329
        %v5401 = vpop.f32.mrf.mxu0
        %v5402 = vadd.f32 0.0, %v5401
        %v5403 = vpop.f32.mrf.mxu0
        %5404 = vdwg.mxu0
        %v5405 = vmul.f32 %v5402, 0.35355338
        %v5406 = vadd.f32 %v5405, %v737
        %v5407 = vsel %vm2136, %v5406, -inf
        %5408 = vmax.xlane.f32.xlu0 %v5407
        %v5409 = vpop.xlane.xlu0 %5408
        %v5410 = vsub.f32 %v5406, %v5409
        %v5411 = vmul.f32 %v5410, 1.442695
        %v5412 = vpow.pop %v5411
        %v5413 = vsel %vm2136, %v5412, 0.0
        %5414 = vadd.xlane.f32.xlu0 %v5413
        %v5415 = vpop.xlane.xlu0 %5414
        %v5416 = vrcp.pop %v5415
        %v5417 = vmul.f32 %v5412, %v5416
        %5418 = vrot.lane.b32.xlu0 %v4569, 72
        %v5419 = vpop.permute.xlu0 %5418
        %5420 = vrot.lane.b32.xlu0 %v4574, 72
        %v5421 = vpop.permute.xlu0 %5420
        %v5425 = vsel %vm2136, %v5417, 0
        %5427 = vmatprep.subr.mxu0 0.0
        %5428 = vmatpush1.msra.mxu0 0.0
        %5429 = vmatprep.subr.mxu0 0.0
        %5430 = vmatpush1.msra.mxu0 0.0
        %5431 = vmatprep.subr.mxu0 0.0
        %5432 = vmatpush1.msra.mxu0 0.0
        %5433 = vmatprep.subr.mxu0 0.0
        %5434 = vmatpush1.msra.mxu0 0.0
        %5435 = vmatprep.subr.mxu0 0.0
        %5436 = vmatpush1.msra.mxu0 0.0
        %5437 = vmatprep.subr.mxu0 0.0
        %5438 = vmatpush1.msra.mxu0 0.0
        %5439 = vmatprep.subr.mxu0 0.0
        %5440 = vmatpush1.msra.mxu0 0.0
        %5441 = vmatprep.subr.mxu0 0.0
        %5442 = vmatpush1.msra.mxu0 0.0
        %5443 = vmatprep.subr.mxu0 0.0
        %5444 = vmatpush1.msra.mxu0 0.0
        %5445 = vmatprep.subr.mxu0 0.0
        %5446 = vmatpush1.msra.mxu0 0.0
        %5447 = vmatprep.subr.mxu0 0.0
        %5448 = vmatpush1.msra.mxu0 0.0
        %5449 = vmatprep.subr.mxu0 0.0
        %5450 = vmatpush1.msra.mxu0 0.0
        %5451 = vmatprep.subr.mxu0 0.0
        %5452 = vmatpush1.msra.mxu0 0.0
        %5453 = vmatprep.subr.mxu0 0.0
        %5454 = vmatpush1.msra.mxu0 0.0
        %5455 = vmatprep.subr.mxu0 0.0
        %5456 = vmatpush1.msra.mxu0 %v5421
        %5457 = vmatprep.subr.mxu0 0.0
        %5458 = vmatpush1.msra.mxu0 %v5419
        %5459 = vmatprep.subr.mxu0 0.0
        %5460 = vmatpush2.msra.mxu0 0.0
        %5461 = vmatprep.subr.mxu0 0.0
        %5462 = vmatpush2.msra.mxu0 0.0
        %5463 = vmatprep.subr.mxu0 0.0
        %5464 = vmatpush2.msra.mxu0 0.0
        %5465 = vmatprep.subr.mxu0 0.0
        %5466 = vmatpush2.msra.mxu0 0.0
        %5467 = vmatprep.subr.mxu0 0.0
        %5468 = vmatpush2.msra.mxu0 0.0
        %5469 = vmatprep.subr.mxu0 0.0
        %5470 = vmatpush2.msra.mxu0 0.0
        %5471 = vmatprep.subr.mxu0 0.0
        %5472 = vmatpush2.msra.mxu0 0.0
        %5473 = vmatprep.subr.mxu0 0.0
        %5474 = vmatpush2.msra.mxu0 0.0
        %5475 = vmatprep.subr.mxu0 0.0
        %5476 = vmatpush2.msra.mxu0 0.0
        %5477 = vmatprep.subr.mxu0 0.0
        %5478 = vmatpush2.msra.mxu0 0.0
        %5479 = vmatprep.subr.mxu0 0.0
        %5480 = vmatpush2.msra.mxu0 0.0
        %5481 = vmatprep.subr.mxu0 0.0
        %5482 = vmatpush2.msra.mxu0 0.0
        %5483 = vmatprep.subr.mxu0 0.0
        %5484 = vmatpush2.msra.mxu0 0.0
        %5485 = vmatprep.subr.mxu0 0.0
        %5486 = vmatpush2.msra.mxu0 0.0
        %5487 = vmatprep.subr.mxu0 0.0
        %5488 = vmatpush2.msra.mxu0 0.0
        %5489 = vmatprep.subr.mxu0 0.0
        %5490 = vmatpush2.msra.mxu0 0.0
        %5491 = vmatprep.mubr.f32.mxu0 0.0
        %5492 = vmatmul.mubr.f32.gmra.mxu0 %v5425
        %v5493 = vpop.f32.mrf.mxu0
        %v5494 = vadd.f32 0.0, %v5493
        %v5495 = vpop.f32.mrf.mxu0
        %5496 = vdwg.mxu0
        %v5498 = vsel %vm869, %v5494, 0
        %5500 = vmatprep.subr.mxu0 0.0
        %5501 = vmatpush1.msra.mxu0 0.0
        %5502 = vmatprep.subr.mxu0 0.0
        %5503 = vmatpush1.msra.mxu0 0.0
        %5504 = vmatprep.subr.mxu0 0.0
        %5505 = vmatpush1.msra.mxu0 0.0
        %5506 = vmatprep.subr.mxu0 0.0
        %5507 = vmatpush1.msra.mxu0 0.0
        %5508 = vmatprep.subr.mxu0 0.0
        %5509 = vmatpush1.msra.mxu0 0.0
        %5510 = vmatprep.subr.mxu0 0.0
        %5511 = vmatpush1.msra.mxu0 0.0
        %5512 = vmatprep.subr.mxu0 0.0
        %5513 = vmatpush1.msra.mxu0 0.0
        %5514 = vmatprep.subr.mxu0 0.0
        %5515 = vmatpush1.msra.mxu0 0.0
        %5516 = vmatprep.subr.mxu0 0.0
        %5517 = vmatpush1.msra.mxu0 0.0
        %5518 = vmatprep.subr.mxu0 0.0
        %5519 = vmatpush1.msra.mxu0 0.0
        %5520 = vmatprep.subr.mxu0 0.0
        %5521 = vmatpush1.msra.mxu0 0.0
        %5522 = vmatprep.subr.mxu0 0.0
        %5523 = vmatpush1.msra.mxu0 0.0
        %5524 = vmatprep.subr.mxu0 0.0
        %5525 = vmatpush1.msra.mxu0 0.0
        %5526 = vmatprep.subr.mxu0 0.0
        %5527 = vmatpush1.msra.mxu0 0.0
        %5528 = vmatprep.subr.mxu0 0.0
        %5529 = vmatpush1.msra.mxu0 0.0
        %5530 = vmatprep.subr.mxu0 0.0
        %5531 = vmatpush1.msra.mxu0 %v4581
        %5532 = vmatprep.subr.mxu0 0.0
        %5533 = vmatpush2.msra.mxu0 0.0
        %5534 = vmatprep.subr.mxu0 0.0
        %5535 = vmatpush2.msra.mxu0 0.0
        %5536 = vmatprep.subr.mxu0 0.0
        %5537 = vmatpush2.msra.mxu0 0.0
        %5538 = vmatprep.subr.mxu0 0.0
        %5539 = vmatpush2.msra.mxu0 0.0
        %5540 = vmatprep.subr.mxu0 0.0
        %5541 = vmatpush2.msra.mxu0 0.0
        %5542 = vmatprep.subr.mxu0 0.0
        %5543 = vmatpush2.msra.mxu0 0.0
        %5544 = vmatprep.subr.mxu0 0.0
        %5545 = vmatpush2.msra.mxu0 0.0
        %5546 = vmatprep.subr.mxu0 0.0
        %5547 = vmatpush2.msra.mxu0 0.0
        %5548 = vmatprep.subr.mxu0 0.0
        %5549 = vmatpush2.msra.mxu0 0.0
        %5550 = vmatprep.subr.mxu0 0.0
        %5551 = vmatpush2.msra.mxu0 0.0
        %5552 = vmatprep.subr.mxu0 0.0
        %5553 = vmatpush2.msra.mxu0 0.0
        %5554 = vmatprep.subr.mxu0 0.0
        %5555 = vmatpush2.msra.mxu0 0.0
        %5556 = vmatprep.subr.mxu0 0.0
        %5557 = vmatpush2.msra.mxu0 0.0
        %5558 = vmatprep.subr.mxu0 0.0
        %5559 = vmatpush2.msra.mxu0 0.0
        %5560 = vmatprep.subr.mxu0 0.0
        %5561 = vmatpush2.msra.mxu0 0.0
        %5562 = vmatprep.subr.mxu0 0.0
        %5563 = vmatpush2.msra.mxu0 0.0
        %5564 = vmatprep.mubr.f32.mxu0 0.0
        %5565 = vmatmul.mubr.f32.gmra.mxu0 %v5498
        %v5566 = vpop.f32.mrf.mxu0
        %v5567 = vadd.f32 0.0, %v5566
        %v5568 = vpop.f32.mrf.mxu0
        %5569 = vdwg.mxu0
        %v5570 = vadd.f32 %v5322, %v5567
        %v5572 = vlaneseq
        %v5573 = vshrl.u32 %v5572, 7
        %v5574 = vsub.s32 0, %v5573
        %v5575 = vrot.slane %v4583, %v5574
        %v5577 = vadd.f32 %v5570, %v5575
        %v5578 = vadd.f32 %v4364, %v5577
        %s5579 = scalar_lea.vmem %s4, 5
        %v5580 = vld [vmem:[%s5579] sm:$0x1]
        %s5581 = scalar_lea.vmem %s5, 5
        %v5582 = vld [vmem:[%s5581] sm:$0x1]
        %v5583 = vsel %vm740, %v5578, 0.0
        %5584 = vadd.xlane.f32.xlu0 %v5583
        %v5585 = vpop.xlane.xlu0 %5584
        %v5586 = vmul.f32 %v5585, %v744
        %v5587 = vsub.f32 %v5578, %v5586
        %v5588 = vmul.f32 %v5587, %v5587
        %v5589 = vsel %vm740, %v5588, 0.0
        %5590 = vadd.xlane.f32.xlu0 %v5589
        %v5591 = vpop.xlane.xlu0 %5590
        %v5592 = vmul.f32 %v5591, %v751
        %v5593 = vrsqrt.pop %v5592
        %v5594 = vmul.f32 %v5592, %v5593
        %vm5595 = vcmp.eq.f32.partialorder %v5592, inf
        %v5596 = vsel %vm5595, %v5592, %v5594
        %vm5597 = vcmp.eq.f32.partialorder %v5592, 0.0
        %v5598 = vand.u32 %v5592, 2147483648
        %v5599 = vsel %vm5597, %v5598, %v5596
        %v5600 = vadd.f32 %v5599, 1e-06
        %v5601 = vrcp.pop %v5600
        %v5603 = vlaneseq
        %v5604 = vshrl.u32 %v5603, 7
        %v5605 = vsub.s32 0, %v5604
        %v5606 = vrot.slane %v5580, %v5605
        %v5608 = vmul.f32 %v5606, %v5587
        %v5609 = vmul.f32 %v5608, %v5601
        %v5611 = vlaneseq
        %v5612 = vshrl.u32 %v5611, 7
        %v5613 = vsub.s32 0, %v5612
        %v5614 = vrot.slane %v5582, %v5613
        %v5616 = vadd.f32 %v5609, %v5614
        %s5617 = scalar_lea.vmem %s16, 32
        %v5618 = vld [vmem:[%s5617] sm:$0xff]
        %v5619 = vld [vmem:[%s5617 + $0x8] sm:$0xff]
        %v5620 = vld [vmem:[%s5617 + $0x10] sm:$0xff]
        %v5621 = vld [vmem:[%s5617 + $0x18] sm:$0xff]
        %s5622 = scalar_lea.vmem %s17, 1
        %v5623 = vld [vmem:[%s5622] sm:$0x1]
        %v5625 = vlaneseq
        %v5626 = vshrl.u32 %v5625, 7
        %v5627 = vsub.s32 0, %v5626
        %v5628 = vrot.slane %v5623, %v5627
        %v5631 = vsel %vm740, %v5616, 0
        %5633 = vmatprep.subr.mxu0 0.0
        %5634 = vmatpush1.msra.mxu0 0.0
        %5635 = vmatprep.subr.mxu0 0.0
        %5636 = vmatpush1.msra.mxu0 0.0
        %5637 = vmatprep.subr.mxu0 0.0
        %5638 = vmatpush1.msra.mxu0 0.0
        %5639 = vmatprep.subr.mxu0 0.0
        %5640 = vmatpush1.msra.mxu0 0.0
        %5641 = vmatprep.subr.mxu0 0.0
        %5642 = vmatpush1.msra.mxu0 0.0
        %5643 = vmatprep.subr.mxu0 0.0
        %5644 = vmatpush1.msra.mxu0 0.0
        %5645 = vmatprep.subr.mxu0 0.0
        %5646 = vmatpush1.msra.mxu0 0.0
        %5647 = vmatprep.subr.mxu0 0.0
        %5648 = vmatpush1.msra.mxu0 0.0
        %5649 = vmatprep.subr.mxu0 0.0
        %5650 = vmatpush1.msra.mxu0 0.0
        %5651 = vmatprep.subr.mxu0 0.0
        %5652 = vmatpush1.msra.mxu0 0.0
        %5653 = vmatprep.subr.mxu0 0.0
        %5654 = vmatpush1.msra.mxu0 0.0
        %5655 = vmatprep.subr.mxu0 0.0
        %5656 = vmatpush1.msra.mxu0 0.0
        %5657 = vmatprep.subr.mxu0 0.0
        %5658 = vmatpush1.msra.mxu0 %v5621
        %5659 = vmatprep.subr.mxu0 0.0
        %5660 = vmatpush1.msra.mxu0 %v5620
        %5661 = vmatprep.subr.mxu0 0.0
        %5662 = vmatpush1.msra.mxu0 %v5619
        %5663 = vmatprep.subr.mxu0 0.0
        %5664 = vmatpush1.msra.mxu0 %v5618
        %5665 = vmatprep.subr.mxu0 0.0
        %5666 = vmatpush2.msra.mxu0 0.0
        %5667 = vmatprep.subr.mxu0 0.0
        %5668 = vmatpush2.msra.mxu0 0.0
        %5669 = vmatprep.subr.mxu0 0.0
        %5670 = vmatpush2.msra.mxu0 0.0
        %5671 = vmatprep.subr.mxu0 0.0
        %5672 = vmatpush2.msra.mxu0 0.0
        %5673 = vmatprep.subr.mxu0 0.0
        %5674 = vmatpush2.msra.mxu0 0.0
        %5675 = vmatprep.subr.mxu0 0.0
        %5676 = vmatpush2.msra.mxu0 0.0
        %5677 = vmatprep.subr.mxu0 0.0
        %5678 = vmatpush2.msra.mxu0 0.0
        %5679 = vmatprep.subr.mxu0 0.0
        %5680 = vmatpush2.msra.mxu0 0.0
        %5681 = vmatprep.subr.mxu0 0.0
        %5682 = vmatpush2.msra.mxu0 0.0
        %5683 = vmatprep.subr.mxu0 0.0
        %5684 = vmatpush2.msra.mxu0 0.0
        %5685 = vmatprep.subr.mxu0 0.0
        %5686 = vmatpush2.msra.mxu0 0.0
        %5687 = vmatprep.subr.mxu0 0.0
        %5688 = vmatpush2.msra.mxu0 0.0
        %5689 = vmatprep.subr.mxu0 0.0
        %5690 = vmatpush2.msra.mxu0 0.0
        %5691 = vmatprep.subr.mxu0 0.0
        %5692 = vmatpush2.msra.mxu0 0.0
        %5693 = vmatprep.subr.mxu0 0.0
        %5694 = vmatpush2.msra.mxu0 0.0
        %5695 = vmatprep.subr.mxu0 0.0
        %5696 = vmatpush2.msra.mxu0 0.0
        %5697 = vmatprep.mubr.f32.mxu0 0.0
        %5698 = vmatmul.mubr.f32.gmra.mxu0 %v5631
        %v5699 = vpop.f32.mrf.mxu0
        %v5700 = vadd.f32 %v5628, %v5699
        %v5701 = vpop.f32.mrf.mxu0
        %5702 = vdwg.mxu0
        %v5703 = vmax.f32 %v5700, 0.0
        %s5704 = scalar_lea.vmem %s18, 64
        %v5705 = vld [vmem:[%s5704] sm:$0xff]
        %v5706 = vld [vmem:[%s5704 + $0x8] sm:$0xff]
        %v5707 = vld [vmem:[%s5704 + $0x10] sm:$0xff]
        %v5708 = vld [vmem:[%s5704 + $0x18] sm:$0xff]
        %v5709 = vld [vmem:[%s5704 + $0x20] sm:$0xff]
        %v5710 = vld [vmem:[%s5704 + $0x28] sm:$0xff]
        %v5711 = vld [vmem:[%s5704 + $0x30] sm:$0xff]
        %v5712 = vld [vmem:[%s5704 + $0x38] sm:$0xff]
        %v5714 = vsel %vm3182, %v5703, 0
        %5716 = vmatprep.subr.mxu0 0.0
        %5717 = vmatpush1.msra.mxu0 0.0
        %5718 = vmatprep.subr.mxu0 0.0
        %5719 = vmatpush1.msra.mxu0 0.0
        %5720 = vmatprep.subr.mxu0 0.0
        %5721 = vmatpush1.msra.mxu0 0.0
        %5722 = vmatprep.subr.mxu0 0.0
        %5723 = vmatpush1.msra.mxu0 0.0
        %5724 = vmatprep.subr.mxu0 0.0
        %5725 = vmatpush1.msra.mxu0 0.0
        %5726 = vmatprep.subr.mxu0 0.0
        %5727 = vmatpush1.msra.mxu0 0.0
        %5728 = vmatprep.subr.mxu0 0.0
        %5729 = vmatpush1.msra.mxu0 0.0
        %5730 = vmatprep.subr.mxu0 0.0
        %5731 = vmatpush1.msra.mxu0 0.0
        %5732 = vmatprep.subr.mxu0 0.0
        %5733 = vmatpush1.msra.mxu0 %v5712
        %5734 = vmatprep.subr.mxu0 0.0
        %5735 = vmatpush1.msra.mxu0 %v5711
        %5736 = vmatprep.subr.mxu0 0.0
        %5737 = vmatpush1.msra.mxu0 %v5710
        %5738 = vmatprep.subr.mxu0 0.0
        %5739 = vmatpush1.msra.mxu0 %v5709
        %5740 = vmatprep.subr.mxu0 0.0
        %5741 = vmatpush1.msra.mxu0 %v5708
        %5742 = vmatprep.subr.mxu0 0.0
        %5743 = vmatpush1.msra.mxu0 %v5707
        %5744 = vmatprep.subr.mxu0 0.0
        %5745 = vmatpush1.msra.mxu0 %v5706
        %5746 = vmatprep.subr.mxu0 0.0
        %5747 = vmatpush1.msra.mxu0 %v5705
        %5748 = vmatprep.subr.mxu0 0.0
        %5749 = vmatpush2.msra.mxu0 0.0
        %5750 = vmatprep.subr.mxu0 0.0
        %5751 = vmatpush2.msra.mxu0 0.0
        %5752 = vmatprep.subr.mxu0 0.0
        %5753 = vmatpush2.msra.mxu0 0.0
        %5754 = vmatprep.subr.mxu0 0.0
        %5755 = vmatpush2.msra.mxu0 0.0
        %5756 = vmatprep.subr.mxu0 0.0
        %5757 = vmatpush2.msra.mxu0 0.0
        %5758 = vmatprep.subr.mxu0 0.0
        %5759 = vmatpush2.msra.mxu0 0.0
        %5760 = vmatprep.subr.mxu0 0.0
        %5761 = vmatpush2.msra.mxu0 0.0
        %5762 = vmatprep.subr.mxu0 0.0
        %5763 = vmatpush2.msra.mxu0 0.0
        %5764 = vmatprep.subr.mxu0 0.0
        %5765 = vmatpush2.msra.mxu0 0.0
        %5766 = vmatprep.subr.mxu0 0.0
        %5767 = vmatpush2.msra.mxu0 0.0
        %5768 = vmatprep.subr.mxu0 0.0
        %5769 = vmatpush2.msra.mxu0 0.0
        %5770 = vmatprep.subr.mxu0 0.0
        %5771 = vmatpush2.msra.mxu0 0.0
        %5772 = vmatprep.subr.mxu0 0.0
        %5773 = vmatpush2.msra.mxu0 0.0
        %5774 = vmatprep.subr.mxu0 0.0
        %5775 = vmatpush2.msra.mxu0 0.0
        %5776 = vmatprep.subr.mxu0 0.0
        %5777 = vmatpush2.msra.mxu0 0.0
        %5778 = vmatprep.subr.mxu0 0.0
        %5779 = vmatpush2.msra.mxu0 0.0
        %5780 = vmatprep.mubr.f32.mxu0 0.0
        %5781 = vmatmul.mubr.f32.gmra.mxu0 %v5714
        %v5782 = vpop.f32.mrf.mxu0
        %v5783 = vadd.f32 0.0, %v5782
        %v5784 = vpop.f32.mrf.mxu0
        %5785 = vdwg.mxu0
        %v5786 = vadd.f32 %v5578, %v5783
        %s5787 = scalar_lea.vmem %s19, 1
        %v5788 = vld [vmem:[%s5787] sm:$0x1]
        %v5790 = vlaneseq
        %v5791 = vshrl.u32 %v5790, 7
        %v5792 = vsub.s32 0, %v5791
        %v5793 = vrot.slane %v5788, %v5792
        %v5795 = vadd.f32 %v5786, %v5793
        %v5796 = vld [vmem:[%s20] sm:$0x1]
        %v5797 = vld [vmem:[%s21] sm:$0x1]
        %v5798 = vsel %vm740, %v5795, 0.0
        %5799 = vadd.xlane.f32.xlu0 %v5798
        %v5800 = vpop.xlane.xlu0 %5799
        %v5801 = vmul.f32 %v5800, %v744
        %v5802 = vsub.f32 %v5795, %v5801
        %v5803 = vmul.f32 %v5802, %v5802
        %v5804 = vsel %vm740, %v5803, 0.0
        %5805 = vadd.xlane.f32.xlu0 %v5804
        %v5806 = vpop.xlane.xlu0 %5805
        %v5807 = vmul.f32 %v5806, %v751
        %v5808 = vrsqrt.pop %v5807
        %v5809 = vmul.f32 %v5807, %v5808
        %vm5810 = vcmp.eq.f32.partialorder %v5807, inf
        %v5811 = vsel %vm5810, %v5807, %v5809
        %vm5812 = vcmp.eq.f32.partialorder %v5807, 0.0
        %v5813 = vand.u32 %v5807, 2147483648
        %v5814 = vsel %vm5812, %v5813, %v5811
        %v5815 = vadd.f32 %v5814, 1e-06
        %v5816 = vrcp.pop %v5815
        %v5818 = vlaneseq
        %v5819 = vshrl.u32 %v5818, 7
        %v5820 = vsub.s32 0, %v5819
        %v5821 = vrot.slane %v5796, %v5820
        %v5823 = vmul.f32 %v5821, %v5802
        %v5824 = vmul.f32 %v5823, %v5816
        %v5826 = vlaneseq
        %v5827 = vshrl.u32 %v5826, 7
        %v5828 = vsub.s32 0, %v5827
        %v5829 = vrot.slane %v5797, %v5828
        %v5831 = vadd.f32 %v5824, %v5829
        %5832 = vst.msk [vmem:[%s715] sm:$0xff] %vm740, %v5831
        %s5833 = sand.u32 %s526, 1
        %s5834 = scalar_lea.sflag [#allocation3], %s5833
        %s5835 = sand.u32 %s526, 1
        %s5836 = smul.addr %s5835, 8
        %s5837 = scalar_lea.vmem [#allocation2], %s5836
        // Predicated region
        $region109: #{decoder_forward.1} parent=107 // pred_check
          %p5838 = pneg %p536
        $region110: #{decoder_forward.1} parent=107 // pred_check_branch
          %5840 = sbr.rel (%p5838) target = $region112
        $region111: #{decoder_forward.1} parent=107 // pred_region
          %s5842 = ssub.s32 128, 128
          %5843 = vsyncadd %s5834, %s5842
          %s5844 = smul.addr %s36, 128
          %s5845 = scalar_lea.hbm %s22, %s5844
          %s5847 = sshll.u32 %s5837, 4
          %s5848 = int_to_ptr.vmem [resolvable:$true] %s5847
          %5850 = dma.vmem_to_hbm [thread:$0]  %s5848, 128, %s5845, %s5834
        $region112: #{decoder_forward.1} parent=107 // pred_fallthru
          _
      $region108: #{decoder_forward.1} parent=5 // pred_fallthru
        _
      %p5851 = scmp.le.s32.totalorder 2, %s31
      // Predicated region
      $region113: #{decoder_forward.1} parent=5 // pred_check
        %p5852 = pneg %p5851
      $region114: #{decoder_forward.1} parent=5 // pred_check_branch
        %5854 = sbr.rel (%p5852) target = $region116
      $region115: #{decoder_forward.1} parent=5 // pred_region
        %s5855 = ssub.s32 %s31, 2
        // Predicated region
        $region117: #{decoder_forward.1} parent=115 // pred_check
          %p5856 = pneg %p542
        $region118: #{decoder_forward.1} parent=115 // pred_check_branch
          %5858 = sbr.rel (%p5856) target = $region120
        $region119: #{decoder_forward.1} parent=115 // pred_region
          %s5859 = sand.u32 %s527, 1
          %s5860 = scalar_lea.sflag [#allocation3], %s5859
          %s5861 = sand.u32 %s527, 1
          %s5862 = smul.addr %s5861, 8
          %s5863 = scalar_lea.vmem [#allocation2], %s5862
          %5864 = dma.done %s5860, 128
        $region120: #{decoder_forward.1} parent=115 // pred_fallthru
          _
      $region116: #{decoder_forward.1} parent=5 // pred_fallthru
        _
    $region6: #{decoder_forward.1} parent=1 // loop_footer
      %s35 = sadd.s32 1, %s31
    $region7: #{decoder_forward.1} parent=1 // loop_footer_branch
      %30 = sbr.rel target = $region3
    $region8: #{decoder_forward.1} parent=1 // loop_exit
      _
    %5865 = vsyncpa [#allocation3], 1
    %s5866 = scalar_lea.sflag [#allocation3], 1
    %5867 = vsyncpa %s5866, 1

</llo_original>
